<compile_context>
chip_gen: v7x
topology: tpu7x:2x2x1
jax: 0.10.0
libtpu: 0.0.40
codegen_flags: <defaults>
</compile_context>

<pallas_src>
import functools

import jax
import jax.numpy as jnp
from jax.experimental import pallas as pl
from jax.experimental.pallas import tpu as pltpu


# ----------------------------------------------------------------------------
# Pallas kernels
# ----------------------------------------------------------------------------
def _conv_block_kernel(p_ref, w_ref, o_ref, *, norm, act, pool):
    """Fused conv block for one sample of the batch grid.

    p_ref: (1, HW, K) bf16 im2col patches     w_ref: (K, Cout) bf16
    o_ref: (1, HW, Cout) bf16 (pool=False)  or  (1, 1, Cout) f32 (pool=True)

    matmul (MXU, f32 acc) -> [InstanceNorm2d] -> [LeakyReLU(0.2)] -> [mean over HW]
    """
    x = p_ref[0]                                                         # (HW, K)
    acc = jnp.dot(x, w_ref[...], preferred_element_type=jnp.float32)    # (HW, Cout) f32

    if norm == "in":
        # InstanceNorm2d(affine=False, eps=1e-5): per-channel over spatial, biased variance.
        mean = jnp.mean(acc, axis=0, keepdims=True)
        centered = acc - mean
        var = jnp.mean(centered * centered, axis=0, keepdims=True)
        acc = centered * jax.lax.rsqrt(var + 1e-5)

    if act == "lrelu":
        acc = jnp.where(acc >= 0.0, acc, 0.2 * acc)

    if pool:
        # Fused AdaptiveAvgPool2d((1,1)) epilogue (commutes with the later 1x1 conv).
        o_ref[0] = jnp.mean(acc, axis=0, keepdims=True).astype(o_ref.dtype)   # (1, Cout)
    else:
        o_ref[0] = acc.astype(o_ref.dtype)                                    # (HW, Cout)


def _head_kernel(f_ref, w5_ref, b5_ref, feat_ref):
    """1x1 conv applied to pooled features: (N, 512) @ (512, Cout) + bias."""
    feat = jnp.dot(f_ref[...], w5_ref[...], preferred_element_type=jnp.float32) + b5_ref[...]
    feat_ref[...] = feat.astype(feat_ref.dtype)


def _head_prob_kernel(f_ref, w5_ref, b5_ref, wl_ref, bl_ref, feat_ref, prob_ref):
    """1x1 conv on pooled features + fused Linear(Cout -> 1) head, one call."""
    feat = jnp.dot(f_ref[...], w5_ref[...], preferred_element_type=jnp.float32) + b5_ref[...]
    feat_ref[...] = feat.astype(feat_ref.dtype)
    prob = jnp.sum(feat * wl_ref[...], axis=1, keepdims=True) + bl_ref[...]   # (N, 1)
    prob_ref[...] = prob.astype(prob_ref.dtype)


# ----------------------------------------------------------------------------
# Pallas-call wrappers
# ----------------------------------------------------------------------------
_COMPILER_PARAMS = pltpu.CompilerParams(
    dimension_semantics=("parallel",),          # batch axis -> megacore / both TCs on v7x
    vmem_limit_bytes=32 * 1024 * 1024,
)


def conv_block(patches, w, *, norm, act, pool):
    """patches: (N, HW, K) bf16, w: (K, Cout) bf16 -> (N, HW, Cout) bf16 or (N, 1, Cout) f32."""
    n, hw, k = patches.shape
    k2, cout = w.shape
    assert k == k2
    kernel = functools.partial(_conv_block_kernel, norm=norm, act=act, pool=pool)
    if pool:
        out_shape = jax.ShapeDtypeStruct((n, 1, cout), jnp.float32)
        out_spec = pl.BlockSpec((1, 1, cout), lambda i: (i, 0, 0))
    else:
        out_shape = jax.ShapeDtypeStruct((n, hw, cout), jnp.bfloat16)
        out_spec = pl.BlockSpec((1, hw, cout), lambda i: (i, 0, 0))
    return pl.pallas_call(
        kernel,
        out_shape=out_shape,
        grid=(n,),
        in_specs=[
            pl.BlockSpec((1, hw, k), lambda i: (i, 0, 0)),
            pl.BlockSpec((k, cout), lambda i: (0, 0)),
        ],
        out_specs=out_spec,
        compiler_params=_COMPILER_PARAMS,
    )(patches, w)


def head(pooled, w5, b5, wl=None, bl=None):
    """pooled: (N, 512) f32 -> feature (N, Cout) [, prob (N, 1)] in one Pallas call."""
    n, c = pooled.shape
    cout = w5.shape[1]
    b5r = b5.reshape(1, cout)
    if wl is None:
        return pl.pallas_call(
            _head_kernel,
            out_shape=jax.ShapeDtypeStruct((n, cout), jnp.float32),
            in_specs=[
                pl.BlockSpec((n, c), lambda: (0, 0)),
                pl.BlockSpec((c, cout), lambda: (0, 0)),
                pl.BlockSpec((1, cout), lambda: (0, 0)),
            ],
            out_specs=pl.BlockSpec((n, cout), lambda: (0, 0)),
        )(pooled, w5, b5r)
    wlr = wl.reshape(1, cout)    # Linear weight (Cout, 1) -> broadcastable row
    blr = bl.reshape(1, 1)
    return pl.pallas_call(
        _head_prob_kernel,
        out_shape=(jax.ShapeDtypeStruct((n, cout), jnp.float32),
                   jax.ShapeDtypeStruct((n, 1), jnp.float32)),
        in_specs=[
            pl.BlockSpec((n, c), lambda: (0, 0)),
            pl.BlockSpec((c, cout), lambda: (0, 0)),
            pl.BlockSpec((1, cout), lambda: (0, 0)),
            pl.BlockSpec((1, cout), lambda: (0, 0)),
            pl.BlockSpec((1, 1), lambda: (0, 0)),
        ],
        out_specs=(pl.BlockSpec((n, cout), lambda: (0, 0)),
                   pl.BlockSpec((n, 1), lambda: (0, 0))),
    )(pooled, w5, b5r, wlr, blr)


# ----------------------------------------------------------------------------
# im2col glue (plain JAX; the per-block hot path is a single fused Pallas call)
# ----------------------------------------------------------------------------
def extract_patches(x, kh, kw, stride, pad):
    """x: (N, H, W, C) NHWC -> ((N, Ho*Wo, kh*kw*C) patches, Ho, Wo); (kh, kw, c) feature order."""
    n, h, w, c = x.shape
    xp = jnp.pad(x, ((0, 0), (pad, pad), (pad, pad), (0, 0)))
    ho = (h + 2 * pad - kh) // stride + 1
    wo = (w + 2 * pad - kw) // stride + 1
    cols = []
    for i in range(kh):
        for j in range(kw):
            cols.append(xp[:, i:i + stride * ho:stride, j:j + stride * wo:stride, :])
    patches = jnp.concatenate(cols, axis=-1)                 # (N, Ho, Wo, kh*kw*C)
    return patches.reshape(n, ho * wo, kh * kw * c), ho, wo


# ----------------------------------------------------------------------------
# Parameter initialization (deterministic, synthetic weights)
# ----------------------------------------------------------------------------
def init_params(key, in_channels, num_out_channels):
    def conv_w(k, kh, kw, cin, cout):
        fan_in = kh * kw * cin
        w = jax.random.normal(k, (kh, kw, cin, cout), jnp.float32) / jnp.sqrt(fan_in)
        return w.reshape(kh * kw * cin, cout).astype(jnp.bfloat16)

    keys = jax.random.split(key, 8)
    return {
        "w1": conv_w(keys[0], 6, 6, in_channels, 64),            # bias=False
        "w2": conv_w(keys[1], 4, 4, 64, 128),                    # bias=False
        "w3": conv_w(keys[2], 4, 4, 128, 256),                   # bias=False
        "w4": conv_w(keys[3], 4, 4, 256, 512),                   # bias=False
        "w5": (jax.random.normal(keys[4], (512, num_out_channels), jnp.float32)
               / jnp.sqrt(512.0)),                               # 1x1 conv, bias=True
        "b5": jax.random.normal(keys[5], (num_out_channels,), jnp.float32) * 0.01,
        "wl": (jax.random.normal(keys[6], (num_out_channels, 1), jnp.float32)
               / jnp.sqrt(float(num_out_channels))),             # Linear(num_out, 1)
        "bl": jax.random.normal(keys[7], (1,), jnp.float32) * 0.01,
    }


# ----------------------------------------------------------------------------
# Forward pass (matches SiameseNet.forward semantics)
# ----------------------------------------------------------------------------
def siamese_forward(params, a_nchw, num_out_channels, require_prob=False):
    n = a_nchw.shape[0]
    x = jnp.transpose(a_nchw, (0, 2, 3, 1)).astype(jnp.bfloat16)   # NCHW -> NHWC, bf16

    # Block 1: Conv(6, s=2, p=2, bias=False) -> LeakyReLU(0.2)      [norm='none']
    p, ho, wo = extract_patches(x, 6, 6, 2, 2)
    x = conv_block(p, params["w1"], norm="none", act="lrelu", pool=False)
    x = x.reshape(n, ho, wo, 64)

    # Blocks 2-3: Conv(4, s=2, p=1, bias=False) -> InstanceNorm2d -> LeakyReLU(0.2)
    for w_key, cout in (("w2", 128), ("w3", 256)):
        p, ho, wo = extract_patches(x, 4, 4, 2, 1)
        x = conv_block(p, params[w_key], norm="in", act="lrelu", pool=False)
        x = x.reshape(n, ho, wo, cout)

    # Block 4: same, with AdaptiveAvgPool2d((1,1)) fused into the epilogue.
    # (Pooling commutes with the later 1x1 conv because both are linear.)
    p, ho, wo = extract_patches(x, 4, 4, 2, 1)
    pooled = conv_block(p, params["w4"], norm="in", act="lrelu", pool=True)   # (N, 1, 512) f32
    pooled = pooled.reshape(n, 512)

    # Final Conv2d(512, num_out, 1, bias=True) on the pooled features
    # (+ optional Linear(num_out, 1) head), as ONE Pallas call.
    if require_prob:
        feature, prob = head(pooled, params["w5"], params["b5"], params["wl"], params["bl"])
        return feature, prob
    return head(pooled, params["w5"], params["b5"])


# ----------------------------------------------------------------------------
if __name__ == "__main__":
    IN_CHANNELS = 4
    NUM_OUT_CHANNELS = 128
    BATCH = 2
    SPATIAL = 32     # 32 -> 16 -> 8 -> 4 -> 2 -> pool

    key = jax.random.PRNGKey(0)
    k_param, k_in = jax.random.split(key)
    params = init_params(k_param, IN_CHANNELS, NUM_OUT_CHANNELS)
    a = jax.random.normal(k_in, (BATCH, IN_CHANNELS, SPATIAL, SPATIAL), jnp.float32)

    fwd = jax.jit(functools.partial(siamese_forward,
                                    num_out_channels=NUM_OUT_CHANNELS,
                                    require_prob=False))
    feat = jax.block_until_ready(fwd(params, a))
    assert feat.shape == (BATCH, NUM_OUT_CHANNELS), feat.shape

    # also exercise the require_prob=True path (fused 1x1-conv + linear head)
    fwd_p = jax.jit(functools.partial(siamese_forward,
                                      num_out_channels=NUM_OUT_CHANNELS,
                                      require_prob=True))
    feat2, prob = fwd_p(params, a)
    jax.block_until_ready((feat2, prob))
    assert feat2.shape == (BATCH, NUM_OUT_CHANNELS) and prob.shape == (BATCH, 1)

    print("KERNEL_OK")
</pallas_src>

<mosaic_0001>
module attributes {stable_mosaic.version = 11 : i64} {
  func.func @_conv_block_kernel(%arg0: i32, %arg1: memref<1x256x144xbf16, #tpu.memory_space<vmem>>, %arg2: memref<144x64xbf16, #tpu.memory_space<vmem>>, %arg3: memref<1x256x64xbf16, #tpu.memory_space<vmem>>) attributes {dimension_semantics = [#tpu.dimension_semantics<parallel>], iteration_bounds = array<i64: 2>, scalar_prefetch = 0 : i64, scratch_operands = 0 : i64, tpu.core_type = #tpu.core_type<tc>, window_params = [{transform_indices = @transform_0, window_bounds = array<i64: 1, 256, 144>}, {pipeline_mode = #tpu.pipeline_mode<synchronous>, transform_indices = @transform_1, window_bounds = array<i64: 144, 64>}, {transform_indices = @transform_2, window_bounds = array<i64: 1, 256, 64>}]} {
    %c0 = arith.constant 0 : index
    %c0_0 = arith.constant 0 : index
    %c0_1 = arith.constant 0 : index
    %0 = vector.load %arg1[%c0, %c0_0, %c0_1] : memref<1x256x144xbf16, #tpu.memory_space<vmem>>, vector<1x256x144xbf16>
    %1 = vector.shape_cast %0 : vector<1x256x144xbf16> to vector<256x144xbf16>
    %c0_2 = arith.constant 0 : index
    %c0_3 = arith.constant 0 : index
    %2 = vector.load %arg2[%c0_2, %c0_3] : memref<144x64xbf16, #tpu.memory_space<vmem>>, vector<144x64xbf16>
    %cst = arith.constant dense<0.000000e+00> : vector<256x64xf32>
    %3 = tpu.matmul %1, %2, %cst {dimension_numbers = #tpu.dot_dimension_numbers<[1], [0], [0], [1], [0, 0, 1, 1], [], []>} : vector<256x144xbf16>, vector<144x64xbf16>, vector<256x64xf32> -> vector<256x64xf32>
    %cst_4 = arith.constant 0.000000e+00 : f32
    %4 = vector.broadcast %cst_4 : f32 to vector<256x64xf32>
    %5 = arith.cmpf oge, %3, %4 : vector<256x64xf32>
    %cst_5 = arith.constant 2.000000e-01 : f32
    %6 = vector.broadcast %cst_5 : f32 to vector<256x64xf32>
    %7 = arith.mulf %6, %3 : vector<256x64xf32>
    %8 = arith.select %5, %3, %7 : vector<256x64xi1>, vector<256x64xf32>
    %9 = arith.truncf %8 : vector<256x64xf32> to vector<256x64xbf16>
    %c0_6 = arith.constant 0 : index
    %c0_7 = arith.constant 0 : index
    %c0_8 = arith.constant 0 : index
    %10 = vector.load %arg3[%c0_6, %c0_7, %c0_8] : memref<1x256x64xbf16, #tpu.memory_space<vmem>>, vector<1x256x64xbf16>
    %11 = vector.shape_cast %10 : vector<1x256x64xbf16> to vector<256x64xbf16>
    %12 = vector.shape_cast %9 : vector<256x64xbf16> to vector<1x256x64xbf16>
    tpu.vector_store %arg3[%c0_6, %c0_7, %c0_8], %12 {strides = array<i32>} : memref<1x256x64xbf16, #tpu.memory_space<vmem>>, vector<1x256x64xbf16>,
    return
  }
  func.func @transform_0(%arg0: i32) -> (i32, i32, i32) {
    %c0_i32 = arith.constant 0 : i32
    %c0_i32_0 = arith.constant 0 : i32
    %c0_i32_1 = arith.constant 0 : i32
    return %arg0, %c0_i32, %c0_i32_0 : i32, i32, i32
  }
  func.func @transform_1(%arg0: i32) -> (i32, i32) {
    %c0_i32 = arith.constant 0 : i32
    %c0_i32_0 = arith.constant 0 : i32
    %c0_i32_1 = arith.constant 0 : i32
    return %c0_i32, %c0_i32_0 : i32, i32
  }
  func.func @transform_2(%arg0: i32) -> (i32, i32, i32) {
    %c0_i32 = arith.constant 0 : i32
    %c0_i32_0 = arith.constant 0 : i32
    %c0_i32_1 = arith.constant 0 : i32
    return %arg0, %c0_i32, %c0_i32_0 : i32, i32, i32
  }
}

module attributes {stable_mosaic.version = 11 : i64} {
  func.func @_conv_block_kernel(%arg0: i32, %arg1: memref<1x64x1024xbf16, #tpu.memory_space<vmem>>, %arg2: memref<1024x128xbf16, #tpu.memory_space<vmem>>, %arg3: memref<1x64x128xbf16, #tpu.memory_space<vmem>>) attributes {dimension_semantics = [#tpu.dimension_semantics<parallel>], iteration_bounds = array<i64: 2>, scalar_prefetch = 0 : i64, scratch_operands = 0 : i64, tpu.core_type = #tpu.core_type<tc>, window_params = [{transform_indices = @transform_0, window_bounds = array<i64: 1, 64, 1024>}, {pipeline_mode = #tpu.pipeline_mode<synchronous>, transform_indices = @transform_1, window_bounds = array<i64: 1024, 128>}, {transform_indices = @transform_2, window_bounds = array<i64: 1, 64, 128>}]} {
    %c0 = arith.constant 0 : index
    %c0_0 = arith.constant 0 : index
    %c0_1 = arith.constant 0 : index
    %0 = vector.load %arg1[%c0, %c0_0, %c0_1] : memref<1x64x1024xbf16, #tpu.memory_space<vmem>>, vector<1x64x1024xbf16>
    %1 = vector.shape_cast %0 : vector<1x64x1024xbf16> to vector<64x1024xbf16>
    %c0_2 = arith.constant 0 : index
    %c0_3 = arith.constant 0 : index
    %2 = vector.load %arg2[%c0_2, %c0_3] : memref<1024x128xbf16, #tpu.memory_space<vmem>>, vector<1024x128xbf16>
    %cst = arith.constant dense<0.000000e+00> : vector<64x128xf32>
    %3 = tpu.matmul %1, %2, %cst {dimension_numbers = #tpu.dot_dimension_numbers<[1], [0], [0], [1], [0, 0, 1, 1], [], []>} : vector<64x1024xbf16>, vector<1024x128xbf16>, vector<64x128xf32> -> vector<64x128xf32>
    %cst_4 = arith.constant dense<0.000000e+00> : vector<128xf32>
    %4 = vector.multi_reduction <add>, %3, %cst_4 [0] : vector<64x128xf32> to vector<128xf32>
    %5 = vector.shape_cast %4 : vector<128xf32> to vector<1x128xf32>
    %cst_5 = arith.constant 6.400000e+01 : f32
    %6 = vector.broadcast %cst_5 : f32 to vector<1x128xf32>
    %7 = arith.divf %5, %6 : vector<1x128xf32>
    %8 = vector.broadcast %7 : vector<1x128xf32> to vector<64x128xf32>
    %9 = arith.subf %3, %8 : vector<64x128xf32>
    %10 = arith.mulf %9, %9 : vector<64x128xf32>
    %cst_6 = arith.constant dense<0.000000e+00> : vector<128xf32>
    %11 = vector.multi_reduction <add>, %10, %cst_6 [0] : vector<64x128xf32> to vector<128xf32>
    %12 = vector.shape_cast %11 : vector<128xf32> to vector<1x128xf32>
    %cst_7 = arith.constant 6.400000e+01 : f32
    %13 = vector.broadcast %cst_7 : f32 to vector<1x128xf32>
    %14 = arith.divf %12, %13 : vector<1x128xf32>
    %cst_8 = arith.constant 9.99999974E-6 : f32
    %15 = vector.broadcast %cst_8 : f32 to vector<1x128xf32>
    %16 = arith.addf %14, %15 : vector<1x128xf32>
    %17 = math.rsqrt %16 : vector<1x128xf32>
    %18 = vector.broadcast %17 : vector<1x128xf32> to vector<64x128xf32>
    %19 = arith.mulf %9, %18 : vector<64x128xf32>
    %cst_9 = arith.constant 0.000000e+00 : f32
    %20 = vector.broadcast %cst_9 : f32 to vector<64x128xf32>
    %21 = arith.cmpf oge, %19, %20 : vector<64x128xf32>
    %cst_10 = arith.constant 2.000000e-01 : f32
    %22 = vector.broadcast %cst_10 : f32 to vector<64x128xf32>
    %23 = arith.mulf %22, %19 : vector<64x128xf32>
    %24 = arith.select %21, %19, %23 : vector<64x128xi1>, vector<64x128xf32>
    %25 = arith.truncf %24 : vector<64x128xf32> to vector<64x128xbf16>
    %c0_11 = arith.constant 0 : index
    %c0_12 = arith.constant 0 : index
    %c0_13 = arith.constant 0 : index
    %26 = vector.load %arg3[%c0_11, %c0_12, %c0_13] : memref<1x64x128xbf16, #tpu.memory_space<vmem>>, vector<1x64x128xbf16>
    %27 = vector.shape_cast %26 : vector<1x64x128xbf16> to vector<64x128xbf16>
    %28 = vector.shape_cast %25 : vector<64x128xbf16> to vector<1x64x128xbf16>
    tpu.vector_store %arg3[%c0_11, %c0_12, %c0_13], %28 {strides = array<i32>} : memref<1x64x128xbf16, #tpu.memory_space<vmem>>, vector<1x64x128xbf16>,
    return
  }
  func.func @transform_0(%arg0: i32) -> (i32, i32, i32) {
    %c0_i32 = arith.constant 0 : i32
    %c0_i32_0 = arith.constant 0 : i32
    %c0_i32_1 = arith.constant 0 : i32
    return %arg0, %c0_i32, %c0_i32_0 : i32, i32, i32
  }
  func.func @transform_1(%arg0: i32) -> (i32, i32) {
    %c0_i32 = arith.constant 0 : i32
    %c0_i32_0 = arith.constant 0 : i32
    %c0_i32_1 = arith.constant 0 : i32
    return %c0_i32, %c0_i32_0 : i32, i32
  }
  func.func @transform_2(%arg0: i32) -> (i32, i32, i32) {
    %c0_i32 = arith.constant 0 : i32
    %c0_i32_0 = arith.constant 0 : i32
    %c0_i32_1 = arith.constant 0 : i32
    return %arg0, %c0_i32, %c0_i32_0 : i32, i32, i32
  }
}

module attributes {stable_mosaic.version = 11 : i64} {
  func.func @_conv_block_kernel(%arg0: i32, %arg1: memref<1x16x2048xbf16, #tpu.memory_space<vmem>>, %arg2: memref<2048x256xbf16, #tpu.memory_space<vmem>>, %arg3: memref<1x16x256xbf16, #tpu.memory_space<vmem>>) attributes {dimension_semantics = [#tpu.dimension_semantics<parallel>], iteration_bounds = array<i64: 2>, scalar_prefetch = 0 : i64, scratch_operands = 0 : i64, tpu.core_type = #tpu.core_type<tc>, window_params = [{transform_indices = @transform_0, window_bounds = array<i64: 1, 16, 2048>}, {pipeline_mode = #tpu.pipeline_mode<synchronous>, transform_indices = @transform_1, window_bounds = array<i64: 2048, 256>}, {transform_indices = @transform_2, window_bounds = array<i64: 1, 16, 256>}]} {
    %c0 = arith.constant 0 : index
    %c0_0 = arith.constant 0 : index
    %c0_1 = arith.constant 0 : index
    %0 = vector.load %arg1[%c0, %c0_0, %c0_1] : memref<1x16x2048xbf16, #tpu.memory_space<vmem>>, vector<1x16x2048xbf16>
    %1 = vector.shape_cast %0 : vector<1x16x2048xbf16> to vector<16x2048xbf16>
    %c0_2 = arith.constant 0 : index
    %c0_3 = arith.constant 0 : index
    %2 = vector.load %arg2[%c0_2, %c0_3] : memref<2048x256xbf16, #tpu.memory_space<vmem>>, vector<2048x256xbf16>
    %cst = arith.constant dense<0.000000e+00> : vector<16x256xf32>
    %3 = tpu.matmul %1, %2, %cst {dimension_numbers = #tpu.dot_dimension_numbers<[1], [0], [0], [1], [0, 0, 1, 1], [], []>} : vector<16x2048xbf16>, vector<2048x256xbf16>, vector<16x256xf32> -> vector<16x256xf32>
    %cst_4 = arith.constant dense<0.000000e+00> : vector<256xf32>
    %4 = vector.multi_reduction <add>, %3, %cst_4 [0] : vector<16x256xf32> to vector<256xf32>
    %5 = vector.shape_cast %4 : vector<256xf32> to vector<1x256xf32>
    %cst_5 = arith.constant 1.600000e+01 : f32
    %6 = vector.broadcast %cst_5 : f32 to vector<1x256xf32>
    %7 = arith.divf %5, %6 : vector<1x256xf32>
    %8 = vector.broadcast %7 : vector<1x256xf32> to vector<16x256xf32>
    %9 = arith.subf %3, %8 : vector<16x256xf32>
    %10 = arith.mulf %9, %9 : vector<16x256xf32>
    %cst_6 = arith.constant dense<0.000000e+00> : vector<256xf32>
    %11 = vector.multi_reduction <add>, %10, %cst_6 [0] : vector<16x256xf32> to vector<256xf32>
    %12 = vector.shape_cast %11 : vector<256xf32> to vector<1x256xf32>
    %cst_7 = arith.constant 1.600000e+01 : f32
    %13 = vector.broadcast %cst_7 : f32 to vector<1x256xf32>
    %14 = arith.divf %12, %13 : vector<1x256xf32>
    %cst_8 = arith.constant 9.99999974E-6 : f32
    %15 = vector.broadcast %cst_8 : f32 to vector<1x256xf32>
    %16 = arith.addf %14, %15 : vector<1x256xf32>
    %17 = math.rsqrt %16 : vector<1x256xf32>
    %18 = vector.broadcast %17 : vector<1x256xf32> to vector<16x256xf32>
    %19 = arith.mulf %9, %18 : vector<16x256xf32>
    %cst_9 = arith.constant 0.000000e+00 : f32
    %20 = vector.broadcast %cst_9 : f32 to vector<16x256xf32>
    %21 = arith.cmpf oge, %19, %20 : vector<16x256xf32>
    %cst_10 = arith.constant 2.000000e-01 : f32
    %22 = vector.broadcast %cst_10 : f32 to vector<16x256xf32>
    %23 = arith.mulf %22, %19 : vector<16x256xf32>
    %24 = arith.select %21, %19, %23 : vector<16x256xi1>, vector<16x256xf32>
    %25 = arith.truncf %24 : vector<16x256xf32> to vector<16x256xbf16>
    %c0_11 = arith.constant 0 : index
    %c0_12 = arith.constant 0 : index
    %c0_13 = arith.constant 0 : index
    %26 = vector.load %arg3[%c0_11, %c0_12, %c0_13] : memref<1x16x256xbf16, #tpu.memory_space<vmem>>, vector<1x16x256xbf16>
    %27 = vector.shape_cast %26 : vector<1x16x256xbf16> to vector<16x256xbf16>
    %28 = vector.shape_cast %25 : vector<16x256xbf16> to vector<1x16x256xbf16>
    tpu.vector_store %arg3[%c0_11, %c0_12, %c0_13], %28 {strides = array<i32>} : memref<1x16x256xbf16, #tpu.memory_space<vmem>>, vector<1x16x256xbf16>,
    return
  }
  func.func @transform_0(%arg0: i32) -> (i32, i32, i32) {
    %c0_i32 = arith.constant 0 : i32
    %c0_i32_0 = arith.constant 0 : i32
    %c0_i32_1 = arith.constant 0 : i32
    return %arg0, %c0_i32, %c0_i32_0 : i32, i32, i32
  }
  func.func @transform_1(%arg0: i32) -> (i32, i32) {
    %c0_i32 = arith.constant 0 : i32
    %c0_i32_0 = arith.constant 0 : i32
    %c0_i32_1 = arith.constant 0 : i32
    return %c0_i32, %c0_i32_0 : i32, i32
  }
  func.func @transform_2(%arg0: i32) -> (i32, i32, i32) {
    %c0_i32 = arith.constant 0 : i32
    %c0_i32_0 = arith.constant 0 : i32
    %c0_i32_1 = arith.constant 0 : i32
    return %arg0, %c0_i32, %c0_i32_0 : i32, i32, i32
  }
}

module attributes {stable_mosaic.version = 11 : i64} {
  func.func @_head_kernel(%arg0: memref<2x512xf32, #tpu.memory_space<vmem>>, %arg1: memref<512x128xf32, #tpu.memory_space<vmem>>, %arg2: memref<1x128xf32, #tpu.memory_space<vmem>>, %arg3: memref<2x128xf32, #tpu.memory_space<vmem>>) attributes {dimension_semantics = [], scalar_prefetch = 0 : i64, scratch_operands = 0 : i64, tpu.core_type = #tpu.core_type<tc>} {
    %c0 = arith.constant 0 : index
    %c0_0 = arith.constant 0 : index
    %0 = vector.load %arg0[%c0, %c0_0] : memref<2x512xf32, #tpu.memory_space<vmem>>, vector<2x512xf32>
    %c0_1 = arith.constant 0 : index
    %c0_2 = arith.constant 0 : index
    %1 = vector.load %arg1[%c0_1, %c0_2] : memref<512x128xf32, #tpu.memory_space<vmem>>, vector<512x128xf32>
    %cst = arith.constant dense<0.000000e+00> : vector<2x128xf32>
    %2 = tpu.matmul %0, %1, %cst {dimension_numbers = #tpu.dot_dimension_numbers<[1], [0], [0], [1], [0, 0, 1, 1], [], []>} : vector<2x512xf32>, vector<512x128xf32>, vector<2x128xf32> -> vector<2x128xf32>
    %c0_3 = arith.constant 0 : index
    %c0_4 = arith.constant 0 : index
    %3 = vector.load %arg2[%c0_3, %c0_4] : memref<1x128xf32, #tpu.memory_space<vmem>>, vector<1x128xf32>
    %4 = vector.broadcast %3 : vector<1x128xf32> to vector<2x128xf32>
    %5 = arith.addf %2, %4 : vector<2x128xf32>
    %c0_5 = arith.constant 0 : index
    %c0_6 = arith.constant 0 : index
    %6 = vector.load %arg3[%c0_5, %c0_6] : memref<2x128xf32, #tpu.memory_space<vmem>>, vector<2x128xf32>
    tpu.vector_store %arg3[%c0_5, %c0_6], %5 {strides = array<i32>} : memref<2x128xf32, #tpu.memory_space<vmem>>, vector<2x128xf32>,
    return
  }
}

module attributes {stable_mosaic.version = 11 : i64} {
  func.func @_conv_block_kernel(%arg0: i32, %arg1: memref<1x4x4096xbf16, #tpu.memory_space<vmem>>, %arg2: memref<4096x512xbf16, #tpu.memory_space<vmem>>, %arg3: memref<1x1x512xf32, #tpu.memory_space<vmem>>) attributes {dimension_semantics = [#tpu.dimension_semantics<parallel>], iteration_bounds = array<i64: 2>, scalar_prefetch = 0 : i64, scratch_operands = 0 : i64, tpu.core_type = #tpu.core_type<tc>, window_params = [{transform_indices = @transform_0, window_bounds = array<i64: 1, 4, 4096>}, {pipeline_mode = #tpu.pipeline_mode<synchronous>, transform_indices = @transform_1, window_bounds = array<i64: 4096, 512>}, {transform_indices = @transform_2, window_bounds = array<i64: 1, 1, 512>}]} {
    %c0 = arith.constant 0 : index
    %c0_0 = arith.constant 0 : index
    %c0_1 = arith.constant 0 : index
    %0 = vector.load %arg1[%c0, %c0_0, %c0_1] : memref<1x4x4096xbf16, #tpu.memory_space<vmem>>, vector<1x4x4096xbf16>
    %1 = vector.shape_cast %0 : vector<1x4x4096xbf16> to vector<4x4096xbf16>
    %c0_2 = arith.constant 0 : index
    %c0_3 = arith.constant 0 : index
    %2 = vector.load %arg2[%c0_2, %c0_3] : memref<4096x512xbf16, #tpu.memory_space<vmem>>, vector<4096x512xbf16>
    %cst = arith.constant dense<0.000000e+00> : vector<4x512xf32>
    %3 = tpu.matmul %1, %2, %cst {dimension_numbers = #tpu.dot_dimension_numbers<[1], [0], [0], [1], [0, 0, 1, 1], [], []>} : vector<4x4096xbf16>, vector<4096x512xbf16>, vector<4x512xf32> -> vector<4x512xf32>
    %cst_4 = arith.constant dense<0.000000e+00> : vector<512xf32>
    %4 = vector.multi_reduction <add>, %3, %cst_4 [0] : vector<4x512xf32> to vector<512xf32>
    %5 = vector.shape_cast %4 : vector<512xf32> to vector<1x512xf32>
    %cst_5 = arith.constant 4.000000e+00 : f32
    %6 = vector.broadcast %cst_5 : f32 to vector<1x512xf32>
    %7 = arith.divf %5, %6 : vector<1x512xf32>
    %8 = vector.broadcast %7 : vector<1x512xf32> to vector<4x512xf32>
    %9 = arith.subf %3, %8 : vector<4x512xf32>
    %10 = arith.mulf %9, %9 : vector<4x512xf32>
    %cst_6 = arith.constant dense<0.000000e+00> : vector<512xf32>
    %11 = vector.multi_reduction <add>, %10, %cst_6 [0] : vector<4x512xf32> to vector<512xf32>
    %12 = vector.shape_cast %11 : vector<512xf32> to vector<1x512xf32>
    %cst_7 = arith.constant 4.000000e+00 : f32
    %13 = vector.broadcast %cst_7 : f32 to vector<1x512xf32>
    %14 = arith.divf %12, %13 : vector<1x512xf32>
    %cst_8 = arith.constant 9.99999974E-6 : f32
    %15 = vector.broadcast %cst_8 : f32 to vector<1x512xf32>
    %16 = arith.addf %14, %15 : vector<1x512xf32>
    %17 = math.rsqrt %16 : vector<1x512xf32>
    %18 = vector.broadcast %17 : vector<1x512xf32> to vector<4x512xf32>
    %19 = arith.mulf %9, %18 : vector<4x512xf32>
    %cst_9 = arith.constant 0.000000e+00 : f32
    %20 = vector.broadcast %cst_9 : f32 to vector<4x512xf32>
    %21 = arith.cmpf oge, %19, %20 : vector<4x512xf32>
    %cst_10 = arith.constant 2.000000e-01 : f32
    %22 = vector.broadcast %cst_10 : f32 to vector<4x512xf32>
    %23 = arith.mulf %22, %19 : vector<4x512xf32>
    %24 = arith.select %21, %19, %23 : vector<4x512xi1>, vector<4x512xf32>
    %cst_11 = arith.constant dense<0.000000e+00> : vector<512xf32>
    %25 = vector.multi_reduction <add>, %24, %cst_11 [0] : vector<4x512xf32> to vector<512xf32>
    %26 = vector.shape_cast %25 : vector<512xf32> to vector<1x512xf32>
    %cst_12 = arith.constant 4.000000e+00 : f32
    %27 = vector.broadcast %cst_12 : f32 to vector<1x512xf32>
    %28 = arith.divf %26, %27 : vector<1x512xf32>
    %c0_13 = arith.constant 0 : index
    %c0_14 = arith.constant 0 : index
    %c0_15 = arith.constant 0 : index
    %29 = vector.load %arg3[%c0_13, %c0_14, %c0_15] : memref<1x1x512xf32, #tpu.memory_space<vmem>>, vector<1x1x512xf32>
    %30 = vector.shape_cast %29 : vector<1x1x512xf32> to vector<1x512xf32>
    %31 = vector.shape_cast %28 : vector<1x512xf32> to vector<1x1x512xf32>
    tpu.vector_store %arg3[%c0_13, %c0_14, %c0_15], %31 {strides = array<i32>} : memref<1x1x512xf32, #tpu.memory_space<vmem>>, vector<1x1x512xf32>,
    return
  }
  func.func @transform_0(%arg0: i32) -> (i32, i32, i32) {
    %c0_i32 = arith.constant 0 : i32
    %c0_i32_0 = arith.constant 0 : i32
    %c0_i32_1 = arith.constant 0 : i32
    return %arg0, %c0_i32, %c0_i32_0 : i32, i32, i32
  }
  func.func @transform_1(%arg0: i32) -> (i32, i32) {
    %c0_i32 = arith.constant 0 : i32
    %c0_i32_0 = arith.constant 0 : i32
    %c0_i32_1 = arith.constant 0 : i32
    return %c0_i32, %c0_i32_0 : i32, i32
  }
  func.func @transform_2(%arg0: i32) -> (i32, i32, i32) {
    %c0_i32 = arith.constant 0 : i32
    %c0_i32_0 = arith.constant 0 : i32
    %c0_i32_1 = arith.constant 0 : i32
    return %arg0, %c0_i32, %c0_i32_0 : i32, i32, i32
  }
}

</mosaic_0001>

<llo_original>
// kernel: siamese_forward.5
$region0: #{siamese_forward.5}
  #allocation0 [shape = 'u32[]', space=smem, size = 0x4, offset = 0x4, fixed_abs, tag = 'smem constant byte address 0x4 - core index']
  #allocation1 [shape = 'u32[144,128]{1,0:T(1,128)}', space=vmem, size = 0x12000, scoped, tag = 'internal scratch']
  %s0 = inlined_call_operand.vmem [shape: bf16[2,256,144], index: 0, kind: input, shape index: {}]
  %s1 = inlined_call_operand.vmem [shape: bf16[144,64], index: 1, kind: input, shape index: {}]
  %s2 = inlined_call_operand.vmem [shape: bf16[2,256,64], index: 2, kind: output, shape index: {}]
  %s3 = sld [smem:[#allocation0]]
  $region41: #{siamese_forward.5} parent=0
    _
  %s5 = ssub.s32 1, %s3
  %s6 = scalar_select 0, %s5, %s3
  loop: start=0, step=1, limit=4
  $region2: #{siamese_forward.5} parent=0 // loop_pre_header
    _
  $region3: #{siamese_forward.5} parent=0 // loop_header
    %s8 = sphi 0, %s12
    %p9 = scmp.ge.s32.totalorder %s8, 4
    %s18 = sphi 0, %s20
    %s21 = sphi 0, %s18
    %s22 = sphi 0, %s21
    %s38 = sphi 0, %s22
    %s42 = sphi 0, %s42
    %s44 = sphi 0, %s42
    %s45 = sphi 0, %s44
    %s59 = sphi 0, %s45
    %s65 = sphi 0, %s67
    %s68 = sphi 0, %s65
    %s69 = sphi 0, %s68
    %s85 = sphi 0, %s69
  $region4: #{siamese_forward.5} parent=0 // loop_header_branch
    %11 = sbr.rel (%p9) target = $region8
  $region5: #{siamese_forward.5} parent=0 // loop_body
    %s13 = ssub.s32 %s8, 1
    %s14 = ssub.s32 %s8, 2
    %s15 = sadd.s32 %s8, 1
    %s16 = ssub.s32 %s8, %s15
    %p17 = scmp.eq.s32.totalorder %s16, 0
    %s19 = sadd.s32 %s18, 1
    %s20 = scalar_select %p17, %s18, %s19
    %p23 = pneg %p17
    %p24 = scmp.eq.s32.totalorder %s8, 1
    %p25 = por %p23, %p24
    %p26 = scmp.ne.s32.totalorder %s18, %s21
    %p27 = scmp.eq.s32.totalorder %s8, 0
    %p28 = por %p26, %p27
    %p29 = scmp.ne.s32.totalorder %s18, %s21
    %p30 = scmp.eq.s32.totalorder %s13, 1
    %p31 = por %p29, %p30
    %p32 = scmp.ne.s32.totalorder %s21, %s22
    %p33 = scmp.eq.s32.totalorder %s13, 0
    %p34 = por %p32, %p33
    %p35 = scmp.ne.s32.totalorder %s21, %s22
    %p36 = scmp.eq.s32.totalorder %s14, 1
    %p37 = por %p35, %p36
    %p39 = scmp.ne.s32.totalorder %s22, %s38
    %p40 = scmp.eq.s32.totalorder %s14, 0
    %p41 = por %p39, %p40
    %s43 = sadd.s32 %s42, 1
    %p46 = scmp.eq.s32.totalorder %s8, 1
    %p47 = scmp.ne.s32.totalorder %s42, %s44
    %p48 = scmp.eq.s32.totalorder %s8, 0
    %p49 = por %p47, %p48
    %p50 = scmp.ne.s32.totalorder %s42, %s44
    %p51 = scmp.eq.s32.totalorder %s13, 1
    %p52 = por %p50, %p51
    %p53 = scmp.ne.s32.totalorder %s44, %s45
    %p54 = scmp.eq.s32.totalorder %s13, 0
    %p55 = por %p53, %p54
    %p56 = scmp.ne.s32.totalorder %s44, %s45
    %p57 = scmp.eq.s32.totalorder %s14, 1
    %p58 = por %p56, %p57
    %p60 = scmp.ne.s32.totalorder %s45, %s59
    %p61 = scmp.eq.s32.totalorder %s14, 0
    %p62 = por %p60, %p61
    %s63 = ssub.s32 %s8, %s15
    %p64 = scmp.eq.s32.totalorder %s63, 0
    %s66 = sadd.s32 %s65, 1
    %s67 = scalar_select %p64, %s65, %s66
    %p70 = pneg %p64
    %p71 = scmp.eq.s32.totalorder %s8, 1
    %p72 = por %p70, %p71
    %p73 = scmp.ne.s32.totalorder %s65, %s68
    %p74 = scmp.eq.s32.totalorder %s8, 0
    %p75 = por %p73, %p74
    %p76 = scmp.ne.s32.totalorder %s65, %s68
    %p77 = scmp.eq.s32.totalorder %s13, 1
    %p78 = por %p76, %p77
    %p79 = scmp.ne.s32.totalorder %s68, %s69
    %p80 = scmp.eq.s32.totalorder %s13, 0
    %p81 = por %p79, %p80
    %p82 = scmp.ne.s32.totalorder %s68, %s69
    %p83 = scmp.eq.s32.totalorder %s14, 1
    %p84 = por %p82, %p83
    %p86 = scmp.ne.s32.totalorder %s69, %s85
    %p87 = scmp.eq.s32.totalorder %s14, 0
    %p88 = por %p86, %p87
    %p89 = scmp.le.s32.totalorder 1, %s8
    %p90 = scmp.lt.s32.totalorder %s8, 3
    %p91 = pnand %p89, %p90
    %p92 = pneg %p91
    // Predicated region
    $region9: #{siamese_forward.5} parent=5 // pred_check
      _
    $region10: #{siamese_forward.5} parent=5 // pred_check_branch
      %94 = sbr.rel (%p91) target = $region12
    $region11: #{siamese_forward.5} parent=5 // pred_region
      %s95 = ssub.s32 %s8, 1
      // Predicated region
      $region13: #{siamese_forward.5} parent=11 // pred_check
        %p96 = pneg %p55
      $region14: #{siamese_forward.5} parent=11 // pred_check_branch
        %98 = sbr.rel (%p96) target = $region16
      $region15: #{siamese_forward.5} parent=11 // pred_region
        _
      $region16: #{siamese_forward.5} parent=11 // pred_fallthru
        _
    $region12: #{siamese_forward.5} parent=5 // pred_fallthru
      _
    %p99 = scmp.lt.s32.totalorder %s8, 2
    // Predicated region
    $region17: #{siamese_forward.5} parent=5 // pred_check
      %p100 = pneg %p99
    $region18: #{siamese_forward.5} parent=5 // pred_check_branch
      %102 = sbr.rel (%p100) target = $region20
    $region19: #{siamese_forward.5} parent=5 // pred_region
      // Predicated region
      $region21: #{siamese_forward.5} parent=19 // pred_check
        %p103 = pneg %p28
      $region22: #{siamese_forward.5} parent=19 // pred_check_branch
        %105 = sbr.rel (%p103) target = $region24
      $region23: #{siamese_forward.5} parent=19 // pred_region
        %p106 = scmp.lt.s32.totalorder %s8, 1
        %s107 = scalar_select %p106, %s8, 1
        %s108 = smul.addr %s107, 64
        %s109 = smul.addr %s108, 4
        %s110 = scalar_lea.vmem %s0, %s109
      $region24: #{siamese_forward.5} parent=19 // pred_fallthru
        _
    $region20: #{siamese_forward.5} parent=5 // pred_fallthru
      _
    %p111 = scmp.le.s32.totalorder 1, %s8
    %p112 = scmp.lt.s32.totalorder %s8, 3
    %p113 = pnand %p111, %p112
    %p114 = pneg %p113
    // Predicated region
    $region25: #{siamese_forward.5} parent=5 // pred_check
      _
    $region26: #{siamese_forward.5} parent=5 // pred_check_branch
      %116 = sbr.rel (%p113) target = $region28
    $region27: #{siamese_forward.5} parent=5 // pred_region
      %s117 = ssub.s32 %s8, 1
      %p118 = scmp.lt.s32.totalorder %s13, 1
      %s119 = scalar_select %p118, %s13, 1
      %s120 = smul.addr %s119, 64
      %s121 = smul.addr %s120, 4
      %s122 = scalar_lea.vmem %s0, %s121
      %p123 = pneg %p34
      %p124 = pneg %p31
      %p125 = pneg %p55
      %p126 = pneg %p52
      %p127 = pneg %p81
      %p128 = pneg %p78
      %p129 = scmp.lt.s32.totalorder %s13, 1
      %s130 = scalar_select %p129, %s13, 1
      %s131 = smul.addr %s130, 32
      %s132 = smul.addr %s131, 4
      %s133 = scalar_lea.vmem %s2, %s132
      %p134 = scmp.lt.s32.totalorder %s13, 1
      %s135 = scalar_select %p134, %s13, 1
      %s136 = smul.addr %s135, 64
      %s137 = smul.addr %s136, 4
      %s138 = scalar_lea.vmem %s0, %s137
      %p139 = scmp.lt.s32.totalorder %s13, 1
      %s140 = scalar_select %p139, %s13, 1
      %s141 = smul.addr %s140, 32
      %s142 = smul.addr %s141, 4
      %s143 = scalar_lea.vmem %s2, %s142
      %v145 = vld [vmem:[%s138] sm:$0xff]
      %v146 = vld [vmem:[%s138 + $0x8] sm:$0xff]
      %v147 = vld [vmem:[%s138 + $0x10] sm:$0xff]
      %v148 = vld [vmem:[%s138 + $0x18] sm:$0xff]
      %v149 = vld [vmem:[%s138 + $0x20] sm:$0xff]
      %v150 = vld [vmem:[%s138 + $0x28] sm:$0xff]
      %v151 = vld [vmem:[%s138 + $0x30] sm:$0xff]
      %v152 = vld [vmem:[%s138 + $0x38] sm:$0xff]
      %v153 = vld [vmem:[%s138 + $0x40] sm:$0xff]
      %v154 = vld [vmem:[%s138 + $0x48] sm:$0xff]
      %v155 = vld [vmem:[%s138 + $0x50] sm:$0xff]
      %v156 = vld [vmem:[%s138 + $0x58] sm:$0xff]
      %v157 = vld [vmem:[%s138 + $0x60] sm:$0xff]
      %v158 = vld [vmem:[%s138 + $0x68] sm:$0xff]
      %v159 = vld [vmem:[%s138 + $0x70] sm:$0xff]
      %v160 = vld [vmem:[%s138 + $0x78] sm:$0xff]
      %v161 = vld [vmem:[%s138 + $0x80] sm:$0xff]
      %v162 = vld [vmem:[%s138 + $0x88] sm:$0xff]
      %v163 = vld [vmem:[%s138 + $0x90] sm:$0xff]
      %v164 = vld [vmem:[%s138 + $0x98] sm:$0xff]
      %v165 = vld [vmem:[%s138 + $0xa0] sm:$0xff]
      %v166 = vld [vmem:[%s138 + $0xa8] sm:$0xff]
      %v167 = vld [vmem:[%s138 + $0xb0] sm:$0xff]
      %v168 = vld [vmem:[%s138 + $0xb8] sm:$0xff]
      %v169 = vld [vmem:[%s138 + $0xc0] sm:$0xff]
      %v170 = vld [vmem:[%s138 + $0xc8] sm:$0xff]
      %v171 = vld [vmem:[%s138 + $0xd0] sm:$0xff]
      %v172 = vld [vmem:[%s138 + $0xd8] sm:$0xff]
      %v173 = vld [vmem:[%s138 + $0xe0] sm:$0xff]
      %v174 = vld [vmem:[%s138 + $0xe8] sm:$0xff]
      %v175 = vld [vmem:[%s138 + $0xf0] sm:$0xff]
      %v176 = vld [vmem:[%s138 + $0xf8] sm:$0xff]
      %v177 = vld [vmem:[%s1] sm:$0xf]
      %v178 = vld [vmem:[%s1 + $0x4] sm:$0xf]
      %v179 = vld [vmem:[%s1 + $0x8] sm:$0xf]
      %v180 = vld [vmem:[%s1 + $0xc] sm:$0xf]
      %v181 = vld [vmem:[%s1 + $0x10] sm:$0xf]
      %v182 = vld [vmem:[%s1 + $0x14] sm:$0xf]
      %v183 = vld [vmem:[%s1 + $0x18] sm:$0xf]
      %v184 = vld [vmem:[%s1 + $0x1c] sm:$0xf]
      %v185 = vld [vmem:[%s1 + $0x20] sm:$0xf]
      %v186 = vld [vmem:[%s1 + $0x24] sm:$0xf]
      %v187 = vld [vmem:[%s1 + $0x28] sm:$0xf]
      %v188 = vld [vmem:[%s1 + $0x2c] sm:$0xf]
      %v189 = vld [vmem:[%s1 + $0x30] sm:$0xf]
      %v190 = vld [vmem:[%s1 + $0x34] sm:$0xf]
      %v191 = vld [vmem:[%s1 + $0x38] sm:$0xf]
      %v192 = vld [vmem:[%s1 + $0x3c] sm:$0xf]
      %v193 = vld [vmem:[%s1 + $0x40] sm:$0xf]
      %v194 = vld [vmem:[%s1 + $0x44] sm:$0xf]
      %v227 = vunpack.c.l.b16 %v145
      %v228 = vunpack.c.h.b16 %v145
      %v229 = vunpack.c.l.b16 %v146
      %v230 = vunpack.c.h.b16 %v146
      %v231 = vunpack.c.l.b16 %v147
      %v232 = vunpack.c.h.b16 %v147
      %v233 = vunpack.c.l.b16 %v148
      %v234 = vunpack.c.h.b16 %v148
      %v235 = vunpack.c.l.b16 %v149
      %v236 = vunpack.c.h.b16 %v149
      %v237 = vunpack.c.l.b16 %v150
      %v238 = vunpack.c.h.b16 %v150
      %v239 = vunpack.c.l.b16 %v151
      %v240 = vunpack.c.h.b16 %v151
      %v241 = vunpack.c.l.b16 %v152
      %v242 = vunpack.c.h.b16 %v152
      %v243 = vunpack.c.l.b16 %v153
      %v244 = vunpack.c.h.b16 %v153
      %v245 = vunpack.c.l.b16 %v154
      %v246 = vunpack.c.h.b16 %v154
      %v247 = vunpack.c.l.b16 %v155
      %v248 = vunpack.c.h.b16 %v155
      %v249 = vunpack.c.l.b16 %v156
      %v250 = vunpack.c.h.b16 %v156
      %v251 = vunpack.c.l.b16 %v157
      %v252 = vunpack.c.h.b16 %v157
      %v253 = vunpack.c.l.b16 %v158
      %v254 = vunpack.c.h.b16 %v158
      %v255 = vunpack.c.l.b16 %v159
      %v256 = vunpack.c.h.b16 %v159
      %v257 = vunpack.c.l.b16 %v160
      %v258 = vunpack.c.h.b16 %v160
      %v259 = vunpack.c.l.b16 %v161
      %v260 = vunpack.c.h.b16 %v161
      %v261 = vunpack.c.l.b16 %v162
      %v262 = vunpack.c.h.b16 %v162
      %v263 = vunpack.c.l.b16 %v163
      %v264 = vunpack.c.h.b16 %v163
      %v265 = vunpack.c.l.b16 %v164
      %v266 = vunpack.c.h.b16 %v164
      %v267 = vunpack.c.l.b16 %v165
      %v268 = vunpack.c.h.b16 %v165
      %v269 = vunpack.c.l.b16 %v166
      %v270 = vunpack.c.h.b16 %v166
      %v271 = vunpack.c.l.b16 %v167
      %v272 = vunpack.c.h.b16 %v167
      %v273 = vunpack.c.l.b16 %v168
      %v274 = vunpack.c.h.b16 %v168
      %v275 = vunpack.c.l.b16 %v169
      %v276 = vunpack.c.h.b16 %v169
      %v277 = vunpack.c.l.b16 %v170
      %v278 = vunpack.c.h.b16 %v170
      %v279 = vunpack.c.l.b16 %v171
      %v280 = vunpack.c.h.b16 %v171
      %v281 = vunpack.c.l.b16 %v172
      %v282 = vunpack.c.h.b16 %v172
      %v283 = vunpack.c.l.b16 %v173
      %v284 = vunpack.c.h.b16 %v173
      %v285 = vunpack.c.l.b16 %v174
      %v286 = vunpack.c.h.b16 %v174
      %v287 = vunpack.c.l.b16 %v175
      %v288 = vunpack.c.h.b16 %v175
      %v289 = vunpack.c.l.b16 %v176
      %v290 = vunpack.c.h.b16 %v176
      %v291 = vpack.c.b16 %v229, %v227
      %v292 = vpack.c.b16 %v230, %v228
      %v293 = vpack.c.b16 %v233, %v231
      %v294 = vpack.c.b16 %v234, %v232
      %v295 = vpack.c.b16 %v237, %v235
      %v296 = vpack.c.b16 %v238, %v236
      %v297 = vpack.c.b16 %v241, %v239
      %v298 = vpack.c.b16 %v242, %v240
      %v299 = vpack.c.b16 %v245, %v243
      %v300 = vpack.c.b16 %v246, %v244
      %v301 = vpack.c.b16 %v249, %v247
      %v302 = vpack.c.b16 %v250, %v248
      %v303 = vpack.c.b16 %v253, %v251
      %v304 = vpack.c.b16 %v254, %v252
      %v305 = vpack.c.b16 %v257, %v255
      %v306 = vpack.c.b16 %v258, %v256
      %v307 = vpack.c.b16 %v261, %v259
      %v308 = vpack.c.b16 %v262, %v260
      %v309 = vpack.c.b16 %v265, %v263
      %v310 = vpack.c.b16 %v266, %v264
      %v311 = vpack.c.b16 %v269, %v267
      %v312 = vpack.c.b16 %v270, %v268
      %v313 = vpack.c.b16 %v273, %v271
      %v314 = vpack.c.b16 %v274, %v272
      %v315 = vpack.c.b16 %v277, %v275
      %v316 = vpack.c.b16 %v278, %v276
      %v317 = vpack.c.b16 %v281, %v279
      %v318 = vpack.c.b16 %v282, %v280
      %v319 = vpack.c.b16 %v285, %v283
      %v320 = vpack.c.b16 %v286, %v284
      %v321 = vpack.c.b16 %v289, %v287
      %v322 = vpack.c.b16 %v290, %v288
      %v357 = vunpack.c.l.b16 %v177
      %v358 = vunpack.c.l.b16 %v178
      %v359 = vunpack.c.l.b16 %v179
      %v360 = vunpack.c.l.b16 %v180
      %v361 = vunpack.c.l.b16 %v181
      %v362 = vunpack.c.l.b16 %v182
      %v363 = vunpack.c.l.b16 %v183
      %v364 = vunpack.c.l.b16 %v184
      %v365 = vunpack.c.l.b16 %v185
      %v366 = vunpack.c.l.b16 %v186
      %v367 = vunpack.c.l.b16 %v187
      %v368 = vunpack.c.l.b16 %v188
      %v369 = vunpack.c.l.b16 %v189
      %v370 = vunpack.c.l.b16 %v190
      %v371 = vunpack.c.l.b16 %v191
      %v372 = vunpack.c.l.b16 %v192
      %v373 = vunpack.c.l.b16 %v193
      %v374 = vunpack.c.l.b16 %v194
      %v375 = vpack.c.b16 %v358, %v357
      %v376 = vpack.c.b16 %v360, %v359
      %v377 = vpack.c.b16 %v362, %v361
      %v378 = vpack.c.b16 %v364, %v363
      %v379 = vpack.c.b16 %v366, %v365
      %v380 = vpack.c.b16 %v368, %v367
      %v381 = vpack.c.b16 %v370, %v369
      %v382 = vpack.c.b16 %v372, %v371
      %v383 = vpack.c.b16 %v374, %v373
      %vm393 = vcmask 130048
      %v395 = vsel %vm393, %v292, 0
      %v398 = vsel %vm393, %v294, 0
      %v401 = vsel %vm393, %v296, 0
      %v404 = vsel %vm393, %v298, 0
      %v407 = vsel %vm393, %v300, 0
      %v410 = vsel %vm393, %v302, 0
      %v413 = vsel %vm393, %v304, 0
      %v416 = vsel %vm393, %v306, 0
      %v419 = vsel %vm393, %v308, 0
      %v422 = vsel %vm393, %v310, 0
      %v425 = vsel %vm393, %v312, 0
      %v428 = vsel %vm393, %v314, 0
      %v431 = vsel %vm393, %v316, 0
      %v434 = vsel %vm393, %v318, 0
      %v437 = vsel %vm393, %v320, 0
      %v440 = vsel %vm393, %v322, 0
      %442 = vmatprep.subr.bf16.mxu0 0
      %443 = vmatpush1.bf16.msra.mxu0 %v375
      %444 = vmatprep.subr.bf16.mxu0 0
      %445 = vmatpush1.bf16.msra.mxu0 %v376
      %446 = vmatprep.subr.bf16.mxu0 0
      %447 = vmatpush1.bf16.msra.mxu0 %v377
      %448 = vmatprep.subr.bf16.mxu0 0
      %449 = vmatpush1.bf16.msra.mxu0 %v378
      %450 = vmatprep.subr.bf16.mxu0 0
      %451 = vmatpush1.bf16.msra.mxu0 %v379
      %452 = vmatprep.subr.bf16.mxu0 0
      %453 = vmatpush1.bf16.msra.mxu0 %v380
      %454 = vmatprep.subr.bf16.mxu0 0
      %455 = vmatpush1.bf16.msra.mxu0 %v381
      %456 = vmatprep.subr.bf16.mxu0 0
      %457 = vmatpush1.bf16.msra.mxu0 %v382
      %458 = vmatprep.subr.bf16.mxu0 0
      %459 = vmatpush1.bf16.msra.mxu0 %v383
      %460 = vmatprep.subr.bf16.mxu0 0
      %461 = vmatpush1.bf16.msra.mxu0 0
      %462 = vmatprep.subr.bf16.mxu0 0
      %463 = vmatpush1.bf16.msra.mxu0 0
      %464 = vmatprep.subr.bf16.mxu0 0
      %465 = vmatpush1.bf16.msra.mxu0 0
      %466 = vmatprep.subr.bf16.mxu0 0
      %467 = vmatpush1.bf16.msra.mxu0 0
      %468 = vmatprep.subr.bf16.mxu0 0
      %469 = vmatpush1.bf16.msra.mxu0 0
      %470 = vmatprep.subr.bf16.mxu0 0
      %471 = vmatpush1.bf16.msra.mxu0 0
      %472 = vmatprep.subr.bf16.mxu0 0
      %473 = vmatpush1.bf16.msra.mxu0 0
      %474 = vmatprep.mubr.bf16.mxu0 %v395
      %475 = vmatmul.mubr.bf16.gmra.mrb[0].mxu0 %v291
      %v476 = vpop.f32.mrb[0].mxu0
      %v477 = vadd.f32 0.0, %v476
      %v478 = vpop.f32.mrb[0].mxu0
      %v479 = vpop.f32.mrb[0].mxu0
      %v480 = vadd.f32 0.0, %v479
      %v481 = vpop.f32.mrb[0].mxu0
      %482 = vmatprep.mubr.bf16.mxu0 %v398
      %483 = vmatmul.mubr.bf16.gmra.mrb[0].mxu0 %v293
      %v484 = vpop.f32.mrb[0].mxu0
      %v485 = vadd.f32 0.0, %v484
      %v486 = vpop.f32.mrb[0].mxu0
      %v487 = vpop.f32.mrb[0].mxu0
      %v488 = vadd.f32 0.0, %v487
      %v489 = vpop.f32.mrb[0].mxu0
      %490 = vmatprep.mubr.bf16.mxu0 %v401
      %491 = vmatmul.mubr.bf16.gmra.mrb[0].mxu0 %v295
      %v492 = vpop.f32.mrb[0].mxu0
      %v493 = vadd.f32 0.0, %v492
      %v494 = vpop.f32.mrb[0].mxu0
      %v495 = vpop.f32.mrb[0].mxu0
      %v496 = vadd.f32 0.0, %v495
      %v497 = vpop.f32.mrb[0].mxu0
      %498 = vmatprep.mubr.bf16.mxu0 %v404
      %499 = vmatmul.mubr.bf16.gmra.mrb[0].mxu0 %v297
      %v500 = vpop.f32.mrb[0].mxu0
      %v501 = vadd.f32 0.0, %v500
      %v502 = vpop.f32.mrb[0].mxu0
      %v503 = vpop.f32.mrb[0].mxu0
      %v504 = vadd.f32 0.0, %v503
      %v505 = vpop.f32.mrb[0].mxu0
      %506 = vmatprep.mubr.bf16.mxu0 %v407
      %507 = vmatmul.mubr.bf16.gmra.mrb[0].mxu0 %v299
      %v508 = vpop.f32.mrb[0].mxu0
      %v509 = vadd.f32 0.0, %v508
      %v510 = vpop.f32.mrb[0].mxu0
      %v511 = vpop.f32.mrb[0].mxu0
      %v512 = vadd.f32 0.0, %v511
      %v513 = vpop.f32.mrb[0].mxu0
      %514 = vmatprep.mubr.bf16.mxu0 %v410
      %515 = vmatmul.mubr.bf16.gmra.mrb[0].mxu0 %v301
      %v516 = vpop.f32.mrb[0].mxu0
      %v517 = vadd.f32 0.0, %v516
      %v518 = vpop.f32.mrb[0].mxu0
      %v519 = vpop.f32.mrb[0].mxu0
      %v520 = vadd.f32 0.0, %v519
      %v521 = vpop.f32.mrb[0].mxu0
      %522 = vmatprep.mubr.bf16.mxu0 %v413
      %523 = vmatmul.mubr.bf16.gmra.mrb[0].mxu0 %v303
      %v524 = vpop.f32.mrb[0].mxu0
      %v525 = vadd.f32 0.0, %v524
      %v526 = vpop.f32.mrb[0].mxu0
      %v527 = vpop.f32.mrb[0].mxu0
      %v528 = vadd.f32 0.0, %v527
      %v529 = vpop.f32.mrb[0].mxu0
      %530 = vmatprep.mubr.bf16.mxu0 %v416
      %531 = vmatmul.mubr.bf16.gmra.mrb[0].mxu0 %v305
      %v532 = vpop.f32.mrb[0].mxu0
      %v533 = vadd.f32 0.0, %v532
      %v534 = vpop.f32.mrb[0].mxu0
      %v535 = vpop.f32.mrb[0].mxu0
      %v536 = vadd.f32 0.0, %v535
      %v537 = vpop.f32.mrb[0].mxu0
      %538 = vmatprep.mubr.bf16.mxu0 %v419
      %539 = vmatmul.mubr.bf16.gmra.mrb[0].mxu0 %v307
      %v540 = vpop.f32.mrb[0].mxu0
      %v541 = vadd.f32 0.0, %v540
      %v542 = vpop.f32.mrb[0].mxu0
      %v543 = vpop.f32.mrb[0].mxu0
      %v544 = vadd.f32 0.0, %v543
      %v545 = vpop.f32.mrb[0].mxu0
      %546 = vmatprep.mubr.bf16.mxu0 %v422
      %547 = vmatmul.mubr.bf16.gmra.mrb[0].mxu0 %v309
      %v548 = vpop.f32.mrb[0].mxu0
      %v549 = vadd.f32 0.0, %v548
      %v550 = vpop.f32.mrb[0].mxu0
      %v551 = vpop.f32.mrb[0].mxu0
      %v552 = vadd.f32 0.0, %v551
      %v553 = vpop.f32.mrb[0].mxu0
      %554 = vmatprep.mubr.bf16.mxu0 %v425
      %555 = vmatmul.mubr.bf16.gmra.mrb[0].mxu0 %v311
      %v556 = vpop.f32.mrb[0].mxu0
      %v557 = vadd.f32 0.0, %v556
      %v558 = vpop.f32.mrb[0].mxu0
      %v559 = vpop.f32.mrb[0].mxu0
      %v560 = vadd.f32 0.0, %v559
      %v561 = vpop.f32.mrb[0].mxu0
      %562 = vmatprep.mubr.bf16.mxu0 %v428
      %563 = vmatmul.mubr.bf16.gmra.mrb[0].mxu0 %v313
      %v564 = vpop.f32.mrb[0].mxu0
      %v565 = vadd.f32 0.0, %v564
      %v566 = vpop.f32.mrb[0].mxu0
      %v567 = vpop.f32.mrb[0].mxu0
      %v568 = vadd.f32 0.0, %v567
      %v569 = vpop.f32.mrb[0].mxu0
      %570 = vmatprep.mubr.bf16.mxu0 %v431
      %571 = vmatmul.mubr.bf16.gmra.mrb[0].mxu0 %v315
      %v572 = vpop.f32.mrb[0].mxu0
      %v573 = vadd.f32 0.0, %v572
      %v574 = vpop.f32.mrb[0].mxu0
      %v575 = vpop.f32.mrb[0].mxu0
      %v576 = vadd.f32 0.0, %v575
      %v577 = vpop.f32.mrb[0].mxu0
      %578 = vmatprep.mubr.bf16.mxu0 %v434
      %579 = vmatmul.mubr.bf16.gmra.mrb[0].mxu0 %v317
      %v580 = vpop.f32.mrb[0].mxu0
      %v581 = vadd.f32 0.0, %v580
      %v582 = vpop.f32.mrb[0].mxu0
      %v583 = vpop.f32.mrb[0].mxu0
      %v584 = vadd.f32 0.0, %v583
      %v585 = vpop.f32.mrb[0].mxu0
      %586 = vmatprep.mubr.bf16.mxu0 %v437
      %587 = vmatmul.mubr.bf16.gmra.mrb[0].mxu0 %v319
      %v588 = vpop.f32.mrb[0].mxu0
      %v589 = vadd.f32 0.0, %v588
      %v590 = vpop.f32.mrb[0].mxu0
      %v591 = vpop.f32.mrb[0].mxu0
      %v592 = vadd.f32 0.0, %v591
      %v593 = vpop.f32.mrb[0].mxu0
      %594 = vmatprep.mubr.bf16.mxu0 %v440
      %595 = vmatmul.mubr.bf16.gmra.mrb[0].mxu0 %v321
      %v596 = vpop.f32.mrb[0].mxu0
      %v597 = vadd.f32 0.0, %v596
      %v598 = vpop.f32.mrb[0].mxu0
      %v599 = vpop.f32.mrb[0].mxu0
      %v600 = vadd.f32 0.0, %v599
      %v601 = vpop.f32.mrb[0].mxu0
      %602 = vdwg.mxu0
      %vm603 = vcmp.ge.f32.partialorder %v477, 0.0
      %vm604 = vcmp.ge.f32.partialorder %v480, 0.0
      %vm605 = vcmp.ge.f32.partialorder %v485, 0.0
      %vm606 = vcmp.ge.f32.partialorder %v488, 0.0
      %vm607 = vcmp.ge.f32.partialorder %v493, 0.0
      %vm608 = vcmp.ge.f32.partialorder %v496, 0.0
      %vm609 = vcmp.ge.f32.partialorder %v501, 0.0
      %vm610 = vcmp.ge.f32.partialorder %v504, 0.0
      %vm611 = vcmp.ge.f32.partialorder %v509, 0.0
      %vm612 = vcmp.ge.f32.partialorder %v512, 0.0
      %vm613 = vcmp.ge.f32.partialorder %v517, 0.0
      %vm614 = vcmp.ge.f32.partialorder %v520, 0.0
      %vm615 = vcmp.ge.f32.partialorder %v525, 0.0
      %vm616 = vcmp.ge.f32.partialorder %v528, 0.0
      %vm617 = vcmp.ge.f32.partialorder %v533, 0.0
      %vm618 = vcmp.ge.f32.partialorder %v536, 0.0
      %vm619 = vcmp.ge.f32.partialorder %v541, 0.0
      %vm620 = vcmp.ge.f32.partialorder %v544, 0.0
      %vm621 = vcmp.ge.f32.partialorder %v549, 0.0
      %vm622 = vcmp.ge.f32.partialorder %v552, 0.0
      %vm623 = vcmp.ge.f32.partialorder %v557, 0.0
      %vm624 = vcmp.ge.f32.partialorder %v560, 0.0
      %vm625 = vcmp.ge.f32.partialorder %v565, 0.0
      %vm626 = vcmp.ge.f32.partialorder %v568, 0.0
      %vm627 = vcmp.ge.f32.partialorder %v573, 0.0
      %vm628 = vcmp.ge.f32.partialorder %v576, 0.0
      %vm629 = vcmp.ge.f32.partialorder %v581, 0.0
      %vm630 = vcmp.ge.f32.partialorder %v584, 0.0
      %vm631 = vcmp.ge.f32.partialorder %v589, 0.0
      %vm632 = vcmp.ge.f32.partialorder %v592, 0.0
      %vm633 = vcmp.ge.f32.partialorder %v597, 0.0
      %vm634 = vcmp.ge.f32.partialorder %v600, 0.0
      %v635 = vmul.f32 %v477, 0.2
      %v636 = vmul.f32 %v480, 0.2
      %v637 = vmul.f32 %v485, 0.2
      %v638 = vmul.f32 %v488, 0.2
      %v639 = vmul.f32 %v493, 0.2
      %v640 = vmul.f32 %v496, 0.2
      %v641 = vmul.f32 %v501, 0.2
      %v642 = vmul.f32 %v504, 0.2
      %v643 = vmul.f32 %v509, 0.2
      %v644 = vmul.f32 %v512, 0.2
      %v645 = vmul.f32 %v517, 0.2
      %v646 = vmul.f32 %v520, 0.2
      %v647 = vmul.f32 %v525, 0.2
      %v648 = vmul.f32 %v528, 0.2
      %v649 = vmul.f32 %v533, 0.2
      %v650 = vmul.f32 %v536, 0.2
      %v651 = vmul.f32 %v541, 0.2
      %v652 = vmul.f32 %v544, 0.2
      %v653 = vmul.f32 %v549, 0.2
      %v654 = vmul.f32 %v552, 0.2
      %v655 = vmul.f32 %v557, 0.2
      %v656 = vmul.f32 %v560, 0.2
      %v657 = vmul.f32 %v565, 0.2
      %v658 = vmul.f32 %v568, 0.2
      %v659 = vmul.f32 %v573, 0.2
      %v660 = vmul.f32 %v576, 0.2
      %v661 = vmul.f32 %v581, 0.2
      %v662 = vmul.f32 %v584, 0.2
      %v663 = vmul.f32 %v589, 0.2
      %v664 = vmul.f32 %v592, 0.2
      %v665 = vmul.f32 %v597, 0.2
      %v666 = vmul.f32 %v600, 0.2
      %v667 = vsel %vm603, %v477, %v635
      %v668 = vsel %vm604, %v480, %v636
      %v669 = vsel %vm605, %v485, %v637
      %v670 = vsel %vm606, %v488, %v638
      %v671 = vsel %vm607, %v493, %v639
      %v672 = vsel %vm608, %v496, %v640
      %v673 = vsel %vm609, %v501, %v641
      %v674 = vsel %vm610, %v504, %v642
      %v675 = vsel %vm611, %v509, %v643
      %v676 = vsel %vm612, %v512, %v644
      %v677 = vsel %vm613, %v517, %v645
      %v678 = vsel %vm614, %v520, %v646
      %v679 = vsel %vm615, %v525, %v647
      %v680 = vsel %vm616, %v528, %v648
      %v681 = vsel %vm617, %v533, %v649
      %v682 = vsel %vm618, %v536, %v650
      %v683 = vsel %vm619, %v541, %v651
      %v684 = vsel %vm620, %v544, %v652
      %v685 = vsel %vm621, %v549, %v653
      %v686 = vsel %vm622, %v552, %v654
      %v687 = vsel %vm623, %v557, %v655
      %v688 = vsel %vm624, %v560, %v656
      %v689 = vsel %vm625, %v565, %v657
      %v690 = vsel %vm626, %v568, %v658
      %v691 = vsel %vm627, %v573, %v659
      %v692 = vsel %vm628, %v576, %v660
      %v693 = vsel %vm629, %v581, %v661
      %v694 = vsel %vm630, %v584, %v662
      %v695 = vsel %vm631, %v589, %v663
      %v696 = vsel %vm632, %v592, %v664
      %v697 = vsel %vm633, %v597, %v665
      %v698 = vsel %vm634, %v600, %v666
      %v699 = vpack.c.bf16 %v668, %v667
      %v700 = vpack.c.bf16 %v670, %v669
      %v701 = vpack.c.bf16 %v672, %v671
      %v702 = vpack.c.bf16 %v674, %v673
      %v703 = vpack.c.bf16 %v676, %v675
      %v704 = vpack.c.bf16 %v678, %v677
      %v705 = vpack.c.bf16 %v680, %v679
      %v706 = vpack.c.bf16 %v682, %v681
      %v707 = vpack.c.bf16 %v684, %v683
      %v708 = vpack.c.bf16 %v686, %v685
      %v709 = vpack.c.bf16 %v688, %v687
      %v710 = vpack.c.bf16 %v690, %v689
      %v711 = vpack.c.bf16 %v692, %v691
      %v712 = vpack.c.bf16 %v694, %v693
      %v713 = vpack.c.bf16 %v696, %v695
      %v714 = vpack.c.bf16 %v698, %v697
      %v731 = vunpack.c.l.b16 %v699
      %v732 = vunpack.c.h.b16 %v699
      %v733 = vunpack.c.l.b16 %v700
      %v734 = vunpack.c.h.b16 %v700
      %v735 = vunpack.c.l.b16 %v701
      %v736 = vunpack.c.h.b16 %v701
      %v737 = vunpack.c.l.b16 %v702
      %v738 = vunpack.c.h.b16 %v702
      %v739 = vunpack.c.l.b16 %v703
      %v740 = vunpack.c.h.b16 %v703
      %v741 = vunpack.c.l.b16 %v704
      %v742 = vunpack.c.h.b16 %v704
      %v743 = vunpack.c.l.b16 %v705
      %v744 = vunpack.c.h.b16 %v705
      %v745 = vunpack.c.l.b16 %v706
      %v746 = vunpack.c.h.b16 %v706
      %v747 = vunpack.c.l.b16 %v707
      %v748 = vunpack.c.h.b16 %v707
      %v749 = vunpack.c.l.b16 %v708
      %v750 = vunpack.c.h.b16 %v708
      %v751 = vunpack.c.l.b16 %v709
      %v752 = vunpack.c.h.b16 %v709
      %v753 = vunpack.c.l.b16 %v710
      %v754 = vunpack.c.h.b16 %v710
      %v755 = vunpack.c.l.b16 %v711
      %v756 = vunpack.c.h.b16 %v711
      %v757 = vunpack.c.l.b16 %v712
      %v758 = vunpack.c.h.b16 %v712
      %v759 = vunpack.c.l.b16 %v713
      %v760 = vunpack.c.h.b16 %v713
      %v761 = vunpack.c.l.b16 %v714
      %v762 = vunpack.c.h.b16 %v714
      %v763 = vpack.c.b16 %v731, %v731
      %v764 = vpack.c.b16 %v732, %v732
      %v765 = vpack.c.b16 %v733, %v733
      %v766 = vpack.c.b16 %v734, %v734
      %v767 = vpack.c.b16 %v735, %v735
      %v768 = vpack.c.b16 %v736, %v736
      %v769 = vpack.c.b16 %v737, %v737
      %v770 = vpack.c.b16 %v738, %v738
      %v771 = vpack.c.b16 %v739, %v739
      %v772 = vpack.c.b16 %v740, %v740
      %v773 = vpack.c.b16 %v741, %v741
      %v774 = vpack.c.b16 %v742, %v742
      %v775 = vpack.c.b16 %v743, %v743
      %v776 = vpack.c.b16 %v744, %v744
      %v777 = vpack.c.b16 %v745, %v745
      %v778 = vpack.c.b16 %v746, %v746
      %v779 = vpack.c.b16 %v747, %v747
      %v780 = vpack.c.b16 %v748, %v748
      %v781 = vpack.c.b16 %v749, %v749
      %v782 = vpack.c.b16 %v750, %v750
      %v783 = vpack.c.b16 %v751, %v751
      %v784 = vpack.c.b16 %v752, %v752
      %v785 = vpack.c.b16 %v753, %v753
      %v786 = vpack.c.b16 %v754, %v754
      %v787 = vpack.c.b16 %v755, %v755
      %v788 = vpack.c.b16 %v756, %v756
      %v789 = vpack.c.b16 %v757, %v757
      %v790 = vpack.c.b16 %v758, %v758
      %v791 = vpack.c.b16 %v759, %v759
      %v792 = vpack.c.b16 %v760, %v760
      %v793 = vpack.c.b16 %v761, %v761
      %v794 = vpack.c.b16 %v762, %v762
      %vm827 = vcmask 519168
      %828 = vst.msk [vmem:[%s143] sm:$0xf] %vm827, %v763
      %829 = vst.msk [vmem:[%s143 + $0x4] sm:$0xf] %vm827, %v764
      %830 = vst.msk [vmem:[%s143 + $0x8] sm:$0xf] %vm827, %v765
      %831 = vst.msk [vmem:[%s143 + $0xc] sm:$0xf] %vm827, %v766
      %832 = vst.msk [vmem:[%s143 + $0x10] sm:$0xf] %vm827, %v767
      %833 = vst.msk [vmem:[%s143 + $0x14] sm:$0xf] %vm827, %v768
      %834 = vst.msk [vmem:[%s143 + $0x18] sm:$0xf] %vm827, %v769
      %835 = vst.msk [vmem:[%s143 + $0x1c] sm:$0xf] %vm827, %v770
      %836 = vst.msk [vmem:[%s143 + $0x20] sm:$0xf] %vm827, %v771
      %837 = vst.msk [vmem:[%s143 + $0x24] sm:$0xf] %vm827, %v772
      %838 = vst.msk [vmem:[%s143 + $0x28] sm:$0xf] %vm827, %v773
      %839 = vst.msk [vmem:[%s143 + $0x2c] sm:$0xf] %vm827, %v774
      %840 = vst.msk [vmem:[%s143 + $0x30] sm:$0xf] %vm827, %v775
      %841 = vst.msk [vmem:[%s143 + $0x34] sm:$0xf] %vm827, %v776
      %842 = vst.msk [vmem:[%s143 + $0x38] sm:$0xf] %vm827, %v777
      %843 = vst.msk [vmem:[%s143 + $0x3c] sm:$0xf] %vm827, %v778
      %844 = vst.msk [vmem:[%s143 + $0x40] sm:$0xf] %vm827, %v779
      %845 = vst.msk [vmem:[%s143 + $0x44] sm:$0xf] %vm827, %v780
      %846 = vst.msk [vmem:[%s143 + $0x48] sm:$0xf] %vm827, %v781
      %847 = vst.msk [vmem:[%s143 + $0x4c] sm:$0xf] %vm827, %v782
      %848 = vst.msk [vmem:[%s143 + $0x50] sm:$0xf] %vm827, %v783
      %849 = vst.msk [vmem:[%s143 + $0x54] sm:$0xf] %vm827, %v784
      %850 = vst.msk [vmem:[%s143 + $0x58] sm:$0xf] %vm827, %v785
      %851 = vst.msk [vmem:[%s143 + $0x5c] sm:$0xf] %vm827, %v786
      %852 = vst.msk [vmem:[%s143 + $0x60] sm:$0xf] %vm827, %v787
      %853 = vst.msk [vmem:[%s143 + $0x64] sm:$0xf] %vm827, %v788
      %854 = vst.msk [vmem:[%s143 + $0x68] sm:$0xf] %vm827, %v789
      %855 = vst.msk [vmem:[%s143 + $0x6c] sm:$0xf] %vm827, %v790
      %856 = vst.msk [vmem:[%s143 + $0x70] sm:$0xf] %vm827, %v791
      %857 = vst.msk [vmem:[%s143 + $0x74] sm:$0xf] %vm827, %v792
      %858 = vst.msk [vmem:[%s143 + $0x78] sm:$0xf] %vm827, %v793
      %859 = vst.msk [vmem:[%s143 + $0x7c] sm:$0xf] %vm827, %v794
      %p860 = scmp.lt.s32.totalorder %s13, 1
      %s861 = scalar_select %p860, %s13, 1
      %s862 = smul.addr %s861, 32
      %s863 = smul.addr %s862, 4
      %s864 = scalar_lea.vmem %s2, %s863
      // Predicated region
      $region29: #{siamese_forward.5} parent=27 // pred_check
        %p865 = pneg %p78
      $region30: #{siamese_forward.5} parent=27 // pred_check_branch
        %867 = sbr.rel (%p865) target = $region32
      $region31: #{siamese_forward.5} parent=27 // pred_region
        _
      $region32: #{siamese_forward.5} parent=27 // pred_fallthru
        _
    $region28: #{siamese_forward.5} parent=5 // pred_fallthru
      _
    %p868 = scmp.le.s32.totalorder 2, %s8
    // Predicated region
    $region33: #{siamese_forward.5} parent=5 // pred_check
      %p869 = pneg %p868
    $region34: #{siamese_forward.5} parent=5 // pred_check_branch
      %871 = sbr.rel (%p869) target = $region36
    $region35: #{siamese_forward.5} parent=5 // pred_region
      %s872 = ssub.s32 %s8, 2
      // Predicated region
      $region37: #{siamese_forward.5} parent=35 // pred_check
        %p873 = pneg %p84
      $region38: #{siamese_forward.5} parent=35 // pred_check_branch
        %875 = sbr.rel (%p873) target = $region40
      $region39: #{siamese_forward.5} parent=35 // pred_region
        %p876 = scmp.lt.s32.totalorder %s14, 1
        %s877 = scalar_select %p876, %s14, 1
        %s878 = smul.addr %s877, 32
        %s879 = smul.addr %s878, 4
        %s880 = scalar_lea.vmem %s2, %s879
      $region40: #{siamese_forward.5} parent=35 // pred_fallthru
        _
    $region36: #{siamese_forward.5} parent=5 // pred_fallthru
      _
  $region6: #{siamese_forward.5} parent=0 // loop_footer
    %s12 = sadd.s32 1, %s8
  $region7: #{siamese_forward.5} parent=0 // loop_footer_branch
    %7 = sbr.rel target = $region3
  $region8: #{siamese_forward.5} parent=0 // loop_exit
    _

// kernel: siamese_forward.6
$region0: #{siamese_forward.6}
  #allocation0 [shape = 'u32[]', space=smem, size = 0x4, offset = 0x4, fixed_abs, tag = 'smem constant byte address 0x4 - core index']
  #allocation1 [shape = 'u32[144,128]{1,0:T(1,128)}', space=vmem, size = 0x12000, scoped, tag = 'internal scratch']
  %s0 = inlined_call_operand.vmem [shape: bf16[2,64,1024], index: 0, kind: input, shape index: {}]
  %s1 = inlined_call_operand.vmem [shape: bf16[1024,128], index: 1, kind: input, shape index: {}]
  %s2 = inlined_call_operand.vmem [shape: bf16[2,64,128], index: 2, kind: output, shape index: {}]
  %s3 = sld [smem:[#allocation0]]
  $region41: #{siamese_forward.6} parent=0
    _
  %s5 = ssub.s32 1, %s3
  %s6 = scalar_select 0, %s5, %s3
  loop: start=0, step=1, limit=4
  $region2: #{siamese_forward.6} parent=0 // loop_pre_header
    _
  $region3: #{siamese_forward.6} parent=0 // loop_header
    %s8 = sphi 0, %s12
    %p9 = scmp.ge.s32.totalorder %s8, 4
    %s18 = sphi 0, %s20
    %s21 = sphi 0, %s18
    %s22 = sphi 0, %s21
    %s38 = sphi 0, %s22
    %s42 = sphi 0, %s42
    %s44 = sphi 0, %s42
    %s45 = sphi 0, %s44
    %s59 = sphi 0, %s45
    %s65 = sphi 0, %s67
    %s68 = sphi 0, %s65
    %s69 = sphi 0, %s68
    %s85 = sphi 0, %s69
  $region4: #{siamese_forward.6} parent=0 // loop_header_branch
    %11 = sbr.rel (%p9) target = $region8
  $region5: #{siamese_forward.6} parent=0 // loop_body
    %s13 = ssub.s32 %s8, 1
    %s14 = ssub.s32 %s8, 2
    %s15 = sadd.s32 %s8, 1
    %s16 = ssub.s32 %s8, %s15
    %p17 = scmp.eq.s32.totalorder %s16, 0
    %s19 = sadd.s32 %s18, 1
    %s20 = scalar_select %p17, %s18, %s19
    %p23 = pneg %p17
    %p24 = scmp.eq.s32.totalorder %s8, 1
    %p25 = por %p23, %p24
    %p26 = scmp.ne.s32.totalorder %s18, %s21
    %p27 = scmp.eq.s32.totalorder %s8, 0
    %p28 = por %p26, %p27
    %p29 = scmp.ne.s32.totalorder %s18, %s21
    %p30 = scmp.eq.s32.totalorder %s13, 1
    %p31 = por %p29, %p30
    %p32 = scmp.ne.s32.totalorder %s21, %s22
    %p33 = scmp.eq.s32.totalorder %s13, 0
    %p34 = por %p32, %p33
    %p35 = scmp.ne.s32.totalorder %s21, %s22
    %p36 = scmp.eq.s32.totalorder %s14, 1
    %p37 = por %p35, %p36
    %p39 = scmp.ne.s32.totalorder %s22, %s38
    %p40 = scmp.eq.s32.totalorder %s14, 0
    %p41 = por %p39, %p40
    %s43 = sadd.s32 %s42, 1
    %p46 = scmp.eq.s32.totalorder %s8, 1
    %p47 = scmp.ne.s32.totalorder %s42, %s44
    %p48 = scmp.eq.s32.totalorder %s8, 0
    %p49 = por %p47, %p48
    %p50 = scmp.ne.s32.totalorder %s42, %s44
    %p51 = scmp.eq.s32.totalorder %s13, 1
    %p52 = por %p50, %p51
    %p53 = scmp.ne.s32.totalorder %s44, %s45
    %p54 = scmp.eq.s32.totalorder %s13, 0
    %p55 = por %p53, %p54
    %p56 = scmp.ne.s32.totalorder %s44, %s45
    %p57 = scmp.eq.s32.totalorder %s14, 1
    %p58 = por %p56, %p57
    %p60 = scmp.ne.s32.totalorder %s45, %s59
    %p61 = scmp.eq.s32.totalorder %s14, 0
    %p62 = por %p60, %p61
    %s63 = ssub.s32 %s8, %s15
    %p64 = scmp.eq.s32.totalorder %s63, 0
    %s66 = sadd.s32 %s65, 1
    %s67 = scalar_select %p64, %s65, %s66
    %p70 = pneg %p64
    %p71 = scmp.eq.s32.totalorder %s8, 1
    %p72 = por %p70, %p71
    %p73 = scmp.ne.s32.totalorder %s65, %s68
    %p74 = scmp.eq.s32.totalorder %s8, 0
    %p75 = por %p73, %p74
    %p76 = scmp.ne.s32.totalorder %s65, %s68
    %p77 = scmp.eq.s32.totalorder %s13, 1
    %p78 = por %p76, %p77
    %p79 = scmp.ne.s32.totalorder %s68, %s69
    %p80 = scmp.eq.s32.totalorder %s13, 0
    %p81 = por %p79, %p80
    %p82 = scmp.ne.s32.totalorder %s68, %s69
    %p83 = scmp.eq.s32.totalorder %s14, 1
    %p84 = por %p82, %p83
    %p86 = scmp.ne.s32.totalorder %s69, %s85
    %p87 = scmp.eq.s32.totalorder %s14, 0
    %p88 = por %p86, %p87
    %p89 = scmp.le.s32.totalorder 1, %s8
    %p90 = scmp.lt.s32.totalorder %s8, 3
    %p91 = pnand %p89, %p90
    %p92 = pneg %p91
    // Predicated region
    $region9: #{siamese_forward.6} parent=5 // pred_check
      _
    $region10: #{siamese_forward.6} parent=5 // pred_check_branch
      %94 = sbr.rel (%p91) target = $region12
    $region11: #{siamese_forward.6} parent=5 // pred_region
      %s95 = ssub.s32 %s8, 1
      // Predicated region
      $region13: #{siamese_forward.6} parent=11 // pred_check
        %p96 = pneg %p55
      $region14: #{siamese_forward.6} parent=11 // pred_check_branch
        %98 = sbr.rel (%p96) target = $region16
      $region15: #{siamese_forward.6} parent=11 // pred_region
        _
      $region16: #{siamese_forward.6} parent=11 // pred_fallthru
        _
    $region12: #{siamese_forward.6} parent=5 // pred_fallthru
      _
    %p99 = scmp.lt.s32.totalorder %s8, 2
    // Predicated region
    $region17: #{siamese_forward.6} parent=5 // pred_check
      %p100 = pneg %p99
    $region18: #{siamese_forward.6} parent=5 // pred_check_branch
      %102 = sbr.rel (%p100) target = $region20
    $region19: #{siamese_forward.6} parent=5 // pred_region
      // Predicated region
      $region21: #{siamese_forward.6} parent=19 // pred_check
        %p103 = pneg %p28
      $region22: #{siamese_forward.6} parent=19 // pred_check_branch
        %105 = sbr.rel (%p103) target = $region24
      $region23: #{siamese_forward.6} parent=19 // pred_region
        %p106 = scmp.lt.s32.totalorder %s8, 1
        %s107 = scalar_select %p106, %s8, 1
        %s108 = smul.addr %s107, 64
        %s109 = smul.addr %s108, 4
        %s110 = scalar_lea.vmem %s0, %s109
      $region24: #{siamese_forward.6} parent=19 // pred_fallthru
        _
    $region20: #{siamese_forward.6} parent=5 // pred_fallthru
      _
    %p111 = scmp.le.s32.totalorder 1, %s8
    %p112 = scmp.lt.s32.totalorder %s8, 3
    %p113 = pnand %p111, %p112
    %p114 = pneg %p113
    // Predicated region
    $region25: #{siamese_forward.6} parent=5 // pred_check
      _
    $region26: #{siamese_forward.6} parent=5 // pred_check_branch
      %116 = sbr.rel (%p113) target = $region28
    $region27: #{siamese_forward.6} parent=5 // pred_region
      %s117 = ssub.s32 %s8, 1
      %p118 = scmp.lt.s32.totalorder %s13, 1
      %s119 = scalar_select %p118, %s13, 1
      %s120 = smul.addr %s119, 64
      %s121 = smul.addr %s120, 4
      %s122 = scalar_lea.vmem %s0, %s121
      %p123 = pneg %p34
      %p124 = pneg %p31
      %p125 = pneg %p55
      %p126 = pneg %p52
      %p127 = pneg %p81
      %p128 = pneg %p78
      %p129 = scmp.lt.s32.totalorder %s13, 1
      %s130 = scalar_select %p129, %s13, 1
      %s131 = smul.addr %s130, 8
      %s132 = smul.addr %s131, 4
      %s133 = scalar_lea.vmem %s2, %s132
      %p134 = scmp.lt.s32.totalorder %s13, 1
      %s135 = scalar_select %p134, %s13, 1
      %s136 = smul.addr %s135, 64
      %s137 = smul.addr %s136, 4
      %s138 = scalar_lea.vmem %s0, %s137
      %p139 = scmp.lt.s32.totalorder %s13, 1
      %s140 = scalar_select %p139, %s13, 1
      %s141 = smul.addr %s140, 8
      %s142 = smul.addr %s141, 4
      %s143 = scalar_lea.vmem %s2, %s142
      %v145 = vld [vmem:[%s138] sm:$0xff]
      %v146 = vld [vmem:[%s138 + $0x8] sm:$0xff]
      %v147 = vld [vmem:[%s138 + $0x10] sm:$0xff]
      %v148 = vld [vmem:[%s138 + $0x18] sm:$0xff]
      %v149 = vld [vmem:[%s138 + $0x20] sm:$0xff]
      %v150 = vld [vmem:[%s138 + $0x28] sm:$0xff]
      %v151 = vld [vmem:[%s138 + $0x30] sm:$0xff]
      %v152 = vld [vmem:[%s138 + $0x38] sm:$0xff]
      %v153 = vld [vmem:[%s138 + $0x40] sm:$0xff]
      %v154 = vld [vmem:[%s138 + $0x48] sm:$0xff]
      %v155 = vld [vmem:[%s138 + $0x50] sm:$0xff]
      %v156 = vld [vmem:[%s138 + $0x58] sm:$0xff]
      %v157 = vld [vmem:[%s138 + $0x60] sm:$0xff]
      %v158 = vld [vmem:[%s138 + $0x68] sm:$0xff]
      %v159 = vld [vmem:[%s138 + $0x70] sm:$0xff]
      %v160 = vld [vmem:[%s138 + $0x78] sm:$0xff]
      %v161 = vld [vmem:[%s138 + $0x80] sm:$0xff]
      %v162 = vld [vmem:[%s138 + $0x88] sm:$0xff]
      %v163 = vld [vmem:[%s138 + $0x90] sm:$0xff]
      %v164 = vld [vmem:[%s138 + $0x98] sm:$0xff]
      %v165 = vld [vmem:[%s138 + $0xa0] sm:$0xff]
      %v166 = vld [vmem:[%s138 + $0xa8] sm:$0xff]
      %v167 = vld [vmem:[%s138 + $0xb0] sm:$0xff]
      %v168 = vld [vmem:[%s138 + $0xb8] sm:$0xff]
      %v169 = vld [vmem:[%s138 + $0xc0] sm:$0xff]
      %v170 = vld [vmem:[%s138 + $0xc8] sm:$0xff]
      %v171 = vld [vmem:[%s138 + $0xd0] sm:$0xff]
      %v172 = vld [vmem:[%s138 + $0xd8] sm:$0xff]
      %v173 = vld [vmem:[%s138 + $0xe0] sm:$0xff]
      %v174 = vld [vmem:[%s138 + $0xe8] sm:$0xff]
      %v175 = vld [vmem:[%s138 + $0xf0] sm:$0xff]
      %v176 = vld [vmem:[%s138 + $0xf8] sm:$0xff]
      %v177 = vld [vmem:[%s1] sm:$0xf]
      %v178 = vld [vmem:[%s1 + $0x4] sm:$0xf]
      %v179 = vld [vmem:[%s1 + $0x8] sm:$0xf]
      %v180 = vld [vmem:[%s1 + $0xc] sm:$0xf]
      %v181 = vld [vmem:[%s1 + $0x10] sm:$0xf]
      %v182 = vld [vmem:[%s1 + $0x14] sm:$0xf]
      %v183 = vld [vmem:[%s1 + $0x18] sm:$0xf]
      %v184 = vld [vmem:[%s1 + $0x1c] sm:$0xf]
      %v185 = vld [vmem:[%s1 + $0x20] sm:$0xf]
      %v186 = vld [vmem:[%s1 + $0x24] sm:$0xf]
      %v187 = vld [vmem:[%s1 + $0x28] sm:$0xf]
      %v188 = vld [vmem:[%s1 + $0x2c] sm:$0xf]
      %v189 = vld [vmem:[%s1 + $0x30] sm:$0xf]
      %v190 = vld [vmem:[%s1 + $0x34] sm:$0xf]
      %v191 = vld [vmem:[%s1 + $0x38] sm:$0xf]
      %v192 = vld [vmem:[%s1 + $0x3c] sm:$0xf]
      %v193 = vld [vmem:[%s1 + $0x40] sm:$0xf]
      %v194 = vld [vmem:[%s1 + $0x44] sm:$0xf]
      %v195 = vld [vmem:[%s1 + $0x48] sm:$0xf]
      %v196 = vld [vmem:[%s1 + $0x4c] sm:$0xf]
      %v197 = vld [vmem:[%s1 + $0x50] sm:$0xf]
      %v198 = vld [vmem:[%s1 + $0x54] sm:$0xf]
      %v199 = vld [vmem:[%s1 + $0x58] sm:$0xf]
      %v200 = vld [vmem:[%s1 + $0x5c] sm:$0xf]
      %v201 = vld [vmem:[%s1 + $0x60] sm:$0xf]
      %v202 = vld [vmem:[%s1 + $0x64] sm:$0xf]
      %v203 = vld [vmem:[%s1 + $0x68] sm:$0xf]
      %v204 = vld [vmem:[%s1 + $0x6c] sm:$0xf]
      %v205 = vld [vmem:[%s1 + $0x70] sm:$0xf]
      %v206 = vld [vmem:[%s1 + $0x74] sm:$0xf]
      %v207 = vld [vmem:[%s1 + $0x78] sm:$0xf]
      %v208 = vld [vmem:[%s1 + $0x7c] sm:$0xf]
      %v209 = vld [vmem:[%s1 + $0x80] sm:$0xf]
      %v210 = vld [vmem:[%s1 + $0x84] sm:$0xf]
      %v211 = vld [vmem:[%s1 + $0x88] sm:$0xf]
      %v212 = vld [vmem:[%s1 + $0x8c] sm:$0xf]
      %v213 = vld [vmem:[%s1 + $0x90] sm:$0xf]
      %v214 = vld [vmem:[%s1 + $0x94] sm:$0xf]
      %v215 = vld [vmem:[%s1 + $0x98] sm:$0xf]
      %v216 = vld [vmem:[%s1 + $0x9c] sm:$0xf]
      %v217 = vld [vmem:[%s1 + $0xa0] sm:$0xf]
      %v218 = vld [vmem:[%s1 + $0xa4] sm:$0xf]
      %v219 = vld [vmem:[%s1 + $0xa8] sm:$0xf]
      %v220 = vld [vmem:[%s1 + $0xac] sm:$0xf]
      %v221 = vld [vmem:[%s1 + $0xb0] sm:$0xf]
      %v222 = vld [vmem:[%s1 + $0xb4] sm:$0xf]
      %v223 = vld [vmem:[%s1 + $0xb8] sm:$0xf]
      %v224 = vld [vmem:[%s1 + $0xbc] sm:$0xf]
      %v225 = vld [vmem:[%s1 + $0xc0] sm:$0xf]
      %v226 = vld [vmem:[%s1 + $0xc4] sm:$0xf]
      %v227 = vld [vmem:[%s1 + $0xc8] sm:$0xf]
      %v228 = vld [vmem:[%s1 + $0xcc] sm:$0xf]
      %v229 = vld [vmem:[%s1 + $0xd0] sm:$0xf]
      %v230 = vld [vmem:[%s1 + $0xd4] sm:$0xf]
      %v231 = vld [vmem:[%s1 + $0xd8] sm:$0xf]
      %v232 = vld [vmem:[%s1 + $0xdc] sm:$0xf]
      %v233 = vld [vmem:[%s1 + $0xe0] sm:$0xf]
      %v234 = vld [vmem:[%s1 + $0xe4] sm:$0xf]
      %v235 = vld [vmem:[%s1 + $0xe8] sm:$0xf]
      %v236 = vld [vmem:[%s1 + $0xec] sm:$0xf]
      %v237 = vld [vmem:[%s1 + $0xf0] sm:$0xf]
      %v238 = vld [vmem:[%s1 + $0xf4] sm:$0xf]
      %v239 = vld [vmem:[%s1 + $0xf8] sm:$0xf]
      %v240 = vld [vmem:[%s1 + $0xfc] sm:$0xf]
      %v241 = vld [vmem:[%s1 + $0x100] sm:$0xf]
      %v242 = vld [vmem:[%s1 + $0x104] sm:$0xf]
      %v243 = vld [vmem:[%s1 + $0x108] sm:$0xf]
      %v244 = vld [vmem:[%s1 + $0x10c] sm:$0xf]
      %v245 = vld [vmem:[%s1 + $0x110] sm:$0xf]
      %v246 = vld [vmem:[%s1 + $0x114] sm:$0xf]
      %v247 = vld [vmem:[%s1 + $0x118] sm:$0xf]
      %v248 = vld [vmem:[%s1 + $0x11c] sm:$0xf]
      %v249 = vld [vmem:[%s1 + $0x120] sm:$0xf]
      %v250 = vld [vmem:[%s1 + $0x124] sm:$0xf]
      %v251 = vld [vmem:[%s1 + $0x128] sm:$0xf]
      %v252 = vld [vmem:[%s1 + $0x12c] sm:$0xf]
      %v253 = vld [vmem:[%s1 + $0x130] sm:$0xf]
      %v254 = vld [vmem:[%s1 + $0x134] sm:$0xf]
      %v255 = vld [vmem:[%s1 + $0x138] sm:$0xf]
      %v256 = vld [vmem:[%s1 + $0x13c] sm:$0xf]
      %v257 = vld [vmem:[%s1 + $0x140] sm:$0xf]
      %v258 = vld [vmem:[%s1 + $0x144] sm:$0xf]
      %v259 = vld [vmem:[%s1 + $0x148] sm:$0xf]
      %v260 = vld [vmem:[%s1 + $0x14c] sm:$0xf]
      %v261 = vld [vmem:[%s1 + $0x150] sm:$0xf]
      %v262 = vld [vmem:[%s1 + $0x154] sm:$0xf]
      %v263 = vld [vmem:[%s1 + $0x158] sm:$0xf]
      %v264 = vld [vmem:[%s1 + $0x15c] sm:$0xf]
      %v265 = vld [vmem:[%s1 + $0x160] sm:$0xf]
      %v266 = vld [vmem:[%s1 + $0x164] sm:$0xf]
      %v267 = vld [vmem:[%s1 + $0x168] sm:$0xf]
      %v268 = vld [vmem:[%s1 + $0x16c] sm:$0xf]
      %v269 = vld [vmem:[%s1 + $0x170] sm:$0xf]
      %v270 = vld [vmem:[%s1 + $0x174] sm:$0xf]
      %v271 = vld [vmem:[%s1 + $0x178] sm:$0xf]
      %v272 = vld [vmem:[%s1 + $0x17c] sm:$0xf]
      %v273 = vld [vmem:[%s1 + $0x180] sm:$0xf]
      %v274 = vld [vmem:[%s1 + $0x184] sm:$0xf]
      %v275 = vld [vmem:[%s1 + $0x188] sm:$0xf]
      %v276 = vld [vmem:[%s1 + $0x18c] sm:$0xf]
      %v277 = vld [vmem:[%s1 + $0x190] sm:$0xf]
      %v278 = vld [vmem:[%s1 + $0x194] sm:$0xf]
      %v279 = vld [vmem:[%s1 + $0x198] sm:$0xf]
      %v280 = vld [vmem:[%s1 + $0x19c] sm:$0xf]
      %v281 = vld [vmem:[%s1 + $0x1a0] sm:$0xf]
      %v282 = vld [vmem:[%s1 + $0x1a4] sm:$0xf]
      %v283 = vld [vmem:[%s1 + $0x1a8] sm:$0xf]
      %v284 = vld [vmem:[%s1 + $0x1ac] sm:$0xf]
      %v285 = vld [vmem:[%s1 + $0x1b0] sm:$0xf]
      %v286 = vld [vmem:[%s1 + $0x1b4] sm:$0xf]
      %v287 = vld [vmem:[%s1 + $0x1b8] sm:$0xf]
      %v288 = vld [vmem:[%s1 + $0x1bc] sm:$0xf]
      %v289 = vld [vmem:[%s1 + $0x1c0] sm:$0xf]
      %v290 = vld [vmem:[%s1 + $0x1c4] sm:$0xf]
      %v291 = vld [vmem:[%s1 + $0x1c8] sm:$0xf]
      %v292 = vld [vmem:[%s1 + $0x1cc] sm:$0xf]
      %v293 = vld [vmem:[%s1 + $0x1d0] sm:$0xf]
      %v294 = vld [vmem:[%s1 + $0x1d4] sm:$0xf]
      %v295 = vld [vmem:[%s1 + $0x1d8] sm:$0xf]
      %v296 = vld [vmem:[%s1 + $0x1dc] sm:$0xf]
      %v297 = vld [vmem:[%s1 + $0x1e0] sm:$0xf]
      %v298 = vld [vmem:[%s1 + $0x1e4] sm:$0xf]
      %v299 = vld [vmem:[%s1 + $0x1e8] sm:$0xf]
      %v300 = vld [vmem:[%s1 + $0x1ec] sm:$0xf]
      %v301 = vld [vmem:[%s1 + $0x1f0] sm:$0xf]
      %v302 = vld [vmem:[%s1 + $0x1f4] sm:$0xf]
      %v303 = vld [vmem:[%s1 + $0x1f8] sm:$0xf]
      %v304 = vld [vmem:[%s1 + $0x1fc] sm:$0xf]
      %v337 = vunpack.c.l.b16 %v145
      %v338 = vunpack.c.h.b16 %v145
      %v339 = vunpack.c.l.b16 %v146
      %v340 = vunpack.c.h.b16 %v146
      %v341 = vunpack.c.l.b16 %v147
      %v342 = vunpack.c.h.b16 %v147
      %v343 = vunpack.c.l.b16 %v148
      %v344 = vunpack.c.h.b16 %v148
      %v345 = vunpack.c.l.b16 %v149
      %v346 = vunpack.c.h.b16 %v149
      %v347 = vunpack.c.l.b16 %v150
      %v348 = vunpack.c.h.b16 %v150
      %v349 = vunpack.c.l.b16 %v151
      %v350 = vunpack.c.h.b16 %v151
      %v351 = vunpack.c.l.b16 %v152
      %v352 = vunpack.c.h.b16 %v152
      %v353 = vunpack.c.l.b16 %v153
      %v354 = vunpack.c.h.b16 %v153
      %v355 = vunpack.c.l.b16 %v154
      %v356 = vunpack.c.h.b16 %v154
      %v357 = vunpack.c.l.b16 %v155
      %v358 = vunpack.c.h.b16 %v155
      %v359 = vunpack.c.l.b16 %v156
      %v360 = vunpack.c.h.b16 %v156
      %v361 = vunpack.c.l.b16 %v157
      %v362 = vunpack.c.h.b16 %v157
      %v363 = vunpack.c.l.b16 %v158
      %v364 = vunpack.c.h.b16 %v158
      %v365 = vunpack.c.l.b16 %v159
      %v366 = vunpack.c.h.b16 %v159
      %v367 = vunpack.c.l.b16 %v160
      %v368 = vunpack.c.h.b16 %v160
      %v369 = vunpack.c.l.b16 %v161
      %v370 = vunpack.c.h.b16 %v161
      %v371 = vunpack.c.l.b16 %v162
      %v372 = vunpack.c.h.b16 %v162
      %v373 = vunpack.c.l.b16 %v163
      %v374 = vunpack.c.h.b16 %v163
      %v375 = vunpack.c.l.b16 %v164
      %v376 = vunpack.c.h.b16 %v164
      %v377 = vunpack.c.l.b16 %v165
      %v378 = vunpack.c.h.b16 %v165
      %v379 = vunpack.c.l.b16 %v166
      %v380 = vunpack.c.h.b16 %v166
      %v381 = vunpack.c.l.b16 %v167
      %v382 = vunpack.c.h.b16 %v167
      %v383 = vunpack.c.l.b16 %v168
      %v384 = vunpack.c.h.b16 %v168
      %v385 = vunpack.c.l.b16 %v169
      %v386 = vunpack.c.h.b16 %v169
      %v387 = vunpack.c.l.b16 %v170
      %v388 = vunpack.c.h.b16 %v170
      %v389 = vunpack.c.l.b16 %v171
      %v390 = vunpack.c.h.b16 %v171
      %v391 = vunpack.c.l.b16 %v172
      %v392 = vunpack.c.h.b16 %v172
      %v393 = vunpack.c.l.b16 %v173
      %v394 = vunpack.c.h.b16 %v173
      %v395 = vunpack.c.l.b16 %v174
      %v396 = vunpack.c.h.b16 %v174
      %v397 = vunpack.c.l.b16 %v175
      %v398 = vunpack.c.h.b16 %v175
      %v399 = vunpack.c.l.b16 %v176
      %v400 = vunpack.c.h.b16 %v176
      %v401 = vpack.c.b16 %v345, %v337
      %v402 = vpack.c.b16 %v346, %v338
      %v403 = vpack.c.b16 %v347, %v339
      %v404 = vpack.c.b16 %v348, %v340
      %v405 = vpack.c.b16 %v349, %v341
      %v406 = vpack.c.b16 %v350, %v342
      %v407 = vpack.c.b16 %v351, %v343
      %v408 = vpack.c.b16 %v352, %v344
      %v409 = vpack.c.b16 %v361, %v353
      %v410 = vpack.c.b16 %v362, %v354
      %v411 = vpack.c.b16 %v363, %v355
      %v412 = vpack.c.b16 %v364, %v356
      %v413 = vpack.c.b16 %v365, %v357
      %v414 = vpack.c.b16 %v366, %v358
      %v415 = vpack.c.b16 %v367, %v359
      %v416 = vpack.c.b16 %v368, %v360
      %v417 = vpack.c.b16 %v377, %v369
      %v418 = vpack.c.b16 %v378, %v370
      %v419 = vpack.c.b16 %v379, %v371
      %v420 = vpack.c.b16 %v380, %v372
      %v421 = vpack.c.b16 %v381, %v373
      %v422 = vpack.c.b16 %v382, %v374
      %v423 = vpack.c.b16 %v383, %v375
      %v424 = vpack.c.b16 %v384, %v376
      %v425 = vpack.c.b16 %v393, %v385
      %v426 = vpack.c.b16 %v394, %v386
      %v427 = vpack.c.b16 %v395, %v387
      %v428 = vpack.c.b16 %v396, %v388
      %v429 = vpack.c.b16 %v397, %v389
      %v430 = vpack.c.b16 %v398, %v390
      %v431 = vpack.c.b16 %v399, %v391
      %v432 = vpack.c.b16 %v400, %v392
      %v593 = vunpack.c.l.b16 %v177
      %v594 = vunpack.c.l.b16 %v178
      %v595 = vunpack.c.l.b16 %v179
      %v596 = vunpack.c.l.b16 %v180
      %v597 = vunpack.c.l.b16 %v181
      %v598 = vunpack.c.l.b16 %v182
      %v599 = vunpack.c.l.b16 %v183
      %v600 = vunpack.c.l.b16 %v184
      %v601 = vunpack.c.l.b16 %v185
      %v602 = vunpack.c.l.b16 %v186
      %v603 = vunpack.c.l.b16 %v187
      %v604 = vunpack.c.l.b16 %v188
      %v605 = vunpack.c.l.b16 %v189
      %v606 = vunpack.c.l.b16 %v190
      %v607 = vunpack.c.l.b16 %v191
      %v608 = vunpack.c.l.b16 %v192
      %v609 = vunpack.c.l.b16 %v193
      %v610 = vunpack.c.l.b16 %v194
      %v611 = vunpack.c.l.b16 %v195
      %v612 = vunpack.c.l.b16 %v196
      %v613 = vunpack.c.l.b16 %v197
      %v614 = vunpack.c.l.b16 %v198
      %v615 = vunpack.c.l.b16 %v199
      %v616 = vunpack.c.l.b16 %v200
      %v617 = vunpack.c.l.b16 %v201
      %v618 = vunpack.c.l.b16 %v202
      %v619 = vunpack.c.l.b16 %v203
      %v620 = vunpack.c.l.b16 %v204
      %v621 = vunpack.c.l.b16 %v205
      %v622 = vunpack.c.l.b16 %v206
      %v623 = vunpack.c.l.b16 %v207
      %v624 = vunpack.c.l.b16 %v208
      %v625 = vunpack.c.l.b16 %v209
      %v626 = vunpack.c.l.b16 %v210
      %v627 = vunpack.c.l.b16 %v211
      %v628 = vunpack.c.l.b16 %v212
      %v629 = vunpack.c.l.b16 %v213
      %v630 = vunpack.c.l.b16 %v214
      %v631 = vunpack.c.l.b16 %v215
      %v632 = vunpack.c.l.b16 %v216
      %v633 = vunpack.c.l.b16 %v217
      %v634 = vunpack.c.l.b16 %v218
      %v635 = vunpack.c.l.b16 %v219
      %v636 = vunpack.c.l.b16 %v220
      %v637 = vunpack.c.l.b16 %v221
      %v638 = vunpack.c.l.b16 %v222
      %v639 = vunpack.c.l.b16 %v223
      %v640 = vunpack.c.l.b16 %v224
      %v641 = vunpack.c.l.b16 %v225
      %v642 = vunpack.c.l.b16 %v226
      %v643 = vunpack.c.l.b16 %v227
      %v644 = vunpack.c.l.b16 %v228
      %v645 = vunpack.c.l.b16 %v229
      %v646 = vunpack.c.l.b16 %v230
      %v647 = vunpack.c.l.b16 %v231
      %v648 = vunpack.c.l.b16 %v232
      %v649 = vunpack.c.l.b16 %v233
      %v650 = vunpack.c.l.b16 %v234
      %v651 = vunpack.c.l.b16 %v235
      %v652 = vunpack.c.l.b16 %v236
      %v653 = vunpack.c.l.b16 %v237
      %v654 = vunpack.c.l.b16 %v238
      %v655 = vunpack.c.l.b16 %v239
      %v656 = vunpack.c.l.b16 %v240
      %v657 = vunpack.c.l.b16 %v241
      %v658 = vunpack.c.l.b16 %v242
      %v659 = vunpack.c.l.b16 %v243
      %v660 = vunpack.c.l.b16 %v244
      %v661 = vunpack.c.l.b16 %v245
      %v662 = vunpack.c.l.b16 %v246
      %v663 = vunpack.c.l.b16 %v247
      %v664 = vunpack.c.l.b16 %v248
      %v665 = vunpack.c.l.b16 %v249
      %v666 = vunpack.c.l.b16 %v250
      %v667 = vunpack.c.l.b16 %v251
      %v668 = vunpack.c.l.b16 %v252
      %v669 = vunpack.c.l.b16 %v253
      %v670 = vunpack.c.l.b16 %v254
      %v671 = vunpack.c.l.b16 %v255
      %v672 = vunpack.c.l.b16 %v256
      %v673 = vunpack.c.l.b16 %v257
      %v674 = vunpack.c.l.b16 %v258
      %v675 = vunpack.c.l.b16 %v259
      %v676 = vunpack.c.l.b16 %v260
      %v677 = vunpack.c.l.b16 %v261
      %v678 = vunpack.c.l.b16 %v262
      %v679 = vunpack.c.l.b16 %v263
      %v680 = vunpack.c.l.b16 %v264
      %v681 = vunpack.c.l.b16 %v265
      %v682 = vunpack.c.l.b16 %v266
      %v683 = vunpack.c.l.b16 %v267
      %v684 = vunpack.c.l.b16 %v268
      %v685 = vunpack.c.l.b16 %v269
      %v686 = vunpack.c.l.b16 %v270
      %v687 = vunpack.c.l.b16 %v271
      %v688 = vunpack.c.l.b16 %v272
      %v689 = vunpack.c.l.b16 %v273
      %v690 = vunpack.c.l.b16 %v274
      %v691 = vunpack.c.l.b16 %v275
      %v692 = vunpack.c.l.b16 %v276
      %v693 = vunpack.c.l.b16 %v277
      %v694 = vunpack.c.l.b16 %v278
      %v695 = vunpack.c.l.b16 %v279
      %v696 = vunpack.c.l.b16 %v280
      %v697 = vunpack.c.l.b16 %v281
      %v698 = vunpack.c.l.b16 %v282
      %v699 = vunpack.c.l.b16 %v283
      %v700 = vunpack.c.l.b16 %v284
      %v701 = vunpack.c.l.b16 %v285
      %v702 = vunpack.c.l.b16 %v286
      %v703 = vunpack.c.l.b16 %v287
      %v704 = vunpack.c.l.b16 %v288
      %v705 = vunpack.c.l.b16 %v289
      %v706 = vunpack.c.l.b16 %v290
      %v707 = vunpack.c.l.b16 %v291
      %v708 = vunpack.c.l.b16 %v292
      %v709 = vunpack.c.l.b16 %v293
      %v710 = vunpack.c.l.b16 %v294
      %v711 = vunpack.c.l.b16 %v295
      %v712 = vunpack.c.l.b16 %v296
      %v713 = vunpack.c.l.b16 %v297
      %v714 = vunpack.c.l.b16 %v298
      %v715 = vunpack.c.l.b16 %v299
      %v716 = vunpack.c.l.b16 %v300
      %v717 = vunpack.c.l.b16 %v301
      %v718 = vunpack.c.l.b16 %v302
      %v719 = vunpack.c.l.b16 %v303
      %v720 = vunpack.c.l.b16 %v304
      %v721 = vpack.c.b16 %v594, %v593
      %v722 = vpack.c.b16 %v596, %v595
      %v723 = vpack.c.b16 %v598, %v597
      %v724 = vpack.c.b16 %v600, %v599
      %v725 = vpack.c.b16 %v602, %v601
      %v726 = vpack.c.b16 %v604, %v603
      %v727 = vpack.c.b16 %v606, %v605
      %v728 = vpack.c.b16 %v608, %v607
      %v729 = vpack.c.b16 %v610, %v609
      %v730 = vpack.c.b16 %v612, %v611
      %v731 = vpack.c.b16 %v614, %v613
      %v732 = vpack.c.b16 %v616, %v615
      %v733 = vpack.c.b16 %v618, %v617
      %v734 = vpack.c.b16 %v620, %v619
      %v735 = vpack.c.b16 %v622, %v621
      %v736 = vpack.c.b16 %v624, %v623
      %v737 = vpack.c.b16 %v626, %v625
      %v738 = vpack.c.b16 %v628, %v627
      %v739 = vpack.c.b16 %v630, %v629
      %v740 = vpack.c.b16 %v632, %v631
      %v741 = vpack.c.b16 %v634, %v633
      %v742 = vpack.c.b16 %v636, %v635
      %v743 = vpack.c.b16 %v638, %v637
      %v744 = vpack.c.b16 %v640, %v639
      %v745 = vpack.c.b16 %v642, %v641
      %v746 = vpack.c.b16 %v644, %v643
      %v747 = vpack.c.b16 %v646, %v645
      %v748 = vpack.c.b16 %v648, %v647
      %v749 = vpack.c.b16 %v650, %v649
      %v750 = vpack.c.b16 %v652, %v651
      %v751 = vpack.c.b16 %v654, %v653
      %v752 = vpack.c.b16 %v656, %v655
      %v753 = vpack.c.b16 %v658, %v657
      %v754 = vpack.c.b16 %v660, %v659
      %v755 = vpack.c.b16 %v662, %v661
      %v756 = vpack.c.b16 %v664, %v663
      %v757 = vpack.c.b16 %v666, %v665
      %v758 = vpack.c.b16 %v668, %v667
      %v759 = vpack.c.b16 %v670, %v669
      %v760 = vpack.c.b16 %v672, %v671
      %v761 = vpack.c.b16 %v674, %v673
      %v762 = vpack.c.b16 %v676, %v675
      %v763 = vpack.c.b16 %v678, %v677
      %v764 = vpack.c.b16 %v680, %v679
      %v765 = vpack.c.b16 %v682, %v681
      %v766 = vpack.c.b16 %v684, %v683
      %v767 = vpack.c.b16 %v686, %v685
      %v768 = vpack.c.b16 %v688, %v687
      %v769 = vpack.c.b16 %v690, %v689
      %v770 = vpack.c.b16 %v692, %v691
      %v771 = vpack.c.b16 %v694, %v693
      %v772 = vpack.c.b16 %v696, %v695
      %v773 = vpack.c.b16 %v698, %v697
      %v774 = vpack.c.b16 %v700, %v699
      %v775 = vpack.c.b16 %v702, %v701
      %v776 = vpack.c.b16 %v704, %v703
      %v777 = vpack.c.b16 %v706, %v705
      %v778 = vpack.c.b16 %v708, %v707
      %v779 = vpack.c.b16 %v710, %v709
      %v780 = vpack.c.b16 %v712, %v711
      %v781 = vpack.c.b16 %v714, %v713
      %v782 = vpack.c.b16 %v716, %v715
      %v783 = vpack.c.b16 %v718, %v717
      %v784 = vpack.c.b16 %v720, %v719
      %849 = vmatprep.subr.bf16.mxu0 0
      %850 = vmatpush1.bf16.msra.mxu0 %v721
      %851 = vmatprep.subr.bf16.mxu0 0
      %852 = vmatpush1.bf16.msra.mxu0 %v722
      %853 = vmatprep.subr.bf16.mxu0 0
      %854 = vmatpush1.bf16.msra.mxu0 %v723
      %855 = vmatprep.subr.bf16.mxu0 0
      %856 = vmatpush1.bf16.msra.mxu0 %v724
      %857 = vmatprep.subr.bf16.mxu0 0
      %858 = vmatpush1.bf16.msra.mxu0 %v725
      %859 = vmatprep.subr.bf16.mxu0 0
      %860 = vmatpush1.bf16.msra.mxu0 %v726
      %861 = vmatprep.subr.bf16.mxu0 0
      %862 = vmatpush1.bf16.msra.mxu0 %v727
      %863 = vmatprep.subr.bf16.mxu0 0
      %864 = vmatpush1.bf16.msra.mxu0 %v728
      %865 = vmatprep.subr.bf16.mxu0 0
      %866 = vmatpush1.bf16.msra.mxu0 %v729
      %867 = vmatprep.subr.bf16.mxu0 0
      %868 = vmatpush1.bf16.msra.mxu0 %v730
      %869 = vmatprep.subr.bf16.mxu0 0
      %870 = vmatpush1.bf16.msra.mxu0 %v731
      %871 = vmatprep.subr.bf16.mxu0 0
      %872 = vmatpush1.bf16.msra.mxu0 %v732
      %873 = vmatprep.subr.bf16.mxu0 0
      %874 = vmatpush1.bf16.msra.mxu0 %v733
      %875 = vmatprep.subr.bf16.mxu0 0
      %876 = vmatpush1.bf16.msra.mxu0 %v734
      %877 = vmatprep.subr.bf16.mxu0 0
      %878 = vmatpush1.bf16.msra.mxu0 %v735
      %879 = vmatprep.subr.bf16.mxu0 0
      %880 = vmatpush1.bf16.msra.mxu0 %v736
      %881 = vmatprep.mubr.bf16.mxu0 %v402
      %882 = vmatmul.mubr.bf16.gmra.mrb[0].mxu0 %v401
      %v883 = vpop.f32.mrb[0].mxu0
      %v884 = vadd.f32 0.0, %v883
      %v885 = vpop.f32.mrb[0].mxu0
      %v886 = vpop.f32.mrb[0].mxu0
      %v887 = vadd.f32 0.0, %v886
      %v888 = vpop.f32.mrb[0].mxu0
      %889 = vmatprep.mubr.bf16.mxu0 %v410
      %890 = vmatmul.mubr.bf16.gmra.mrb[0].mxu0 %v409
      %v891 = vpop.f32.mrb[0].mxu0
      %v892 = vadd.f32 0.0, %v891
      %v893 = vpop.f32.mrb[0].mxu0
      %v894 = vpop.f32.mrb[0].mxu0
      %v895 = vadd.f32 0.0, %v894
      %v896 = vpop.f32.mrb[0].mxu0
      %897 = vmatprep.mubr.bf16.mxu0 %v418
      %898 = vmatmul.mubr.bf16.gmra.mrb[0].mxu0 %v417
      %v899 = vpop.f32.mrb[0].mxu0
      %v900 = vadd.f32 0.0, %v899
      %v901 = vpop.f32.mrb[0].mxu0
      %v902 = vpop.f32.mrb[0].mxu0
      %v903 = vadd.f32 0.0, %v902
      %v904 = vpop.f32.mrb[0].mxu0
      %905 = vmatprep.mubr.bf16.mxu0 %v426
      %906 = vmatmul.mubr.bf16.gmra.mrb[0].mxu0 %v425
      %v907 = vpop.f32.mrb[0].mxu0
      %v908 = vadd.f32 0.0, %v907
      %v909 = vpop.f32.mrb[0].mxu0
      %v910 = vpop.f32.mrb[0].mxu0
      %v911 = vadd.f32 0.0, %v910
      %v912 = vpop.f32.mrb[0].mxu0
      %913 = vdwg.mxu0
      %914 = vmatprep.subr.bf16.mxu0 0
      %915 = vmatpush1.bf16.msra.mxu0 %v737
      %916 = vmatprep.subr.bf16.mxu0 0
      %917 = vmatpush1.bf16.msra.mxu0 %v738
      %918 = vmatprep.subr.bf16.mxu0 0
      %919 = vmatpush1.bf16.msra.mxu0 %v739
      %920 = vmatprep.subr.bf16.mxu0 0
      %921 = vmatpush1.bf16.msra.mxu0 %v740
      %922 = vmatprep.subr.bf16.mxu0 0
      %923 = vmatpush1.bf16.msra.mxu0 %v741
      %924 = vmatprep.subr.bf16.mxu0 0
      %925 = vmatpush1.bf16.msra.mxu0 %v742
      %926 = vmatprep.subr.bf16.mxu0 0
      %927 = vmatpush1.bf16.msra.mxu0 %v743
      %928 = vmatprep.subr.bf16.mxu0 0
      %929 = vmatpush1.bf16.msra.mxu0 %v744
      %930 = vmatprep.subr.bf16.mxu0 0
      %931 = vmatpush1.bf16.msra.mxu0 %v745
      %932 = vmatprep.subr.bf16.mxu0 0
      %933 = vmatpush1.bf16.msra.mxu0 %v746
      %934 = vmatprep.subr.bf16.mxu0 0
      %935 = vmatpush1.bf16.msra.mxu0 %v747
      %936 = vmatprep.subr.bf16.mxu0 0
      %937 = vmatpush1.bf16.msra.mxu0 %v748
      %938 = vmatprep.subr.bf16.mxu0 0
      %939 = vmatpush1.bf16.msra.mxu0 %v749
      %940 = vmatprep.subr.bf16.mxu0 0
      %941 = vmatpush1.bf16.msra.mxu0 %v750
      %942 = vmatprep.subr.bf16.mxu0 0
      %943 = vmatpush1.bf16.msra.mxu0 %v751
      %944 = vmatprep.subr.bf16.mxu0 0
      %945 = vmatpush1.bf16.msra.mxu0 %v752
      %946 = vmatprep.mubr.bf16.mxu0 %v404
      %947 = vmatmul.mubr.bf16.gmra.mrb[0].mxu0 %v403
      %v948 = vpop.f32.mrb[0].mxu0
      %v949 = vadd.f32 %v884, %v948
      %v950 = vpop.f32.mrb[0].mxu0
      %v951 = vpop.f32.mrb[0].mxu0
      %v952 = vadd.f32 %v887, %v951
      %v953 = vpop.f32.mrb[0].mxu0
      %954 = vmatprep.mubr.bf16.mxu0 %v412
      %955 = vmatmul.mubr.bf16.gmra.mrb[0].mxu0 %v411
      %v956 = vpop.f32.mrb[0].mxu0
      %v957 = vadd.f32 %v892, %v956
      %v958 = vpop.f32.mrb[0].mxu0
      %v959 = vpop.f32.mrb[0].mxu0
      %v960 = vadd.f32 %v895, %v959
      %v961 = vpop.f32.mrb[0].mxu0
      %962 = vmatprep.mubr.bf16.mxu0 %v420
      %963 = vmatmul.mubr.bf16.gmra.mrb[0].mxu0 %v419
      %v964 = vpop.f32.mrb[0].mxu0
      %v965 = vadd.f32 %v900, %v964
      %v966 = vpop.f32.mrb[0].mxu0
      %v967 = vpop.f32.mrb[0].mxu0
      %v968 = vadd.f32 %v903, %v967
      %v969 = vpop.f32.mrb[0].mxu0
      %970 = vmatprep.mubr.bf16.mxu0 %v428
      %971 = vmatmul.mubr.bf16.gmra.mrb[0].mxu0 %v427
      %v972 = vpop.f32.mrb[0].mxu0
      %v973 = vadd.f32 %v908, %v972
      %v974 = vpop.f32.mrb[0].mxu0
      %v975 = vpop.f32.mrb[0].mxu0
      %v976 = vadd.f32 %v911, %v975
      %v977 = vpop.f32.mrb[0].mxu0
      %978 = vdwg.mxu0
      %979 = vmatprep.subr.bf16.mxu0 0
      %980 = vmatpush1.bf16.msra.mxu0 %v753
      %981 = vmatprep.subr.bf16.mxu0 0
      %982 = vmatpush1.bf16.msra.mxu0 %v754
      %983 = vmatprep.subr.bf16.mxu0 0
      %984 = vmatpush1.bf16.msra.mxu0 %v755
      %985 = vmatprep.subr.bf16.mxu0 0
      %986 = vmatpush1.bf16.msra.mxu0 %v756
      %987 = vmatprep.subr.bf16.mxu0 0
      %988 = vmatpush1.bf16.msra.mxu0 %v757
      %989 = vmatprep.subr.bf16.mxu0 0
      %990 = vmatpush1.bf16.msra.mxu0 %v758
      %991 = vmatprep.subr.bf16.mxu0 0
      %992 = vmatpush1.bf16.msra.mxu0 %v759
      %993 = vmatprep.subr.bf16.mxu0 0
      %994 = vmatpush1.bf16.msra.mxu0 %v760
      %995 = vmatprep.subr.bf16.mxu0 0
      %996 = vmatpush1.bf16.msra.mxu0 %v761
      %997 = vmatprep.subr.bf16.mxu0 0
      %998 = vmatpush1.bf16.msra.mxu0 %v762
      %999 = vmatprep.subr.bf16.mxu0 0
      %1000 = vmatpush1.bf16.msra.mxu0 %v763
      %1001 = vmatprep.subr.bf16.mxu0 0
      %1002 = vmatpush1.bf16.msra.mxu0 %v764
      %1003 = vmatprep.subr.bf16.mxu0 0
      %1004 = vmatpush1.bf16.msra.mxu0 %v765
      %1005 = vmatprep.subr.bf16.mxu0 0
      %1006 = vmatpush1.bf16.msra.mxu0 %v766
      %1007 = vmatprep.subr.bf16.mxu0 0
      %1008 = vmatpush1.bf16.msra.mxu0 %v767
      %1009 = vmatprep.subr.bf16.mxu0 0
      %1010 = vmatpush1.bf16.msra.mxu0 %v768
      %1011 = vmatprep.mubr.bf16.mxu0 %v406
      %1012 = vmatmul.mubr.bf16.gmra.mrb[0].mxu0 %v405
      %v1013 = vpop.f32.mrb[0].mxu0
      %v1014 = vadd.f32 %v949, %v1013
      %v1015 = vpop.f32.mrb[0].mxu0
      %v1016 = vpop.f32.mrb[0].mxu0
      %v1017 = vadd.f32 %v952, %v1016
      %v1018 = vpop.f32.mrb[0].mxu0
      %1019 = vmatprep.mubr.bf16.mxu0 %v414
      %1020 = vmatmul.mubr.bf16.gmra.mrb[0].mxu0 %v413
      %v1021 = vpop.f32.mrb[0].mxu0
      %v1022 = vadd.f32 %v957, %v1021
      %v1023 = vpop.f32.mrb[0].mxu0
      %v1024 = vpop.f32.mrb[0].mxu0
      %v1025 = vadd.f32 %v960, %v1024
      %v1026 = vpop.f32.mrb[0].mxu0
      %1027 = vmatprep.mubr.bf16.mxu0 %v422
      %1028 = vmatmul.mubr.bf16.gmra.mrb[0].mxu0 %v421
      %v1029 = vpop.f32.mrb[0].mxu0
      %v1030 = vadd.f32 %v965, %v1029
      %v1031 = vpop.f32.mrb[0].mxu0
      %v1032 = vpop.f32.mrb[0].mxu0
      %v1033 = vadd.f32 %v968, %v1032
      %v1034 = vpop.f32.mrb[0].mxu0
      %1035 = vmatprep.mubr.bf16.mxu0 %v430
      %1036 = vmatmul.mubr.bf16.gmra.mrb[0].mxu0 %v429
      %v1037 = vpop.f32.mrb[0].mxu0
      %v1038 = vadd.f32 %v973, %v1037
      %v1039 = vpop.f32.mrb[0].mxu0
      %v1040 = vpop.f32.mrb[0].mxu0
      %v1041 = vadd.f32 %v976, %v1040
      %v1042 = vpop.f32.mrb[0].mxu0
      %1043 = vdwg.mxu0
      %1044 = vmatprep.subr.bf16.mxu0 0
      %1045 = vmatpush1.bf16.msra.mxu0 %v769
      %1046 = vmatprep.subr.bf16.mxu0 0
      %1047 = vmatpush1.bf16.msra.mxu0 %v770
      %1048 = vmatprep.subr.bf16.mxu0 0
      %1049 = vmatpush1.bf16.msra.mxu0 %v771
      %1050 = vmatprep.subr.bf16.mxu0 0
      %1051 = vmatpush1.bf16.msra.mxu0 %v772
      %1052 = vmatprep.subr.bf16.mxu0 0
      %1053 = vmatpush1.bf16.msra.mxu0 %v773
      %1054 = vmatprep.subr.bf16.mxu0 0
      %1055 = vmatpush1.bf16.msra.mxu0 %v774
      %1056 = vmatprep.subr.bf16.mxu0 0
      %1057 = vmatpush1.bf16.msra.mxu0 %v775
      %1058 = vmatprep.subr.bf16.mxu0 0
      %1059 = vmatpush1.bf16.msra.mxu0 %v776
      %1060 = vmatprep.subr.bf16.mxu0 0
      %1061 = vmatpush1.bf16.msra.mxu0 %v777
      %1062 = vmatprep.subr.bf16.mxu0 0
      %1063 = vmatpush1.bf16.msra.mxu0 %v778
      %1064 = vmatprep.subr.bf16.mxu0 0
      %1065 = vmatpush1.bf16.msra.mxu0 %v779
      %1066 = vmatprep.subr.bf16.mxu0 0
      %1067 = vmatpush1.bf16.msra.mxu0 %v780
      %1068 = vmatprep.subr.bf16.mxu0 0
      %1069 = vmatpush1.bf16.msra.mxu0 %v781
      %1070 = vmatprep.subr.bf16.mxu0 0
      %1071 = vmatpush1.bf16.msra.mxu0 %v782
      %1072 = vmatprep.subr.bf16.mxu0 0
      %1073 = vmatpush1.bf16.msra.mxu0 %v783
      %1074 = vmatprep.subr.bf16.mxu0 0
      %1075 = vmatpush1.bf16.msra.mxu0 %v784
      %1076 = vmatprep.mubr.bf16.mxu0 %v408
      %1077 = vmatmul.mubr.bf16.gmra.mrb[0].mxu0 %v407
      %v1078 = vpop.f32.mrb[0].mxu0
      %v1079 = vadd.f32 %v1014, %v1078
      %v1080 = vpop.f32.mrb[0].mxu0
      %v1081 = vpop.f32.mrb[0].mxu0
      %v1082 = vadd.f32 %v1017, %v1081
      %v1083 = vpop.f32.mrb[0].mxu0
      %1084 = vmatprep.mubr.bf16.mxu0 %v416
      %1085 = vmatmul.mubr.bf16.gmra.mrb[0].mxu0 %v415
      %v1086 = vpop.f32.mrb[0].mxu0
      %v1087 = vadd.f32 %v1022, %v1086
      %v1088 = vpop.f32.mrb[0].mxu0
      %v1089 = vpop.f32.mrb[0].mxu0
      %v1090 = vadd.f32 %v1025, %v1089
      %v1091 = vpop.f32.mrb[0].mxu0
      %1092 = vmatprep.mubr.bf16.mxu0 %v424
      %1093 = vmatmul.mubr.bf16.gmra.mrb[0].mxu0 %v423
      %v1094 = vpop.f32.mrb[0].mxu0
      %v1095 = vadd.f32 %v1030, %v1094
      %v1096 = vpop.f32.mrb[0].mxu0
      %v1097 = vpop.f32.mrb[0].mxu0
      %v1098 = vadd.f32 %v1033, %v1097
      %v1099 = vpop.f32.mrb[0].mxu0
      %1100 = vmatprep.mubr.bf16.mxu0 %v432
      %1101 = vmatmul.mubr.bf16.gmra.mrb[0].mxu0 %v431
      %v1102 = vpop.f32.mrb[0].mxu0
      %v1103 = vadd.f32 %v1038, %v1102
      %v1104 = vpop.f32.mrb[0].mxu0
      %v1105 = vpop.f32.mrb[0].mxu0
      %v1106 = vadd.f32 %v1041, %v1105
      %v1107 = vpop.f32.mrb[0].mxu0
      %1108 = vdwg.mxu0
      %v1109 = vadd.f32 %v1079, %v1082
      %v1110 = vadd.f32 %v1109, %v1087
      %v1111 = vadd.f32 %v1110, %v1090
      %v1112 = vadd.f32 %v1111, %v1095
      %v1113 = vadd.f32 %v1112, %v1098
      %v1114 = vadd.f32 %v1113, %v1103
      %v1115 = vadd.f32 %v1114, %v1106
      %v1116 = vrot.slane %v1115, 4
      %v1117 = vadd.f32 %v1115, %v1116
      %v1118 = vrot.slane %v1117, 2
      %v1119 = vadd.f32 %v1117, %v1118
      %v1120 = vrot.slane %v1119, 1
      %v1121 = vadd.f32 %v1119, %v1120
      %v1122 = vrcp.pop 64.0
      %v1123 = vmul.f32 %v1121, %v1122
      %v1124 = vsub.f32 %v1079, %v1123
      %v1125 = vsub.f32 %v1082, %v1123
      %v1126 = vsub.f32 %v1087, %v1123
      %v1127 = vsub.f32 %v1090, %v1123
      %v1128 = vsub.f32 %v1095, %v1123
      %v1129 = vsub.f32 %v1098, %v1123
      %v1130 = vsub.f32 %v1103, %v1123
      %v1131 = vsub.f32 %v1106, %v1123
      %v1132 = vmul.f32 %v1124, %v1124
      %v1133 = vmul.f32 %v1125, %v1125
      %v1134 = vmul.f32 %v1126, %v1126
      %v1135 = vmul.f32 %v1127, %v1127
      %v1136 = vmul.f32 %v1128, %v1128
      %v1137 = vmul.f32 %v1129, %v1129
      %v1138 = vmul.f32 %v1130, %v1130
      %v1139 = vmul.f32 %v1131, %v1131
      %v1140 = vadd.f32 %v1132, %v1133
      %v1141 = vadd.f32 %v1140, %v1134
      %v1142 = vadd.f32 %v1141, %v1135
      %v1143 = vadd.f32 %v1142, %v1136
      %v1144 = vadd.f32 %v1143, %v1137
      %v1145 = vadd.f32 %v1144, %v1138
      %v1146 = vadd.f32 %v1145, %v1139
      %v1147 = vrot.slane %v1146, 4
      %v1148 = vadd.f32 %v1146, %v1147
      %v1149 = vrot.slane %v1148, 2
      %v1150 = vadd.f32 %v1148, %v1149
      %v1151 = vrot.slane %v1150, 1
      %v1152 = vadd.f32 %v1150, %v1151
      %v1153 = vmul.f32 %v1152, %v1122
      %v1154 = vadd.f32 %v1153, 1e-05
      %v1155 = vrsqrt.pop %v1154
      %v1156 = vmul.f32 %v1124, %v1155
      %v1157 = vmul.f32 %v1125, %v1155
      %v1158 = vmul.f32 %v1126, %v1155
      %v1159 = vmul.f32 %v1127, %v1155
      %v1160 = vmul.f32 %v1128, %v1155
      %v1161 = vmul.f32 %v1129, %v1155
      %v1162 = vmul.f32 %v1130, %v1155
      %v1163 = vmul.f32 %v1131, %v1155
      %vm1164 = vcmp.ge.f32.partialorder %v1156, 0.0
      %vm1165 = vcmp.ge.f32.partialorder %v1157, 0.0
      %vm1166 = vcmp.ge.f32.partialorder %v1158, 0.0
      %vm1167 = vcmp.ge.f32.partialorder %v1159, 0.0
      %vm1168 = vcmp.ge.f32.partialorder %v1160, 0.0
      %vm1169 = vcmp.ge.f32.partialorder %v1161, 0.0
      %vm1170 = vcmp.ge.f32.partialorder %v1162, 0.0
      %vm1171 = vcmp.ge.f32.partialorder %v1163, 0.0
      %v1172 = vmul.f32 %v1156, 0.2
      %v1173 = vmul.f32 %v1157, 0.2
      %v1174 = vmul.f32 %v1158, 0.2
      %v1175 = vmul.f32 %v1159, 0.2
      %v1176 = vmul.f32 %v1160, 0.2
      %v1177 = vmul.f32 %v1161, 0.2
      %v1178 = vmul.f32 %v1162, 0.2
      %v1179 = vmul.f32 %v1163, 0.2
      %v1180 = vsel %vm1164, %v1156, %v1172
      %v1181 = vsel %vm1165, %v1157, %v1173
      %v1182 = vsel %vm1166, %v1158, %v1174
      %v1183 = vsel %vm1167, %v1159, %v1175
      %v1184 = vsel %vm1168, %v1160, %v1176
      %v1185 = vsel %vm1169, %v1161, %v1177
      %v1186 = vsel %vm1170, %v1162, %v1178
      %v1187 = vsel %vm1171, %v1163, %v1179
      %v1188 = vpack.c.bf16 %v1181, %v1180
      %v1189 = vpack.c.bf16 %v1183, %v1182
      %v1190 = vpack.c.bf16 %v1185, %v1184
      %v1191 = vpack.c.bf16 %v1187, %v1186
      %v1196 = vunpack.c.l.b16 %v1188
      %v1197 = vunpack.c.h.b16 %v1188
      %v1198 = vunpack.c.l.b16 %v1189
      %v1199 = vunpack.c.h.b16 %v1189
      %v1200 = vunpack.c.l.b16 %v1190
      %v1201 = vunpack.c.h.b16 %v1190
      %v1202 = vunpack.c.l.b16 %v1191
      %v1203 = vunpack.c.h.b16 %v1191
      %v1204 = vpack.c.b16 %v1196, %v1196
      %v1205 = vpack.c.b16 %v1197, %v1197
      %v1206 = vpack.c.b16 %v1198, %v1198
      %v1207 = vpack.c.b16 %v1199, %v1199
      %v1208 = vpack.c.b16 %v1200, %v1200
      %v1209 = vpack.c.b16 %v1201, %v1201
      %v1210 = vpack.c.b16 %v1202, %v1202
      %v1211 = vpack.c.b16 %v1203, %v1203
      %1220 = vst [vmem:[%s143] sm:$0xf] %v1204
      %1221 = vst [vmem:[%s143 + $0x4] sm:$0xf] %v1205
      %1222 = vst [vmem:[%s143 + $0x8] sm:$0xf] %v1206
      %1223 = vst [vmem:[%s143 + $0xc] sm:$0xf] %v1207
      %1224 = vst [vmem:[%s143 + $0x10] sm:$0xf] %v1208
      %1225 = vst [vmem:[%s143 + $0x14] sm:$0xf] %v1209
      %1226 = vst [vmem:[%s143 + $0x18] sm:$0xf] %v1210
      %1227 = vst [vmem:[%s143 + $0x1c] sm:$0xf] %v1211
      %p1228 = scmp.lt.s32.totalorder %s13, 1
      %s1229 = scalar_select %p1228, %s13, 1
      %s1230 = smul.addr %s1229, 8
      %s1231 = smul.addr %s1230, 4
      %s1232 = scalar_lea.vmem %s2, %s1231
      // Predicated region
      $region29: #{siamese_forward.6} parent=27 // pred_check
        %p1233 = pneg %p78
      $region30: #{siamese_forward.6} parent=27 // pred_check_branch
        %1235 = sbr.rel (%p1233) target = $region32
      $region31: #{siamese_forward.6} parent=27 // pred_region
        _
      $region32: #{siamese_forward.6} parent=27 // pred_fallthru
        _
    $region28: #{siamese_forward.6} parent=5 // pred_fallthru
      _
    %p1236 = scmp.le.s32.totalorder 2, %s8
    // Predicated region
    $region33: #{siamese_forward.6} parent=5 // pred_check
      %p1237 = pneg %p1236
    $region34: #{siamese_forward.6} parent=5 // pred_check_branch
      %1239 = sbr.rel (%p1237) target = $region36
    $region35: #{siamese_forward.6} parent=5 // pred_region
      %s1240 = ssub.s32 %s8, 2
      // Predicated region
      $region37: #{siamese_forward.6} parent=35 // pred_check
        %p1241 = pneg %p84
      $region38: #{siamese_forward.6} parent=35 // pred_check_branch
        %1243 = sbr.rel (%p1241) target = $region40
      $region39: #{siamese_forward.6} parent=35 // pred_region
        %p1244 = scmp.lt.s32.totalorder %s14, 1
        %s1245 = scalar_select %p1244, %s14, 1
        %s1246 = smul.addr %s1245, 8
        %s1247 = smul.addr %s1246, 4
        %s1248 = scalar_lea.vmem %s2, %s1247
      $region40: #{siamese_forward.6} parent=35 // pred_fallthru
        _
    $region36: #{siamese_forward.6} parent=5 // pred_fallthru
      _
  $region6: #{siamese_forward.6} parent=0 // loop_footer
    %s12 = sadd.s32 1, %s8
  $region7: #{siamese_forward.6} parent=0 // loop_footer_branch
    %7 = sbr.rel target = $region3
  $region8: #{siamese_forward.6} parent=0 // loop_exit
    _

// kernel: siamese_forward.7
$region0: #{siamese_forward.7}
  #allocation0 [shape = 'u32[]', space=smem, size = 0x4, offset = 0x4, fixed_abs, tag = 'smem constant byte address 0x4 - core index']
  #allocation1 [shape = 'u32[144,128]{1,0:T(1,128)}', space=vmem, size = 0x12000, scoped, tag = 'internal scratch']
  %s0 = inlined_call_operand.vmem [shape: bf16[2,16,2048], index: 0, kind: input, shape index: {}]
  %s1 = inlined_call_operand.vmem [shape: bf16[2048,256], index: 1, kind: input, shape index: {}]
  %s2 = inlined_call_operand.vmem [shape: bf16[2,16,256], index: 2, kind: output, shape index: {}]
  %s3 = sld [smem:[#allocation0]]
  $region41: #{siamese_forward.7} parent=0
    _
  %s5 = ssub.s32 1, %s3
  %s6 = scalar_select 0, %s5, %s3
  loop: start=0, step=1, limit=4
  $region2: #{siamese_forward.7} parent=0 // loop_pre_header
    _
  $region3: #{siamese_forward.7} parent=0 // loop_header
    %s8 = sphi 0, %s12
    %p9 = scmp.ge.s32.totalorder %s8, 4
    %s18 = sphi 0, %s20
    %s21 = sphi 0, %s18
    %s22 = sphi 0, %s21
    %s38 = sphi 0, %s22
    %s42 = sphi 0, %s42
    %s44 = sphi 0, %s42
    %s45 = sphi 0, %s44
    %s59 = sphi 0, %s45
    %s65 = sphi 0, %s67
    %s68 = sphi 0, %s65
    %s69 = sphi 0, %s68
    %s85 = sphi 0, %s69
  $region4: #{siamese_forward.7} parent=0 // loop_header_branch
    %11 = sbr.rel (%p9) target = $region8
  $region5: #{siamese_forward.7} parent=0 // loop_body
    %s13 = ssub.s32 %s8, 1
    %s14 = ssub.s32 %s8, 2
    %s15 = sadd.s32 %s8, 1
    %s16 = ssub.s32 %s8, %s15
    %p17 = scmp.eq.s32.totalorder %s16, 0
    %s19 = sadd.s32 %s18, 1
    %s20 = scalar_select %p17, %s18, %s19
    %p23 = pneg %p17
    %p24 = scmp.eq.s32.totalorder %s8, 1
    %p25 = por %p23, %p24
    %p26 = scmp.ne.s32.totalorder %s18, %s21
    %p27 = scmp.eq.s32.totalorder %s8, 0
    %p28 = por %p26, %p27
    %p29 = scmp.ne.s32.totalorder %s18, %s21
    %p30 = scmp.eq.s32.totalorder %s13, 1
    %p31 = por %p29, %p30
    %p32 = scmp.ne.s32.totalorder %s21, %s22
    %p33 = scmp.eq.s32.totalorder %s13, 0
    %p34 = por %p32, %p33
    %p35 = scmp.ne.s32.totalorder %s21, %s22
    %p36 = scmp.eq.s32.totalorder %s14, 1
    %p37 = por %p35, %p36
    %p39 = scmp.ne.s32.totalorder %s22, %s38
    %p40 = scmp.eq.s32.totalorder %s14, 0
    %p41 = por %p39, %p40
    %s43 = sadd.s32 %s42, 1
    %p46 = scmp.eq.s32.totalorder %s8, 1
    %p47 = scmp.ne.s32.totalorder %s42, %s44
    %p48 = scmp.eq.s32.totalorder %s8, 0
    %p49 = por %p47, %p48
    %p50 = scmp.ne.s32.totalorder %s42, %s44
    %p51 = scmp.eq.s32.totalorder %s13, 1
    %p52 = por %p50, %p51
    %p53 = scmp.ne.s32.totalorder %s44, %s45
    %p54 = scmp.eq.s32.totalorder %s13, 0
    %p55 = por %p53, %p54
    %p56 = scmp.ne.s32.totalorder %s44, %s45
    %p57 = scmp.eq.s32.totalorder %s14, 1
    %p58 = por %p56, %p57
    %p60 = scmp.ne.s32.totalorder %s45, %s59
    %p61 = scmp.eq.s32.totalorder %s14, 0
    %p62 = por %p60, %p61
    %s63 = ssub.s32 %s8, %s15
    %p64 = scmp.eq.s32.totalorder %s63, 0
    %s66 = sadd.s32 %s65, 1
    %s67 = scalar_select %p64, %s65, %s66
    %p70 = pneg %p64
    %p71 = scmp.eq.s32.totalorder %s8, 1
    %p72 = por %p70, %p71
    %p73 = scmp.ne.s32.totalorder %s65, %s68
    %p74 = scmp.eq.s32.totalorder %s8, 0
    %p75 = por %p73, %p74
    %p76 = scmp.ne.s32.totalorder %s65, %s68
    %p77 = scmp.eq.s32.totalorder %s13, 1
    %p78 = por %p76, %p77
    %p79 = scmp.ne.s32.totalorder %s68, %s69
    %p80 = scmp.eq.s32.totalorder %s13, 0
    %p81 = por %p79, %p80
    %p82 = scmp.ne.s32.totalorder %s68, %s69
    %p83 = scmp.eq.s32.totalorder %s14, 1
    %p84 = por %p82, %p83
    %p86 = scmp.ne.s32.totalorder %s69, %s85
    %p87 = scmp.eq.s32.totalorder %s14, 0
    %p88 = por %p86, %p87
    %p89 = scmp.le.s32.totalorder 1, %s8
    %p90 = scmp.lt.s32.totalorder %s8, 3
    %p91 = pnand %p89, %p90
    %p92 = pneg %p91
    // Predicated region
    $region9: #{siamese_forward.7} parent=5 // pred_check
      _
    $region10: #{siamese_forward.7} parent=5 // pred_check_branch
      %94 = sbr.rel (%p91) target = $region12
    $region11: #{siamese_forward.7} parent=5 // pred_region
      %s95 = ssub.s32 %s8, 1
      // Predicated region
      $region13: #{siamese_forward.7} parent=11 // pred_check
        %p96 = pneg %p55
      $region14: #{siamese_forward.7} parent=11 // pred_check_branch
        %98 = sbr.rel (%p96) target = $region16
      $region15: #{siamese_forward.7} parent=11 // pred_region
        _
      $region16: #{siamese_forward.7} parent=11 // pred_fallthru
        _
    $region12: #{siamese_forward.7} parent=5 // pred_fallthru
      _
    %p99 = scmp.lt.s32.totalorder %s8, 2
    // Predicated region
    $region17: #{siamese_forward.7} parent=5 // pred_check
      %p100 = pneg %p99
    $region18: #{siamese_forward.7} parent=5 // pred_check_branch
      %102 = sbr.rel (%p100) target = $region20
    $region19: #{siamese_forward.7} parent=5 // pred_region
      // Predicated region
      $region21: #{siamese_forward.7} parent=19 // pred_check
        %p103 = pneg %p28
      $region22: #{siamese_forward.7} parent=19 // pred_check_branch
        %105 = sbr.rel (%p103) target = $region24
      $region23: #{siamese_forward.7} parent=19 // pred_region
        %p106 = scmp.lt.s32.totalorder %s8, 1
        %s107 = scalar_select %p106, %s8, 1
        %s108 = smul.addr %s107, 32
        %s109 = smul.addr %s108, 4
        %s110 = scalar_lea.vmem %s0, %s109
      $region24: #{siamese_forward.7} parent=19 // pred_fallthru
        _
    $region20: #{siamese_forward.7} parent=5 // pred_fallthru
      _
    %p111 = scmp.le.s32.totalorder 1, %s8
    %p112 = scmp.lt.s32.totalorder %s8, 3
    %p113 = pnand %p111, %p112
    %p114 = pneg %p113
    // Predicated region
    $region25: #{siamese_forward.7} parent=5 // pred_check
      _
    $region26: #{siamese_forward.7} parent=5 // pred_check_branch
      %116 = sbr.rel (%p113) target = $region28
    $region27: #{siamese_forward.7} parent=5 // pred_region
      %s117 = ssub.s32 %s8, 1
      %p118 = scmp.lt.s32.totalorder %s13, 1
      %s119 = scalar_select %p118, %s13, 1
      %s120 = smul.addr %s119, 32
      %s121 = smul.addr %s120, 4
      %s122 = scalar_lea.vmem %s0, %s121
      %p123 = pneg %p34
      %p124 = pneg %p31
      %p125 = pneg %p55
      %p126 = pneg %p52
      %p127 = pneg %p81
      %p128 = pneg %p78
      %p129 = scmp.lt.s32.totalorder %s13, 1
      %s130 = scalar_select %p129, %s13, 1
      %s131 = smul.addr %s130, 4
      %s132 = smul.addr %s131, 4
      %s133 = scalar_lea.vmem %s2, %s132
      %p134 = scmp.lt.s32.totalorder %s13, 1
      %s135 = scalar_select %p134, %s13, 1
      %s136 = smul.addr %s135, 32
      %s137 = smul.addr %s136, 4
      %s138 = scalar_lea.vmem %s0, %s137
      %p139 = scmp.lt.s32.totalorder %s13, 1
      %s140 = scalar_select %p139, %s13, 1
      %s141 = smul.addr %s140, 4
      %s142 = smul.addr %s141, 4
      %s143 = scalar_lea.vmem %s2, %s142
      %v144 = vld [vmem:[%s138] sm:$0xff]
      %v145 = vld [vmem:[%s138 + $0x8] sm:$0xff]
      %v146 = vld [vmem:[%s138 + $0x10] sm:$0xff]
      %v147 = vld [vmem:[%s138 + $0x18] sm:$0xff]
      %v148 = vld [vmem:[%s138 + $0x20] sm:$0xff]
      %v149 = vld [vmem:[%s138 + $0x28] sm:$0xff]
      %v150 = vld [vmem:[%s138 + $0x30] sm:$0xff]
      %v151 = vld [vmem:[%s138 + $0x38] sm:$0xff]
      %v152 = vld [vmem:[%s138 + $0x40] sm:$0xff]
      %v153 = vld [vmem:[%s138 + $0x48] sm:$0xff]
      %v154 = vld [vmem:[%s138 + $0x50] sm:$0xff]
      %v155 = vld [vmem:[%s138 + $0x58] sm:$0xff]
      %v156 = vld [vmem:[%s138 + $0x60] sm:$0xff]
      %v157 = vld [vmem:[%s138 + $0x68] sm:$0xff]
      %v158 = vld [vmem:[%s138 + $0x70] sm:$0xff]
      %v159 = vld [vmem:[%s138 + $0x78] sm:$0xff]
      %v160 = vld [vmem:[%s1] sm:$0xff]
      %v161 = vld [vmem:[%s1 + $0x8] sm:$0xff]
      %v162 = vld [vmem:[%s1 + $0x10] sm:$0xff]
      %v163 = vld [vmem:[%s1 + $0x18] sm:$0xff]
      %v164 = vld [vmem:[%s1 + $0x20] sm:$0xff]
      %v165 = vld [vmem:[%s1 + $0x28] sm:$0xff]
      %v166 = vld [vmem:[%s1 + $0x30] sm:$0xff]
      %v167 = vld [vmem:[%s1 + $0x38] sm:$0xff]
      %v168 = vld [vmem:[%s1 + $0x40] sm:$0xff]
      %v169 = vld [vmem:[%s1 + $0x48] sm:$0xff]
      %v170 = vld [vmem:[%s1 + $0x50] sm:$0xff]
      %v171 = vld [vmem:[%s1 + $0x58] sm:$0xff]
      %v172 = vld [vmem:[%s1 + $0x60] sm:$0xff]
      %v173 = vld [vmem:[%s1 + $0x68] sm:$0xff]
      %v174 = vld [vmem:[%s1 + $0x70] sm:$0xff]
      %v175 = vld [vmem:[%s1 + $0x78] sm:$0xff]
      %v176 = vld [vmem:[%s1 + $0x80] sm:$0xff]
      %v177 = vld [vmem:[%s1 + $0x88] sm:$0xff]
      %v178 = vld [vmem:[%s1 + $0x90] sm:$0xff]
      %v179 = vld [vmem:[%s1 + $0x98] sm:$0xff]
      %v180 = vld [vmem:[%s1 + $0xa0] sm:$0xff]
      %v181 = vld [vmem:[%s1 + $0xa8] sm:$0xff]
      %v182 = vld [vmem:[%s1 + $0xb0] sm:$0xff]
      %v183 = vld [vmem:[%s1 + $0xb8] sm:$0xff]
      %v184 = vld [vmem:[%s1 + $0xc0] sm:$0xff]
      %v185 = vld [vmem:[%s1 + $0xc8] sm:$0xff]
      %v186 = vld [vmem:[%s1 + $0xd0] sm:$0xff]
      %v187 = vld [vmem:[%s1 + $0xd8] sm:$0xff]
      %v188 = vld [vmem:[%s1 + $0xe0] sm:$0xff]
      %v189 = vld [vmem:[%s1 + $0xe8] sm:$0xff]
      %v190 = vld [vmem:[%s1 + $0xf0] sm:$0xff]
      %v191 = vld [vmem:[%s1 + $0xf8] sm:$0xff]
      %v192 = vld [vmem:[%s1 + $0x100] sm:$0xff]
      %v193 = vld [vmem:[%s1 + $0x108] sm:$0xff]
      %v194 = vld [vmem:[%s1 + $0x110] sm:$0xff]
      %v195 = vld [vmem:[%s1 + $0x118] sm:$0xff]
      %v196 = vld [vmem:[%s1 + $0x120] sm:$0xff]
      %v197 = vld [vmem:[%s1 + $0x128] sm:$0xff]
      %v198 = vld [vmem:[%s1 + $0x130] sm:$0xff]
      %v199 = vld [vmem:[%s1 + $0x138] sm:$0xff]
      %v200 = vld [vmem:[%s1 + $0x140] sm:$0xff]
      %v201 = vld [vmem:[%s1 + $0x148] sm:$0xff]
      %v202 = vld [vmem:[%s1 + $0x150] sm:$0xff]
      %v203 = vld [vmem:[%s1 + $0x158] sm:$0xff]
      %v204 = vld [vmem:[%s1 + $0x160] sm:$0xff]
      %v205 = vld [vmem:[%s1 + $0x168] sm:$0xff]
      %v206 = vld [vmem:[%s1 + $0x170] sm:$0xff]
      %v207 = vld [vmem:[%s1 + $0x178] sm:$0xff]
      %v208 = vld [vmem:[%s1 + $0x180] sm:$0xff]
      %v209 = vld [vmem:[%s1 + $0x188] sm:$0xff]
      %v210 = vld [vmem:[%s1 + $0x190] sm:$0xff]
      %v211 = vld [vmem:[%s1 + $0x198] sm:$0xff]
      %v212 = vld [vmem:[%s1 + $0x1a0] sm:$0xff]
      %v213 = vld [vmem:[%s1 + $0x1a8] sm:$0xff]
      %v214 = vld [vmem:[%s1 + $0x1b0] sm:$0xff]
      %v215 = vld [vmem:[%s1 + $0x1b8] sm:$0xff]
      %v216 = vld [vmem:[%s1 + $0x1c0] sm:$0xff]
      %v217 = vld [vmem:[%s1 + $0x1c8] sm:$0xff]
      %v218 = vld [vmem:[%s1 + $0x1d0] sm:$0xff]
      %v219 = vld [vmem:[%s1 + $0x1d8] sm:$0xff]
      %v220 = vld [vmem:[%s1 + $0x1e0] sm:$0xff]
      %v221 = vld [vmem:[%s1 + $0x1e8] sm:$0xff]
      %v222 = vld [vmem:[%s1 + $0x1f0] sm:$0xff]
      %v223 = vld [vmem:[%s1 + $0x1f8] sm:$0xff]
      %v224 = vld [vmem:[%s1 + $0x200] sm:$0xff]
      %v225 = vld [vmem:[%s1 + $0x208] sm:$0xff]
      %v226 = vld [vmem:[%s1 + $0x210] sm:$0xff]
      %v227 = vld [vmem:[%s1 + $0x218] sm:$0xff]
      %v228 = vld [vmem:[%s1 + $0x220] sm:$0xff]
      %v229 = vld [vmem:[%s1 + $0x228] sm:$0xff]
      %v230 = vld [vmem:[%s1 + $0x230] sm:$0xff]
      %v231 = vld [vmem:[%s1 + $0x238] sm:$0xff]
      %v232 = vld [vmem:[%s1 + $0x240] sm:$0xff]
      %v233 = vld [vmem:[%s1 + $0x248] sm:$0xff]
      %v234 = vld [vmem:[%s1 + $0x250] sm:$0xff]
      %v235 = vld [vmem:[%s1 + $0x258] sm:$0xff]
      %v236 = vld [vmem:[%s1 + $0x260] sm:$0xff]
      %v237 = vld [vmem:[%s1 + $0x268] sm:$0xff]
      %v238 = vld [vmem:[%s1 + $0x270] sm:$0xff]
      %v239 = vld [vmem:[%s1 + $0x278] sm:$0xff]
      %v240 = vld [vmem:[%s1 + $0x280] sm:$0xff]
      %v241 = vld [vmem:[%s1 + $0x288] sm:$0xff]
      %v242 = vld [vmem:[%s1 + $0x290] sm:$0xff]
      %v243 = vld [vmem:[%s1 + $0x298] sm:$0xff]
      %v244 = vld [vmem:[%s1 + $0x2a0] sm:$0xff]
      %v245 = vld [vmem:[%s1 + $0x2a8] sm:$0xff]
      %v246 = vld [vmem:[%s1 + $0x2b0] sm:$0xff]
      %v247 = vld [vmem:[%s1 + $0x2b8] sm:$0xff]
      %v248 = vld [vmem:[%s1 + $0x2c0] sm:$0xff]
      %v249 = vld [vmem:[%s1 + $0x2c8] sm:$0xff]
      %v250 = vld [vmem:[%s1 + $0x2d0] sm:$0xff]
      %v251 = vld [vmem:[%s1 + $0x2d8] sm:$0xff]
      %v252 = vld [vmem:[%s1 + $0x2e0] sm:$0xff]
      %v253 = vld [vmem:[%s1 + $0x2e8] sm:$0xff]
      %v254 = vld [vmem:[%s1 + $0x2f0] sm:$0xff]
      %v255 = vld [vmem:[%s1 + $0x2f8] sm:$0xff]
      %v256 = vld [vmem:[%s1 + $0x300] sm:$0xff]
      %v257 = vld [vmem:[%s1 + $0x308] sm:$0xff]
      %v258 = vld [vmem:[%s1 + $0x310] sm:$0xff]
      %v259 = vld [vmem:[%s1 + $0x318] sm:$0xff]
      %v260 = vld [vmem:[%s1 + $0x320] sm:$0xff]
      %v261 = vld [vmem:[%s1 + $0x328] sm:$0xff]
      %v262 = vld [vmem:[%s1 + $0x330] sm:$0xff]
      %v263 = vld [vmem:[%s1 + $0x338] sm:$0xff]
      %v264 = vld [vmem:[%s1 + $0x340] sm:$0xff]
      %v265 = vld [vmem:[%s1 + $0x348] sm:$0xff]
      %v266 = vld [vmem:[%s1 + $0x350] sm:$0xff]
      %v267 = vld [vmem:[%s1 + $0x358] sm:$0xff]
      %v268 = vld [vmem:[%s1 + $0x360] sm:$0xff]
      %v269 = vld [vmem:[%s1 + $0x368] sm:$0xff]
      %v270 = vld [vmem:[%s1 + $0x370] sm:$0xff]
      %v271 = vld [vmem:[%s1 + $0x378] sm:$0xff]
      %v272 = vld [vmem:[%s1 + $0x380] sm:$0xff]
      %v273 = vld [vmem:[%s1 + $0x388] sm:$0xff]
      %v274 = vld [vmem:[%s1 + $0x390] sm:$0xff]
      %v275 = vld [vmem:[%s1 + $0x398] sm:$0xff]
      %v276 = vld [vmem:[%s1 + $0x3a0] sm:$0xff]
      %v277 = vld [vmem:[%s1 + $0x3a8] sm:$0xff]
      %v278 = vld [vmem:[%s1 + $0x3b0] sm:$0xff]
      %v279 = vld [vmem:[%s1 + $0x3b8] sm:$0xff]
      %v280 = vld [vmem:[%s1 + $0x3c0] sm:$0xff]
      %v281 = vld [vmem:[%s1 + $0x3c8] sm:$0xff]
      %v282 = vld [vmem:[%s1 + $0x3d0] sm:$0xff]
      %v283 = vld [vmem:[%s1 + $0x3d8] sm:$0xff]
      %v284 = vld [vmem:[%s1 + $0x3e0] sm:$0xff]
      %v285 = vld [vmem:[%s1 + $0x3e8] sm:$0xff]
      %v286 = vld [vmem:[%s1 + $0x3f0] sm:$0xff]
      %v287 = vld [vmem:[%s1 + $0x3f8] sm:$0xff]
      %v288 = vld [vmem:[%s1 + $0x400] sm:$0xff]
      %v289 = vld [vmem:[%s1 + $0x408] sm:$0xff]
      %v290 = vld [vmem:[%s1 + $0x410] sm:$0xff]
      %v291 = vld [vmem:[%s1 + $0x418] sm:$0xff]
      %v292 = vld [vmem:[%s1 + $0x420] sm:$0xff]
      %v293 = vld [vmem:[%s1 + $0x428] sm:$0xff]
      %v294 = vld [vmem:[%s1 + $0x430] sm:$0xff]
      %v295 = vld [vmem:[%s1 + $0x438] sm:$0xff]
      %v296 = vld [vmem:[%s1 + $0x440] sm:$0xff]
      %v297 = vld [vmem:[%s1 + $0x448] sm:$0xff]
      %v298 = vld [vmem:[%s1 + $0x450] sm:$0xff]
      %v299 = vld [vmem:[%s1 + $0x458] sm:$0xff]
      %v300 = vld [vmem:[%s1 + $0x460] sm:$0xff]
      %v301 = vld [vmem:[%s1 + $0x468] sm:$0xff]
      %v302 = vld [vmem:[%s1 + $0x470] sm:$0xff]
      %v303 = vld [vmem:[%s1 + $0x478] sm:$0xff]
      %v304 = vld [vmem:[%s1 + $0x480] sm:$0xff]
      %v305 = vld [vmem:[%s1 + $0x488] sm:$0xff]
      %v306 = vld [vmem:[%s1 + $0x490] sm:$0xff]
      %v307 = vld [vmem:[%s1 + $0x498] sm:$0xff]
      %v308 = vld [vmem:[%s1 + $0x4a0] sm:$0xff]
      %v309 = vld [vmem:[%s1 + $0x4a8] sm:$0xff]
      %v310 = vld [vmem:[%s1 + $0x4b0] sm:$0xff]
      %v311 = vld [vmem:[%s1 + $0x4b8] sm:$0xff]
      %v312 = vld [vmem:[%s1 + $0x4c0] sm:$0xff]
      %v313 = vld [vmem:[%s1 + $0x4c8] sm:$0xff]
      %v314 = vld [vmem:[%s1 + $0x4d0] sm:$0xff]
      %v315 = vld [vmem:[%s1 + $0x4d8] sm:$0xff]
      %v316 = vld [vmem:[%s1 + $0x4e0] sm:$0xff]
      %v317 = vld [vmem:[%s1 + $0x4e8] sm:$0xff]
      %v318 = vld [vmem:[%s1 + $0x4f0] sm:$0xff]
      %v319 = vld [vmem:[%s1 + $0x4f8] sm:$0xff]
      %v320 = vld [vmem:[%s1 + $0x500] sm:$0xff]
      %v321 = vld [vmem:[%s1 + $0x508] sm:$0xff]
      %v322 = vld [vmem:[%s1 + $0x510] sm:$0xff]
      %v323 = vld [vmem:[%s1 + $0x518] sm:$0xff]
      %v324 = vld [vmem:[%s1 + $0x520] sm:$0xff]
      %v325 = vld [vmem:[%s1 + $0x528] sm:$0xff]
      %v326 = vld [vmem:[%s1 + $0x530] sm:$0xff]
      %v327 = vld [vmem:[%s1 + $0x538] sm:$0xff]
      %v328 = vld [vmem:[%s1 + $0x540] sm:$0xff]
      %v329 = vld [vmem:[%s1 + $0x548] sm:$0xff]
      %v330 = vld [vmem:[%s1 + $0x550] sm:$0xff]
      %v331 = vld [vmem:[%s1 + $0x558] sm:$0xff]
      %v332 = vld [vmem:[%s1 + $0x560] sm:$0xff]
      %v333 = vld [vmem:[%s1 + $0x568] sm:$0xff]
      %v334 = vld [vmem:[%s1 + $0x570] sm:$0xff]
      %v335 = vld [vmem:[%s1 + $0x578] sm:$0xff]
      %v336 = vld [vmem:[%s1 + $0x580] sm:$0xff]
      %v337 = vld [vmem:[%s1 + $0x588] sm:$0xff]
      %v338 = vld [vmem:[%s1 + $0x590] sm:$0xff]
      %v339 = vld [vmem:[%s1 + $0x598] sm:$0xff]
      %v340 = vld [vmem:[%s1 + $0x5a0] sm:$0xff]
      %v341 = vld [vmem:[%s1 + $0x5a8] sm:$0xff]
      %v342 = vld [vmem:[%s1 + $0x5b0] sm:$0xff]
      %v343 = vld [vmem:[%s1 + $0x5b8] sm:$0xff]
      %v344 = vld [vmem:[%s1 + $0x5c0] sm:$0xff]
      %v345 = vld [vmem:[%s1 + $0x5c8] sm:$0xff]
      %v346 = vld [vmem:[%s1 + $0x5d0] sm:$0xff]
      %v347 = vld [vmem:[%s1 + $0x5d8] sm:$0xff]
      %v348 = vld [vmem:[%s1 + $0x5e0] sm:$0xff]
      %v349 = vld [vmem:[%s1 + $0x5e8] sm:$0xff]
      %v350 = vld [vmem:[%s1 + $0x5f0] sm:$0xff]
      %v351 = vld [vmem:[%s1 + $0x5f8] sm:$0xff]
      %v352 = vld [vmem:[%s1 + $0x600] sm:$0xff]
      %v353 = vld [vmem:[%s1 + $0x608] sm:$0xff]
      %v354 = vld [vmem:[%s1 + $0x610] sm:$0xff]
      %v355 = vld [vmem:[%s1 + $0x618] sm:$0xff]
      %v356 = vld [vmem:[%s1 + $0x620] sm:$0xff]
      %v357 = vld [vmem:[%s1 + $0x628] sm:$0xff]
      %v358 = vld [vmem:[%s1 + $0x630] sm:$0xff]
      %v359 = vld [vmem:[%s1 + $0x638] sm:$0xff]
      %v360 = vld [vmem:[%s1 + $0x640] sm:$0xff]
      %v361 = vld [vmem:[%s1 + $0x648] sm:$0xff]
      %v362 = vld [vmem:[%s1 + $0x650] sm:$0xff]
      %v363 = vld [vmem:[%s1 + $0x658] sm:$0xff]
      %v364 = vld [vmem:[%s1 + $0x660] sm:$0xff]
      %v365 = vld [vmem:[%s1 + $0x668] sm:$0xff]
      %v366 = vld [vmem:[%s1 + $0x670] sm:$0xff]
      %v367 = vld [vmem:[%s1 + $0x678] sm:$0xff]
      %v368 = vld [vmem:[%s1 + $0x680] sm:$0xff]
      %v369 = vld [vmem:[%s1 + $0x688] sm:$0xff]
      %v370 = vld [vmem:[%s1 + $0x690] sm:$0xff]
      %v371 = vld [vmem:[%s1 + $0x698] sm:$0xff]
      %v372 = vld [vmem:[%s1 + $0x6a0] sm:$0xff]
      %v373 = vld [vmem:[%s1 + $0x6a8] sm:$0xff]
      %v374 = vld [vmem:[%s1 + $0x6b0] sm:$0xff]
      %v375 = vld [vmem:[%s1 + $0x6b8] sm:$0xff]
      %v376 = vld [vmem:[%s1 + $0x6c0] sm:$0xff]
      %v377 = vld [vmem:[%s1 + $0x6c8] sm:$0xff]
      %v378 = vld [vmem:[%s1 + $0x6d0] sm:$0xff]
      %v379 = vld [vmem:[%s1 + $0x6d8] sm:$0xff]
      %v380 = vld [vmem:[%s1 + $0x6e0] sm:$0xff]
      %v381 = vld [vmem:[%s1 + $0x6e8] sm:$0xff]
      %v382 = vld [vmem:[%s1 + $0x6f0] sm:$0xff]
      %v383 = vld [vmem:[%s1 + $0x6f8] sm:$0xff]
      %v384 = vld [vmem:[%s1 + $0x700] sm:$0xff]
      %v385 = vld [vmem:[%s1 + $0x708] sm:$0xff]
      %v386 = vld [vmem:[%s1 + $0x710] sm:$0xff]
      %v387 = vld [vmem:[%s1 + $0x718] sm:$0xff]
      %v388 = vld [vmem:[%s1 + $0x720] sm:$0xff]
      %v389 = vld [vmem:[%s1 + $0x728] sm:$0xff]
      %v390 = vld [vmem:[%s1 + $0x730] sm:$0xff]
      %v391 = vld [vmem:[%s1 + $0x738] sm:$0xff]
      %v392 = vld [vmem:[%s1 + $0x740] sm:$0xff]
      %v393 = vld [vmem:[%s1 + $0x748] sm:$0xff]
      %v394 = vld [vmem:[%s1 + $0x750] sm:$0xff]
      %v395 = vld [vmem:[%s1 + $0x758] sm:$0xff]
      %v396 = vld [vmem:[%s1 + $0x760] sm:$0xff]
      %v397 = vld [vmem:[%s1 + $0x768] sm:$0xff]
      %v398 = vld [vmem:[%s1 + $0x770] sm:$0xff]
      %v399 = vld [vmem:[%s1 + $0x778] sm:$0xff]
      %v400 = vld [vmem:[%s1 + $0x780] sm:$0xff]
      %v401 = vld [vmem:[%s1 + $0x788] sm:$0xff]
      %v402 = vld [vmem:[%s1 + $0x790] sm:$0xff]
      %v403 = vld [vmem:[%s1 + $0x798] sm:$0xff]
      %v404 = vld [vmem:[%s1 + $0x7a0] sm:$0xff]
      %v405 = vld [vmem:[%s1 + $0x7a8] sm:$0xff]
      %v406 = vld [vmem:[%s1 + $0x7b0] sm:$0xff]
      %v407 = vld [vmem:[%s1 + $0x7b8] sm:$0xff]
      %v408 = vld [vmem:[%s1 + $0x7c0] sm:$0xff]
      %v409 = vld [vmem:[%s1 + $0x7c8] sm:$0xff]
      %v410 = vld [vmem:[%s1 + $0x7d0] sm:$0xff]
      %v411 = vld [vmem:[%s1 + $0x7d8] sm:$0xff]
      %v412 = vld [vmem:[%s1 + $0x7e0] sm:$0xff]
      %v413 = vld [vmem:[%s1 + $0x7e8] sm:$0xff]
      %v414 = vld [vmem:[%s1 + $0x7f0] sm:$0xff]
      %v415 = vld [vmem:[%s1 + $0x7f8] sm:$0xff]
      %v432 = vunpack.c.l.b16 %v144
      %v433 = vunpack.c.h.b16 %v144
      %v434 = vunpack.c.l.b16 %v145
      %v435 = vunpack.c.h.b16 %v145
      %v436 = vunpack.c.l.b16 %v146
      %v437 = vunpack.c.h.b16 %v146
      %v438 = vunpack.c.l.b16 %v147
      %v439 = vunpack.c.h.b16 %v147
      %v440 = vunpack.c.l.b16 %v148
      %v441 = vunpack.c.h.b16 %v148
      %v442 = vunpack.c.l.b16 %v149
      %v443 = vunpack.c.h.b16 %v149
      %v444 = vunpack.c.l.b16 %v150
      %v445 = vunpack.c.h.b16 %v150
      %v446 = vunpack.c.l.b16 %v151
      %v447 = vunpack.c.h.b16 %v151
      %v448 = vunpack.c.l.b16 %v152
      %v449 = vunpack.c.h.b16 %v152
      %v450 = vunpack.c.l.b16 %v153
      %v451 = vunpack.c.h.b16 %v153
      %v452 = vunpack.c.l.b16 %v154
      %v453 = vunpack.c.h.b16 %v154
      %v454 = vunpack.c.l.b16 %v155
      %v455 = vunpack.c.h.b16 %v155
      %v456 = vunpack.c.l.b16 %v156
      %v457 = vunpack.c.h.b16 %v156
      %v458 = vunpack.c.l.b16 %v157
      %v459 = vunpack.c.h.b16 %v157
      %v460 = vunpack.c.l.b16 %v158
      %v461 = vunpack.c.h.b16 %v158
      %v462 = vunpack.c.l.b16 %v159
      %v463 = vunpack.c.h.b16 %v159
      %v464 = vpack.c.b16 %v448, %v432
      %v465 = vpack.c.b16 %v449, %v433
      %v466 = vpack.c.b16 %v450, %v434
      %v467 = vpack.c.b16 %v451, %v435
      %v468 = vpack.c.b16 %v452, %v436
      %v469 = vpack.c.b16 %v453, %v437
      %v470 = vpack.c.b16 %v454, %v438
      %v471 = vpack.c.b16 %v455, %v439
      %v472 = vpack.c.b16 %v456, %v440
      %v473 = vpack.c.b16 %v457, %v441
      %v474 = vpack.c.b16 %v458, %v442
      %v475 = vpack.c.b16 %v459, %v443
      %v476 = vpack.c.b16 %v460, %v444
      %v477 = vpack.c.b16 %v461, %v445
      %v478 = vpack.c.b16 %v462, %v446
      %v479 = vpack.c.b16 %v463, %v447
      %v752 = vunpack.c.l.b16 %v160
      %v753 = vunpack.c.h.b16 %v160
      %v754 = vunpack.c.l.b16 %v161
      %v755 = vunpack.c.h.b16 %v161
      %v756 = vunpack.c.l.b16 %v162
      %v757 = vunpack.c.h.b16 %v162
      %v758 = vunpack.c.l.b16 %v163
      %v759 = vunpack.c.h.b16 %v163
      %v760 = vunpack.c.l.b16 %v164
      %v761 = vunpack.c.h.b16 %v164
      %v762 = vunpack.c.l.b16 %v165
      %v763 = vunpack.c.h.b16 %v165
      %v764 = vunpack.c.l.b16 %v166
      %v765 = vunpack.c.h.b16 %v166
      %v766 = vunpack.c.l.b16 %v167
      %v767 = vunpack.c.h.b16 %v167
      %v768 = vunpack.c.l.b16 %v168
      %v769 = vunpack.c.h.b16 %v168
      %v770 = vunpack.c.l.b16 %v169
      %v771 = vunpack.c.h.b16 %v169
      %v772 = vunpack.c.l.b16 %v170
      %v773 = vunpack.c.h.b16 %v170
      %v774 = vunpack.c.l.b16 %v171
      %v775 = vunpack.c.h.b16 %v171
      %v776 = vunpack.c.l.b16 %v172
      %v777 = vunpack.c.h.b16 %v172
      %v778 = vunpack.c.l.b16 %v173
      %v779 = vunpack.c.h.b16 %v173
      %v780 = vunpack.c.l.b16 %v174
      %v781 = vunpack.c.h.b16 %v174
      %v782 = vunpack.c.l.b16 %v175
      %v783 = vunpack.c.h.b16 %v175
      %v784 = vunpack.c.l.b16 %v176
      %v785 = vunpack.c.h.b16 %v176
      %v786 = vunpack.c.l.b16 %v177
      %v787 = vunpack.c.h.b16 %v177
      %v788 = vunpack.c.l.b16 %v178
      %v789 = vunpack.c.h.b16 %v178
      %v790 = vunpack.c.l.b16 %v179
      %v791 = vunpack.c.h.b16 %v179
      %v792 = vunpack.c.l.b16 %v180
      %v793 = vunpack.c.h.b16 %v180
      %v794 = vunpack.c.l.b16 %v181
      %v795 = vunpack.c.h.b16 %v181
      %v796 = vunpack.c.l.b16 %v182
      %v797 = vunpack.c.h.b16 %v182
      %v798 = vunpack.c.l.b16 %v183
      %v799 = vunpack.c.h.b16 %v183
      %v800 = vunpack.c.l.b16 %v184
      %v801 = vunpack.c.h.b16 %v184
      %v802 = vunpack.c.l.b16 %v185
      %v803 = vunpack.c.h.b16 %v185
      %v804 = vunpack.c.l.b16 %v186
      %v805 = vunpack.c.h.b16 %v186
      %v806 = vunpack.c.l.b16 %v187
      %v807 = vunpack.c.h.b16 %v187
      %v808 = vunpack.c.l.b16 %v188
      %v809 = vunpack.c.h.b16 %v188
      %v810 = vunpack.c.l.b16 %v189
      %v811 = vunpack.c.h.b16 %v189
      %v812 = vunpack.c.l.b16 %v190
      %v813 = vunpack.c.h.b16 %v190
      %v814 = vunpack.c.l.b16 %v191
      %v815 = vunpack.c.h.b16 %v191
      %v816 = vunpack.c.l.b16 %v192
      %v817 = vunpack.c.h.b16 %v192
      %v818 = vunpack.c.l.b16 %v193
      %v819 = vunpack.c.h.b16 %v193
      %v820 = vunpack.c.l.b16 %v194
      %v821 = vunpack.c.h.b16 %v194
      %v822 = vunpack.c.l.b16 %v195
      %v823 = vunpack.c.h.b16 %v195
      %v824 = vunpack.c.l.b16 %v196
      %v825 = vunpack.c.h.b16 %v196
      %v826 = vunpack.c.l.b16 %v197
      %v827 = vunpack.c.h.b16 %v197
      %v828 = vunpack.c.l.b16 %v198
      %v829 = vunpack.c.h.b16 %v198
      %v830 = vunpack.c.l.b16 %v199
      %v831 = vunpack.c.h.b16 %v199
      %v832 = vunpack.c.l.b16 %v200
      %v833 = vunpack.c.h.b16 %v200
      %v834 = vunpack.c.l.b16 %v201
      %v835 = vunpack.c.h.b16 %v201
      %v836 = vunpack.c.l.b16 %v202
      %v837 = vunpack.c.h.b16 %v202
      %v838 = vunpack.c.l.b16 %v203
      %v839 = vunpack.c.h.b16 %v203
      %v840 = vunpack.c.l.b16 %v204
      %v841 = vunpack.c.h.b16 %v204
      %v842 = vunpack.c.l.b16 %v205
      %v843 = vunpack.c.h.b16 %v205
      %v844 = vunpack.c.l.b16 %v206
      %v845 = vunpack.c.h.b16 %v206
      %v846 = vunpack.c.l.b16 %v207
      %v847 = vunpack.c.h.b16 %v207
      %v848 = vunpack.c.l.b16 %v208
      %v849 = vunpack.c.h.b16 %v208
      %v850 = vunpack.c.l.b16 %v209
      %v851 = vunpack.c.h.b16 %v209
      %v852 = vunpack.c.l.b16 %v210
      %v853 = vunpack.c.h.b16 %v210
      %v854 = vunpack.c.l.b16 %v211
      %v855 = vunpack.c.h.b16 %v211
      %v856 = vunpack.c.l.b16 %v212
      %v857 = vunpack.c.h.b16 %v212
      %v858 = vunpack.c.l.b16 %v213
      %v859 = vunpack.c.h.b16 %v213
      %v860 = vunpack.c.l.b16 %v214
      %v861 = vunpack.c.h.b16 %v214
      %v862 = vunpack.c.l.b16 %v215
      %v863 = vunpack.c.h.b16 %v215
      %v864 = vunpack.c.l.b16 %v216
      %v865 = vunpack.c.h.b16 %v216
      %v866 = vunpack.c.l.b16 %v217
      %v867 = vunpack.c.h.b16 %v217
      %v868 = vunpack.c.l.b16 %v218
      %v869 = vunpack.c.h.b16 %v218
      %v870 = vunpack.c.l.b16 %v219
      %v871 = vunpack.c.h.b16 %v219
      %v872 = vunpack.c.l.b16 %v220
      %v873 = vunpack.c.h.b16 %v220
      %v874 = vunpack.c.l.b16 %v221
      %v875 = vunpack.c.h.b16 %v221
      %v876 = vunpack.c.l.b16 %v222
      %v877 = vunpack.c.h.b16 %v222
      %v878 = vunpack.c.l.b16 %v223
      %v879 = vunpack.c.h.b16 %v223
      %v880 = vunpack.c.l.b16 %v224
      %v881 = vunpack.c.h.b16 %v224
      %v882 = vunpack.c.l.b16 %v225
      %v883 = vunpack.c.h.b16 %v225
      %v884 = vunpack.c.l.b16 %v226
      %v885 = vunpack.c.h.b16 %v226
      %v886 = vunpack.c.l.b16 %v227
      %v887 = vunpack.c.h.b16 %v227
      %v888 = vunpack.c.l.b16 %v228
      %v889 = vunpack.c.h.b16 %v228
      %v890 = vunpack.c.l.b16 %v229
      %v891 = vunpack.c.h.b16 %v229
      %v892 = vunpack.c.l.b16 %v230
      %v893 = vunpack.c.h.b16 %v230
      %v894 = vunpack.c.l.b16 %v231
      %v895 = vunpack.c.h.b16 %v231
      %v896 = vunpack.c.l.b16 %v232
      %v897 = vunpack.c.h.b16 %v232
      %v898 = vunpack.c.l.b16 %v233
      %v899 = vunpack.c.h.b16 %v233
      %v900 = vunpack.c.l.b16 %v234
      %v901 = vunpack.c.h.b16 %v234
      %v902 = vunpack.c.l.b16 %v235
      %v903 = vunpack.c.h.b16 %v235
      %v904 = vunpack.c.l.b16 %v236
      %v905 = vunpack.c.h.b16 %v236
      %v906 = vunpack.c.l.b16 %v237
      %v907 = vunpack.c.h.b16 %v237
      %v908 = vunpack.c.l.b16 %v238
      %v909 = vunpack.c.h.b16 %v238
      %v910 = vunpack.c.l.b16 %v239
      %v911 = vunpack.c.h.b16 %v239
      %v912 = vunpack.c.l.b16 %v240
      %v913 = vunpack.c.h.b16 %v240
      %v914 = vunpack.c.l.b16 %v241
      %v915 = vunpack.c.h.b16 %v241
      %v916 = vunpack.c.l.b16 %v242
      %v917 = vunpack.c.h.b16 %v242
      %v918 = vunpack.c.l.b16 %v243
      %v919 = vunpack.c.h.b16 %v243
      %v920 = vunpack.c.l.b16 %v244
      %v921 = vunpack.c.h.b16 %v244
      %v922 = vunpack.c.l.b16 %v245
      %v923 = vunpack.c.h.b16 %v245
      %v924 = vunpack.c.l.b16 %v246
      %v925 = vunpack.c.h.b16 %v246
      %v926 = vunpack.c.l.b16 %v247
      %v927 = vunpack.c.h.b16 %v247
      %v928 = vunpack.c.l.b16 %v248
      %v929 = vunpack.c.h.b16 %v248
      %v930 = vunpack.c.l.b16 %v249
      %v931 = vunpack.c.h.b16 %v249
      %v932 = vunpack.c.l.b16 %v250
      %v933 = vunpack.c.h.b16 %v250
      %v934 = vunpack.c.l.b16 %v251
      %v935 = vunpack.c.h.b16 %v251
      %v936 = vunpack.c.l.b16 %v252
      %v937 = vunpack.c.h.b16 %v252
      %v938 = vunpack.c.l.b16 %v253
      %v939 = vunpack.c.h.b16 %v253
      %v940 = vunpack.c.l.b16 %v254
      %v941 = vunpack.c.h.b16 %v254
      %v942 = vunpack.c.l.b16 %v255
      %v943 = vunpack.c.h.b16 %v255
      %v944 = vunpack.c.l.b16 %v256
      %v945 = vunpack.c.h.b16 %v256
      %v946 = vunpack.c.l.b16 %v257
      %v947 = vunpack.c.h.b16 %v257
      %v948 = vunpack.c.l.b16 %v258
      %v949 = vunpack.c.h.b16 %v258
      %v950 = vunpack.c.l.b16 %v259
      %v951 = vunpack.c.h.b16 %v259
      %v952 = vunpack.c.l.b16 %v260
      %v953 = vunpack.c.h.b16 %v260
      %v954 = vunpack.c.l.b16 %v261
      %v955 = vunpack.c.h.b16 %v261
      %v956 = vunpack.c.l.b16 %v262
      %v957 = vunpack.c.h.b16 %v262
      %v958 = vunpack.c.l.b16 %v263
      %v959 = vunpack.c.h.b16 %v263
      %v960 = vunpack.c.l.b16 %v264
      %v961 = vunpack.c.h.b16 %v264
      %v962 = vunpack.c.l.b16 %v265
      %v963 = vunpack.c.h.b16 %v265
      %v964 = vunpack.c.l.b16 %v266
      %v965 = vunpack.c.h.b16 %v266
      %v966 = vunpack.c.l.b16 %v267
      %v967 = vunpack.c.h.b16 %v267
      %v968 = vunpack.c.l.b16 %v268
      %v969 = vunpack.c.h.b16 %v268
      %v970 = vunpack.c.l.b16 %v269
      %v971 = vunpack.c.h.b16 %v269
      %v972 = vunpack.c.l.b16 %v270
      %v973 = vunpack.c.h.b16 %v270
      %v974 = vunpack.c.l.b16 %v271
      %v975 = vunpack.c.h.b16 %v271
      %v976 = vunpack.c.l.b16 %v272
      %v977 = vunpack.c.h.b16 %v272
      %v978 = vunpack.c.l.b16 %v273
      %v979 = vunpack.c.h.b16 %v273
      %v980 = vunpack.c.l.b16 %v274
      %v981 = vunpack.c.h.b16 %v274
      %v982 = vunpack.c.l.b16 %v275
      %v983 = vunpack.c.h.b16 %v275
      %v984 = vunpack.c.l.b16 %v276
      %v985 = vunpack.c.h.b16 %v276
      %v986 = vunpack.c.l.b16 %v277
      %v987 = vunpack.c.h.b16 %v277
      %v988 = vunpack.c.l.b16 %v278
      %v989 = vunpack.c.h.b16 %v278
      %v990 = vunpack.c.l.b16 %v279
      %v991 = vunpack.c.h.b16 %v279
      %v992 = vunpack.c.l.b16 %v280
      %v993 = vunpack.c.h.b16 %v280
      %v994 = vunpack.c.l.b16 %v281
      %v995 = vunpack.c.h.b16 %v281
      %v996 = vunpack.c.l.b16 %v282
      %v997 = vunpack.c.h.b16 %v282
      %v998 = vunpack.c.l.b16 %v283
      %v999 = vunpack.c.h.b16 %v283
      %v1000 = vunpack.c.l.b16 %v284
      %v1001 = vunpack.c.h.b16 %v284
      %v1002 = vunpack.c.l.b16 %v285
      %v1003 = vunpack.c.h.b16 %v285
      %v1004 = vunpack.c.l.b16 %v286
      %v1005 = vunpack.c.h.b16 %v286
      %v1006 = vunpack.c.l.b16 %v287
      %v1007 = vunpack.c.h.b16 %v287
      %v1008 = vunpack.c.l.b16 %v288
      %v1009 = vunpack.c.h.b16 %v288
      %v1010 = vunpack.c.l.b16 %v289
      %v1011 = vunpack.c.h.b16 %v289
      %v1012 = vunpack.c.l.b16 %v290
      %v1013 = vunpack.c.h.b16 %v290
      %v1014 = vunpack.c.l.b16 %v291
      %v1015 = vunpack.c.h.b16 %v291
      %v1016 = vunpack.c.l.b16 %v292
      %v1017 = vunpack.c.h.b16 %v292
      %v1018 = vunpack.c.l.b16 %v293
      %v1019 = vunpack.c.h.b16 %v293
      %v1020 = vunpack.c.l.b16 %v294
      %v1021 = vunpack.c.h.b16 %v294
      %v1022 = vunpack.c.l.b16 %v295
      %v1023 = vunpack.c.h.b16 %v295
      %v1024 = vunpack.c.l.b16 %v296
      %v1025 = vunpack.c.h.b16 %v296
      %v1026 = vunpack.c.l.b16 %v297
      %v1027 = vunpack.c.h.b16 %v297
      %v1028 = vunpack.c.l.b16 %v298
      %v1029 = vunpack.c.h.b16 %v298
      %v1030 = vunpack.c.l.b16 %v299
      %v1031 = vunpack.c.h.b16 %v299
      %v1032 = vunpack.c.l.b16 %v300
      %v1033 = vunpack.c.h.b16 %v300
      %v1034 = vunpack.c.l.b16 %v301
      %v1035 = vunpack.c.h.b16 %v301
      %v1036 = vunpack.c.l.b16 %v302
      %v1037 = vunpack.c.h.b16 %v302
      %v1038 = vunpack.c.l.b16 %v303
      %v1039 = vunpack.c.h.b16 %v303
      %v1040 = vunpack.c.l.b16 %v304
      %v1041 = vunpack.c.h.b16 %v304
      %v1042 = vunpack.c.l.b16 %v305
      %v1043 = vunpack.c.h.b16 %v305
      %v1044 = vunpack.c.l.b16 %v306
      %v1045 = vunpack.c.h.b16 %v306
      %v1046 = vunpack.c.l.b16 %v307
      %v1047 = vunpack.c.h.b16 %v307
      %v1048 = vunpack.c.l.b16 %v308
      %v1049 = vunpack.c.h.b16 %v308
      %v1050 = vunpack.c.l.b16 %v309
      %v1051 = vunpack.c.h.b16 %v309
      %v1052 = vunpack.c.l.b16 %v310
      %v1053 = vunpack.c.h.b16 %v310
      %v1054 = vunpack.c.l.b16 %v311
      %v1055 = vunpack.c.h.b16 %v311
      %v1056 = vunpack.c.l.b16 %v312
      %v1057 = vunpack.c.h.b16 %v312
      %v1058 = vunpack.c.l.b16 %v313
      %v1059 = vunpack.c.h.b16 %v313
      %v1060 = vunpack.c.l.b16 %v314
      %v1061 = vunpack.c.h.b16 %v314
      %v1062 = vunpack.c.l.b16 %v315
      %v1063 = vunpack.c.h.b16 %v315
      %v1064 = vunpack.c.l.b16 %v316
      %v1065 = vunpack.c.h.b16 %v316
      %v1066 = vunpack.c.l.b16 %v317
      %v1067 = vunpack.c.h.b16 %v317
      %v1068 = vunpack.c.l.b16 %v318
      %v1069 = vunpack.c.h.b16 %v318
      %v1070 = vunpack.c.l.b16 %v319
      %v1071 = vunpack.c.h.b16 %v319
      %v1072 = vunpack.c.l.b16 %v320
      %v1073 = vunpack.c.h.b16 %v320
      %v1074 = vunpack.c.l.b16 %v321
      %v1075 = vunpack.c.h.b16 %v321
      %v1076 = vunpack.c.l.b16 %v322
      %v1077 = vunpack.c.h.b16 %v322
      %v1078 = vunpack.c.l.b16 %v323
      %v1079 = vunpack.c.h.b16 %v323
      %v1080 = vunpack.c.l.b16 %v324
      %v1081 = vunpack.c.h.b16 %v324
      %v1082 = vunpack.c.l.b16 %v325
      %v1083 = vunpack.c.h.b16 %v325
      %v1084 = vunpack.c.l.b16 %v326
      %v1085 = vunpack.c.h.b16 %v326
      %v1086 = vunpack.c.l.b16 %v327
      %v1087 = vunpack.c.h.b16 %v327
      %v1088 = vunpack.c.l.b16 %v328
      %v1089 = vunpack.c.h.b16 %v328
      %v1090 = vunpack.c.l.b16 %v329
      %v1091 = vunpack.c.h.b16 %v329
      %v1092 = vunpack.c.l.b16 %v330
      %v1093 = vunpack.c.h.b16 %v330
      %v1094 = vunpack.c.l.b16 %v331
      %v1095 = vunpack.c.h.b16 %v331
      %v1096 = vunpack.c.l.b16 %v332
      %v1097 = vunpack.c.h.b16 %v332
      %v1098 = vunpack.c.l.b16 %v333
      %v1099 = vunpack.c.h.b16 %v333
      %v1100 = vunpack.c.l.b16 %v334
      %v1101 = vunpack.c.h.b16 %v334
      %v1102 = vunpack.c.l.b16 %v335
      %v1103 = vunpack.c.h.b16 %v335
      %v1104 = vunpack.c.l.b16 %v336
      %v1105 = vunpack.c.h.b16 %v336
      %v1106 = vunpack.c.l.b16 %v337
      %v1107 = vunpack.c.h.b16 %v337
      %v1108 = vunpack.c.l.b16 %v338
      %v1109 = vunpack.c.h.b16 %v338
      %v1110 = vunpack.c.l.b16 %v339
      %v1111 = vunpack.c.h.b16 %v339
      %v1112 = vunpack.c.l.b16 %v340
      %v1113 = vunpack.c.h.b16 %v340
      %v1114 = vunpack.c.l.b16 %v341
      %v1115 = vunpack.c.h.b16 %v341
      %v1116 = vunpack.c.l.b16 %v342
      %v1117 = vunpack.c.h.b16 %v342
      %v1118 = vunpack.c.l.b16 %v343
      %v1119 = vunpack.c.h.b16 %v343
      %v1120 = vunpack.c.l.b16 %v344
      %v1121 = vunpack.c.h.b16 %v344
      %v1122 = vunpack.c.l.b16 %v345
      %v1123 = vunpack.c.h.b16 %v345
      %v1124 = vunpack.c.l.b16 %v346
      %v1125 = vunpack.c.h.b16 %v346
      %v1126 = vunpack.c.l.b16 %v347
      %v1127 = vunpack.c.h.b16 %v347
      %v1128 = vunpack.c.l.b16 %v348
      %v1129 = vunpack.c.h.b16 %v348
      %v1130 = vunpack.c.l.b16 %v349
      %v1131 = vunpack.c.h.b16 %v349
      %v1132 = vunpack.c.l.b16 %v350
      %v1133 = vunpack.c.h.b16 %v350
      %v1134 = vunpack.c.l.b16 %v351
      %v1135 = vunpack.c.h.b16 %v351
      %v1136 = vunpack.c.l.b16 %v352
      %v1137 = vunpack.c.h.b16 %v352
      %v1138 = vunpack.c.l.b16 %v353
      %v1139 = vunpack.c.h.b16 %v353
      %v1140 = vunpack.c.l.b16 %v354
      %v1141 = vunpack.c.h.b16 %v354
      %v1142 = vunpack.c.l.b16 %v355
      %v1143 = vunpack.c.h.b16 %v355
      %v1144 = vunpack.c.l.b16 %v356
      %v1145 = vunpack.c.h.b16 %v356
      %v1146 = vunpack.c.l.b16 %v357
      %v1147 = vunpack.c.h.b16 %v357
      %v1148 = vunpack.c.l.b16 %v358
      %v1149 = vunpack.c.h.b16 %v358
      %v1150 = vunpack.c.l.b16 %v359
      %v1151 = vunpack.c.h.b16 %v359
      %v1152 = vunpack.c.l.b16 %v360
      %v1153 = vunpack.c.h.b16 %v360
      %v1154 = vunpack.c.l.b16 %v361
      %v1155 = vunpack.c.h.b16 %v361
      %v1156 = vunpack.c.l.b16 %v362
      %v1157 = vunpack.c.h.b16 %v362
      %v1158 = vunpack.c.l.b16 %v363
      %v1159 = vunpack.c.h.b16 %v363
      %v1160 = vunpack.c.l.b16 %v364
      %v1161 = vunpack.c.h.b16 %v364
      %v1162 = vunpack.c.l.b16 %v365
      %v1163 = vunpack.c.h.b16 %v365
      %v1164 = vunpack.c.l.b16 %v366
      %v1165 = vunpack.c.h.b16 %v366
      %v1166 = vunpack.c.l.b16 %v367
      %v1167 = vunpack.c.h.b16 %v367
      %v1168 = vunpack.c.l.b16 %v368
      %v1169 = vunpack.c.h.b16 %v368
      %v1170 = vunpack.c.l.b16 %v369
      %v1171 = vunpack.c.h.b16 %v369
      %v1172 = vunpack.c.l.b16 %v370
      %v1173 = vunpack.c.h.b16 %v370
      %v1174 = vunpack.c.l.b16 %v371
      %v1175 = vunpack.c.h.b16 %v371
      %v1176 = vunpack.c.l.b16 %v372
      %v1177 = vunpack.c.h.b16 %v372
      %v1178 = vunpack.c.l.b16 %v373
      %v1179 = vunpack.c.h.b16 %v373
      %v1180 = vunpack.c.l.b16 %v374
      %v1181 = vunpack.c.h.b16 %v374
      %v1182 = vunpack.c.l.b16 %v375
      %v1183 = vunpack.c.h.b16 %v375
      %v1184 = vunpack.c.l.b16 %v376
      %v1185 = vunpack.c.h.b16 %v376
      %v1186 = vunpack.c.l.b16 %v377
      %v1187 = vunpack.c.h.b16 %v377
      %v1188 = vunpack.c.l.b16 %v378
      %v1189 = vunpack.c.h.b16 %v378
      %v1190 = vunpack.c.l.b16 %v379
      %v1191 = vunpack.c.h.b16 %v379
      %v1192 = vunpack.c.l.b16 %v380
      %v1193 = vunpack.c.h.b16 %v380
      %v1194 = vunpack.c.l.b16 %v381
      %v1195 = vunpack.c.h.b16 %v381
      %v1196 = vunpack.c.l.b16 %v382
      %v1197 = vunpack.c.h.b16 %v382
      %v1198 = vunpack.c.l.b16 %v383
      %v1199 = vunpack.c.h.b16 %v383
      %v1200 = vunpack.c.l.b16 %v384
      %v1201 = vunpack.c.h.b16 %v384
      %v1202 = vunpack.c.l.b16 %v385
      %v1203 = vunpack.c.h.b16 %v385
      %v1204 = vunpack.c.l.b16 %v386
      %v1205 = vunpack.c.h.b16 %v386
      %v1206 = vunpack.c.l.b16 %v387
      %v1207 = vunpack.c.h.b16 %v387
      %v1208 = vunpack.c.l.b16 %v388
      %v1209 = vunpack.c.h.b16 %v388
      %v1210 = vunpack.c.l.b16 %v389
      %v1211 = vunpack.c.h.b16 %v389
      %v1212 = vunpack.c.l.b16 %v390
      %v1213 = vunpack.c.h.b16 %v390
      %v1214 = vunpack.c.l.b16 %v391
      %v1215 = vunpack.c.h.b16 %v391
      %v1216 = vunpack.c.l.b16 %v392
      %v1217 = vunpack.c.h.b16 %v392
      %v1218 = vunpack.c.l.b16 %v393
      %v1219 = vunpack.c.h.b16 %v393
      %v1220 = vunpack.c.l.b16 %v394
      %v1221 = vunpack.c.h.b16 %v394
      %v1222 = vunpack.c.l.b16 %v395
      %v1223 = vunpack.c.h.b16 %v395
      %v1224 = vunpack.c.l.b16 %v396
      %v1225 = vunpack.c.h.b16 %v396
      %v1226 = vunpack.c.l.b16 %v397
      %v1227 = vunpack.c.h.b16 %v397
      %v1228 = vunpack.c.l.b16 %v398
      %v1229 = vunpack.c.h.b16 %v398
      %v1230 = vunpack.c.l.b16 %v399
      %v1231 = vunpack.c.h.b16 %v399
      %v1232 = vunpack.c.l.b16 %v400
      %v1233 = vunpack.c.h.b16 %v400
      %v1234 = vunpack.c.l.b16 %v401
      %v1235 = vunpack.c.h.b16 %v401
      %v1236 = vunpack.c.l.b16 %v402
      %v1237 = vunpack.c.h.b16 %v402
      %v1238 = vunpack.c.l.b16 %v403
      %v1239 = vunpack.c.h.b16 %v403
      %v1240 = vunpack.c.l.b16 %v404
      %v1241 = vunpack.c.h.b16 %v404
      %v1242 = vunpack.c.l.b16 %v405
      %v1243 = vunpack.c.h.b16 %v405
      %v1244 = vunpack.c.l.b16 %v406
      %v1245 = vunpack.c.h.b16 %v406
      %v1246 = vunpack.c.l.b16 %v407
      %v1247 = vunpack.c.h.b16 %v407
      %v1248 = vunpack.c.l.b16 %v408
      %v1249 = vunpack.c.h.b16 %v408
      %v1250 = vunpack.c.l.b16 %v409
      %v1251 = vunpack.c.h.b16 %v409
      %v1252 = vunpack.c.l.b16 %v410
      %v1253 = vunpack.c.h.b16 %v410
      %v1254 = vunpack.c.l.b16 %v411
      %v1255 = vunpack.c.h.b16 %v411
      %v1256 = vunpack.c.l.b16 %v412
      %v1257 = vunpack.c.h.b16 %v412
      %v1258 = vunpack.c.l.b16 %v413
      %v1259 = vunpack.c.h.b16 %v413
      %v1260 = vunpack.c.l.b16 %v414
      %v1261 = vunpack.c.h.b16 %v414
      %v1262 = vunpack.c.l.b16 %v415
      %v1263 = vunpack.c.h.b16 %v415
      %v1264 = vpack.c.b16 %v754, %v752
      %v1265 = vpack.c.b16 %v755, %v753
      %v1266 = vpack.c.b16 %v758, %v756
      %v1267 = vpack.c.b16 %v759, %v757
      %v1268 = vpack.c.b16 %v762, %v760
      %v1269 = vpack.c.b16 %v763, %v761
      %v1270 = vpack.c.b16 %v766, %v764
      %v1271 = vpack.c.b16 %v767, %v765
      %v1272 = vpack.c.b16 %v770, %v768
      %v1273 = vpack.c.b16 %v771, %v769
      %v1274 = vpack.c.b16 %v774, %v772
      %v1275 = vpack.c.b16 %v775, %v773
      %v1276 = vpack.c.b16 %v778, %v776
      %v1277 = vpack.c.b16 %v779, %v777
      %v1278 = vpack.c.b16 %v782, %v780
      %v1279 = vpack.c.b16 %v783, %v781
      %v1280 = vpack.c.b16 %v786, %v784
      %v1281 = vpack.c.b16 %v787, %v785
      %v1282 = vpack.c.b16 %v790, %v788
      %v1283 = vpack.c.b16 %v791, %v789
      %v1284 = vpack.c.b16 %v794, %v792
      %v1285 = vpack.c.b16 %v795, %v793
      %v1286 = vpack.c.b16 %v798, %v796
      %v1287 = vpack.c.b16 %v799, %v797
      %v1288 = vpack.c.b16 %v802, %v800
      %v1289 = vpack.c.b16 %v803, %v801
      %v1290 = vpack.c.b16 %v806, %v804
      %v1291 = vpack.c.b16 %v807, %v805
      %v1292 = vpack.c.b16 %v810, %v808
      %v1293 = vpack.c.b16 %v811, %v809
      %v1294 = vpack.c.b16 %v814, %v812
      %v1295 = vpack.c.b16 %v815, %v813
      %v1296 = vpack.c.b16 %v818, %v816
      %v1297 = vpack.c.b16 %v819, %v817
      %v1298 = vpack.c.b16 %v822, %v820
      %v1299 = vpack.c.b16 %v823, %v821
      %v1300 = vpack.c.b16 %v826, %v824
      %v1301 = vpack.c.b16 %v827, %v825
      %v1302 = vpack.c.b16 %v830, %v828
      %v1303 = vpack.c.b16 %v831, %v829
      %v1304 = vpack.c.b16 %v834, %v832
      %v1305 = vpack.c.b16 %v835, %v833
      %v1306 = vpack.c.b16 %v838, %v836
      %v1307 = vpack.c.b16 %v839, %v837
      %v1308 = vpack.c.b16 %v842, %v840
      %v1309 = vpack.c.b16 %v843, %v841
      %v1310 = vpack.c.b16 %v846, %v844
      %v1311 = vpack.c.b16 %v847, %v845
      %v1312 = vpack.c.b16 %v850, %v848
      %v1313 = vpack.c.b16 %v851, %v849
      %v1314 = vpack.c.b16 %v854, %v852
      %v1315 = vpack.c.b16 %v855, %v853
      %v1316 = vpack.c.b16 %v858, %v856
      %v1317 = vpack.c.b16 %v859, %v857
      %v1318 = vpack.c.b16 %v862, %v860
      %v1319 = vpack.c.b16 %v863, %v861
      %v1320 = vpack.c.b16 %v866, %v864
      %v1321 = vpack.c.b16 %v867, %v865
      %v1322 = vpack.c.b16 %v870, %v868
      %v1323 = vpack.c.b16 %v871, %v869
      %v1324 = vpack.c.b16 %v874, %v872
      %v1325 = vpack.c.b16 %v875, %v873
      %v1326 = vpack.c.b16 %v878, %v876
      %v1327 = vpack.c.b16 %v879, %v877
      %v1328 = vpack.c.b16 %v882, %v880
      %v1329 = vpack.c.b16 %v883, %v881
      %v1330 = vpack.c.b16 %v886, %v884
      %v1331 = vpack.c.b16 %v887, %v885
      %v1332 = vpack.c.b16 %v890, %v888
      %v1333 = vpack.c.b16 %v891, %v889
      %v1334 = vpack.c.b16 %v894, %v892
      %v1335 = vpack.c.b16 %v895, %v893
      %v1336 = vpack.c.b16 %v898, %v896
      %v1337 = vpack.c.b16 %v899, %v897
      %v1338 = vpack.c.b16 %v902, %v900
      %v1339 = vpack.c.b16 %v903, %v901
      %v1340 = vpack.c.b16 %v906, %v904
      %v1341 = vpack.c.b16 %v907, %v905
      %v1342 = vpack.c.b16 %v910, %v908
      %v1343 = vpack.c.b16 %v911, %v909
      %v1344 = vpack.c.b16 %v914, %v912
      %v1345 = vpack.c.b16 %v915, %v913
      %v1346 = vpack.c.b16 %v918, %v916
      %v1347 = vpack.c.b16 %v919, %v917
      %v1348 = vpack.c.b16 %v922, %v920
      %v1349 = vpack.c.b16 %v923, %v921
      %v1350 = vpack.c.b16 %v926, %v924
      %v1351 = vpack.c.b16 %v927, %v925
      %v1352 = vpack.c.b16 %v930, %v928
      %v1353 = vpack.c.b16 %v931, %v929
      %v1354 = vpack.c.b16 %v934, %v932
      %v1355 = vpack.c.b16 %v935, %v933
      %v1356 = vpack.c.b16 %v938, %v936
      %v1357 = vpack.c.b16 %v939, %v937
      %v1358 = vpack.c.b16 %v942, %v940
      %v1359 = vpack.c.b16 %v943, %v941
      %v1360 = vpack.c.b16 %v946, %v944
      %v1361 = vpack.c.b16 %v947, %v945
      %v1362 = vpack.c.b16 %v950, %v948
      %v1363 = vpack.c.b16 %v951, %v949
      %v1364 = vpack.c.b16 %v954, %v952
      %v1365 = vpack.c.b16 %v955, %v953
      %v1366 = vpack.c.b16 %v958, %v956
      %v1367 = vpack.c.b16 %v959, %v957
      %v1368 = vpack.c.b16 %v962, %v960
      %v1369 = vpack.c.b16 %v963, %v961
      %v1370 = vpack.c.b16 %v966, %v964
      %v1371 = vpack.c.b16 %v967, %v965
      %v1372 = vpack.c.b16 %v970, %v968
      %v1373 = vpack.c.b16 %v971, %v969
      %v1374 = vpack.c.b16 %v974, %v972
      %v1375 = vpack.c.b16 %v975, %v973
      %v1376 = vpack.c.b16 %v978, %v976
      %v1377 = vpack.c.b16 %v979, %v977
      %v1378 = vpack.c.b16 %v982, %v980
      %v1379 = vpack.c.b16 %v983, %v981
      %v1380 = vpack.c.b16 %v986, %v984
      %v1381 = vpack.c.b16 %v987, %v985
      %v1382 = vpack.c.b16 %v990, %v988
      %v1383 = vpack.c.b16 %v991, %v989
      %v1384 = vpack.c.b16 %v994, %v992
      %v1385 = vpack.c.b16 %v995, %v993
      %v1386 = vpack.c.b16 %v998, %v996
      %v1387 = vpack.c.b16 %v999, %v997
      %v1388 = vpack.c.b16 %v1002, %v1000
      %v1389 = vpack.c.b16 %v1003, %v1001
      %v1390 = vpack.c.b16 %v1006, %v1004
      %v1391 = vpack.c.b16 %v1007, %v1005
      %v1392 = vpack.c.b16 %v1010, %v1008
      %v1393 = vpack.c.b16 %v1011, %v1009
      %v1394 = vpack.c.b16 %v1014, %v1012
      %v1395 = vpack.c.b16 %v1015, %v1013
      %v1396 = vpack.c.b16 %v1018, %v1016
      %v1397 = vpack.c.b16 %v1019, %v1017
      %v1398 = vpack.c.b16 %v1022, %v1020
      %v1399 = vpack.c.b16 %v1023, %v1021
      %v1400 = vpack.c.b16 %v1026, %v1024
      %v1401 = vpack.c.b16 %v1027, %v1025
      %v1402 = vpack.c.b16 %v1030, %v1028
      %v1403 = vpack.c.b16 %v1031, %v1029
      %v1404 = vpack.c.b16 %v1034, %v1032
      %v1405 = vpack.c.b16 %v1035, %v1033
      %v1406 = vpack.c.b16 %v1038, %v1036
      %v1407 = vpack.c.b16 %v1039, %v1037
      %v1408 = vpack.c.b16 %v1042, %v1040
      %v1409 = vpack.c.b16 %v1043, %v1041
      %v1410 = vpack.c.b16 %v1046, %v1044
      %v1411 = vpack.c.b16 %v1047, %v1045
      %v1412 = vpack.c.b16 %v1050, %v1048
      %v1413 = vpack.c.b16 %v1051, %v1049
      %v1414 = vpack.c.b16 %v1054, %v1052
      %v1415 = vpack.c.b16 %v1055, %v1053
      %v1416 = vpack.c.b16 %v1058, %v1056
      %v1417 = vpack.c.b16 %v1059, %v1057
      %v1418 = vpack.c.b16 %v1062, %v1060
      %v1419 = vpack.c.b16 %v1063, %v1061
      %v1420 = vpack.c.b16 %v1066, %v1064
      %v1421 = vpack.c.b16 %v1067, %v1065
      %v1422 = vpack.c.b16 %v1070, %v1068
      %v1423 = vpack.c.b16 %v1071, %v1069
      %v1424 = vpack.c.b16 %v1074, %v1072
      %v1425 = vpack.c.b16 %v1075, %v1073
      %v1426 = vpack.c.b16 %v1078, %v1076
      %v1427 = vpack.c.b16 %v1079, %v1077
      %v1428 = vpack.c.b16 %v1082, %v1080
      %v1429 = vpack.c.b16 %v1083, %v1081
      %v1430 = vpack.c.b16 %v1086, %v1084
      %v1431 = vpack.c.b16 %v1087, %v1085
      %v1432 = vpack.c.b16 %v1090, %v1088
      %v1433 = vpack.c.b16 %v1091, %v1089
      %v1434 = vpack.c.b16 %v1094, %v1092
      %v1435 = vpack.c.b16 %v1095, %v1093
      %v1436 = vpack.c.b16 %v1098, %v1096
      %v1437 = vpack.c.b16 %v1099, %v1097
      %v1438 = vpack.c.b16 %v1102, %v1100
      %v1439 = vpack.c.b16 %v1103, %v1101
      %v1440 = vpack.c.b16 %v1106, %v1104
      %v1441 = vpack.c.b16 %v1107, %v1105
      %v1442 = vpack.c.b16 %v1110, %v1108
      %v1443 = vpack.c.b16 %v1111, %v1109
      %v1444 = vpack.c.b16 %v1114, %v1112
      %v1445 = vpack.c.b16 %v1115, %v1113
      %v1446 = vpack.c.b16 %v1118, %v1116
      %v1447 = vpack.c.b16 %v1119, %v1117
      %v1448 = vpack.c.b16 %v1122, %v1120
      %v1449 = vpack.c.b16 %v1123, %v1121
      %v1450 = vpack.c.b16 %v1126, %v1124
      %v1451 = vpack.c.b16 %v1127, %v1125
      %v1452 = vpack.c.b16 %v1130, %v1128
      %v1453 = vpack.c.b16 %v1131, %v1129
      %v1454 = vpack.c.b16 %v1134, %v1132
      %v1455 = vpack.c.b16 %v1135, %v1133
      %v1456 = vpack.c.b16 %v1138, %v1136
      %v1457 = vpack.c.b16 %v1139, %v1137
      %v1458 = vpack.c.b16 %v1142, %v1140
      %v1459 = vpack.c.b16 %v1143, %v1141
      %v1460 = vpack.c.b16 %v1146, %v1144
      %v1461 = vpack.c.b16 %v1147, %v1145
      %v1462 = vpack.c.b16 %v1150, %v1148
      %v1463 = vpack.c.b16 %v1151, %v1149
      %v1464 = vpack.c.b16 %v1154, %v1152
      %v1465 = vpack.c.b16 %v1155, %v1153
      %v1466 = vpack.c.b16 %v1158, %v1156
      %v1467 = vpack.c.b16 %v1159, %v1157
      %v1468 = vpack.c.b16 %v1162, %v1160
      %v1469 = vpack.c.b16 %v1163, %v1161
      %v1470 = vpack.c.b16 %v1166, %v1164
      %v1471 = vpack.c.b16 %v1167, %v1165
      %v1472 = vpack.c.b16 %v1170, %v1168
      %v1473 = vpack.c.b16 %v1171, %v1169
      %v1474 = vpack.c.b16 %v1174, %v1172
      %v1475 = vpack.c.b16 %v1175, %v1173
      %v1476 = vpack.c.b16 %v1178, %v1176
      %v1477 = vpack.c.b16 %v1179, %v1177
      %v1478 = vpack.c.b16 %v1182, %v1180
      %v1479 = vpack.c.b16 %v1183, %v1181
      %v1480 = vpack.c.b16 %v1186, %v1184
      %v1481 = vpack.c.b16 %v1187, %v1185
      %v1482 = vpack.c.b16 %v1190, %v1188
      %v1483 = vpack.c.b16 %v1191, %v1189
      %v1484 = vpack.c.b16 %v1194, %v1192
      %v1485 = vpack.c.b16 %v1195, %v1193
      %v1486 = vpack.c.b16 %v1198, %v1196
      %v1487 = vpack.c.b16 %v1199, %v1197
      %v1488 = vpack.c.b16 %v1202, %v1200
      %v1489 = vpack.c.b16 %v1203, %v1201
      %v1490 = vpack.c.b16 %v1206, %v1204
      %v1491 = vpack.c.b16 %v1207, %v1205
      %v1492 = vpack.c.b16 %v1210, %v1208
      %v1493 = vpack.c.b16 %v1211, %v1209
      %v1494 = vpack.c.b16 %v1214, %v1212
      %v1495 = vpack.c.b16 %v1215, %v1213
      %v1496 = vpack.c.b16 %v1218, %v1216
      %v1497 = vpack.c.b16 %v1219, %v1217
      %v1498 = vpack.c.b16 %v1222, %v1220
      %v1499 = vpack.c.b16 %v1223, %v1221
      %v1500 = vpack.c.b16 %v1226, %v1224
      %v1501 = vpack.c.b16 %v1227, %v1225
      %v1502 = vpack.c.b16 %v1230, %v1228
      %v1503 = vpack.c.b16 %v1231, %v1229
      %v1504 = vpack.c.b16 %v1234, %v1232
      %v1505 = vpack.c.b16 %v1235, %v1233
      %v1506 = vpack.c.b16 %v1238, %v1236
      %v1507 = vpack.c.b16 %v1239, %v1237
      %v1508 = vpack.c.b16 %v1242, %v1240
      %v1509 = vpack.c.b16 %v1243, %v1241
      %v1510 = vpack.c.b16 %v1246, %v1244
      %v1511 = vpack.c.b16 %v1247, %v1245
      %v1512 = vpack.c.b16 %v1250, %v1248
      %v1513 = vpack.c.b16 %v1251, %v1249
      %v1514 = vpack.c.b16 %v1254, %v1252
      %v1515 = vpack.c.b16 %v1255, %v1253
      %v1516 = vpack.c.b16 %v1258, %v1256
      %v1517 = vpack.c.b16 %v1259, %v1257
      %v1518 = vpack.c.b16 %v1262, %v1260
      %v1519 = vpack.c.b16 %v1263, %v1261
      %1776 = vmatprep.subr.bf16.mxu0 %v1265
      %1777 = vmatpush1.bf16.msra.mxu0 %v1264
      %1778 = vmatprep.subr.bf16.mxu0 %v1267
      %1779 = vmatpush1.bf16.msra.mxu0 %v1266
      %1780 = vmatprep.subr.bf16.mxu0 %v1269
      %1781 = vmatpush1.bf16.msra.mxu0 %v1268
      %1782 = vmatprep.subr.bf16.mxu0 %v1271
      %1783 = vmatpush1.bf16.msra.mxu0 %v1270
      %1784 = vmatprep.subr.bf16.mxu0 %v1273
      %1785 = vmatpush1.bf16.msra.mxu0 %v1272
      %1786 = vmatprep.subr.bf16.mxu0 %v1275
      %1787 = vmatpush1.bf16.msra.mxu0 %v1274
      %1788 = vmatprep.subr.bf16.mxu0 %v1277
      %1789 = vmatpush1.bf16.msra.mxu0 %v1276
      %1790 = vmatprep.subr.bf16.mxu0 %v1279
      %1791 = vmatpush1.bf16.msra.mxu0 %v1278
      %1792 = vmatprep.subr.bf16.mxu0 %v1281
      %1793 = vmatpush1.bf16.msra.mxu0 %v1280
      %1794 = vmatprep.subr.bf16.mxu0 %v1283
      %1795 = vmatpush1.bf16.msra.mxu0 %v1282
      %1796 = vmatprep.subr.bf16.mxu0 %v1285
      %1797 = vmatpush1.bf16.msra.mxu0 %v1284
      %1798 = vmatprep.subr.bf16.mxu0 %v1287
      %1799 = vmatpush1.bf16.msra.mxu0 %v1286
      %1800 = vmatprep.subr.bf16.mxu0 %v1289
      %1801 = vmatpush1.bf16.msra.mxu0 %v1288
      %1802 = vmatprep.subr.bf16.mxu0 %v1291
      %1803 = vmatpush1.bf16.msra.mxu0 %v1290
      %1804 = vmatprep.subr.bf16.mxu0 %v1293
      %1805 = vmatpush1.bf16.msra.mxu0 %v1292
      %1806 = vmatprep.subr.bf16.mxu0 %v1295
      %1807 = vmatpush1.bf16.msra.mxu0 %v1294
      %1808 = vmatprep.mubr.bf16.mxu0 %v465
      %1809 = vmatmul.mubr.bf16.gmra.mrb[0].mxu0 %v464
      %v1810 = vpop.f32.mrb[0].mxu0
      %v1811 = vadd.f32 0.0, %v1810
      %v1812 = vpop.f32.mrb[0].mxu0
      %v1813 = vadd.f32 0.0, %v1812
      %v1814 = vpop.f32.mrb[0].mxu0
      %v1815 = vadd.f32 0.0, %v1814
      %v1816 = vpop.f32.mrb[0].mxu0
      %v1817 = vadd.f32 0.0, %v1816
      %1818 = vdwg.mxu0
      %1819 = vmatprep.subr.bf16.mxu0 %v1297
      %1820 = vmatpush1.bf16.msra.mxu0 %v1296
      %1821 = vmatprep.subr.bf16.mxu0 %v1299
      %1822 = vmatpush1.bf16.msra.mxu0 %v1298
      %1823 = vmatprep.subr.bf16.mxu0 %v1301
      %1824 = vmatpush1.bf16.msra.mxu0 %v1300
      %1825 = vmatprep.subr.bf16.mxu0 %v1303
      %1826 = vmatpush1.bf16.msra.mxu0 %v1302
      %1827 = vmatprep.subr.bf16.mxu0 %v1305
      %1828 = vmatpush1.bf16.msra.mxu0 %v1304
      %1829 = vmatprep.subr.bf16.mxu0 %v1307
      %1830 = vmatpush1.bf16.msra.mxu0 %v1306
      %1831 = vmatprep.subr.bf16.mxu0 %v1309
      %1832 = vmatpush1.bf16.msra.mxu0 %v1308
      %1833 = vmatprep.subr.bf16.mxu0 %v1311
      %1834 = vmatpush1.bf16.msra.mxu0 %v1310
      %1835 = vmatprep.subr.bf16.mxu0 %v1313
      %1836 = vmatpush1.bf16.msra.mxu0 %v1312
      %1837 = vmatprep.subr.bf16.mxu0 %v1315
      %1838 = vmatpush1.bf16.msra.mxu0 %v1314
      %1839 = vmatprep.subr.bf16.mxu0 %v1317
      %1840 = vmatpush1.bf16.msra.mxu0 %v1316
      %1841 = vmatprep.subr.bf16.mxu0 %v1319
      %1842 = vmatpush1.bf16.msra.mxu0 %v1318
      %1843 = vmatprep.subr.bf16.mxu0 %v1321
      %1844 = vmatpush1.bf16.msra.mxu0 %v1320
      %1845 = vmatprep.subr.bf16.mxu0 %v1323
      %1846 = vmatpush1.bf16.msra.mxu0 %v1322
      %1847 = vmatprep.subr.bf16.mxu0 %v1325
      %1848 = vmatpush1.bf16.msra.mxu0 %v1324
      %1849 = vmatprep.subr.bf16.mxu0 %v1327
      %1850 = vmatpush1.bf16.msra.mxu0 %v1326
      %1851 = vmatprep.mubr.bf16.mxu0 %v467
      %1852 = vmatmul.mubr.bf16.gmra.mrb[0].mxu0 %v466
      %v1853 = vpop.f32.mrb[0].mxu0
      %v1854 = vadd.f32 %v1811, %v1853
      %v1855 = vpop.f32.mrb[0].mxu0
      %v1856 = vadd.f32 %v1813, %v1855
      %v1857 = vpop.f32.mrb[0].mxu0
      %v1858 = vadd.f32 %v1815, %v1857
      %v1859 = vpop.f32.mrb[0].mxu0
      %v1860 = vadd.f32 %v1817, %v1859
      %1861 = vdwg.mxu0
      %1862 = vmatprep.subr.bf16.mxu0 %v1329
      %1863 = vmatpush1.bf16.msra.mxu0 %v1328
      %1864 = vmatprep.subr.bf16.mxu0 %v1331
      %1865 = vmatpush1.bf16.msra.mxu0 %v1330
      %1866 = vmatprep.subr.bf16.mxu0 %v1333
      %1867 = vmatpush1.bf16.msra.mxu0 %v1332
      %1868 = vmatprep.subr.bf16.mxu0 %v1335
      %1869 = vmatpush1.bf16.msra.mxu0 %v1334
      %1870 = vmatprep.subr.bf16.mxu0 %v1337
      %1871 = vmatpush1.bf16.msra.mxu0 %v1336
      %1872 = vmatprep.subr.bf16.mxu0 %v1339
      %1873 = vmatpush1.bf16.msra.mxu0 %v1338
      %1874 = vmatprep.subr.bf16.mxu0 %v1341
      %1875 = vmatpush1.bf16.msra.mxu0 %v1340
      %1876 = vmatprep.subr.bf16.mxu0 %v1343
      %1877 = vmatpush1.bf16.msra.mxu0 %v1342
      %1878 = vmatprep.subr.bf16.mxu0 %v1345
      %1879 = vmatpush1.bf16.msra.mxu0 %v1344
      %1880 = vmatprep.subr.bf16.mxu0 %v1347
      %1881 = vmatpush1.bf16.msra.mxu0 %v1346
      %1882 = vmatprep.subr.bf16.mxu0 %v1349
      %1883 = vmatpush1.bf16.msra.mxu0 %v1348
      %1884 = vmatprep.subr.bf16.mxu0 %v1351
      %1885 = vmatpush1.bf16.msra.mxu0 %v1350
      %1886 = vmatprep.subr.bf16.mxu0 %v1353
      %1887 = vmatpush1.bf16.msra.mxu0 %v1352
      %1888 = vmatprep.subr.bf16.mxu0 %v1355
      %1889 = vmatpush1.bf16.msra.mxu0 %v1354
      %1890 = vmatprep.subr.bf16.mxu0 %v1357
      %1891 = vmatpush1.bf16.msra.mxu0 %v1356
      %1892 = vmatprep.subr.bf16.mxu0 %v1359
      %1893 = vmatpush1.bf16.msra.mxu0 %v1358
      %1894 = vmatprep.mubr.bf16.mxu0 %v469
      %1895 = vmatmul.mubr.bf16.gmra.mrb[0].mxu0 %v468
      %v1896 = vpop.f32.mrb[0].mxu0
      %v1897 = vadd.f32 %v1854, %v1896
      %v1898 = vpop.f32.mrb[0].mxu0
      %v1899 = vadd.f32 %v1856, %v1898
      %v1900 = vpop.f32.mrb[0].mxu0
      %v1901 = vadd.f32 %v1858, %v1900
      %v1902 = vpop.f32.mrb[0].mxu0
      %v1903 = vadd.f32 %v1860, %v1902
      %1904 = vdwg.mxu0
      %1905 = vmatprep.subr.bf16.mxu0 %v1361
      %1906 = vmatpush1.bf16.msra.mxu0 %v1360
      %1907 = vmatprep.subr.bf16.mxu0 %v1363
      %1908 = vmatpush1.bf16.msra.mxu0 %v1362
      %1909 = vmatprep.subr.bf16.mxu0 %v1365
      %1910 = vmatpush1.bf16.msra.mxu0 %v1364
      %1911 = vmatprep.subr.bf16.mxu0 %v1367
      %1912 = vmatpush1.bf16.msra.mxu0 %v1366
      %1913 = vmatprep.subr.bf16.mxu0 %v1369
      %1914 = vmatpush1.bf16.msra.mxu0 %v1368
      %1915 = vmatprep.subr.bf16.mxu0 %v1371
      %1916 = vmatpush1.bf16.msra.mxu0 %v1370
      %1917 = vmatprep.subr.bf16.mxu0 %v1373
      %1918 = vmatpush1.bf16.msra.mxu0 %v1372
      %1919 = vmatprep.subr.bf16.mxu0 %v1375
      %1920 = vmatpush1.bf16.msra.mxu0 %v1374
      %1921 = vmatprep.subr.bf16.mxu0 %v1377
      %1922 = vmatpush1.bf16.msra.mxu0 %v1376
      %1923 = vmatprep.subr.bf16.mxu0 %v1379
      %1924 = vmatpush1.bf16.msra.mxu0 %v1378
      %1925 = vmatprep.subr.bf16.mxu0 %v1381
      %1926 = vmatpush1.bf16.msra.mxu0 %v1380
      %1927 = vmatprep.subr.bf16.mxu0 %v1383
      %1928 = vmatpush1.bf16.msra.mxu0 %v1382
      %1929 = vmatprep.subr.bf16.mxu0 %v1385
      %1930 = vmatpush1.bf16.msra.mxu0 %v1384
      %1931 = vmatprep.subr.bf16.mxu0 %v1387
      %1932 = vmatpush1.bf16.msra.mxu0 %v1386
      %1933 = vmatprep.subr.bf16.mxu0 %v1389
      %1934 = vmatpush1.bf16.msra.mxu0 %v1388
      %1935 = vmatprep.subr.bf16.mxu0 %v1391
      %1936 = vmatpush1.bf16.msra.mxu0 %v1390
      %1937 = vmatprep.mubr.bf16.mxu0 %v471
      %1938 = vmatmul.mubr.bf16.gmra.mrb[0].mxu0 %v470
      %v1939 = vpop.f32.mrb[0].mxu0
      %v1940 = vadd.f32 %v1897, %v1939
      %v1941 = vpop.f32.mrb[0].mxu0
      %v1942 = vadd.f32 %v1899, %v1941
      %v1943 = vpop.f32.mrb[0].mxu0
      %v1944 = vadd.f32 %v1901, %v1943
      %v1945 = vpop.f32.mrb[0].mxu0
      %v1946 = vadd.f32 %v1903, %v1945
      %1947 = vdwg.mxu0
      %1948 = vmatprep.subr.bf16.mxu0 %v1393
      %1949 = vmatpush1.bf16.msra.mxu0 %v1392
      %1950 = vmatprep.subr.bf16.mxu0 %v1395
      %1951 = vmatpush1.bf16.msra.mxu0 %v1394
      %1952 = vmatprep.subr.bf16.mxu0 %v1397
      %1953 = vmatpush1.bf16.msra.mxu0 %v1396
      %1954 = vmatprep.subr.bf16.mxu0 %v1399
      %1955 = vmatpush1.bf16.msra.mxu0 %v1398
      %1956 = vmatprep.subr.bf16.mxu0 %v1401
      %1957 = vmatpush1.bf16.msra.mxu0 %v1400
      %1958 = vmatprep.subr.bf16.mxu0 %v1403
      %1959 = vmatpush1.bf16.msra.mxu0 %v1402
      %1960 = vmatprep.subr.bf16.mxu0 %v1405
      %1961 = vmatpush1.bf16.msra.mxu0 %v1404
      %1962 = vmatprep.subr.bf16.mxu0 %v1407
      %1963 = vmatpush1.bf16.msra.mxu0 %v1406
      %1964 = vmatprep.subr.bf16.mxu0 %v1409
      %1965 = vmatpush1.bf16.msra.mxu0 %v1408
      %1966 = vmatprep.subr.bf16.mxu0 %v1411
      %1967 = vmatpush1.bf16.msra.mxu0 %v1410
      %1968 = vmatprep.subr.bf16.mxu0 %v1413
      %1969 = vmatpush1.bf16.msra.mxu0 %v1412
      %1970 = vmatprep.subr.bf16.mxu0 %v1415
      %1971 = vmatpush1.bf16.msra.mxu0 %v1414
      %1972 = vmatprep.subr.bf16.mxu0 %v1417
      %1973 = vmatpush1.bf16.msra.mxu0 %v1416
      %1974 = vmatprep.subr.bf16.mxu0 %v1419
      %1975 = vmatpush1.bf16.msra.mxu0 %v1418
      %1976 = vmatprep.subr.bf16.mxu0 %v1421
      %1977 = vmatpush1.bf16.msra.mxu0 %v1420
      %1978 = vmatprep.subr.bf16.mxu0 %v1423
      %1979 = vmatpush1.bf16.msra.mxu0 %v1422
      %1980 = vmatprep.mubr.bf16.mxu0 %v473
      %1981 = vmatmul.mubr.bf16.gmra.mrb[0].mxu0 %v472
      %v1982 = vpop.f32.mrb[0].mxu0
      %v1983 = vadd.f32 %v1940, %v1982
      %v1984 = vpop.f32.mrb[0].mxu0
      %v1985 = vadd.f32 %v1942, %v1984
      %v1986 = vpop.f32.mrb[0].mxu0
      %v1987 = vadd.f32 %v1944, %v1986
      %v1988 = vpop.f32.mrb[0].mxu0
      %v1989 = vadd.f32 %v1946, %v1988
      %1990 = vdwg.mxu0
      %1991 = vmatprep.subr.bf16.mxu0 %v1425
      %1992 = vmatpush1.bf16.msra.mxu0 %v1424
      %1993 = vmatprep.subr.bf16.mxu0 %v1427
      %1994 = vmatpush1.bf16.msra.mxu0 %v1426
      %1995 = vmatprep.subr.bf16.mxu0 %v1429
      %1996 = vmatpush1.bf16.msra.mxu0 %v1428
      %1997 = vmatprep.subr.bf16.mxu0 %v1431
      %1998 = vmatpush1.bf16.msra.mxu0 %v1430
      %1999 = vmatprep.subr.bf16.mxu0 %v1433
      %2000 = vmatpush1.bf16.msra.mxu0 %v1432
      %2001 = vmatprep.subr.bf16.mxu0 %v1435
      %2002 = vmatpush1.bf16.msra.mxu0 %v1434
      %2003 = vmatprep.subr.bf16.mxu0 %v1437
      %2004 = vmatpush1.bf16.msra.mxu0 %v1436
      %2005 = vmatprep.subr.bf16.mxu0 %v1439
      %2006 = vmatpush1.bf16.msra.mxu0 %v1438
      %2007 = vmatprep.subr.bf16.mxu0 %v1441
      %2008 = vmatpush1.bf16.msra.mxu0 %v1440
      %2009 = vmatprep.subr.bf16.mxu0 %v1443
      %2010 = vmatpush1.bf16.msra.mxu0 %v1442
      %2011 = vmatprep.subr.bf16.mxu0 %v1445
      %2012 = vmatpush1.bf16.msra.mxu0 %v1444
      %2013 = vmatprep.subr.bf16.mxu0 %v1447
      %2014 = vmatpush1.bf16.msra.mxu0 %v1446
      %2015 = vmatprep.subr.bf16.mxu0 %v1449
      %2016 = vmatpush1.bf16.msra.mxu0 %v1448
      %2017 = vmatprep.subr.bf16.mxu0 %v1451
      %2018 = vmatpush1.bf16.msra.mxu0 %v1450
      %2019 = vmatprep.subr.bf16.mxu0 %v1453
      %2020 = vmatpush1.bf16.msra.mxu0 %v1452
      %2021 = vmatprep.subr.bf16.mxu0 %v1455
      %2022 = vmatpush1.bf16.msra.mxu0 %v1454
      %2023 = vmatprep.mubr.bf16.mxu0 %v475
      %2024 = vmatmul.mubr.bf16.gmra.mrb[0].mxu0 %v474
      %v2025 = vpop.f32.mrb[0].mxu0
      %v2026 = vadd.f32 %v1983, %v2025
      %v2027 = vpop.f32.mrb[0].mxu0
      %v2028 = vadd.f32 %v1985, %v2027
      %v2029 = vpop.f32.mrb[0].mxu0
      %v2030 = vadd.f32 %v1987, %v2029
      %v2031 = vpop.f32.mrb[0].mxu0
      %v2032 = vadd.f32 %v1989, %v2031
      %2033 = vdwg.mxu0
      %2034 = vmatprep.subr.bf16.mxu0 %v1457
      %2035 = vmatpush1.bf16.msra.mxu0 %v1456
      %2036 = vmatprep.subr.bf16.mxu0 %v1459
      %2037 = vmatpush1.bf16.msra.mxu0 %v1458
      %2038 = vmatprep.subr.bf16.mxu0 %v1461
      %2039 = vmatpush1.bf16.msra.mxu0 %v1460
      %2040 = vmatprep.subr.bf16.mxu0 %v1463
      %2041 = vmatpush1.bf16.msra.mxu0 %v1462
      %2042 = vmatprep.subr.bf16.mxu0 %v1465
      %2043 = vmatpush1.bf16.msra.mxu0 %v1464
      %2044 = vmatprep.subr.bf16.mxu0 %v1467
      %2045 = vmatpush1.bf16.msra.mxu0 %v1466
      %2046 = vmatprep.subr.bf16.mxu0 %v1469
      %2047 = vmatpush1.bf16.msra.mxu0 %v1468
      %2048 = vmatprep.subr.bf16.mxu0 %v1471
      %2049 = vmatpush1.bf16.msra.mxu0 %v1470
      %2050 = vmatprep.subr.bf16.mxu0 %v1473
      %2051 = vmatpush1.bf16.msra.mxu0 %v1472
      %2052 = vmatprep.subr.bf16.mxu0 %v1475
      %2053 = vmatpush1.bf16.msra.mxu0 %v1474
      %2054 = vmatprep.subr.bf16.mxu0 %v1477
      %2055 = vmatpush1.bf16.msra.mxu0 %v1476
      %2056 = vmatprep.subr.bf16.mxu0 %v1479
      %2057 = vmatpush1.bf16.msra.mxu0 %v1478
      %2058 = vmatprep.subr.bf16.mxu0 %v1481
      %2059 = vmatpush1.bf16.msra.mxu0 %v1480
      %2060 = vmatprep.subr.bf16.mxu0 %v1483
      %2061 = vmatpush1.bf16.msra.mxu0 %v1482
      %2062 = vmatprep.subr.bf16.mxu0 %v1485
      %2063 = vmatpush1.bf16.msra.mxu0 %v1484
      %2064 = vmatprep.subr.bf16.mxu0 %v1487
      %2065 = vmatpush1.bf16.msra.mxu0 %v1486
      %2066 = vmatprep.mubr.bf16.mxu0 %v477
      %2067 = vmatmul.mubr.bf16.gmra.mrb[0].mxu0 %v476
      %v2068 = vpop.f32.mrb[0].mxu0
      %v2069 = vadd.f32 %v2026, %v2068
      %v2070 = vpop.f32.mrb[0].mxu0
      %v2071 = vadd.f32 %v2028, %v2070
      %v2072 = vpop.f32.mrb[0].mxu0
      %v2073 = vadd.f32 %v2030, %v2072
      %v2074 = vpop.f32.mrb[0].mxu0
      %v2075 = vadd.f32 %v2032, %v2074
      %2076 = vdwg.mxu0
      %2077 = vmatprep.subr.bf16.mxu0 %v1489
      %2078 = vmatpush1.bf16.msra.mxu0 %v1488
      %2079 = vmatprep.subr.bf16.mxu0 %v1491
      %2080 = vmatpush1.bf16.msra.mxu0 %v1490
      %2081 = vmatprep.subr.bf16.mxu0 %v1493
      %2082 = vmatpush1.bf16.msra.mxu0 %v1492
      %2083 = vmatprep.subr.bf16.mxu0 %v1495
      %2084 = vmatpush1.bf16.msra.mxu0 %v1494
      %2085 = vmatprep.subr.bf16.mxu0 %v1497
      %2086 = vmatpush1.bf16.msra.mxu0 %v1496
      %2087 = vmatprep.subr.bf16.mxu0 %v1499
      %2088 = vmatpush1.bf16.msra.mxu0 %v1498
      %2089 = vmatprep.subr.bf16.mxu0 %v1501
      %2090 = vmatpush1.bf16.msra.mxu0 %v1500
      %2091 = vmatprep.subr.bf16.mxu0 %v1503
      %2092 = vmatpush1.bf16.msra.mxu0 %v1502
      %2093 = vmatprep.subr.bf16.mxu0 %v1505
      %2094 = vmatpush1.bf16.msra.mxu0 %v1504
      %2095 = vmatprep.subr.bf16.mxu0 %v1507
      %2096 = vmatpush1.bf16.msra.mxu0 %v1506
      %2097 = vmatprep.subr.bf16.mxu0 %v1509
      %2098 = vmatpush1.bf16.msra.mxu0 %v1508
      %2099 = vmatprep.subr.bf16.mxu0 %v1511
      %2100 = vmatpush1.bf16.msra.mxu0 %v1510
      %2101 = vmatprep.subr.bf16.mxu0 %v1513
      %2102 = vmatpush1.bf16.msra.mxu0 %v1512
      %2103 = vmatprep.subr.bf16.mxu0 %v1515
      %2104 = vmatpush1.bf16.msra.mxu0 %v1514
      %2105 = vmatprep.subr.bf16.mxu0 %v1517
      %2106 = vmatpush1.bf16.msra.mxu0 %v1516
      %2107 = vmatprep.subr.bf16.mxu0 %v1519
      %2108 = vmatpush1.bf16.msra.mxu0 %v1518
      %2109 = vmatprep.mubr.bf16.mxu0 %v479
      %2110 = vmatmul.mubr.bf16.gmra.mrb[0].mxu0 %v478
      %v2111 = vpop.f32.mrb[0].mxu0
      %v2112 = vadd.f32 %v2069, %v2111
      %v2113 = vpop.f32.mrb[0].mxu0
      %v2114 = vadd.f32 %v2071, %v2113
      %v2115 = vpop.f32.mrb[0].mxu0
      %v2116 = vadd.f32 %v2073, %v2115
      %v2117 = vpop.f32.mrb[0].mxu0
      %v2118 = vadd.f32 %v2075, %v2117
      %2119 = vdwg.mxu0
      %v2120 = vadd.f32 %v2112, %v2116
      %v2121 = vrot.slane %v2120, 4
      %v2122 = vadd.f32 %v2120, %v2121
      %v2123 = vrot.slane %v2122, 2
      %v2124 = vadd.f32 %v2122, %v2123
      %v2125 = vrot.slane %v2124, 1
      %v2126 = vadd.f32 %v2124, %v2125
      %v2127 = vadd.f32 %v2114, %v2118
      %v2128 = vrot.slane %v2127, 4
      %v2129 = vadd.f32 %v2127, %v2128
      %v2130 = vrot.slane %v2129, 2
      %v2131 = vadd.f32 %v2129, %v2130
      %v2132 = vrot.slane %v2131, 1
      %v2133 = vadd.f32 %v2131, %v2132
      %v2134 = vrcp.pop 16.0
      %v2135 = vmul.f32 %v2126, %v2134
      %v2136 = vmul.f32 %v2133, %v2134
      %v2137 = vsub.f32 %v2112, %v2135
      %v2138 = vsub.f32 %v2114, %v2136
      %v2139 = vsub.f32 %v2116, %v2135
      %v2140 = vsub.f32 %v2118, %v2136
      %v2141 = vmul.f32 %v2137, %v2137
      %v2142 = vmul.f32 %v2138, %v2138
      %v2143 = vmul.f32 %v2139, %v2139
      %v2144 = vmul.f32 %v2140, %v2140
      %v2145 = vadd.f32 %v2141, %v2143
      %v2146 = vrot.slane %v2145, 4
      %v2147 = vadd.f32 %v2145, %v2146
      %v2148 = vrot.slane %v2147, 2
      %v2149 = vadd.f32 %v2147, %v2148
      %v2150 = vrot.slane %v2149, 1
      %v2151 = vadd.f32 %v2149, %v2150
      %v2152 = vadd.f32 %v2142, %v2144
      %v2153 = vrot.slane %v2152, 4
      %v2154 = vadd.f32 %v2152, %v2153
      %v2155 = vrot.slane %v2154, 2
      %v2156 = vadd.f32 %v2154, %v2155
      %v2157 = vrot.slane %v2156, 1
      %v2158 = vadd.f32 %v2156, %v2157
      %v2159 = vmul.f32 %v2151, %v2134
      %v2160 = vmul.f32 %v2158, %v2134
      %v2161 = vadd.f32 %v2159, 1e-05
      %v2162 = vadd.f32 %v2160, 1e-05
      %v2163 = vrsqrt.pop %v2161
      %v2164 = vrsqrt.pop %v2162
      %v2165 = vmul.f32 %v2137, %v2163
      %v2166 = vmul.f32 %v2138, %v2164
      %v2167 = vmul.f32 %v2139, %v2163
      %v2168 = vmul.f32 %v2140, %v2164
      %vm2169 = vcmp.ge.f32.partialorder %v2165, 0.0
      %vm2170 = vcmp.ge.f32.partialorder %v2166, 0.0
      %vm2171 = vcmp.ge.f32.partialorder %v2167, 0.0
      %vm2172 = vcmp.ge.f32.partialorder %v2168, 0.0
      %v2173 = vmul.f32 %v2165, 0.2
      %v2174 = vmul.f32 %v2166, 0.2
      %v2175 = vmul.f32 %v2167, 0.2
      %v2176 = vmul.f32 %v2168, 0.2
      %v2177 = vsel %vm2169, %v2165, %v2173
      %v2178 = vsel %vm2170, %v2166, %v2174
      %v2179 = vsel %vm2171, %v2167, %v2175
      %v2180 = vsel %vm2172, %v2168, %v2176
      %v2181 = vpack.c.bf16 %v2179, %v2177
      %v2182 = vpack.c.bf16 %v2180, %v2178
      %v2185 = vunpack.c.l.b16 %v2181
      %v2186 = vunpack.c.l.b16 %v2182
      %v2187 = vunpack.c.h.b16 %v2181
      %v2188 = vunpack.c.h.b16 %v2182
      %v2189 = vpack.c.b16 %v2186, %v2185
      %v2190 = vpack.c.b16 %v2188, %v2187
      %2193 = vst [vmem:[%s143] sm:$0xff] %v2189
      %2194 = vst [vmem:[%s143 + $0x8] sm:$0xff] %v2190
      %p2195 = scmp.lt.s32.totalorder %s13, 1
      %s2196 = scalar_select %p2195, %s13, 1
      %s2197 = smul.addr %s2196, 4
      %s2198 = smul.addr %s2197, 4
      %s2199 = scalar_lea.vmem %s2, %s2198
      // Predicated region
      $region29: #{siamese_forward.7} parent=27 // pred_check
        %p2200 = pneg %p78
      $region30: #{siamese_forward.7} parent=27 // pred_check_branch
        %2202 = sbr.rel (%p2200) target = $region32
      $region31: #{siamese_forward.7} parent=27 // pred_region
        _
      $region32: #{siamese_forward.7} parent=27 // pred_fallthru
        _
    $region28: #{siamese_forward.7} parent=5 // pred_fallthru
      _
    %p2203 = scmp.le.s32.totalorder 2, %s8
    // Predicated region
    $region33: #{siamese_forward.7} parent=5 // pred_check
      %p2204 = pneg %p2203
    $region34: #{siamese_forward.7} parent=5 // pred_check_branch
      %2206 = sbr.rel (%p2204) target = $region36
    $region35: #{siamese_forward.7} parent=5 // pred_region
      %s2207 = ssub.s32 %s8, 2
      // Predicated region
      $region37: #{siamese_forward.7} parent=35 // pred_check
        %p2208 = pneg %p84
      $region38: #{siamese_forward.7} parent=35 // pred_check_branch
        %2210 = sbr.rel (%p2208) target = $region40
      $region39: #{siamese_forward.7} parent=35 // pred_region
        %p2211 = scmp.lt.s32.totalorder %s14, 1
        %s2212 = scalar_select %p2211, %s14, 1
        %s2213 = smul.addr %s2212, 4
        %s2214 = smul.addr %s2213, 4
        %s2215 = scalar_lea.vmem %s2, %s2214
      $region40: #{siamese_forward.7} parent=35 // pred_fallthru
        _
    $region36: #{siamese_forward.7} parent=5 // pred_fallthru
      _
  $region6: #{siamese_forward.7} parent=0 // loop_footer
    %s12 = sadd.s32 1, %s8
  $region7: #{siamese_forward.7} parent=0 // loop_footer_branch
    %7 = sbr.rel target = $region3
  $region8: #{siamese_forward.7} parent=0 // loop_exit
    _

// kernel: siamese_forward.9
$region0: #{siamese_forward.9}
  #allocation0 [shape = 'u32[]', space=smem, size = 0x4, offset = 0x4, fixed_abs, tag = 'smem constant byte address 0x4 - core index']
  #allocation1 [shape = 'u32[144,128]{1,0:T(1,128)}', space=vmem, size = 0x12000, scoped, tag = 'internal scratch']
  %s0 = inlined_call_operand.vmem [shape: f32[2,512], index: 0, kind: input, shape index: {}]
  %s1 = inlined_call_operand.vmem [shape: f32[512,128], index: 1, kind: input, shape index: {}]
  %s2 = inlined_call_operand.vmem [shape: f32[1,128], index: 2, kind: input, shape index: {}]
  %s3 = inlined_call_operand.hbm [shape: f32[2,128], index: 3, kind: output, shape index: {}]
  %s4 = sld [smem:[#allocation0]]
  $region22: #{siamese_forward.9} parent=0
    _
  %s6 = ssub.s32 1, %s4
  %s7 = scalar_select 0, %s6, %s4
  $region1: #{siamese_forward.9} parent=0
    #allocation2 [shape = 'u8[1024]{0}', space=vmem, size = 0x400, scoped, tag = 'output window, operand 0, single buffered']
    #allocation3 [shape = 's32[1]{0}', space=sflag, size = 0x4, scoped, tag = 'scoped memory for siamese_forward.9']
    %8 = vsyncpa [#allocation3], 0
    // Predicated region
    $region2: #{siamese_forward.9} parent=1 // pred_check
      _
    $region3: #{siamese_forward.9} parent=1 // pred_check_branch
      %10 = sbr.rel (0) target = $region5
    $region4: #{siamese_forward.9} parent=1 // pred_region
      _
    $region5: #{siamese_forward.9} parent=1 // pred_fallthru
      _
    // Predicated region
    $region6: #{siamese_forward.9} parent=1 // pred_check
      _
    $region7: #{siamese_forward.9} parent=1 // pred_check_branch
      %12 = sbr.rel (0) target = $region9
    $region8: #{siamese_forward.9} parent=1 // pred_region
      _
    $region9: #{siamese_forward.9} parent=1 // pred_fallthru
      _
    // Predicated region
    $region10: #{siamese_forward.9} parent=1 // pred_check
      _
    $region11: #{siamese_forward.9} parent=1 // pred_check_branch
      %14 = sbr.rel (0) target = $region13
    $region12: #{siamese_forward.9} parent=1 // pred_region
      _
    $region13: #{siamese_forward.9} parent=1 // pred_fallthru
      _
    %v15 = vld [vmem:[%s0] sm:$0xff]
    %v16 = vld [vmem:[%s1] sm:$0xff]
    %v17 = vld [vmem:[%s1 + $0x8] sm:$0xff]
    %v18 = vld [vmem:[%s1 + $0x10] sm:$0xff]
    %v19 = vld [vmem:[%s1 + $0x18] sm:$0xff]
    %v20 = vld [vmem:[%s1 + $0x20] sm:$0xff]
    %v21 = vld [vmem:[%s1 + $0x28] sm:$0xff]
    %v22 = vld [vmem:[%s1 + $0x30] sm:$0xff]
    %v23 = vld [vmem:[%s1 + $0x38] sm:$0xff]
    %v24 = vld [vmem:[%s1 + $0x40] sm:$0xff]
    %v25 = vld [vmem:[%s1 + $0x48] sm:$0xff]
    %v26 = vld [vmem:[%s1 + $0x50] sm:$0xff]
    %v27 = vld [vmem:[%s1 + $0x58] sm:$0xff]
    %v28 = vld [vmem:[%s1 + $0x60] sm:$0xff]
    %v29 = vld [vmem:[%s1 + $0x68] sm:$0xff]
    %v30 = vld [vmem:[%s1 + $0x70] sm:$0xff]
    %v31 = vld [vmem:[%s1 + $0x78] sm:$0xff]
    %v32 = vld [vmem:[%s1 + $0x80] sm:$0xff]
    %v33 = vld [vmem:[%s1 + $0x88] sm:$0xff]
    %v34 = vld [vmem:[%s1 + $0x90] sm:$0xff]
    %v35 = vld [vmem:[%s1 + $0x98] sm:$0xff]
    %v36 = vld [vmem:[%s1 + $0xa0] sm:$0xff]
    %v37 = vld [vmem:[%s1 + $0xa8] sm:$0xff]
    %v38 = vld [vmem:[%s1 + $0xb0] sm:$0xff]
    %v39 = vld [vmem:[%s1 + $0xb8] sm:$0xff]
    %v40 = vld [vmem:[%s1 + $0xc0] sm:$0xff]
    %v41 = vld [vmem:[%s1 + $0xc8] sm:$0xff]
    %v42 = vld [vmem:[%s1 + $0xd0] sm:$0xff]
    %v43 = vld [vmem:[%s1 + $0xd8] sm:$0xff]
    %v44 = vld [vmem:[%s1 + $0xe0] sm:$0xff]
    %v45 = vld [vmem:[%s1 + $0xe8] sm:$0xff]
    %v46 = vld [vmem:[%s1 + $0xf0] sm:$0xff]
    %v47 = vld [vmem:[%s1 + $0xf8] sm:$0xff]
    %v48 = vld [vmem:[%s1 + $0x100] sm:$0xff]
    %v49 = vld [vmem:[%s1 + $0x108] sm:$0xff]
    %v50 = vld [vmem:[%s1 + $0x110] sm:$0xff]
    %v51 = vld [vmem:[%s1 + $0x118] sm:$0xff]
    %v52 = vld [vmem:[%s1 + $0x120] sm:$0xff]
    %v53 = vld [vmem:[%s1 + $0x128] sm:$0xff]
    %v54 = vld [vmem:[%s1 + $0x130] sm:$0xff]
    %v55 = vld [vmem:[%s1 + $0x138] sm:$0xff]
    %v56 = vld [vmem:[%s1 + $0x140] sm:$0xff]
    %v57 = vld [vmem:[%s1 + $0x148] sm:$0xff]
    %v58 = vld [vmem:[%s1 + $0x150] sm:$0xff]
    %v59 = vld [vmem:[%s1 + $0x158] sm:$0xff]
    %v60 = vld [vmem:[%s1 + $0x160] sm:$0xff]
    %v61 = vld [vmem:[%s1 + $0x168] sm:$0xff]
    %v62 = vld [vmem:[%s1 + $0x170] sm:$0xff]
    %v63 = vld [vmem:[%s1 + $0x178] sm:$0xff]
    %v64 = vld [vmem:[%s1 + $0x180] sm:$0xff]
    %v65 = vld [vmem:[%s1 + $0x188] sm:$0xff]
    %v66 = vld [vmem:[%s1 + $0x190] sm:$0xff]
    %v67 = vld [vmem:[%s1 + $0x198] sm:$0xff]
    %v68 = vld [vmem:[%s1 + $0x1a0] sm:$0xff]
    %v69 = vld [vmem:[%s1 + $0x1a8] sm:$0xff]
    %v70 = vld [vmem:[%s1 + $0x1b0] sm:$0xff]
    %v71 = vld [vmem:[%s1 + $0x1b8] sm:$0xff]
    %v72 = vld [vmem:[%s1 + $0x1c0] sm:$0xff]
    %v73 = vld [vmem:[%s1 + $0x1c8] sm:$0xff]
    %v74 = vld [vmem:[%s1 + $0x1d0] sm:$0xff]
    %v75 = vld [vmem:[%s1 + $0x1d8] sm:$0xff]
    %v76 = vld [vmem:[%s1 + $0x1e0] sm:$0xff]
    %v77 = vld [vmem:[%s1 + $0x1e8] sm:$0xff]
    %v78 = vld [vmem:[%s1 + $0x1f0] sm:$0xff]
    %v79 = vld [vmem:[%s1 + $0x1f8] sm:$0xff]
    %v80 = vld [vmem:[%s2] sm:$0x1]
    %v82 = vlaneseq
    %v83 = vshrl.u32 %v82, 7
    %v84 = vsub.s32 0, %v83
    %v85 = vrot.slane %v80, %v84
    %v88 = vcombine.high %v15, %v15
    %v90 = vunpack.c.l.s4 1983009808
    %v91 = vunpack.c.0.s8 %v90
    %v92 = vlaneseq
    %v93 = vshrl.u32 %v92, 7
    %v94 = vsub.s32 %v91, %v93
    %v95 = vrot.slane %v15, %v94
    %v97 = vunpack.c.l.s4 1983009808
    %v98 = vunpack.c.0.s8 %v97
    %v99 = vlaneseq
    %v100 = vshrl.u32 %v99, 7
    %v101 = vsub.s32 %v98, %v100
    %v102 = vrot.slane %v88, %v101
    %v103 = vcombine.high %v95, %v95
    %v104 = vcombine.high %v102, %v102
    %109 = vmatprep.subr.mxu0 0.0
    %110 = vmatpush1.msra.mxu0 %v16
    %111 = vmatprep.subr.mxu0 0.0
    %112 = vmatpush1.msra.mxu0 %v17
    %113 = vmatprep.subr.mxu0 0.0
    %114 = vmatpush1.msra.mxu0 %v18
    %115 = vmatprep.subr.mxu0 0.0
    %116 = vmatpush1.msra.mxu0 %v19
    %117 = vmatprep.subr.mxu0 0.0
    %118 = vmatpush1.msra.mxu0 %v20
    %119 = vmatprep.subr.mxu0 0.0
    %120 = vmatpush1.msra.mxu0 %v21
    %121 = vmatprep.subr.mxu0 0.0
    %122 = vmatpush1.msra.mxu0 %v22
    %123 = vmatprep.subr.mxu0 0.0
    %124 = vmatpush1.msra.mxu0 %v23
    %125 = vmatprep.subr.mxu0 0.0
    %126 = vmatpush1.msra.mxu0 %v24
    %127 = vmatprep.subr.mxu0 0.0
    %128 = vmatpush1.msra.mxu0 %v25
    %129 = vmatprep.subr.mxu0 0.0
    %130 = vmatpush1.msra.mxu0 %v26
    %131 = vmatprep.subr.mxu0 0.0
    %132 = vmatpush1.msra.mxu0 %v27
    %133 = vmatprep.subr.mxu0 0.0
    %134 = vmatpush1.msra.mxu0 %v28
    %135 = vmatprep.subr.mxu0 0.0
    %136 = vmatpush1.msra.mxu0 %v29
    %137 = vmatprep.subr.mxu0 0.0
    %138 = vmatpush1.msra.mxu0 %v30
    %139 = vmatprep.subr.mxu0 0.0
    %140 = vmatpush1.msra.mxu0 %v31
    %141 = vmatprep.subr.mxu0 0.0
    %142 = vmatpush1.msra.mxu0 %v32
    %143 = vmatprep.subr.mxu0 0.0
    %144 = vmatpush1.msra.mxu0 %v33
    %145 = vmatprep.subr.mxu0 0.0
    %146 = vmatpush1.msra.mxu0 %v34
    %147 = vmatprep.subr.mxu0 0.0
    %148 = vmatpush1.msra.mxu0 %v35
    %149 = vmatprep.subr.mxu0 0.0
    %150 = vmatpush1.msra.mxu0 %v36
    %151 = vmatprep.subr.mxu0 0.0
    %152 = vmatpush1.msra.mxu0 %v37
    %153 = vmatprep.subr.mxu0 0.0
    %154 = vmatpush1.msra.mxu0 %v38
    %155 = vmatprep.subr.mxu0 0.0
    %156 = vmatpush1.msra.mxu0 %v39
    %157 = vmatprep.subr.mxu0 0.0
    %158 = vmatpush1.msra.mxu0 %v40
    %159 = vmatprep.subr.mxu0 0.0
    %160 = vmatpush1.msra.mxu0 %v41
    %161 = vmatprep.subr.mxu0 0.0
    %162 = vmatpush1.msra.mxu0 %v42
    %163 = vmatprep.subr.mxu0 0.0
    %164 = vmatpush1.msra.mxu0 %v43
    %165 = vmatprep.subr.mxu0 0.0
    %166 = vmatpush1.msra.mxu0 %v44
    %167 = vmatprep.subr.mxu0 0.0
    %168 = vmatpush1.msra.mxu0 %v45
    %169 = vmatprep.subr.mxu0 0.0
    %170 = vmatpush1.msra.mxu0 %v46
    %171 = vmatprep.subr.mxu0 0.0
    %172 = vmatpush1.msra.mxu0 %v47
    %173 = vmatprep.mubr.f32.mxu0 %v103
    %174 = vmatmul.mubr.f32.gmra.mrb[0].mxu0 %v95
    %v175 = vpop.f32.mrb[0].mxu0
    %v176 = vadd.f32 %v85, %v175
    %v177 = vpop.f32.mrb[0].mxu0
    %178 = vdwg.mxu0
    %179 = vmatprep.subr.mxu0 0.0
    %180 = vmatpush1.msra.mxu0 %v48
    %181 = vmatprep.subr.mxu0 0.0
    %182 = vmatpush1.msra.mxu0 %v49
    %183 = vmatprep.subr.mxu0 0.0
    %184 = vmatpush1.msra.mxu0 %v50
    %185 = vmatprep.subr.mxu0 0.0
    %186 = vmatpush1.msra.mxu0 %v51
    %187 = vmatprep.subr.mxu0 0.0
    %188 = vmatpush1.msra.mxu0 %v52
    %189 = vmatprep.subr.mxu0 0.0
    %190 = vmatpush1.msra.mxu0 %v53
    %191 = vmatprep.subr.mxu0 0.0
    %192 = vmatpush1.msra.mxu0 %v54
    %193 = vmatprep.subr.mxu0 0.0
    %194 = vmatpush1.msra.mxu0 %v55
    %195 = vmatprep.subr.mxu0 0.0
    %196 = vmatpush1.msra.mxu0 %v56
    %197 = vmatprep.subr.mxu0 0.0
    %198 = vmatpush1.msra.mxu0 %v57
    %199 = vmatprep.subr.mxu0 0.0
    %200 = vmatpush1.msra.mxu0 %v58
    %201 = vmatprep.subr.mxu0 0.0
    %202 = vmatpush1.msra.mxu0 %v59
    %203 = vmatprep.subr.mxu0 0.0
    %204 = vmatpush1.msra.mxu0 %v60
    %205 = vmatprep.subr.mxu0 0.0
    %206 = vmatpush1.msra.mxu0 %v61
    %207 = vmatprep.subr.mxu0 0.0
    %208 = vmatpush1.msra.mxu0 %v62
    %209 = vmatprep.subr.mxu0 0.0
    %210 = vmatpush1.msra.mxu0 %v63
    %211 = vmatprep.subr.mxu0 0.0
    %212 = vmatpush1.msra.mxu0 %v64
    %213 = vmatprep.subr.mxu0 0.0
    %214 = vmatpush1.msra.mxu0 %v65
    %215 = vmatprep.subr.mxu0 0.0
    %216 = vmatpush1.msra.mxu0 %v66
    %217 = vmatprep.subr.mxu0 0.0
    %218 = vmatpush1.msra.mxu0 %v67
    %219 = vmatprep.subr.mxu0 0.0
    %220 = vmatpush1.msra.mxu0 %v68
    %221 = vmatprep.subr.mxu0 0.0
    %222 = vmatpush1.msra.mxu0 %v69
    %223 = vmatprep.subr.mxu0 0.0
    %224 = vmatpush1.msra.mxu0 %v70
    %225 = vmatprep.subr.mxu0 0.0
    %226 = vmatpush1.msra.mxu0 %v71
    %227 = vmatprep.subr.mxu0 0.0
    %228 = vmatpush1.msra.mxu0 %v72
    %229 = vmatprep.subr.mxu0 0.0
    %230 = vmatpush1.msra.mxu0 %v73
    %231 = vmatprep.subr.mxu0 0.0
    %232 = vmatpush1.msra.mxu0 %v74
    %233 = vmatprep.subr.mxu0 0.0
    %234 = vmatpush1.msra.mxu0 %v75
    %235 = vmatprep.subr.mxu0 0.0
    %236 = vmatpush1.msra.mxu0 %v76
    %237 = vmatprep.subr.mxu0 0.0
    %238 = vmatpush1.msra.mxu0 %v77
    %239 = vmatprep.subr.mxu0 0.0
    %240 = vmatpush1.msra.mxu0 %v78
    %241 = vmatprep.subr.mxu0 0.0
    %242 = vmatpush1.msra.mxu0 %v79
    %243 = vmatprep.mubr.f32.mxu0 %v104
    %244 = vmatmul.mubr.f32.gmra.mrb[0].mxu0 %v102
    %v245 = vpop.f32.mrb[0].mxu0
    %v246 = vadd.f32 %v176, %v245
    %v247 = vpop.f32.mrb[0].mxu0
    %248 = vdwg.mxu0
    %249 = vst [vmem:[#allocation2] sm:$0x3] %v246
    // Predicated region
    $region14: #{siamese_forward.9} parent=1 // pred_check
      _
    $region15: #{siamese_forward.9} parent=1 // pred_check_branch
      %251 = sbr.rel (0) target = $region17
    $region16: #{siamese_forward.9} parent=1 // pred_region
      %s253 = ssub.s32 32, 32
      %254 = vsyncadd [#allocation3], %s253
      %s256 = sshll.u32 [#allocation2], 4
      %s257 = int_to_ptr.vmem [resolvable:$true] %s256
      %259 = dma.vmem_to_hbm [thread:$0]  %s257, 32, %s3, [#allocation3]
    $region17: #{siamese_forward.9} parent=1 // pred_fallthru
      _
    // Predicated region
    $region18: #{siamese_forward.9} parent=1 // pred_check
      _
    $region19: #{siamese_forward.9} parent=1 // pred_check_branch
      %261 = sbr.rel (0) target = $region21
    $region20: #{siamese_forward.9} parent=1 // pred_region
      %262 = dma.done [#allocation3], 32
    $region21: #{siamese_forward.9} parent=1 // pred_fallthru
      _
    %263 = vsyncpa [#allocation3], 1

// kernel: siamese_forward.8
$region0: #{siamese_forward.8}
  #allocation0 [shape = 'u32[]', space=smem, size = 0x4, offset = 0x4, fixed_abs, tag = 'smem constant byte address 0x4 - core index']
  #allocation1 [shape = 'u32[144,128]{1,0:T(1,128)}', space=vmem, size = 0x12000, scoped, tag = 'internal scratch']
  %s0 = inlined_call_operand.vmem [shape: bf16[2,4,4096], index: 0, kind: input, shape index: {}]
  %s1 = inlined_call_operand.vmem [shape: bf16[4096,512], index: 1, kind: input, shape index: {}]
  %s2 = inlined_call_operand.vmem [shape: f32[2,1,512], index: 2, kind: output, shape index: {}]
  %s3 = sld [smem:[#allocation0]]
  $region41: #{siamese_forward.8} parent=0
    _
  %s5 = ssub.s32 1, %s3
  %s6 = scalar_select 0, %s5, %s3
  loop: start=0, step=1, limit=4
  $region2: #{siamese_forward.8} parent=0 // loop_pre_header
    _
  $region3: #{siamese_forward.8} parent=0 // loop_header
    %s8 = sphi 0, %s12
    %p9 = scmp.ge.s32.totalorder %s8, 4
    %s18 = sphi 0, %s20
    %s21 = sphi 0, %s18
    %s22 = sphi 0, %s21
    %s38 = sphi 0, %s22
    %s42 = sphi 0, %s42
    %s44 = sphi 0, %s42
    %s45 = sphi 0, %s44
    %s59 = sphi 0, %s45
    %s65 = sphi 0, %s67
    %s68 = sphi 0, %s65
    %s69 = sphi 0, %s68
    %s85 = sphi 0, %s69
  $region4: #{siamese_forward.8} parent=0 // loop_header_branch
    %11 = sbr.rel (%p9) target = $region8
  $region5: #{siamese_forward.8} parent=0 // loop_body
    %s13 = ssub.s32 %s8, 1
    %s14 = ssub.s32 %s8, 2
    %s15 = sadd.s32 %s8, 1
    %s16 = ssub.s32 %s8, %s15
    %p17 = scmp.eq.s32.totalorder %s16, 0
    %s19 = sadd.s32 %s18, 1
    %s20 = scalar_select %p17, %s18, %s19
    %p23 = pneg %p17
    %p24 = scmp.eq.s32.totalorder %s8, 1
    %p25 = por %p23, %p24
    %p26 = scmp.ne.s32.totalorder %s18, %s21
    %p27 = scmp.eq.s32.totalorder %s8, 0
    %p28 = por %p26, %p27
    %p29 = scmp.ne.s32.totalorder %s18, %s21
    %p30 = scmp.eq.s32.totalorder %s13, 1
    %p31 = por %p29, %p30
    %p32 = scmp.ne.s32.totalorder %s21, %s22
    %p33 = scmp.eq.s32.totalorder %s13, 0
    %p34 = por %p32, %p33
    %p35 = scmp.ne.s32.totalorder %s21, %s22
    %p36 = scmp.eq.s32.totalorder %s14, 1
    %p37 = por %p35, %p36
    %p39 = scmp.ne.s32.totalorder %s22, %s38
    %p40 = scmp.eq.s32.totalorder %s14, 0
    %p41 = por %p39, %p40
    %s43 = sadd.s32 %s42, 1
    %p46 = scmp.eq.s32.totalorder %s8, 1
    %p47 = scmp.ne.s32.totalorder %s42, %s44
    %p48 = scmp.eq.s32.totalorder %s8, 0
    %p49 = por %p47, %p48
    %p50 = scmp.ne.s32.totalorder %s42, %s44
    %p51 = scmp.eq.s32.totalorder %s13, 1
    %p52 = por %p50, %p51
    %p53 = scmp.ne.s32.totalorder %s44, %s45
    %p54 = scmp.eq.s32.totalorder %s13, 0
    %p55 = por %p53, %p54
    %p56 = scmp.ne.s32.totalorder %s44, %s45
    %p57 = scmp.eq.s32.totalorder %s14, 1
    %p58 = por %p56, %p57
    %p60 = scmp.ne.s32.totalorder %s45, %s59
    %p61 = scmp.eq.s32.totalorder %s14, 0
    %p62 = por %p60, %p61
    %s63 = ssub.s32 %s8, %s15
    %p64 = scmp.eq.s32.totalorder %s63, 0
    %s66 = sadd.s32 %s65, 1
    %s67 = scalar_select %p64, %s65, %s66
    %p70 = pneg %p64
    %p71 = scmp.eq.s32.totalorder %s8, 1
    %p72 = por %p70, %p71
    %p73 = scmp.ne.s32.totalorder %s65, %s68
    %p74 = scmp.eq.s32.totalorder %s8, 0
    %p75 = por %p73, %p74
    %p76 = scmp.ne.s32.totalorder %s65, %s68
    %p77 = scmp.eq.s32.totalorder %s13, 1
    %p78 = por %p76, %p77
    %p79 = scmp.ne.s32.totalorder %s68, %s69
    %p80 = scmp.eq.s32.totalorder %s13, 0
    %p81 = por %p79, %p80
    %p82 = scmp.ne.s32.totalorder %s68, %s69
    %p83 = scmp.eq.s32.totalorder %s14, 1
    %p84 = por %p82, %p83
    %p86 = scmp.ne.s32.totalorder %s69, %s85
    %p87 = scmp.eq.s32.totalorder %s14, 0
    %p88 = por %p86, %p87
    %p89 = scmp.le.s32.totalorder 1, %s8
    %p90 = scmp.lt.s32.totalorder %s8, 3
    %p91 = pnand %p89, %p90
    %p92 = pneg %p91
    // Predicated region
    $region9: #{siamese_forward.8} parent=5 // pred_check
      _
    $region10: #{siamese_forward.8} parent=5 // pred_check_branch
      %94 = sbr.rel (%p91) target = $region12
    $region11: #{siamese_forward.8} parent=5 // pred_region
      %s95 = ssub.s32 %s8, 1
      // Predicated region
      $region13: #{siamese_forward.8} parent=11 // pred_check
        %p96 = pneg %p55
      $region14: #{siamese_forward.8} parent=11 // pred_check_branch
        %98 = sbr.rel (%p96) target = $region16
      $region15: #{siamese_forward.8} parent=11 // pred_region
        _
      $region16: #{siamese_forward.8} parent=11 // pred_fallthru
        _
    $region12: #{siamese_forward.8} parent=5 // pred_fallthru
      _
    %p99 = scmp.lt.s32.totalorder %s8, 2
    // Predicated region
    $region17: #{siamese_forward.8} parent=5 // pred_check
      %p100 = pneg %p99
    $region18: #{siamese_forward.8} parent=5 // pred_check_branch
      %102 = sbr.rel (%p100) target = $region20
    $region19: #{siamese_forward.8} parent=5 // pred_region
      // Predicated region
      $region21: #{siamese_forward.8} parent=19 // pred_check
        %p103 = pneg %p28
      $region22: #{siamese_forward.8} parent=19 // pred_check_branch
        %105 = sbr.rel (%p103) target = $region24
      $region23: #{siamese_forward.8} parent=19 // pred_region
        %p106 = scmp.lt.s32.totalorder %s8, 1
        %s107 = scalar_select %p106, %s8, 1
        %s108 = smul.addr %s107, 32
        %s109 = smul.addr %s108, 2
        %s110 = scalar_lea.vmem %s0, %s109
      $region24: #{siamese_forward.8} parent=19 // pred_fallthru
        _
    $region20: #{siamese_forward.8} parent=5 // pred_fallthru
      _
    %p111 = scmp.le.s32.totalorder 1, %s8
    %p112 = scmp.lt.s32.totalorder %s8, 3
    %p113 = pnand %p111, %p112
    %p114 = pneg %p113
    // Predicated region
    $region25: #{siamese_forward.8} parent=5 // pred_check
      _
    $region26: #{siamese_forward.8} parent=5 // pred_check_branch
      %116 = sbr.rel (%p113) target = $region28
    $region27: #{siamese_forward.8} parent=5 // pred_region
      %s117 = ssub.s32 %s8, 1
      %p118 = scmp.lt.s32.totalorder %s13, 1
      %s119 = scalar_select %p118, %s13, 1
      %s120 = smul.addr %s119, 32
      %s121 = smul.addr %s120, 2
      %s122 = scalar_lea.vmem %s0, %s121
      %p123 = pneg %p34
      %p124 = pneg %p31
      %p125 = pneg %p55
      %p126 = pneg %p52
      %p127 = pneg %p81
      %p128 = pneg %p78
      %p129 = scmp.lt.s32.totalorder %s13, 1
      %s130 = scalar_select %p129, %s13, 1
      %s131 = smul.addr %s130, 4
      %s132 = scalar_lea.vmem %s2, %s131
      %p133 = scmp.lt.s32.totalorder %s13, 1
      %s134 = scalar_select %p133, %s13, 1
      %s135 = smul.addr %s134, 32
      %s136 = smul.addr %s135, 2
      %s137 = scalar_lea.vmem %s0, %s136
      %p138 = scmp.lt.s32.totalorder %s13, 1
      %s139 = scalar_select %p138, %s13, 1
      %s140 = smul.addr %s139, 4
      %s141 = scalar_lea.vmem %s2, %s140
      %v142 = vld [vmem:[%s137] sm:$0xff]
      %v143 = vld [vmem:[%s137 + $0x8] sm:$0xff]
      %v144 = vld [vmem:[%s137 + $0x10] sm:$0xff]
      %v145 = vld [vmem:[%s137 + $0x18] sm:$0xff]
      %v146 = vld [vmem:[%s137 + $0x20] sm:$0xff]
      %v147 = vld [vmem:[%s137 + $0x28] sm:$0xff]
      %v148 = vld [vmem:[%s137 + $0x30] sm:$0xff]
      %v149 = vld [vmem:[%s137 + $0x38] sm:$0xff]
      %v150 = vld [vmem:[%s1] sm:$0xff]
      %v151 = vld [vmem:[%s1 + $0x8] sm:$0xff]
      %v152 = vld [vmem:[%s1 + $0x10] sm:$0xff]
      %v153 = vld [vmem:[%s1 + $0x18] sm:$0xff]
      %v154 = vld [vmem:[%s1 + $0x20] sm:$0xff]
      %v155 = vld [vmem:[%s1 + $0x28] sm:$0xff]
      %v156 = vld [vmem:[%s1 + $0x30] sm:$0xff]
      %v157 = vld [vmem:[%s1 + $0x38] sm:$0xff]
      %v158 = vld [vmem:[%s1 + $0x40] sm:$0xff]
      %v159 = vld [vmem:[%s1 + $0x48] sm:$0xff]
      %v160 = vld [vmem:[%s1 + $0x50] sm:$0xff]
      %v161 = vld [vmem:[%s1 + $0x58] sm:$0xff]
      %v162 = vld [vmem:[%s1 + $0x60] sm:$0xff]
      %v163 = vld [vmem:[%s1 + $0x68] sm:$0xff]
      %v164 = vld [vmem:[%s1 + $0x70] sm:$0xff]
      %v165 = vld [vmem:[%s1 + $0x78] sm:$0xff]
      %v166 = vld [vmem:[%s1 + $0x80] sm:$0xff]
      %v167 = vld [vmem:[%s1 + $0x88] sm:$0xff]
      %v168 = vld [vmem:[%s1 + $0x90] sm:$0xff]
      %v169 = vld [vmem:[%s1 + $0x98] sm:$0xff]
      %v170 = vld [vmem:[%s1 + $0xa0] sm:$0xff]
      %v171 = vld [vmem:[%s1 + $0xa8] sm:$0xff]
      %v172 = vld [vmem:[%s1 + $0xb0] sm:$0xff]
      %v173 = vld [vmem:[%s1 + $0xb8] sm:$0xff]
      %v174 = vld [vmem:[%s1 + $0xc0] sm:$0xff]
      %v175 = vld [vmem:[%s1 + $0xc8] sm:$0xff]
      %v176 = vld [vmem:[%s1 + $0xd0] sm:$0xff]
      %v177 = vld [vmem:[%s1 + $0xd8] sm:$0xff]
      %v178 = vld [vmem:[%s1 + $0xe0] sm:$0xff]
      %v179 = vld [vmem:[%s1 + $0xe8] sm:$0xff]
      %v180 = vld [vmem:[%s1 + $0xf0] sm:$0xff]
      %v181 = vld [vmem:[%s1 + $0xf8] sm:$0xff]
      %v182 = vld [vmem:[%s1 + $0x100] sm:$0xff]
      %v183 = vld [vmem:[%s1 + $0x108] sm:$0xff]
      %v184 = vld [vmem:[%s1 + $0x110] sm:$0xff]
      %v185 = vld [vmem:[%s1 + $0x118] sm:$0xff]
      %v186 = vld [vmem:[%s1 + $0x120] sm:$0xff]
      %v187 = vld [vmem:[%s1 + $0x128] sm:$0xff]
      %v188 = vld [vmem:[%s1 + $0x130] sm:$0xff]
      %v189 = vld [vmem:[%s1 + $0x138] sm:$0xff]
      %v190 = vld [vmem:[%s1 + $0x140] sm:$0xff]
      %v191 = vld [vmem:[%s1 + $0x148] sm:$0xff]
      %v192 = vld [vmem:[%s1 + $0x150] sm:$0xff]
      %v193 = vld [vmem:[%s1 + $0x158] sm:$0xff]
      %v194 = vld [vmem:[%s1 + $0x160] sm:$0xff]
      %v195 = vld [vmem:[%s1 + $0x168] sm:$0xff]
      %v196 = vld [vmem:[%s1 + $0x170] sm:$0xff]
      %v197 = vld [vmem:[%s1 + $0x178] sm:$0xff]
      %v198 = vld [vmem:[%s1 + $0x180] sm:$0xff]
      %v199 = vld [vmem:[%s1 + $0x188] sm:$0xff]
      %v200 = vld [vmem:[%s1 + $0x190] sm:$0xff]
      %v201 = vld [vmem:[%s1 + $0x198] sm:$0xff]
      %v202 = vld [vmem:[%s1 + $0x1a0] sm:$0xff]
      %v203 = vld [vmem:[%s1 + $0x1a8] sm:$0xff]
      %v204 = vld [vmem:[%s1 + $0x1b0] sm:$0xff]
      %v205 = vld [vmem:[%s1 + $0x1b8] sm:$0xff]
      %v206 = vld [vmem:[%s1 + $0x1c0] sm:$0xff]
      %v207 = vld [vmem:[%s1 + $0x1c8] sm:$0xff]
      %v208 = vld [vmem:[%s1 + $0x1d0] sm:$0xff]
      %v209 = vld [vmem:[%s1 + $0x1d8] sm:$0xff]
      %v210 = vld [vmem:[%s1 + $0x1e0] sm:$0xff]
      %v211 = vld [vmem:[%s1 + $0x1e8] sm:$0xff]
      %v212 = vld [vmem:[%s1 + $0x1f0] sm:$0xff]
      %v213 = vld [vmem:[%s1 + $0x1f8] sm:$0xff]
      %v214 = vld [vmem:[%s1 + $0x200] sm:$0xff]
      %v215 = vld [vmem:[%s1 + $0x208] sm:$0xff]
      %v216 = vld [vmem:[%s1 + $0x210] sm:$0xff]
      %v217 = vld [vmem:[%s1 + $0x218] sm:$0xff]
      %v218 = vld [vmem:[%s1 + $0x220] sm:$0xff]
      %v219 = vld [vmem:[%s1 + $0x228] sm:$0xff]
      %v220 = vld [vmem:[%s1 + $0x230] sm:$0xff]
      %v221 = vld [vmem:[%s1 + $0x238] sm:$0xff]
      %v222 = vld [vmem:[%s1 + $0x240] sm:$0xff]
      %v223 = vld [vmem:[%s1 + $0x248] sm:$0xff]
      %v224 = vld [vmem:[%s1 + $0x250] sm:$0xff]
      %v225 = vld [vmem:[%s1 + $0x258] sm:$0xff]
      %v226 = vld [vmem:[%s1 + $0x260] sm:$0xff]
      %v227 = vld [vmem:[%s1 + $0x268] sm:$0xff]
      %v228 = vld [vmem:[%s1 + $0x270] sm:$0xff]
      %v229 = vld [vmem:[%s1 + $0x278] sm:$0xff]
      %v230 = vld [vmem:[%s1 + $0x280] sm:$0xff]
      %v231 = vld [vmem:[%s1 + $0x288] sm:$0xff]
      %v232 = vld [vmem:[%s1 + $0x290] sm:$0xff]
      %v233 = vld [vmem:[%s1 + $0x298] sm:$0xff]
      %v234 = vld [vmem:[%s1 + $0x2a0] sm:$0xff]
      %v235 = vld [vmem:[%s1 + $0x2a8] sm:$0xff]
      %v236 = vld [vmem:[%s1 + $0x2b0] sm:$0xff]
      %v237 = vld [vmem:[%s1 + $0x2b8] sm:$0xff]
      %v238 = vld [vmem:[%s1 + $0x2c0] sm:$0xff]
      %v239 = vld [vmem:[%s1 + $0x2c8] sm:$0xff]
      %v240 = vld [vmem:[%s1 + $0x2d0] sm:$0xff]
      %v241 = vld [vmem:[%s1 + $0x2d8] sm:$0xff]
      %v242 = vld [vmem:[%s1 + $0x2e0] sm:$0xff]
      %v243 = vld [vmem:[%s1 + $0x2e8] sm:$0xff]
      %v244 = vld [vmem:[%s1 + $0x2f0] sm:$0xff]
      %v245 = vld [vmem:[%s1 + $0x2f8] sm:$0xff]
      %v246 = vld [vmem:[%s1 + $0x300] sm:$0xff]
      %v247 = vld [vmem:[%s1 + $0x308] sm:$0xff]
      %v248 = vld [vmem:[%s1 + $0x310] sm:$0xff]
      %v249 = vld [vmem:[%s1 + $0x318] sm:$0xff]
      %v250 = vld [vmem:[%s1 + $0x320] sm:$0xff]
      %v251 = vld [vmem:[%s1 + $0x328] sm:$0xff]
      %v252 = vld [vmem:[%s1 + $0x330] sm:$0xff]
      %v253 = vld [vmem:[%s1 + $0x338] sm:$0xff]
      %v254 = vld [vmem:[%s1 + $0x340] sm:$0xff]
      %v255 = vld [vmem:[%s1 + $0x348] sm:$0xff]
      %v256 = vld [vmem:[%s1 + $0x350] sm:$0xff]
      %v257 = vld [vmem:[%s1 + $0x358] sm:$0xff]
      %v258 = vld [vmem:[%s1 + $0x360] sm:$0xff]
      %v259 = vld [vmem:[%s1 + $0x368] sm:$0xff]
      %v260 = vld [vmem:[%s1 + $0x370] sm:$0xff]
      %v261 = vld [vmem:[%s1 + $0x378] sm:$0xff]
      %v262 = vld [vmem:[%s1 + $0x380] sm:$0xff]
      %v263 = vld [vmem:[%s1 + $0x388] sm:$0xff]
      %v264 = vld [vmem:[%s1 + $0x390] sm:$0xff]
      %v265 = vld [vmem:[%s1 + $0x398] sm:$0xff]
      %v266 = vld [vmem:[%s1 + $0x3a0] sm:$0xff]
      %v267 = vld [vmem:[%s1 + $0x3a8] sm:$0xff]
      %v268 = vld [vmem:[%s1 + $0x3b0] sm:$0xff]
      %v269 = vld [vmem:[%s1 + $0x3b8] sm:$0xff]
      %v270 = vld [vmem:[%s1 + $0x3c0] sm:$0xff]
      %v271 = vld [vmem:[%s1 + $0x3c8] sm:$0xff]
      %v272 = vld [vmem:[%s1 + $0x3d0] sm:$0xff]
      %v273 = vld [vmem:[%s1 + $0x3d8] sm:$0xff]
      %v274 = vld [vmem:[%s1 + $0x3e0] sm:$0xff]
      %v275 = vld [vmem:[%s1 + $0x3e8] sm:$0xff]
      %v276 = vld [vmem:[%s1 + $0x3f0] sm:$0xff]
      %v277 = vld [vmem:[%s1 + $0x3f8] sm:$0xff]
      %v278 = vld [vmem:[%s1 + $0x400] sm:$0xff]
      %v279 = vld [vmem:[%s1 + $0x408] sm:$0xff]
      %v280 = vld [vmem:[%s1 + $0x410] sm:$0xff]
      %v281 = vld [vmem:[%s1 + $0x418] sm:$0xff]
      %v282 = vld [vmem:[%s1 + $0x420] sm:$0xff]
      %v283 = vld [vmem:[%s1 + $0x428] sm:$0xff]
      %v284 = vld [vmem:[%s1 + $0x430] sm:$0xff]
      %v285 = vld [vmem:[%s1 + $0x438] sm:$0xff]
      %v286 = vld [vmem:[%s1 + $0x440] sm:$0xff]
      %v287 = vld [vmem:[%s1 + $0x448] sm:$0xff]
      %v288 = vld [vmem:[%s1 + $0x450] sm:$0xff]
      %v289 = vld [vmem:[%s1 + $0x458] sm:$0xff]
      %v290 = vld [vmem:[%s1 + $0x460] sm:$0xff]
      %v291 = vld [vmem:[%s1 + $0x468] sm:$0xff]
      %v292 = vld [vmem:[%s1 + $0x470] sm:$0xff]
      %v293 = vld [vmem:[%s1 + $0x478] sm:$0xff]
      %v294 = vld [vmem:[%s1 + $0x480] sm:$0xff]
      %v295 = vld [vmem:[%s1 + $0x488] sm:$0xff]
      %v296 = vld [vmem:[%s1 + $0x490] sm:$0xff]
      %v297 = vld [vmem:[%s1 + $0x498] sm:$0xff]
      %v298 = vld [vmem:[%s1 + $0x4a0] sm:$0xff]
      %v299 = vld [vmem:[%s1 + $0x4a8] sm:$0xff]
      %v300 = vld [vmem:[%s1 + $0x4b0] sm:$0xff]
      %v301 = vld [vmem:[%s1 + $0x4b8] sm:$0xff]
      %v302 = vld [vmem:[%s1 + $0x4c0] sm:$0xff]
      %v303 = vld [vmem:[%s1 + $0x4c8] sm:$0xff]
      %v304 = vld [vmem:[%s1 + $0x4d0] sm:$0xff]
      %v305 = vld [vmem:[%s1 + $0x4d8] sm:$0xff]
      %v306 = vld [vmem:[%s1 + $0x4e0] sm:$0xff]
      %v307 = vld [vmem:[%s1 + $0x4e8] sm:$0xff]
      %v308 = vld [vmem:[%s1 + $0x4f0] sm:$0xff]
      %v309 = vld [vmem:[%s1 + $0x4f8] sm:$0xff]
      %v310 = vld [vmem:[%s1 + $0x500] sm:$0xff]
      %v311 = vld [vmem:[%s1 + $0x508] sm:$0xff]
      %v312 = vld [vmem:[%s1 + $0x510] sm:$0xff]
      %v313 = vld [vmem:[%s1 + $0x518] sm:$0xff]
      %v314 = vld [vmem:[%s1 + $0x520] sm:$0xff]
      %v315 = vld [vmem:[%s1 + $0x528] sm:$0xff]
      %v316 = vld [vmem:[%s1 + $0x530] sm:$0xff]
      %v317 = vld [vmem:[%s1 + $0x538] sm:$0xff]
      %v318 = vld [vmem:[%s1 + $0x540] sm:$0xff]
      %v319 = vld [vmem:[%s1 + $0x548] sm:$0xff]
      %v320 = vld [vmem:[%s1 + $0x550] sm:$0xff]
      %v321 = vld [vmem:[%s1 + $0x558] sm:$0xff]
      %v322 = vld [vmem:[%s1 + $0x560] sm:$0xff]
      %v323 = vld [vmem:[%s1 + $0x568] sm:$0xff]
      %v324 = vld [vmem:[%s1 + $0x570] sm:$0xff]
      %v325 = vld [vmem:[%s1 + $0x578] sm:$0xff]
      %v326 = vld [vmem:[%s1 + $0x580] sm:$0xff]
      %v327 = vld [vmem:[%s1 + $0x588] sm:$0xff]
      %v328 = vld [vmem:[%s1 + $0x590] sm:$0xff]
      %v329 = vld [vmem:[%s1 + $0x598] sm:$0xff]
      %v330 = vld [vmem:[%s1 + $0x5a0] sm:$0xff]
      %v331 = vld [vmem:[%s1 + $0x5a8] sm:$0xff]
      %v332 = vld [vmem:[%s1 + $0x5b0] sm:$0xff]
      %v333 = vld [vmem:[%s1 + $0x5b8] sm:$0xff]
      %v334 = vld [vmem:[%s1 + $0x5c0] sm:$0xff]
      %v335 = vld [vmem:[%s1 + $0x5c8] sm:$0xff]
      %v336 = vld [vmem:[%s1 + $0x5d0] sm:$0xff]
      %v337 = vld [vmem:[%s1 + $0x5d8] sm:$0xff]
      %v338 = vld [vmem:[%s1 + $0x5e0] sm:$0xff]
      %v339 = vld [vmem:[%s1 + $0x5e8] sm:$0xff]
      %v340 = vld [vmem:[%s1 + $0x5f0] sm:$0xff]
      %v341 = vld [vmem:[%s1 + $0x5f8] sm:$0xff]
      %v342 = vld [vmem:[%s1 + $0x600] sm:$0xff]
      %v343 = vld [vmem:[%s1 + $0x608] sm:$0xff]
      %v344 = vld [vmem:[%s1 + $0x610] sm:$0xff]
      %v345 = vld [vmem:[%s1 + $0x618] sm:$0xff]
      %v346 = vld [vmem:[%s1 + $0x620] sm:$0xff]
      %v347 = vld [vmem:[%s1 + $0x628] sm:$0xff]
      %v348 = vld [vmem:[%s1 + $0x630] sm:$0xff]
      %v349 = vld [vmem:[%s1 + $0x638] sm:$0xff]
      %v350 = vld [vmem:[%s1 + $0x640] sm:$0xff]
      %v351 = vld [vmem:[%s1 + $0x648] sm:$0xff]
      %v352 = vld [vmem:[%s1 + $0x650] sm:$0xff]
      %v353 = vld [vmem:[%s1 + $0x658] sm:$0xff]
      %v354 = vld [vmem:[%s1 + $0x660] sm:$0xff]
      %v355 = vld [vmem:[%s1 + $0x668] sm:$0xff]
      %v356 = vld [vmem:[%s1 + $0x670] sm:$0xff]
      %v357 = vld [vmem:[%s1 + $0x678] sm:$0xff]
      %v358 = vld [vmem:[%s1 + $0x680] sm:$0xff]
      %v359 = vld [vmem:[%s1 + $0x688] sm:$0xff]
      %v360 = vld [vmem:[%s1 + $0x690] sm:$0xff]
      %v361 = vld [vmem:[%s1 + $0x698] sm:$0xff]
      %v362 = vld [vmem:[%s1 + $0x6a0] sm:$0xff]
      %v363 = vld [vmem:[%s1 + $0x6a8] sm:$0xff]
      %v364 = vld [vmem:[%s1 + $0x6b0] sm:$0xff]
      %v365 = vld [vmem:[%s1 + $0x6b8] sm:$0xff]
      %v366 = vld [vmem:[%s1 + $0x6c0] sm:$0xff]
      %v367 = vld [vmem:[%s1 + $0x6c8] sm:$0xff]
      %v368 = vld [vmem:[%s1 + $0x6d0] sm:$0xff]
      %v369 = vld [vmem:[%s1 + $0x6d8] sm:$0xff]
      %v370 = vld [vmem:[%s1 + $0x6e0] sm:$0xff]
      %v371 = vld [vmem:[%s1 + $0x6e8] sm:$0xff]
      %v372 = vld [vmem:[%s1 + $0x6f0] sm:$0xff]
      %v373 = vld [vmem:[%s1 + $0x6f8] sm:$0xff]
      %v374 = vld [vmem:[%s1 + $0x700] sm:$0xff]
      %v375 = vld [vmem:[%s1 + $0x708] sm:$0xff]
      %v376 = vld [vmem:[%s1 + $0x710] sm:$0xff]
      %v377 = vld [vmem:[%s1 + $0x718] sm:$0xff]
      %v378 = vld [vmem:[%s1 + $0x720] sm:$0xff]
      %v379 = vld [vmem:[%s1 + $0x728] sm:$0xff]
      %v380 = vld [vmem:[%s1 + $0x730] sm:$0xff]
      %v381 = vld [vmem:[%s1 + $0x738] sm:$0xff]
      %v382 = vld [vmem:[%s1 + $0x740] sm:$0xff]
      %v383 = vld [vmem:[%s1 + $0x748] sm:$0xff]
      %v384 = vld [vmem:[%s1 + $0x750] sm:$0xff]
      %v385 = vld [vmem:[%s1 + $0x758] sm:$0xff]
      %v386 = vld [vmem:[%s1 + $0x760] sm:$0xff]
      %v387 = vld [vmem:[%s1 + $0x768] sm:$0xff]
      %v388 = vld [vmem:[%s1 + $0x770] sm:$0xff]
      %v389 = vld [vmem:[%s1 + $0x778] sm:$0xff]
      %v390 = vld [vmem:[%s1 + $0x780] sm:$0xff]
      %v391 = vld [vmem:[%s1 + $0x788] sm:$0xff]
      %v392 = vld [vmem:[%s1 + $0x790] sm:$0xff]
      %v393 = vld [vmem:[%s1 + $0x798] sm:$0xff]
      %v394 = vld [vmem:[%s1 + $0x7a0] sm:$0xff]
      %v395 = vld [vmem:[%s1 + $0x7a8] sm:$0xff]
      %v396 = vld [vmem:[%s1 + $0x7b0] sm:$0xff]
      %v397 = vld [vmem:[%s1 + $0x7b8] sm:$0xff]
      %v398 = vld [vmem:[%s1 + $0x7c0] sm:$0xff]
      %v399 = vld [vmem:[%s1 + $0x7c8] sm:$0xff]
      %v400 = vld [vmem:[%s1 + $0x7d0] sm:$0xff]
      %v401 = vld [vmem:[%s1 + $0x7d8] sm:$0xff]
      %v402 = vld [vmem:[%s1 + $0x7e0] sm:$0xff]
      %v403 = vld [vmem:[%s1 + $0x7e8] sm:$0xff]
      %v404 = vld [vmem:[%s1 + $0x7f0] sm:$0xff]
      %v405 = vld [vmem:[%s1 + $0x7f8] sm:$0xff]
      %v406 = vld [vmem:[%s1 + $0x800] sm:$0xff]
      %v407 = vld [vmem:[%s1 + $0x808] sm:$0xff]
      %v408 = vld [vmem:[%s1 + $0x810] sm:$0xff]
      %v409 = vld [vmem:[%s1 + $0x818] sm:$0xff]
      %v410 = vld [vmem:[%s1 + $0x820] sm:$0xff]
      %v411 = vld [vmem:[%s1 + $0x828] sm:$0xff]
      %v412 = vld [vmem:[%s1 + $0x830] sm:$0xff]
      %v413 = vld [vmem:[%s1 + $0x838] sm:$0xff]
      %v414 = vld [vmem:[%s1 + $0x840] sm:$0xff]
      %v415 = vld [vmem:[%s1 + $0x848] sm:$0xff]
      %v416 = vld [vmem:[%s1 + $0x850] sm:$0xff]
      %v417 = vld [vmem:[%s1 + $0x858] sm:$0xff]
      %v418 = vld [vmem:[%s1 + $0x860] sm:$0xff]
      %v419 = vld [vmem:[%s1 + $0x868] sm:$0xff]
      %v420 = vld [vmem:[%s1 + $0x870] sm:$0xff]
      %v421 = vld [vmem:[%s1 + $0x878] sm:$0xff]
      %v422 = vld [vmem:[%s1 + $0x880] sm:$0xff]
      %v423 = vld [vmem:[%s1 + $0x888] sm:$0xff]
      %v424 = vld [vmem:[%s1 + $0x890] sm:$0xff]
      %v425 = vld [vmem:[%s1 + $0x898] sm:$0xff]
      %v426 = vld [vmem:[%s1 + $0x8a0] sm:$0xff]
      %v427 = vld [vmem:[%s1 + $0x8a8] sm:$0xff]
      %v428 = vld [vmem:[%s1 + $0x8b0] sm:$0xff]
      %v429 = vld [vmem:[%s1 + $0x8b8] sm:$0xff]
      %v430 = vld [vmem:[%s1 + $0x8c0] sm:$0xff]
      %v431 = vld [vmem:[%s1 + $0x8c8] sm:$0xff]
      %v432 = vld [vmem:[%s1 + $0x8d0] sm:$0xff]
      %v433 = vld [vmem:[%s1 + $0x8d8] sm:$0xff]
      %v434 = vld [vmem:[%s1 + $0x8e0] sm:$0xff]
      %v435 = vld [vmem:[%s1 + $0x8e8] sm:$0xff]
      %v436 = vld [vmem:[%s1 + $0x8f0] sm:$0xff]
      %v437 = vld [vmem:[%s1 + $0x8f8] sm:$0xff]
      %v438 = vld [vmem:[%s1 + $0x900] sm:$0xff]
      %v439 = vld [vmem:[%s1 + $0x908] sm:$0xff]
      %v440 = vld [vmem:[%s1 + $0x910] sm:$0xff]
      %v441 = vld [vmem:[%s1 + $0x918] sm:$0xff]
      %v442 = vld [vmem:[%s1 + $0x920] sm:$0xff]
      %v443 = vld [vmem:[%s1 + $0x928] sm:$0xff]
      %v444 = vld [vmem:[%s1 + $0x930] sm:$0xff]
      %v445 = vld [vmem:[%s1 + $0x938] sm:$0xff]
      %v446 = vld [vmem:[%s1 + $0x940] sm:$0xff]
      %v447 = vld [vmem:[%s1 + $0x948] sm:$0xff]
      %v448 = vld [vmem:[%s1 + $0x950] sm:$0xff]
      %v449 = vld [vmem:[%s1 + $0x958] sm:$0xff]
      %v450 = vld [vmem:[%s1 + $0x960] sm:$0xff]
      %v451 = vld [vmem:[%s1 + $0x968] sm:$0xff]
      %v452 = vld [vmem:[%s1 + $0x970] sm:$0xff]
      %v453 = vld [vmem:[%s1 + $0x978] sm:$0xff]
      %v454 = vld [vmem:[%s1 + $0x980] sm:$0xff]
      %v455 = vld [vmem:[%s1 + $0x988] sm:$0xff]
      %v456 = vld [vmem:[%s1 + $0x990] sm:$0xff]
      %v457 = vld [vmem:[%s1 + $0x998] sm:$0xff]
      %v458 = vld [vmem:[%s1 + $0x9a0] sm:$0xff]
      %v459 = vld [vmem:[%s1 + $0x9a8] sm:$0xff]
      %v460 = vld [vmem:[%s1 + $0x9b0] sm:$0xff]
      %v461 = vld [vmem:[%s1 + $0x9b8] sm:$0xff]
      %v462 = vld [vmem:[%s1 + $0x9c0] sm:$0xff]
      %v463 = vld [vmem:[%s1 + $0x9c8] sm:$0xff]
      %v464 = vld [vmem:[%s1 + $0x9d0] sm:$0xff]
      %v465 = vld [vmem:[%s1 + $0x9d8] sm:$0xff]
      %v466 = vld [vmem:[%s1 + $0x9e0] sm:$0xff]
      %v467 = vld [vmem:[%s1 + $0x9e8] sm:$0xff]
      %v468 = vld [vmem:[%s1 + $0x9f0] sm:$0xff]
      %v469 = vld [vmem:[%s1 + $0x9f8] sm:$0xff]
      %v470 = vld [vmem:[%s1 + $0xa00] sm:$0xff]
      %v471 = vld [vmem:[%s1 + $0xa08] sm:$0xff]
      %v472 = vld [vmem:[%s1 + $0xa10] sm:$0xff]
      %v473 = vld [vmem:[%s1 + $0xa18] sm:$0xff]
      %v474 = vld [vmem:[%s1 + $0xa20] sm:$0xff]
      %v475 = vld [vmem:[%s1 + $0xa28] sm:$0xff]
      %v476 = vld [vmem:[%s1 + $0xa30] sm:$0xff]
      %v477 = vld [vmem:[%s1 + $0xa38] sm:$0xff]
      %v478 = vld [vmem:[%s1 + $0xa40] sm:$0xff]
      %v479 = vld [vmem:[%s1 + $0xa48] sm:$0xff]
      %v480 = vld [vmem:[%s1 + $0xa50] sm:$0xff]
      %v481 = vld [vmem:[%s1 + $0xa58] sm:$0xff]
      %v482 = vld [vmem:[%s1 + $0xa60] sm:$0xff]
      %v483 = vld [vmem:[%s1 + $0xa68] sm:$0xff]
      %v484 = vld [vmem:[%s1 + $0xa70] sm:$0xff]
      %v485 = vld [vmem:[%s1 + $0xa78] sm:$0xff]
      %v486 = vld [vmem:[%s1 + $0xa80] sm:$0xff]
      %v487 = vld [vmem:[%s1 + $0xa88] sm:$0xff]
      %v488 = vld [vmem:[%s1 + $0xa90] sm:$0xff]
      %v489 = vld [vmem:[%s1 + $0xa98] sm:$0xff]
      %v490 = vld [vmem:[%s1 + $0xaa0] sm:$0xff]
      %v491 = vld [vmem:[%s1 + $0xaa8] sm:$0xff]
      %v492 = vld [vmem:[%s1 + $0xab0] sm:$0xff]
      %v493 = vld [vmem:[%s1 + $0xab8] sm:$0xff]
      %v494 = vld [vmem:[%s1 + $0xac0] sm:$0xff]
      %v495 = vld [vmem:[%s1 + $0xac8] sm:$0xff]
      %v496 = vld [vmem:[%s1 + $0xad0] sm:$0xff]
      %v497 = vld [vmem:[%s1 + $0xad8] sm:$0xff]
      %v498 = vld [vmem:[%s1 + $0xae0] sm:$0xff]
      %v499 = vld [vmem:[%s1 + $0xae8] sm:$0xff]
      %v500 = vld [vmem:[%s1 + $0xaf0] sm:$0xff]
      %v501 = vld [vmem:[%s1 + $0xaf8] sm:$0xff]
      %v502 = vld [vmem:[%s1 + $0xb00] sm:$0xff]
      %v503 = vld [vmem:[%s1 + $0xb08] sm:$0xff]
      %v504 = vld [vmem:[%s1 + $0xb10] sm:$0xff]
      %v505 = vld [vmem:[%s1 + $0xb18] sm:$0xff]
      %v506 = vld [vmem:[%s1 + $0xb20] sm:$0xff]
      %v507 = vld [vmem:[%s1 + $0xb28] sm:$0xff]
      %v508 = vld [vmem:[%s1 + $0xb30] sm:$0xff]
      %v509 = vld [vmem:[%s1 + $0xb38] sm:$0xff]
      %v510 = vld [vmem:[%s1 + $0xb40] sm:$0xff]
      %v511 = vld [vmem:[%s1 + $0xb48] sm:$0xff]
      %v512 = vld [vmem:[%s1 + $0xb50] sm:$0xff]
      %v513 = vld [vmem:[%s1 + $0xb58] sm:$0xff]
      %v514 = vld [vmem:[%s1 + $0xb60] sm:$0xff]
      %v515 = vld [vmem:[%s1 + $0xb68] sm:$0xff]
      %v516 = vld [vmem:[%s1 + $0xb70] sm:$0xff]
      %v517 = vld [vmem:[%s1 + $0xb78] sm:$0xff]
      %v518 = vld [vmem:[%s1 + $0xb80] sm:$0xff]
      %v519 = vld [vmem:[%s1 + $0xb88] sm:$0xff]
      %v520 = vld [vmem:[%s1 + $0xb90] sm:$0xff]
      %v521 = vld [vmem:[%s1 + $0xb98] sm:$0xff]
      %v522 = vld [vmem:[%s1 + $0xba0] sm:$0xff]
      %v523 = vld [vmem:[%s1 + $0xba8] sm:$0xff]
      %v524 = vld [vmem:[%s1 + $0xbb0] sm:$0xff]
      %v525 = vld [vmem:[%s1 + $0xbb8] sm:$0xff]
      %v526 = vld [vmem:[%s1 + $0xbc0] sm:$0xff]
      %v527 = vld [vmem:[%s1 + $0xbc8] sm:$0xff]
      %v528 = vld [vmem:[%s1 + $0xbd0] sm:$0xff]
      %v529 = vld [vmem:[%s1 + $0xbd8] sm:$0xff]
      %v530 = vld [vmem:[%s1 + $0xbe0] sm:$0xff]
      %v531 = vld [vmem:[%s1 + $0xbe8] sm:$0xff]
      %v532 = vld [vmem:[%s1 + $0xbf0] sm:$0xff]
      %v533 = vld [vmem:[%s1 + $0xbf8] sm:$0xff]
      %v534 = vld [vmem:[%s1 + $0xc00] sm:$0xff]
      %v535 = vld [vmem:[%s1 + $0xc08] sm:$0xff]
      %v536 = vld [vmem:[%s1 + $0xc10] sm:$0xff]
      %v537 = vld [vmem:[%s1 + $0xc18] sm:$0xff]
      %v538 = vld [vmem:[%s1 + $0xc20] sm:$0xff]
      %v539 = vld [vmem:[%s1 + $0xc28] sm:$0xff]
      %v540 = vld [vmem:[%s1 + $0xc30] sm:$0xff]
      %v541 = vld [vmem:[%s1 + $0xc38] sm:$0xff]
      %v542 = vld [vmem:[%s1 + $0xc40] sm:$0xff]
      %v543 = vld [vmem:[%s1 + $0xc48] sm:$0xff]
      %v544 = vld [vmem:[%s1 + $0xc50] sm:$0xff]
      %v545 = vld [vmem:[%s1 + $0xc58] sm:$0xff]
      %v546 = vld [vmem:[%s1 + $0xc60] sm:$0xff]
      %v547 = vld [vmem:[%s1 + $0xc68] sm:$0xff]
      %v548 = vld [vmem:[%s1 + $0xc70] sm:$0xff]
      %v549 = vld [vmem:[%s1 + $0xc78] sm:$0xff]
      %v550 = vld [vmem:[%s1 + $0xc80] sm:$0xff]
      %v551 = vld [vmem:[%s1 + $0xc88] sm:$0xff]
      %v552 = vld [vmem:[%s1 + $0xc90] sm:$0xff]
      %v553 = vld [vmem:[%s1 + $0xc98] sm:$0xff]
      %v554 = vld [vmem:[%s1 + $0xca0] sm:$0xff]
      %v555 = vld [vmem:[%s1 + $0xca8] sm:$0xff]
      %v556 = vld [vmem:[%s1 + $0xcb0] sm:$0xff]
      %v557 = vld [vmem:[%s1 + $0xcb8] sm:$0xff]
      %v558 = vld [vmem:[%s1 + $0xcc0] sm:$0xff]
      %v559 = vld [vmem:[%s1 + $0xcc8] sm:$0xff]
      %v560 = vld [vmem:[%s1 + $0xcd0] sm:$0xff]
      %v561 = vld [vmem:[%s1 + $0xcd8] sm:$0xff]
      %v562 = vld [vmem:[%s1 + $0xce0] sm:$0xff]
      %v563 = vld [vmem:[%s1 + $0xce8] sm:$0xff]
      %v564 = vld [vmem:[%s1 + $0xcf0] sm:$0xff]
      %v565 = vld [vmem:[%s1 + $0xcf8] sm:$0xff]
      %v566 = vld [vmem:[%s1 + $0xd00] sm:$0xff]
      %v567 = vld [vmem:[%s1 + $0xd08] sm:$0xff]
      %v568 = vld [vmem:[%s1 + $0xd10] sm:$0xff]
      %v569 = vld [vmem:[%s1 + $0xd18] sm:$0xff]
      %v570 = vld [vmem:[%s1 + $0xd20] sm:$0xff]
      %v571 = vld [vmem:[%s1 + $0xd28] sm:$0xff]
      %v572 = vld [vmem:[%s1 + $0xd30] sm:$0xff]
      %v573 = vld [vmem:[%s1 + $0xd38] sm:$0xff]
      %v574 = vld [vmem:[%s1 + $0xd40] sm:$0xff]
      %v575 = vld [vmem:[%s1 + $0xd48] sm:$0xff]
      %v576 = vld [vmem:[%s1 + $0xd50] sm:$0xff]
      %v577 = vld [vmem:[%s1 + $0xd58] sm:$0xff]
      %v578 = vld [vmem:[%s1 + $0xd60] sm:$0xff]
      %v579 = vld [vmem:[%s1 + $0xd68] sm:$0xff]
      %v580 = vld [vmem:[%s1 + $0xd70] sm:$0xff]
      %v581 = vld [vmem:[%s1 + $0xd78] sm:$0xff]
      %v582 = vld [vmem:[%s1 + $0xd80] sm:$0xff]
      %v583 = vld [vmem:[%s1 + $0xd88] sm:$0xff]
      %v584 = vld [vmem:[%s1 + $0xd90] sm:$0xff]
      %v585 = vld [vmem:[%s1 + $0xd98] sm:$0xff]
      %v586 = vld [vmem:[%s1 + $0xda0] sm:$0xff]
      %v587 = vld [vmem:[%s1 + $0xda8] sm:$0xff]
      %v588 = vld [vmem:[%s1 + $0xdb0] sm:$0xff]
      %v589 = vld [vmem:[%s1 + $0xdb8] sm:$0xff]
      %v590 = vld [vmem:[%s1 + $0xdc0] sm:$0xff]
      %v591 = vld [vmem:[%s1 + $0xdc8] sm:$0xff]
      %v592 = vld [vmem:[%s1 + $0xdd0] sm:$0xff]
      %v593 = vld [vmem:[%s1 + $0xdd8] sm:$0xff]
      %v594 = vld [vmem:[%s1 + $0xde0] sm:$0xff]
      %v595 = vld [vmem:[%s1 + $0xde8] sm:$0xff]
      %v596 = vld [vmem:[%s1 + $0xdf0] sm:$0xff]
      %v597 = vld [vmem:[%s1 + $0xdf8] sm:$0xff]
      %v598 = vld [vmem:[%s1 + $0xe00] sm:$0xff]
      %v599 = vld [vmem:[%s1 + $0xe08] sm:$0xff]
      %v600 = vld [vmem:[%s1 + $0xe10] sm:$0xff]
      %v601 = vld [vmem:[%s1 + $0xe18] sm:$0xff]
      %v602 = vld [vmem:[%s1 + $0xe20] sm:$0xff]
      %v603 = vld [vmem:[%s1 + $0xe28] sm:$0xff]
      %v604 = vld [vmem:[%s1 + $0xe30] sm:$0xff]
      %v605 = vld [vmem:[%s1 + $0xe38] sm:$0xff]
      %v606 = vld [vmem:[%s1 + $0xe40] sm:$0xff]
      %v607 = vld [vmem:[%s1 + $0xe48] sm:$0xff]
      %v608 = vld [vmem:[%s1 + $0xe50] sm:$0xff]
      %v609 = vld [vmem:[%s1 + $0xe58] sm:$0xff]
      %v610 = vld [vmem:[%s1 + $0xe60] sm:$0xff]
      %v611 = vld [vmem:[%s1 + $0xe68] sm:$0xff]
      %v612 = vld [vmem:[%s1 + $0xe70] sm:$0xff]
      %v613 = vld [vmem:[%s1 + $0xe78] sm:$0xff]
      %v614 = vld [vmem:[%s1 + $0xe80] sm:$0xff]
      %v615 = vld [vmem:[%s1 + $0xe88] sm:$0xff]
      %v616 = vld [vmem:[%s1 + $0xe90] sm:$0xff]
      %v617 = vld [vmem:[%s1 + $0xe98] sm:$0xff]
      %v618 = vld [vmem:[%s1 + $0xea0] sm:$0xff]
      %v619 = vld [vmem:[%s1 + $0xea8] sm:$0xff]
      %v620 = vld [vmem:[%s1 + $0xeb0] sm:$0xff]
      %v621 = vld [vmem:[%s1 + $0xeb8] sm:$0xff]
      %v622 = vld [vmem:[%s1 + $0xec0] sm:$0xff]
      %v623 = vld [vmem:[%s1 + $0xec8] sm:$0xff]
      %v624 = vld [vmem:[%s1 + $0xed0] sm:$0xff]
      %v625 = vld [vmem:[%s1 + $0xed8] sm:$0xff]
      %v626 = vld [vmem:[%s1 + $0xee0] sm:$0xff]
      %v627 = vld [vmem:[%s1 + $0xee8] sm:$0xff]
      %v628 = vld [vmem:[%s1 + $0xef0] sm:$0xff]
      %v629 = vld [vmem:[%s1 + $0xef8] sm:$0xff]
      %v630 = vld [vmem:[%s1 + $0xf00] sm:$0xff]
      %v631 = vld [vmem:[%s1 + $0xf08] sm:$0xff]
      %v632 = vld [vmem:[%s1 + $0xf10] sm:$0xff]
      %v633 = vld [vmem:[%s1 + $0xf18] sm:$0xff]
      %v634 = vld [vmem:[%s1 + $0xf20] sm:$0xff]
      %v635 = vld [vmem:[%s1 + $0xf28] sm:$0xff]
      %v636 = vld [vmem:[%s1 + $0xf30] sm:$0xff]
      %v637 = vld [vmem:[%s1 + $0xf38] sm:$0xff]
      %v638 = vld [vmem:[%s1 + $0xf40] sm:$0xff]
      %v639 = vld [vmem:[%s1 + $0xf48] sm:$0xff]
      %v640 = vld [vmem:[%s1 + $0xf50] sm:$0xff]
      %v641 = vld [vmem:[%s1 + $0xf58] sm:$0xff]
      %v642 = vld [vmem:[%s1 + $0xf60] sm:$0xff]
      %v643 = vld [vmem:[%s1 + $0xf68] sm:$0xff]
      %v644 = vld [vmem:[%s1 + $0xf70] sm:$0xff]
      %v645 = vld [vmem:[%s1 + $0xf78] sm:$0xff]
      %v646 = vld [vmem:[%s1 + $0xf80] sm:$0xff]
      %v647 = vld [vmem:[%s1 + $0xf88] sm:$0xff]
      %v648 = vld [vmem:[%s1 + $0xf90] sm:$0xff]
      %v649 = vld [vmem:[%s1 + $0xf98] sm:$0xff]
      %v650 = vld [vmem:[%s1 + $0xfa0] sm:$0xff]
      %v651 = vld [vmem:[%s1 + $0xfa8] sm:$0xff]
      %v652 = vld [vmem:[%s1 + $0xfb0] sm:$0xff]
      %v653 = vld [vmem:[%s1 + $0xfb8] sm:$0xff]
      %v654 = vld [vmem:[%s1 + $0xfc0] sm:$0xff]
      %v655 = vld [vmem:[%s1 + $0xfc8] sm:$0xff]
      %v656 = vld [vmem:[%s1 + $0xfd0] sm:$0xff]
      %v657 = vld [vmem:[%s1 + $0xfd8] sm:$0xff]
      %v658 = vld [vmem:[%s1 + $0xfe0] sm:$0xff]
      %v659 = vld [vmem:[%s1 + $0xfe8] sm:$0xff]
      %v660 = vld [vmem:[%s1 + $0xff0] sm:$0xff]
      %v661 = vld [vmem:[%s1 + $0xff8] sm:$0xff]
      %v662 = vld [vmem:[%s1 + $0x1000] sm:$0xff]
      %v663 = vld [vmem:[%s1 + $0x1008] sm:$0xff]
      %v664 = vld [vmem:[%s1 + $0x1010] sm:$0xff]
      %v665 = vld [vmem:[%s1 + $0x1018] sm:$0xff]
      %v666 = vld [vmem:[%s1 + $0x1020] sm:$0xff]
      %v667 = vld [vmem:[%s1 + $0x1028] sm:$0xff]
      %v668 = vld [vmem:[%s1 + $0x1030] sm:$0xff]
      %v669 = vld [vmem:[%s1 + $0x1038] sm:$0xff]
      %v670 = vld [vmem:[%s1 + $0x1040] sm:$0xff]
      %v671 = vld [vmem:[%s1 + $0x1048] sm:$0xff]
      %v672 = vld [vmem:[%s1 + $0x1050] sm:$0xff]
      %v673 = vld [vmem:[%s1 + $0x1058] sm:$0xff]
      %v674 = vld [vmem:[%s1 + $0x1060] sm:$0xff]
      %v675 = vld [vmem:[%s1 + $0x1068] sm:$0xff]
      %v676 = vld [vmem:[%s1 + $0x1070] sm:$0xff]
      %v677 = vld [vmem:[%s1 + $0x1078] sm:$0xff]
      %v678 = vld [vmem:[%s1 + $0x1080] sm:$0xff]
      %v679 = vld [vmem:[%s1 + $0x1088] sm:$0xff]
      %v680 = vld [vmem:[%s1 + $0x1090] sm:$0xff]
      %v681 = vld [vmem:[%s1 + $0x1098] sm:$0xff]
      %v682 = vld [vmem:[%s1 + $0x10a0] sm:$0xff]
      %v683 = vld [vmem:[%s1 + $0x10a8] sm:$0xff]
      %v684 = vld [vmem:[%s1 + $0x10b0] sm:$0xff]
      %v685 = vld [vmem:[%s1 + $0x10b8] sm:$0xff]
      %v686 = vld [vmem:[%s1 + $0x10c0] sm:$0xff]
      %v687 = vld [vmem:[%s1 + $0x10c8] sm:$0xff]
      %v688 = vld [vmem:[%s1 + $0x10d0] sm:$0xff]
      %v689 = vld [vmem:[%s1 + $0x10d8] sm:$0xff]
      %v690 = vld [vmem:[%s1 + $0x10e0] sm:$0xff]
      %v691 = vld [vmem:[%s1 + $0x10e8] sm:$0xff]
      %v692 = vld [vmem:[%s1 + $0x10f0] sm:$0xff]
      %v693 = vld [vmem:[%s1 + $0x10f8] sm:$0xff]
      %v694 = vld [vmem:[%s1 + $0x1100] sm:$0xff]
      %v695 = vld [vmem:[%s1 + $0x1108] sm:$0xff]
      %v696 = vld [vmem:[%s1 + $0x1110] sm:$0xff]
      %v697 = vld [vmem:[%s1 + $0x1118] sm:$0xff]
      %v698 = vld [vmem:[%s1 + $0x1120] sm:$0xff]
      %v699 = vld [vmem:[%s1 + $0x1128] sm:$0xff]
      %v700 = vld [vmem:[%s1 + $0x1130] sm:$0xff]
      %v701 = vld [vmem:[%s1 + $0x1138] sm:$0xff]
      %v702 = vld [vmem:[%s1 + $0x1140] sm:$0xff]
      %v703 = vld [vmem:[%s1 + $0x1148] sm:$0xff]
      %v704 = vld [vmem:[%s1 + $0x1150] sm:$0xff]
      %v705 = vld [vmem:[%s1 + $0x1158] sm:$0xff]
      %v706 = vld [vmem:[%s1 + $0x1160] sm:$0xff]
      %v707 = vld [vmem:[%s1 + $0x1168] sm:$0xff]
      %v708 = vld [vmem:[%s1 + $0x1170] sm:$0xff]
      %v709 = vld [vmem:[%s1 + $0x1178] sm:$0xff]
      %v710 = vld [vmem:[%s1 + $0x1180] sm:$0xff]
      %v711 = vld [vmem:[%s1 + $0x1188] sm:$0xff]
      %v712 = vld [vmem:[%s1 + $0x1190] sm:$0xff]
      %v713 = vld [vmem:[%s1 + $0x1198] sm:$0xff]
      %v714 = vld [vmem:[%s1 + $0x11a0] sm:$0xff]
      %v715 = vld [vmem:[%s1 + $0x11a8] sm:$0xff]
      %v716 = vld [vmem:[%s1 + $0x11b0] sm:$0xff]
      %v717 = vld [vmem:[%s1 + $0x11b8] sm:$0xff]
      %v718 = vld [vmem:[%s1 + $0x11c0] sm:$0xff]
      %v719 = vld [vmem:[%s1 + $0x11c8] sm:$0xff]
      %v720 = vld [vmem:[%s1 + $0x11d0] sm:$0xff]
      %v721 = vld [vmem:[%s1 + $0x11d8] sm:$0xff]
      %v722 = vld [vmem:[%s1 + $0x11e0] sm:$0xff]
      %v723 = vld [vmem:[%s1 + $0x11e8] sm:$0xff]
      %v724 = vld [vmem:[%s1 + $0x11f0] sm:$0xff]
      %v725 = vld [vmem:[%s1 + $0x11f8] sm:$0xff]
      %v726 = vld [vmem:[%s1 + $0x1200] sm:$0xff]
      %v727 = vld [vmem:[%s1 + $0x1208] sm:$0xff]
      %v728 = vld [vmem:[%s1 + $0x1210] sm:$0xff]
      %v729 = vld [vmem:[%s1 + $0x1218] sm:$0xff]
      %v730 = vld [vmem:[%s1 + $0x1220] sm:$0xff]
      %v731 = vld [vmem:[%s1 + $0x1228] sm:$0xff]
      %v732 = vld [vmem:[%s1 + $0x1230] sm:$0xff]
      %v733 = vld [vmem:[%s1 + $0x1238] sm:$0xff]
      %v734 = vld [vmem:[%s1 + $0x1240] sm:$0xff]
      %v735 = vld [vmem:[%s1 + $0x1248] sm:$0xff]
      %v736 = vld [vmem:[%s1 + $0x1250] sm:$0xff]
      %v737 = vld [vmem:[%s1 + $0x1258] sm:$0xff]
      %v738 = vld [vmem:[%s1 + $0x1260] sm:$0xff]
      %v739 = vld [vmem:[%s1 + $0x1268] sm:$0xff]
      %v740 = vld [vmem:[%s1 + $0x1270] sm:$0xff]
      %v741 = vld [vmem:[%s1 + $0x1278] sm:$0xff]
      %v742 = vld [vmem:[%s1 + $0x1280] sm:$0xff]
      %v743 = vld [vmem:[%s1 + $0x1288] sm:$0xff]
      %v744 = vld [vmem:[%s1 + $0x1290] sm:$0xff]
      %v745 = vld [vmem:[%s1 + $0x1298] sm:$0xff]
      %v746 = vld [vmem:[%s1 + $0x12a0] sm:$0xff]
      %v747 = vld [vmem:[%s1 + $0x12a8] sm:$0xff]
      %v748 = vld [vmem:[%s1 + $0x12b0] sm:$0xff]
      %v749 = vld [vmem:[%s1 + $0x12b8] sm:$0xff]
      %v750 = vld [vmem:[%s1 + $0x12c0] sm:$0xff]
      %v751 = vld [vmem:[%s1 + $0x12c8] sm:$0xff]
      %v752 = vld [vmem:[%s1 + $0x12d0] sm:$0xff]
      %v753 = vld [vmem:[%s1 + $0x12d8] sm:$0xff]
      %v754 = vld [vmem:[%s1 + $0x12e0] sm:$0xff]
      %v755 = vld [vmem:[%s1 + $0x12e8] sm:$0xff]
      %v756 = vld [vmem:[%s1 + $0x12f0] sm:$0xff]
      %v757 = vld [vmem:[%s1 + $0x12f8] sm:$0xff]
      %v758 = vld [vmem:[%s1 + $0x1300] sm:$0xff]
      %v759 = vld [vmem:[%s1 + $0x1308] sm:$0xff]
      %v760 = vld [vmem:[%s1 + $0x1310] sm:$0xff]
      %v761 = vld [vmem:[%s1 + $0x1318] sm:$0xff]
      %v762 = vld [vmem:[%s1 + $0x1320] sm:$0xff]
      %v763 = vld [vmem:[%s1 + $0x1328] sm:$0xff]
      %v764 = vld [vmem:[%s1 + $0x1330] sm:$0xff]
      %v765 = vld [vmem:[%s1 + $0x1338] sm:$0xff]
      %v766 = vld [vmem:[%s1 + $0x1340] sm:$0xff]
      %v767 = vld [vmem:[%s1 + $0x1348] sm:$0xff]
      %v768 = vld [vmem:[%s1 + $0x1350] sm:$0xff]
      %v769 = vld [vmem:[%s1 + $0x1358] sm:$0xff]
      %v770 = vld [vmem:[%s1 + $0x1360] sm:$0xff]
      %v771 = vld [vmem:[%s1 + $0x1368] sm:$0xff]
      %v772 = vld [vmem:[%s1 + $0x1370] sm:$0xff]
      %v773 = vld [vmem:[%s1 + $0x1378] sm:$0xff]
      %v774 = vld [vmem:[%s1 + $0x1380] sm:$0xff]
      %v775 = vld [vmem:[%s1 + $0x1388] sm:$0xff]
      %v776 = vld [vmem:[%s1 + $0x1390] sm:$0xff]
      %v777 = vld [vmem:[%s1 + $0x1398] sm:$0xff]
      %v778 = vld [vmem:[%s1 + $0x13a0] sm:$0xff]
      %v779 = vld [vmem:[%s1 + $0x13a8] sm:$0xff]
      %v780 = vld [vmem:[%s1 + $0x13b0] sm:$0xff]
      %v781 = vld [vmem:[%s1 + $0x13b8] sm:$0xff]
      %v782 = vld [vmem:[%s1 + $0x13c0] sm:$0xff]
      %v783 = vld [vmem:[%s1 + $0x13c8] sm:$0xff]
      %v784 = vld [vmem:[%s1 + $0x13d0] sm:$0xff]
      %v785 = vld [vmem:[%s1 + $0x13d8] sm:$0xff]
      %v786 = vld [vmem:[%s1 + $0x13e0] sm:$0xff]
      %v787 = vld [vmem:[%s1 + $0x13e8] sm:$0xff]
      %v788 = vld [vmem:[%s1 + $0x13f0] sm:$0xff]
      %v789 = vld [vmem:[%s1 + $0x13f8] sm:$0xff]
      %v790 = vld [vmem:[%s1 + $0x1400] sm:$0xff]
      %v791 = vld [vmem:[%s1 + $0x1408] sm:$0xff]
      %v792 = vld [vmem:[%s1 + $0x1410] sm:$0xff]
      %v793 = vld [vmem:[%s1 + $0x1418] sm:$0xff]
      %v794 = vld [vmem:[%s1 + $0x1420] sm:$0xff]
      %v795 = vld [vmem:[%s1 + $0x1428] sm:$0xff]
      %v796 = vld [vmem:[%s1 + $0x1430] sm:$0xff]
      %v797 = vld [vmem:[%s1 + $0x1438] sm:$0xff]
      %v798 = vld [vmem:[%s1 + $0x1440] sm:$0xff]
      %v799 = vld [vmem:[%s1 + $0x1448] sm:$0xff]
      %v800 = vld [vmem:[%s1 + $0x1450] sm:$0xff]
      %v801 = vld [vmem:[%s1 + $0x1458] sm:$0xff]
      %v802 = vld [vmem:[%s1 + $0x1460] sm:$0xff]
      %v803 = vld [vmem:[%s1 + $0x1468] sm:$0xff]
      %v804 = vld [vmem:[%s1 + $0x1470] sm:$0xff]
      %v805 = vld [vmem:[%s1 + $0x1478] sm:$0xff]
      %v806 = vld [vmem:[%s1 + $0x1480] sm:$0xff]
      %v807 = vld [vmem:[%s1 + $0x1488] sm:$0xff]
      %v808 = vld [vmem:[%s1 + $0x1490] sm:$0xff]
      %v809 = vld [vmem:[%s1 + $0x1498] sm:$0xff]
      %v810 = vld [vmem:[%s1 + $0x14a0] sm:$0xff]
      %v811 = vld [vmem:[%s1 + $0x14a8] sm:$0xff]
      %v812 = vld [vmem:[%s1 + $0x14b0] sm:$0xff]
      %v813 = vld [vmem:[%s1 + $0x14b8] sm:$0xff]
      %v814 = vld [vmem:[%s1 + $0x14c0] sm:$0xff]
      %v815 = vld [vmem:[%s1 + $0x14c8] sm:$0xff]
      %v816 = vld [vmem:[%s1 + $0x14d0] sm:$0xff]
      %v817 = vld [vmem:[%s1 + $0x14d8] sm:$0xff]
      %v818 = vld [vmem:[%s1 + $0x14e0] sm:$0xff]
      %v819 = vld [vmem:[%s1 + $0x14e8] sm:$0xff]
      %v820 = vld [vmem:[%s1 + $0x14f0] sm:$0xff]
      %v821 = vld [vmem:[%s1 + $0x14f8] sm:$0xff]
      %v822 = vld [vmem:[%s1 + $0x1500] sm:$0xff]
      %v823 = vld [vmem:[%s1 + $0x1508] sm:$0xff]
      %v824 = vld [vmem:[%s1 + $0x1510] sm:$0xff]
      %v825 = vld [vmem:[%s1 + $0x1518] sm:$0xff]
      %v826 = vld [vmem:[%s1 + $0x1520] sm:$0xff]
      %v827 = vld [vmem:[%s1 + $0x1528] sm:$0xff]
      %v828 = vld [vmem:[%s1 + $0x1530] sm:$0xff]
      %v829 = vld [vmem:[%s1 + $0x1538] sm:$0xff]
      %v830 = vld [vmem:[%s1 + $0x1540] sm:$0xff]
      %v831 = vld [vmem:[%s1 + $0x1548] sm:$0xff]
      %v832 = vld [vmem:[%s1 + $0x1550] sm:$0xff]
      %v833 = vld [vmem:[%s1 + $0x1558] sm:$0xff]
      %v834 = vld [vmem:[%s1 + $0x1560] sm:$0xff]
      %v835 = vld [vmem:[%s1 + $0x1568] sm:$0xff]
      %v836 = vld [vmem:[%s1 + $0x1570] sm:$0xff]
      %v837 = vld [vmem:[%s1 + $0x1578] sm:$0xff]
      %v838 = vld [vmem:[%s1 + $0x1580] sm:$0xff]
      %v839 = vld [vmem:[%s1 + $0x1588] sm:$0xff]
      %v840 = vld [vmem:[%s1 + $0x1590] sm:$0xff]
      %v841 = vld [vmem:[%s1 + $0x1598] sm:$0xff]
      %v842 = vld [vmem:[%s1 + $0x15a0] sm:$0xff]
      %v843 = vld [vmem:[%s1 + $0x15a8] sm:$0xff]
      %v844 = vld [vmem:[%s1 + $0x15b0] sm:$0xff]
      %v845 = vld [vmem:[%s1 + $0x15b8] sm:$0xff]
      %v846 = vld [vmem:[%s1 + $0x15c0] sm:$0xff]
      %v847 = vld [vmem:[%s1 + $0x15c8] sm:$0xff]
      %v848 = vld [vmem:[%s1 + $0x15d0] sm:$0xff]
      %v849 = vld [vmem:[%s1 + $0x15d8] sm:$0xff]
      %v850 = vld [vmem:[%s1 + $0x15e0] sm:$0xff]
      %v851 = vld [vmem:[%s1 + $0x15e8] sm:$0xff]
      %v852 = vld [vmem:[%s1 + $0x15f0] sm:$0xff]
      %v853 = vld [vmem:[%s1 + $0x15f8] sm:$0xff]
      %v854 = vld [vmem:[%s1 + $0x1600] sm:$0xff]
      %v855 = vld [vmem:[%s1 + $0x1608] sm:$0xff]
      %v856 = vld [vmem:[%s1 + $0x1610] sm:$0xff]
      %v857 = vld [vmem:[%s1 + $0x1618] sm:$0xff]
      %v858 = vld [vmem:[%s1 + $0x1620] sm:$0xff]
      %v859 = vld [vmem:[%s1 + $0x1628] sm:$0xff]
      %v860 = vld [vmem:[%s1 + $0x1630] sm:$0xff]
      %v861 = vld [vmem:[%s1 + $0x1638] sm:$0xff]
      %v862 = vld [vmem:[%s1 + $0x1640] sm:$0xff]
      %v863 = vld [vmem:[%s1 + $0x1648] sm:$0xff]
      %v864 = vld [vmem:[%s1 + $0x1650] sm:$0xff]
      %v865 = vld [vmem:[%s1 + $0x1658] sm:$0xff]
      %v866 = vld [vmem:[%s1 + $0x1660] sm:$0xff]
      %v867 = vld [vmem:[%s1 + $0x1668] sm:$0xff]
      %v868 = vld [vmem:[%s1 + $0x1670] sm:$0xff]
      %v869 = vld [vmem:[%s1 + $0x1678] sm:$0xff]
      %v870 = vld [vmem:[%s1 + $0x1680] sm:$0xff]
      %v871 = vld [vmem:[%s1 + $0x1688] sm:$0xff]
      %v872 = vld [vmem:[%s1 + $0x1690] sm:$0xff]
      %v873 = vld [vmem:[%s1 + $0x1698] sm:$0xff]
      %v874 = vld [vmem:[%s1 + $0x16a0] sm:$0xff]
      %v875 = vld [vmem:[%s1 + $0x16a8] sm:$0xff]
      %v876 = vld [vmem:[%s1 + $0x16b0] sm:$0xff]
      %v877 = vld [vmem:[%s1 + $0x16b8] sm:$0xff]
      %v878 = vld [vmem:[%s1 + $0x16c0] sm:$0xff]
      %v879 = vld [vmem:[%s1 + $0x16c8] sm:$0xff]
      %v880 = vld [vmem:[%s1 + $0x16d0] sm:$0xff]
      %v881 = vld [vmem:[%s1 + $0x16d8] sm:$0xff]
      %v882 = vld [vmem:[%s1 + $0x16e0] sm:$0xff]
      %v883 = vld [vmem:[%s1 + $0x16e8] sm:$0xff]
      %v884 = vld [vmem:[%s1 + $0x16f0] sm:$0xff]
      %v885 = vld [vmem:[%s1 + $0x16f8] sm:$0xff]
      %v886 = vld [vmem:[%s1 + $0x1700] sm:$0xff]
      %v887 = vld [vmem:[%s1 + $0x1708] sm:$0xff]
      %v888 = vld [vmem:[%s1 + $0x1710] sm:$0xff]
      %v889 = vld [vmem:[%s1 + $0x1718] sm:$0xff]
      %v890 = vld [vmem:[%s1 + $0x1720] sm:$0xff]
      %v891 = vld [vmem:[%s1 + $0x1728] sm:$0xff]
      %v892 = vld [vmem:[%s1 + $0x1730] sm:$0xff]
      %v893 = vld [vmem:[%s1 + $0x1738] sm:$0xff]
      %v894 = vld [vmem:[%s1 + $0x1740] sm:$0xff]
      %v895 = vld [vmem:[%s1 + $0x1748] sm:$0xff]
      %v896 = vld [vmem:[%s1 + $0x1750] sm:$0xff]
      %v897 = vld [vmem:[%s1 + $0x1758] sm:$0xff]
      %v898 = vld [vmem:[%s1 + $0x1760] sm:$0xff]
      %v899 = vld [vmem:[%s1 + $0x1768] sm:$0xff]
      %v900 = vld [vmem:[%s1 + $0x1770] sm:$0xff]
      %v901 = vld [vmem:[%s1 + $0x1778] sm:$0xff]
      %v902 = vld [vmem:[%s1 + $0x1780] sm:$0xff]
      %v903 = vld [vmem:[%s1 + $0x1788] sm:$0xff]
      %v904 = vld [vmem:[%s1 + $0x1790] sm:$0xff]
      %v905 = vld [vmem:[%s1 + $0x1798] sm:$0xff]
      %v906 = vld [vmem:[%s1 + $0x17a0] sm:$0xff]
      %v907 = vld [vmem:[%s1 + $0x17a8] sm:$0xff]
      %v908 = vld [vmem:[%s1 + $0x17b0] sm:$0xff]
      %v909 = vld [vmem:[%s1 + $0x17b8] sm:$0xff]
      %v910 = vld [vmem:[%s1 + $0x17c0] sm:$0xff]
      %v911 = vld [vmem:[%s1 + $0x17c8] sm:$0xff]
      %v912 = vld [vmem:[%s1 + $0x17d0] sm:$0xff]
      %v913 = vld [vmem:[%s1 + $0x17d8] sm:$0xff]
      %v914 = vld [vmem:[%s1 + $0x17e0] sm:$0xff]
      %v915 = vld [vmem:[%s1 + $0x17e8] sm:$0xff]
      %v916 = vld [vmem:[%s1 + $0x17f0] sm:$0xff]
      %v917 = vld [vmem:[%s1 + $0x17f8] sm:$0xff]
      %v918 = vld [vmem:[%s1 + $0x1800] sm:$0xff]
      %v919 = vld [vmem:[%s1 + $0x1808] sm:$0xff]
      %v920 = vld [vmem:[%s1 + $0x1810] sm:$0xff]
      %v921 = vld [vmem:[%s1 + $0x1818] sm:$0xff]
      %v922 = vld [vmem:[%s1 + $0x1820] sm:$0xff]
      %v923 = vld [vmem:[%s1 + $0x1828] sm:$0xff]
      %v924 = vld [vmem:[%s1 + $0x1830] sm:$0xff]
      %v925 = vld [vmem:[%s1 + $0x1838] sm:$0xff]
      %v926 = vld [vmem:[%s1 + $0x1840] sm:$0xff]
      %v927 = vld [vmem:[%s1 + $0x1848] sm:$0xff]
      %v928 = vld [vmem:[%s1 + $0x1850] sm:$0xff]
      %v929 = vld [vmem:[%s1 + $0x1858] sm:$0xff]
      %v930 = vld [vmem:[%s1 + $0x1860] sm:$0xff]
      %v931 = vld [vmem:[%s1 + $0x1868] sm:$0xff]
      %v932 = vld [vmem:[%s1 + $0x1870] sm:$0xff]
      %v933 = vld [vmem:[%s1 + $0x1878] sm:$0xff]
      %v934 = vld [vmem:[%s1 + $0x1880] sm:$0xff]
      %v935 = vld [vmem:[%s1 + $0x1888] sm:$0xff]
      %v936 = vld [vmem:[%s1 + $0x1890] sm:$0xff]
      %v937 = vld [vmem:[%s1 + $0x1898] sm:$0xff]
      %v938 = vld [vmem:[%s1 + $0x18a0] sm:$0xff]
      %v939 = vld [vmem:[%s1 + $0x18a8] sm:$0xff]
      %v940 = vld [vmem:[%s1 + $0x18b0] sm:$0xff]
      %v941 = vld [vmem:[%s1 + $0x18b8] sm:$0xff]
      %v942 = vld [vmem:[%s1 + $0x18c0] sm:$0xff]
      %v943 = vld [vmem:[%s1 + $0x18c8] sm:$0xff]
      %v944 = vld [vmem:[%s1 + $0x18d0] sm:$0xff]
      %v945 = vld [vmem:[%s1 + $0x18d8] sm:$0xff]
      %v946 = vld [vmem:[%s1 + $0x18e0] sm:$0xff]
      %v947 = vld [vmem:[%s1 + $0x18e8] sm:$0xff]
      %v948 = vld [vmem:[%s1 + $0x18f0] sm:$0xff]
      %v949 = vld [vmem:[%s1 + $0x18f8] sm:$0xff]
      %v950 = vld [vmem:[%s1 + $0x1900] sm:$0xff]
      %v951 = vld [vmem:[%s1 + $0x1908] sm:$0xff]
      %v952 = vld [vmem:[%s1 + $0x1910] sm:$0xff]
      %v953 = vld [vmem:[%s1 + $0x1918] sm:$0xff]
      %v954 = vld [vmem:[%s1 + $0x1920] sm:$0xff]
      %v955 = vld [vmem:[%s1 + $0x1928] sm:$0xff]
      %v956 = vld [vmem:[%s1 + $0x1930] sm:$0xff]
      %v957 = vld [vmem:[%s1 + $0x1938] sm:$0xff]
      %v958 = vld [vmem:[%s1 + $0x1940] sm:$0xff]
      %v959 = vld [vmem:[%s1 + $0x1948] sm:$0xff]
      %v960 = vld [vmem:[%s1 + $0x1950] sm:$0xff]
      %v961 = vld [vmem:[%s1 + $0x1958] sm:$0xff]
      %v962 = vld [vmem:[%s1 + $0x1960] sm:$0xff]
      %v963 = vld [vmem:[%s1 + $0x1968] sm:$0xff]
      %v964 = vld [vmem:[%s1 + $0x1970] sm:$0xff]
      %v965 = vld [vmem:[%s1 + $0x1978] sm:$0xff]
      %v966 = vld [vmem:[%s1 + $0x1980] sm:$0xff]
      %v967 = vld [vmem:[%s1 + $0x1988] sm:$0xff]
      %v968 = vld [vmem:[%s1 + $0x1990] sm:$0xff]
      %v969 = vld [vmem:[%s1 + $0x1998] sm:$0xff]
      %v970 = vld [vmem:[%s1 + $0x19a0] sm:$0xff]
      %v971 = vld [vmem:[%s1 + $0x19a8] sm:$0xff]
      %v972 = vld [vmem:[%s1 + $0x19b0] sm:$0xff]
      %v973 = vld [vmem:[%s1 + $0x19b8] sm:$0xff]
      %v974 = vld [vmem:[%s1 + $0x19c0] sm:$0xff]
      %v975 = vld [vmem:[%s1 + $0x19c8] sm:$0xff]
      %v976 = vld [vmem:[%s1 + $0x19d0] sm:$0xff]
      %v977 = vld [vmem:[%s1 + $0x19d8] sm:$0xff]
      %v978 = vld [vmem:[%s1 + $0x19e0] sm:$0xff]
      %v979 = vld [vmem:[%s1 + $0x19e8] sm:$0xff]
      %v980 = vld [vmem:[%s1 + $0x19f0] sm:$0xff]
      %v981 = vld [vmem:[%s1 + $0x19f8] sm:$0xff]
      %v982 = vld [vmem:[%s1 + $0x1a00] sm:$0xff]
      %v983 = vld [vmem:[%s1 + $0x1a08] sm:$0xff]
      %v984 = vld [vmem:[%s1 + $0x1a10] sm:$0xff]
      %v985 = vld [vmem:[%s1 + $0x1a18] sm:$0xff]
      %v986 = vld [vmem:[%s1 + $0x1a20] sm:$0xff]
      %v987 = vld [vmem:[%s1 + $0x1a28] sm:$0xff]
      %v988 = vld [vmem:[%s1 + $0x1a30] sm:$0xff]
      %v989 = vld [vmem:[%s1 + $0x1a38] sm:$0xff]
      %v990 = vld [vmem:[%s1 + $0x1a40] sm:$0xff]
      %v991 = vld [vmem:[%s1 + $0x1a48] sm:$0xff]
      %v992 = vld [vmem:[%s1 + $0x1a50] sm:$0xff]
      %v993 = vld [vmem:[%s1 + $0x1a58] sm:$0xff]
      %v994 = vld [vmem:[%s1 + $0x1a60] sm:$0xff]
      %v995 = vld [vmem:[%s1 + $0x1a68] sm:$0xff]
      %v996 = vld [vmem:[%s1 + $0x1a70] sm:$0xff]
      %v997 = vld [vmem:[%s1 + $0x1a78] sm:$0xff]
      %v998 = vld [vmem:[%s1 + $0x1a80] sm:$0xff]
      %v999 = vld [vmem:[%s1 + $0x1a88] sm:$0xff]
      %v1000 = vld [vmem:[%s1 + $0x1a90] sm:$0xff]
      %v1001 = vld [vmem:[%s1 + $0x1a98] sm:$0xff]
      %v1002 = vld [vmem:[%s1 + $0x1aa0] sm:$0xff]
      %v1003 = vld [vmem:[%s1 + $0x1aa8] sm:$0xff]
      %v1004 = vld [vmem:[%s1 + $0x1ab0] sm:$0xff]
      %v1005 = vld [vmem:[%s1 + $0x1ab8] sm:$0xff]
      %v1006 = vld [vmem:[%s1 + $0x1ac0] sm:$0xff]
      %v1007 = vld [vmem:[%s1 + $0x1ac8] sm:$0xff]
      %v1008 = vld [vmem:[%s1 + $0x1ad0] sm:$0xff]
      %v1009 = vld [vmem:[%s1 + $0x1ad8] sm:$0xff]
      %v1010 = vld [vmem:[%s1 + $0x1ae0] sm:$0xff]
      %v1011 = vld [vmem:[%s1 + $0x1ae8] sm:$0xff]
      %v1012 = vld [vmem:[%s1 + $0x1af0] sm:$0xff]
      %v1013 = vld [vmem:[%s1 + $0x1af8] sm:$0xff]
      %v1014 = vld [vmem:[%s1 + $0x1b00] sm:$0xff]
      %v1015 = vld [vmem:[%s1 + $0x1b08] sm:$0xff]
      %v1016 = vld [vmem:[%s1 + $0x1b10] sm:$0xff]
      %v1017 = vld [vmem:[%s1 + $0x1b18] sm:$0xff]
      %v1018 = vld [vmem:[%s1 + $0x1b20] sm:$0xff]
      %v1019 = vld [vmem:[%s1 + $0x1b28] sm:$0xff]
      %v1020 = vld [vmem:[%s1 + $0x1b30] sm:$0xff]
      %v1021 = vld [vmem:[%s1 + $0x1b38] sm:$0xff]
      %v1022 = vld [vmem:[%s1 + $0x1b40] sm:$0xff]
      %v1023 = vld [vmem:[%s1 + $0x1b48] sm:$0xff]
      %v1024 = vld [vmem:[%s1 + $0x1b50] sm:$0xff]
      %v1025 = vld [vmem:[%s1 + $0x1b58] sm:$0xff]
      %v1026 = vld [vmem:[%s1 + $0x1b60] sm:$0xff]
      %v1027 = vld [vmem:[%s1 + $0x1b68] sm:$0xff]
      %v1028 = vld [vmem:[%s1 + $0x1b70] sm:$0xff]
      %v1029 = vld [vmem:[%s1 + $0x1b78] sm:$0xff]
      %v1030 = vld [vmem:[%s1 + $0x1b80] sm:$0xff]
      %v1031 = vld [vmem:[%s1 + $0x1b88] sm:$0xff]
      %v1032 = vld [vmem:[%s1 + $0x1b90] sm:$0xff]
      %v1033 = vld [vmem:[%s1 + $0x1b98] sm:$0xff]
      %v1034 = vld [vmem:[%s1 + $0x1ba0] sm:$0xff]
      %v1035 = vld [vmem:[%s1 + $0x1ba8] sm:$0xff]
      %v1036 = vld [vmem:[%s1 + $0x1bb0] sm:$0xff]
      %v1037 = vld [vmem:[%s1 + $0x1bb8] sm:$0xff]
      %v1038 = vld [vmem:[%s1 + $0x1bc0] sm:$0xff]
      %v1039 = vld [vmem:[%s1 + $0x1bc8] sm:$0xff]
      %v1040 = vld [vmem:[%s1 + $0x1bd0] sm:$0xff]
      %v1041 = vld [vmem:[%s1 + $0x1bd8] sm:$0xff]
      %v1042 = vld [vmem:[%s1 + $0x1be0] sm:$0xff]
      %v1043 = vld [vmem:[%s1 + $0x1be8] sm:$0xff]
      %v1044 = vld [vmem:[%s1 + $0x1bf0] sm:$0xff]
      %v1045 = vld [vmem:[%s1 + $0x1bf8] sm:$0xff]
      %v1046 = vld [vmem:[%s1 + $0x1c00] sm:$0xff]
      %v1047 = vld [vmem:[%s1 + $0x1c08] sm:$0xff]
      %v1048 = vld [vmem:[%s1 + $0x1c10] sm:$0xff]
      %v1049 = vld [vmem:[%s1 + $0x1c18] sm:$0xff]
      %v1050 = vld [vmem:[%s1 + $0x1c20] sm:$0xff]
      %v1051 = vld [vmem:[%s1 + $0x1c28] sm:$0xff]
      %v1052 = vld [vmem:[%s1 + $0x1c30] sm:$0xff]
      %v1053 = vld [vmem:[%s1 + $0x1c38] sm:$0xff]
      %v1054 = vld [vmem:[%s1 + $0x1c40] sm:$0xff]
      %v1055 = vld [vmem:[%s1 + $0x1c48] sm:$0xff]
      %v1056 = vld [vmem:[%s1 + $0x1c50] sm:$0xff]
      %v1057 = vld [vmem:[%s1 + $0x1c58] sm:$0xff]
      %v1058 = vld [vmem:[%s1 + $0x1c60] sm:$0xff]
      %v1059 = vld [vmem:[%s1 + $0x1c68] sm:$0xff]
      %v1060 = vld [vmem:[%s1 + $0x1c70] sm:$0xff]
      %v1061 = vld [vmem:[%s1 + $0x1c78] sm:$0xff]
      %v1062 = vld [vmem:[%s1 + $0x1c80] sm:$0xff]
      %v1063 = vld [vmem:[%s1 + $0x1c88] sm:$0xff]
      %v1064 = vld [vmem:[%s1 + $0x1c90] sm:$0xff]
      %v1065 = vld [vmem:[%s1 + $0x1c98] sm:$0xff]
      %v1066 = vld [vmem:[%s1 + $0x1ca0] sm:$0xff]
      %v1067 = vld [vmem:[%s1 + $0x1ca8] sm:$0xff]
      %v1068 = vld [vmem:[%s1 + $0x1cb0] sm:$0xff]
      %v1069 = vld [vmem:[%s1 + $0x1cb8] sm:$0xff]
      %v1070 = vld [vmem:[%s1 + $0x1cc0] sm:$0xff]
      %v1071 = vld [vmem:[%s1 + $0x1cc8] sm:$0xff]
      %v1072 = vld [vmem:[%s1 + $0x1cd0] sm:$0xff]
      %v1073 = vld [vmem:[%s1 + $0x1cd8] sm:$0xff]
      %v1074 = vld [vmem:[%s1 + $0x1ce0] sm:$0xff]
      %v1075 = vld [vmem:[%s1 + $0x1ce8] sm:$0xff]
      %v1076 = vld [vmem:[%s1 + $0x1cf0] sm:$0xff]
      %v1077 = vld [vmem:[%s1 + $0x1cf8] sm:$0xff]
      %v1078 = vld [vmem:[%s1 + $0x1d00] sm:$0xff]
      %v1079 = vld [vmem:[%s1 + $0x1d08] sm:$0xff]
      %v1080 = vld [vmem:[%s1 + $0x1d10] sm:$0xff]
      %v1081 = vld [vmem:[%s1 + $0x1d18] sm:$0xff]
      %v1082 = vld [vmem:[%s1 + $0x1d20] sm:$0xff]
      %v1083 = vld [vmem:[%s1 + $0x1d28] sm:$0xff]
      %v1084 = vld [vmem:[%s1 + $0x1d30] sm:$0xff]
      %v1085 = vld [vmem:[%s1 + $0x1d38] sm:$0xff]
      %v1086 = vld [vmem:[%s1 + $0x1d40] sm:$0xff]
      %v1087 = vld [vmem:[%s1 + $0x1d48] sm:$0xff]
      %v1088 = vld [vmem:[%s1 + $0x1d50] sm:$0xff]
      %v1089 = vld [vmem:[%s1 + $0x1d58] sm:$0xff]
      %v1090 = vld [vmem:[%s1 + $0x1d60] sm:$0xff]
      %v1091 = vld [vmem:[%s1 + $0x1d68] sm:$0xff]
      %v1092 = vld [vmem:[%s1 + $0x1d70] sm:$0xff]
      %v1093 = vld [vmem:[%s1 + $0x1d78] sm:$0xff]
      %v1094 = vld [vmem:[%s1 + $0x1d80] sm:$0xff]
      %v1095 = vld [vmem:[%s1 + $0x1d88] sm:$0xff]
      %v1096 = vld [vmem:[%s1 + $0x1d90] sm:$0xff]
      %v1097 = vld [vmem:[%s1 + $0x1d98] sm:$0xff]
      %v1098 = vld [vmem:[%s1 + $0x1da0] sm:$0xff]
      %v1099 = vld [vmem:[%s1 + $0x1da8] sm:$0xff]
      %v1100 = vld [vmem:[%s1 + $0x1db0] sm:$0xff]
      %v1101 = vld [vmem:[%s1 + $0x1db8] sm:$0xff]
      %v1102 = vld [vmem:[%s1 + $0x1dc0] sm:$0xff]
      %v1103 = vld [vmem:[%s1 + $0x1dc8] sm:$0xff]
      %v1104 = vld [vmem:[%s1 + $0x1dd0] sm:$0xff]
      %v1105 = vld [vmem:[%s1 + $0x1dd8] sm:$0xff]
      %v1106 = vld [vmem:[%s1 + $0x1de0] sm:$0xff]
      %v1107 = vld [vmem:[%s1 + $0x1de8] sm:$0xff]
      %v1108 = vld [vmem:[%s1 + $0x1df0] sm:$0xff]
      %v1109 = vld [vmem:[%s1 + $0x1df8] sm:$0xff]
      %v1110 = vld [vmem:[%s1 + $0x1e00] sm:$0xff]
      %v1111 = vld [vmem:[%s1 + $0x1e08] sm:$0xff]
      %v1112 = vld [vmem:[%s1 + $0x1e10] sm:$0xff]
      %v1113 = vld [vmem:[%s1 + $0x1e18] sm:$0xff]
      %v1114 = vld [vmem:[%s1 + $0x1e20] sm:$0xff]
      %v1115 = vld [vmem:[%s1 + $0x1e28] sm:$0xff]
      %v1116 = vld [vmem:[%s1 + $0x1e30] sm:$0xff]
      %v1117 = vld [vmem:[%s1 + $0x1e38] sm:$0xff]
      %v1118 = vld [vmem:[%s1 + $0x1e40] sm:$0xff]
      %v1119 = vld [vmem:[%s1 + $0x1e48] sm:$0xff]
      %v1120 = vld [vmem:[%s1 + $0x1e50] sm:$0xff]
      %v1121 = vld [vmem:[%s1 + $0x1e58] sm:$0xff]
      %v1122 = vld [vmem:[%s1 + $0x1e60] sm:$0xff]
      %v1123 = vld [vmem:[%s1 + $0x1e68] sm:$0xff]
      %v1124 = vld [vmem:[%s1 + $0x1e70] sm:$0xff]
      %v1125 = vld [vmem:[%s1 + $0x1e78] sm:$0xff]
      %v1126 = vld [vmem:[%s1 + $0x1e80] sm:$0xff]
      %v1127 = vld [vmem:[%s1 + $0x1e88] sm:$0xff]
      %v1128 = vld [vmem:[%s1 + $0x1e90] sm:$0xff]
      %v1129 = vld [vmem:[%s1 + $0x1e98] sm:$0xff]
      %v1130 = vld [vmem:[%s1 + $0x1ea0] sm:$0xff]
      %v1131 = vld [vmem:[%s1 + $0x1ea8] sm:$0xff]
      %v1132 = vld [vmem:[%s1 + $0x1eb0] sm:$0xff]
      %v1133 = vld [vmem:[%s1 + $0x1eb8] sm:$0xff]
      %v1134 = vld [vmem:[%s1 + $0x1ec0] sm:$0xff]
      %v1135 = vld [vmem:[%s1 + $0x1ec8] sm:$0xff]
      %v1136 = vld [vmem:[%s1 + $0x1ed0] sm:$0xff]
      %v1137 = vld [vmem:[%s1 + $0x1ed8] sm:$0xff]
      %v1138 = vld [vmem:[%s1 + $0x1ee0] sm:$0xff]
      %v1139 = vld [vmem:[%s1 + $0x1ee8] sm:$0xff]
      %v1140 = vld [vmem:[%s1 + $0x1ef0] sm:$0xff]
      %v1141 = vld [vmem:[%s1 + $0x1ef8] sm:$0xff]
      %v1142 = vld [vmem:[%s1 + $0x1f00] sm:$0xff]
      %v1143 = vld [vmem:[%s1 + $0x1f08] sm:$0xff]
      %v1144 = vld [vmem:[%s1 + $0x1f10] sm:$0xff]
      %v1145 = vld [vmem:[%s1 + $0x1f18] sm:$0xff]
      %v1146 = vld [vmem:[%s1 + $0x1f20] sm:$0xff]
      %v1147 = vld [vmem:[%s1 + $0x1f28] sm:$0xff]
      %v1148 = vld [vmem:[%s1 + $0x1f30] sm:$0xff]
      %v1149 = vld [vmem:[%s1 + $0x1f38] sm:$0xff]
      %v1150 = vld [vmem:[%s1 + $0x1f40] sm:$0xff]
      %v1151 = vld [vmem:[%s1 + $0x1f48] sm:$0xff]
      %v1152 = vld [vmem:[%s1 + $0x1f50] sm:$0xff]
      %v1153 = vld [vmem:[%s1 + $0x1f58] sm:$0xff]
      %v1154 = vld [vmem:[%s1 + $0x1f60] sm:$0xff]
      %v1155 = vld [vmem:[%s1 + $0x1f68] sm:$0xff]
      %v1156 = vld [vmem:[%s1 + $0x1f70] sm:$0xff]
      %v1157 = vld [vmem:[%s1 + $0x1f78] sm:$0xff]
      %v1158 = vld [vmem:[%s1 + $0x1f80] sm:$0xff]
      %v1159 = vld [vmem:[%s1 + $0x1f88] sm:$0xff]
      %v1160 = vld [vmem:[%s1 + $0x1f90] sm:$0xff]
      %v1161 = vld [vmem:[%s1 + $0x1f98] sm:$0xff]
      %v1162 = vld [vmem:[%s1 + $0x1fa0] sm:$0xff]
      %v1163 = vld [vmem:[%s1 + $0x1fa8] sm:$0xff]
      %v1164 = vld [vmem:[%s1 + $0x1fb0] sm:$0xff]
      %v1165 = vld [vmem:[%s1 + $0x1fb8] sm:$0xff]
      %v1166 = vld [vmem:[%s1 + $0x1fc0] sm:$0xff]
      %v1167 = vld [vmem:[%s1 + $0x1fc8] sm:$0xff]
      %v1168 = vld [vmem:[%s1 + $0x1fd0] sm:$0xff]
      %v1169 = vld [vmem:[%s1 + $0x1fd8] sm:$0xff]
      %v1170 = vld [vmem:[%s1 + $0x1fe0] sm:$0xff]
      %v1171 = vld [vmem:[%s1 + $0x1fe8] sm:$0xff]
      %v1172 = vld [vmem:[%s1 + $0x1ff0] sm:$0xff]
      %v1173 = vld [vmem:[%s1 + $0x1ff8] sm:$0xff]
      %v1182 = vcombine.high %v142, %v142
      %v1184 = vunpack.c.l.s4 1983009808
      %v1185 = vunpack.c.0.s8 %v1184
      %v1186 = vlaneseq
      %v1187 = vshrl.u32 %v1186, 7
      %v1188 = vsub.s32 %v1185, %v1187
      %v1189 = vrot.slane %v142, %v1188
      %v1191 = vunpack.c.l.s4 1983009808
      %v1192 = vunpack.c.0.s8 %v1191
      %v1193 = vlaneseq
      %v1194 = vshrl.u32 %v1193, 7
      %v1195 = vsub.s32 %v1192, %v1194
      %v1196 = vrot.slane %v1182, %v1195
      %v1197 = vcombine.high %v1189, %v1189
      %v1198 = vcombine.high %v1196, %v1196
      %v1199 = vcombine.high %v143, %v143
      %v1201 = vunpack.c.l.s4 1983009808
      %v1202 = vunpack.c.0.s8 %v1201
      %v1203 = vlaneseq
      %v1204 = vshrl.u32 %v1203, 7
      %v1205 = vsub.s32 %v1202, %v1204
      %v1206 = vrot.slane %v143, %v1205
      %v1208 = vunpack.c.l.s4 1983009808
      %v1209 = vunpack.c.0.s8 %v1208
      %v1210 = vlaneseq
      %v1211 = vshrl.u32 %v1210, 7
      %v1212 = vsub.s32 %v1209, %v1211
      %v1213 = vrot.slane %v1199, %v1212
      %v1214 = vcombine.high %v1206, %v1206
      %v1215 = vcombine.high %v1213, %v1213
      %v1216 = vcombine.high %v144, %v144
      %v1218 = vunpack.c.l.s4 1983009808
      %v1219 = vunpack.c.0.s8 %v1218
      %v1220 = vlaneseq
      %v1221 = vshrl.u32 %v1220, 7
      %v1222 = vsub.s32 %v1219, %v1221
      %v1223 = vrot.slane %v144, %v1222
      %v1225 = vunpack.c.l.s4 1983009808
      %v1226 = vunpack.c.0.s8 %v1225
      %v1227 = vlaneseq
      %v1228 = vshrl.u32 %v1227, 7
      %v1229 = vsub.s32 %v1226, %v1228
      %v1230 = vrot.slane %v1216, %v1229
      %v1231 = vcombine.high %v1223, %v1223
      %v1232 = vcombine.high %v1230, %v1230
      %v1233 = vcombine.high %v145, %v145
      %v1235 = vunpack.c.l.s4 1983009808
      %v1236 = vunpack.c.0.s8 %v1235
      %v1237 = vlaneseq
      %v1238 = vshrl.u32 %v1237, 7
      %v1239 = vsub.s32 %v1236, %v1238
      %v1240 = vrot.slane %v145, %v1239
      %v1242 = vunpack.c.l.s4 1983009808
      %v1243 = vunpack.c.0.s8 %v1242
      %v1244 = vlaneseq
      %v1245 = vshrl.u32 %v1244, 7
      %v1246 = vsub.s32 %v1243, %v1245
      %v1247 = vrot.slane %v1233, %v1246
      %v1248 = vcombine.high %v1240, %v1240
      %v1249 = vcombine.high %v1247, %v1247
      %v1250 = vcombine.high %v146, %v146
      %v1252 = vunpack.c.l.s4 1983009808
      %v1253 = vunpack.c.0.s8 %v1252
      %v1254 = vlaneseq
      %v1255 = vshrl.u32 %v1254, 7
      %v1256 = vsub.s32 %v1253, %v1255
      %v1257 = vrot.slane %v146, %v1256
      %v1259 = vunpack.c.l.s4 1983009808
      %v1260 = vunpack.c.0.s8 %v1259
      %v1261 = vlaneseq
      %v1262 = vshrl.u32 %v1261, 7
      %v1263 = vsub.s32 %v1260, %v1262
      %v1264 = vrot.slane %v1250, %v1263
      %v1265 = vcombine.high %v1257, %v1257
      %v1266 = vcombine.high %v1264, %v1264
      %v1267 = vcombine.high %v147, %v147
      %v1269 = vunpack.c.l.s4 1983009808
      %v1270 = vunpack.c.0.s8 %v1269
      %v1271 = vlaneseq
      %v1272 = vshrl.u32 %v1271, 7
      %v1273 = vsub.s32 %v1270, %v1272
      %v1274 = vrot.slane %v147, %v1273
      %v1276 = vunpack.c.l.s4 1983009808
      %v1277 = vunpack.c.0.s8 %v1276
      %v1278 = vlaneseq
      %v1279 = vshrl.u32 %v1278, 7
      %v1280 = vsub.s32 %v1277, %v1279
      %v1281 = vrot.slane %v1267, %v1280
      %v1282 = vcombine.high %v1274, %v1274
      %v1283 = vcombine.high %v1281, %v1281
      %v1284 = vcombine.high %v148, %v148
      %v1286 = vunpack.c.l.s4 1983009808
      %v1287 = vunpack.c.0.s8 %v1286
      %v1288 = vlaneseq
      %v1289 = vshrl.u32 %v1288, 7
      %v1290 = vsub.s32 %v1287, %v1289
      %v1291 = vrot.slane %v148, %v1290
      %v1293 = vunpack.c.l.s4 1983009808
      %v1294 = vunpack.c.0.s8 %v1293
      %v1295 = vlaneseq
      %v1296 = vshrl.u32 %v1295, 7
      %v1297 = vsub.s32 %v1294, %v1296
      %v1298 = vrot.slane %v1284, %v1297
      %v1299 = vcombine.high %v1291, %v1291
      %v1300 = vcombine.high %v1298, %v1298
      %v1301 = vcombine.high %v149, %v149
      %v1303 = vunpack.c.l.s4 1983009808
      %v1304 = vunpack.c.0.s8 %v1303
      %v1305 = vlaneseq
      %v1306 = vshrl.u32 %v1305, 7
      %v1307 = vsub.s32 %v1304, %v1306
      %v1308 = vrot.slane %v149, %v1307
      %v1310 = vunpack.c.l.s4 1983009808
      %v1311 = vunpack.c.0.s8 %v1310
      %v1312 = vlaneseq
      %v1313 = vshrl.u32 %v1312, 7
      %v1314 = vsub.s32 %v1311, %v1313
      %v1315 = vrot.slane %v1301, %v1314
      %v1316 = vcombine.high %v1308, %v1308
      %v1317 = vcombine.high %v1315, %v1315
      %v2374 = vunpack.c.l.b16 %v150
      %v2375 = vunpack.c.h.b16 %v150
      %v2376 = vunpack.c.l.b16 %v151
      %v2377 = vunpack.c.h.b16 %v151
      %v2378 = vunpack.c.l.b16 %v152
      %v2379 = vunpack.c.h.b16 %v152
      %v2380 = vunpack.c.l.b16 %v153
      %v2381 = vunpack.c.h.b16 %v153
      %v2382 = vunpack.c.l.b16 %v154
      %v2383 = vunpack.c.h.b16 %v154
      %v2384 = vunpack.c.l.b16 %v155
      %v2385 = vunpack.c.h.b16 %v155
      %v2386 = vunpack.c.l.b16 %v156
      %v2387 = vunpack.c.h.b16 %v156
      %v2388 = vunpack.c.l.b16 %v157
      %v2389 = vunpack.c.h.b16 %v157
      %v2390 = vunpack.c.l.b16 %v158
      %v2391 = vunpack.c.h.b16 %v158
      %v2392 = vunpack.c.l.b16 %v159
      %v2393 = vunpack.c.h.b16 %v159
      %v2394 = vunpack.c.l.b16 %v160
      %v2395 = vunpack.c.h.b16 %v160
      %v2396 = vunpack.c.l.b16 %v161
      %v2397 = vunpack.c.h.b16 %v161
      %v2398 = vunpack.c.l.b16 %v162
      %v2399 = vunpack.c.h.b16 %v162
      %v2400 = vunpack.c.l.b16 %v163
      %v2401 = vunpack.c.h.b16 %v163
      %v2402 = vunpack.c.l.b16 %v164
      %v2403 = vunpack.c.h.b16 %v164
      %v2404 = vunpack.c.l.b16 %v165
      %v2405 = vunpack.c.h.b16 %v165
      %v2406 = vunpack.c.l.b16 %v166
      %v2407 = vunpack.c.h.b16 %v166
      %v2408 = vunpack.c.l.b16 %v167
      %v2409 = vunpack.c.h.b16 %v167
      %v2410 = vunpack.c.l.b16 %v168
      %v2411 = vunpack.c.h.b16 %v168
      %v2412 = vunpack.c.l.b16 %v169
      %v2413 = vunpack.c.h.b16 %v169
      %v2414 = vunpack.c.l.b16 %v170
      %v2415 = vunpack.c.h.b16 %v170
      %v2416 = vunpack.c.l.b16 %v171
      %v2417 = vunpack.c.h.b16 %v171
      %v2418 = vunpack.c.l.b16 %v172
      %v2419 = vunpack.c.h.b16 %v172
      %v2420 = vunpack.c.l.b16 %v173
      %v2421 = vunpack.c.h.b16 %v173
      %v2422 = vunpack.c.l.b16 %v174
      %v2423 = vunpack.c.h.b16 %v174
      %v2424 = vunpack.c.l.b16 %v175
      %v2425 = vunpack.c.h.b16 %v175
      %v2426 = vunpack.c.l.b16 %v176
      %v2427 = vunpack.c.h.b16 %v176
      %v2428 = vunpack.c.l.b16 %v177
      %v2429 = vunpack.c.h.b16 %v177
      %v2430 = vunpack.c.l.b16 %v178
      %v2431 = vunpack.c.h.b16 %v178
      %v2432 = vunpack.c.l.b16 %v179
      %v2433 = vunpack.c.h.b16 %v179
      %v2434 = vunpack.c.l.b16 %v180
      %v2435 = vunpack.c.h.b16 %v180
      %v2436 = vunpack.c.l.b16 %v181
      %v2437 = vunpack.c.h.b16 %v181
      %v2438 = vunpack.c.l.b16 %v182
      %v2439 = vunpack.c.h.b16 %v182
      %v2440 = vunpack.c.l.b16 %v183
      %v2441 = vunpack.c.h.b16 %v183
      %v2442 = vunpack.c.l.b16 %v184
      %v2443 = vunpack.c.h.b16 %v184
      %v2444 = vunpack.c.l.b16 %v185
      %v2445 = vunpack.c.h.b16 %v185
      %v2446 = vunpack.c.l.b16 %v186
      %v2447 = vunpack.c.h.b16 %v186
      %v2448 = vunpack.c.l.b16 %v187
      %v2449 = vunpack.c.h.b16 %v187
      %v2450 = vunpack.c.l.b16 %v188
      %v2451 = vunpack.c.h.b16 %v188
      %v2452 = vunpack.c.l.b16 %v189
      %v2453 = vunpack.c.h.b16 %v189
      %v2454 = vunpack.c.l.b16 %v190
      %v2455 = vunpack.c.h.b16 %v190
      %v2456 = vunpack.c.l.b16 %v191
      %v2457 = vunpack.c.h.b16 %v191
      %v2458 = vunpack.c.l.b16 %v192
      %v2459 = vunpack.c.h.b16 %v192
      %v2460 = vunpack.c.l.b16 %v193
      %v2461 = vunpack.c.h.b16 %v193
      %v2462 = vunpack.c.l.b16 %v194
      %v2463 = vunpack.c.h.b16 %v194
      %v2464 = vunpack.c.l.b16 %v195
      %v2465 = vunpack.c.h.b16 %v195
      %v2466 = vunpack.c.l.b16 %v196
      %v2467 = vunpack.c.h.b16 %v196
      %v2468 = vunpack.c.l.b16 %v197
      %v2469 = vunpack.c.h.b16 %v197
      %v2470 = vunpack.c.l.b16 %v198
      %v2471 = vunpack.c.h.b16 %v198
      %v2472 = vunpack.c.l.b16 %v199
      %v2473 = vunpack.c.h.b16 %v199
      %v2474 = vunpack.c.l.b16 %v200
      %v2475 = vunpack.c.h.b16 %v200
      %v2476 = vunpack.c.l.b16 %v201
      %v2477 = vunpack.c.h.b16 %v201
      %v2478 = vunpack.c.l.b16 %v202
      %v2479 = vunpack.c.h.b16 %v202
      %v2480 = vunpack.c.l.b16 %v203
      %v2481 = vunpack.c.h.b16 %v203
      %v2482 = vunpack.c.l.b16 %v204
      %v2483 = vunpack.c.h.b16 %v204
      %v2484 = vunpack.c.l.b16 %v205
      %v2485 = vunpack.c.h.b16 %v205
      %v2486 = vunpack.c.l.b16 %v206
      %v2487 = vunpack.c.h.b16 %v206
      %v2488 = vunpack.c.l.b16 %v207
      %v2489 = vunpack.c.h.b16 %v207
      %v2490 = vunpack.c.l.b16 %v208
      %v2491 = vunpack.c.h.b16 %v208
      %v2492 = vunpack.c.l.b16 %v209
      %v2493 = vunpack.c.h.b16 %v209
      %v2494 = vunpack.c.l.b16 %v210
      %v2495 = vunpack.c.h.b16 %v210
      %v2496 = vunpack.c.l.b16 %v211
      %v2497 = vunpack.c.h.b16 %v211
      %v2498 = vunpack.c.l.b16 %v212
      %v2499 = vunpack.c.h.b16 %v212
      %v2500 = vunpack.c.l.b16 %v213
      %v2501 = vunpack.c.h.b16 %v213
      %v2502 = vunpack.c.l.b16 %v214
      %v2503 = vunpack.c.h.b16 %v214
      %v2504 = vunpack.c.l.b16 %v215
      %v2505 = vunpack.c.h.b16 %v215
      %v2506 = vunpack.c.l.b16 %v216
      %v2507 = vunpack.c.h.b16 %v216
      %v2508 = vunpack.c.l.b16 %v217
      %v2509 = vunpack.c.h.b16 %v217
      %v2510 = vunpack.c.l.b16 %v218
      %v2511 = vunpack.c.h.b16 %v218
      %v2512 = vunpack.c.l.b16 %v219
      %v2513 = vunpack.c.h.b16 %v219
      %v2514 = vunpack.c.l.b16 %v220
      %v2515 = vunpack.c.h.b16 %v220
      %v2516 = vunpack.c.l.b16 %v221
      %v2517 = vunpack.c.h.b16 %v221
      %v2518 = vunpack.c.l.b16 %v222
      %v2519 = vunpack.c.h.b16 %v222
      %v2520 = vunpack.c.l.b16 %v223
      %v2521 = vunpack.c.h.b16 %v223
      %v2522 = vunpack.c.l.b16 %v224
      %v2523 = vunpack.c.h.b16 %v224
      %v2524 = vunpack.c.l.b16 %v225
      %v2525 = vunpack.c.h.b16 %v225
      %v2526 = vunpack.c.l.b16 %v226
      %v2527 = vunpack.c.h.b16 %v226
      %v2528 = vunpack.c.l.b16 %v227
      %v2529 = vunpack.c.h.b16 %v227
      %v2530 = vunpack.c.l.b16 %v228
      %v2531 = vunpack.c.h.b16 %v228
      %v2532 = vunpack.c.l.b16 %v229
      %v2533 = vunpack.c.h.b16 %v229
      %v2534 = vunpack.c.l.b16 %v230
      %v2535 = vunpack.c.h.b16 %v230
      %v2536 = vunpack.c.l.b16 %v231
      %v2537 = vunpack.c.h.b16 %v231
      %v2538 = vunpack.c.l.b16 %v232
      %v2539 = vunpack.c.h.b16 %v232
      %v2540 = vunpack.c.l.b16 %v233
      %v2541 = vunpack.c.h.b16 %v233
      %v2542 = vunpack.c.l.b16 %v234
      %v2543 = vunpack.c.h.b16 %v234
      %v2544 = vunpack.c.l.b16 %v235
      %v2545 = vunpack.c.h.b16 %v235
      %v2546 = vunpack.c.l.b16 %v236
      %v2547 = vunpack.c.h.b16 %v236
      %v2548 = vunpack.c.l.b16 %v237
      %v2549 = vunpack.c.h.b16 %v237
      %v2550 = vunpack.c.l.b16 %v238
      %v2551 = vunpack.c.h.b16 %v238
      %v2552 = vunpack.c.l.b16 %v239
      %v2553 = vunpack.c.h.b16 %v239
      %v2554 = vunpack.c.l.b16 %v240
      %v2555 = vunpack.c.h.b16 %v240
      %v2556 = vunpack.c.l.b16 %v241
      %v2557 = vunpack.c.h.b16 %v241
      %v2558 = vunpack.c.l.b16 %v242
      %v2559 = vunpack.c.h.b16 %v242
      %v2560 = vunpack.c.l.b16 %v243
      %v2561 = vunpack.c.h.b16 %v243
      %v2562 = vunpack.c.l.b16 %v244
      %v2563 = vunpack.c.h.b16 %v244
      %v2564 = vunpack.c.l.b16 %v245
      %v2565 = vunpack.c.h.b16 %v245
      %v2566 = vunpack.c.l.b16 %v246
      %v2567 = vunpack.c.h.b16 %v246
      %v2568 = vunpack.c.l.b16 %v247
      %v2569 = vunpack.c.h.b16 %v247
      %v2570 = vunpack.c.l.b16 %v248
      %v2571 = vunpack.c.h.b16 %v248
      %v2572 = vunpack.c.l.b16 %v249
      %v2573 = vunpack.c.h.b16 %v249
      %v2574 = vunpack.c.l.b16 %v250
      %v2575 = vunpack.c.h.b16 %v250
      %v2576 = vunpack.c.l.b16 %v251
      %v2577 = vunpack.c.h.b16 %v251
      %v2578 = vunpack.c.l.b16 %v252
      %v2579 = vunpack.c.h.b16 %v252
      %v2580 = vunpack.c.l.b16 %v253
      %v2581 = vunpack.c.h.b16 %v253
      %v2582 = vunpack.c.l.b16 %v254
      %v2583 = vunpack.c.h.b16 %v254
      %v2584 = vunpack.c.l.b16 %v255
      %v2585 = vunpack.c.h.b16 %v255
      %v2586 = vunpack.c.l.b16 %v256
      %v2587 = vunpack.c.h.b16 %v256
      %v2588 = vunpack.c.l.b16 %v257
      %v2589 = vunpack.c.h.b16 %v257
      %v2590 = vunpack.c.l.b16 %v258
      %v2591 = vunpack.c.h.b16 %v258
      %v2592 = vunpack.c.l.b16 %v259
      %v2593 = vunpack.c.h.b16 %v259
      %v2594 = vunpack.c.l.b16 %v260
      %v2595 = vunpack.c.h.b16 %v260
      %v2596 = vunpack.c.l.b16 %v261
      %v2597 = vunpack.c.h.b16 %v261
      %v2598 = vunpack.c.l.b16 %v262
      %v2599 = vunpack.c.h.b16 %v262
      %v2600 = vunpack.c.l.b16 %v263
      %v2601 = vunpack.c.h.b16 %v263
      %v2602 = vunpack.c.l.b16 %v264
      %v2603 = vunpack.c.h.b16 %v264
      %v2604 = vunpack.c.l.b16 %v265
      %v2605 = vunpack.c.h.b16 %v265
      %v2606 = vunpack.c.l.b16 %v266
      %v2607 = vunpack.c.h.b16 %v266
      %v2608 = vunpack.c.l.b16 %v267
      %v2609 = vunpack.c.h.b16 %v267
      %v2610 = vunpack.c.l.b16 %v268
      %v2611 = vunpack.c.h.b16 %v268
      %v2612 = vunpack.c.l.b16 %v269
      %v2613 = vunpack.c.h.b16 %v269
      %v2614 = vunpack.c.l.b16 %v270
      %v2615 = vunpack.c.h.b16 %v270
      %v2616 = vunpack.c.l.b16 %v271
      %v2617 = vunpack.c.h.b16 %v271
      %v2618 = vunpack.c.l.b16 %v272
      %v2619 = vunpack.c.h.b16 %v272
      %v2620 = vunpack.c.l.b16 %v273
      %v2621 = vunpack.c.h.b16 %v273
      %v2622 = vunpack.c.l.b16 %v274
      %v2623 = vunpack.c.h.b16 %v274
      %v2624 = vunpack.c.l.b16 %v275
      %v2625 = vunpack.c.h.b16 %v275
      %v2626 = vunpack.c.l.b16 %v276
      %v2627 = vunpack.c.h.b16 %v276
      %v2628 = vunpack.c.l.b16 %v277
      %v2629 = vunpack.c.h.b16 %v277
      %v2630 = vunpack.c.l.b16 %v278
      %v2631 = vunpack.c.h.b16 %v278
      %v2632 = vunpack.c.l.b16 %v279
      %v2633 = vunpack.c.h.b16 %v279
      %v2634 = vunpack.c.l.b16 %v280
      %v2635 = vunpack.c.h.b16 %v280
      %v2636 = vunpack.c.l.b16 %v281
      %v2637 = vunpack.c.h.b16 %v281
      %v2638 = vunpack.c.l.b16 %v282
      %v2639 = vunpack.c.h.b16 %v282
      %v2640 = vunpack.c.l.b16 %v283
      %v2641 = vunpack.c.h.b16 %v283
      %v2642 = vunpack.c.l.b16 %v284
      %v2643 = vunpack.c.h.b16 %v284
      %v2644 = vunpack.c.l.b16 %v285
      %v2645 = vunpack.c.h.b16 %v285
      %v2646 = vunpack.c.l.b16 %v286
      %v2647 = vunpack.c.h.b16 %v286
      %v2648 = vunpack.c.l.b16 %v287
      %v2649 = vunpack.c.h.b16 %v287
      %v2650 = vunpack.c.l.b16 %v288
      %v2651 = vunpack.c.h.b16 %v288
      %v2652 = vunpack.c.l.b16 %v289
      %v2653 = vunpack.c.h.b16 %v289
      %v2654 = vunpack.c.l.b16 %v290
      %v2655 = vunpack.c.h.b16 %v290
      %v2656 = vunpack.c.l.b16 %v291
      %v2657 = vunpack.c.h.b16 %v291
      %v2658 = vunpack.c.l.b16 %v292
      %v2659 = vunpack.c.h.b16 %v292
      %v2660 = vunpack.c.l.b16 %v293
      %v2661 = vunpack.c.h.b16 %v293
      %v2662 = vunpack.c.l.b16 %v294
      %v2663 = vunpack.c.h.b16 %v294
      %v2664 = vunpack.c.l.b16 %v295
      %v2665 = vunpack.c.h.b16 %v295
      %v2666 = vunpack.c.l.b16 %v296
      %v2667 = vunpack.c.h.b16 %v296
      %v2668 = vunpack.c.l.b16 %v297
      %v2669 = vunpack.c.h.b16 %v297
      %v2670 = vunpack.c.l.b16 %v298
      %v2671 = vunpack.c.h.b16 %v298
      %v2672 = vunpack.c.l.b16 %v299
      %v2673 = vunpack.c.h.b16 %v299
      %v2674 = vunpack.c.l.b16 %v300
      %v2675 = vunpack.c.h.b16 %v300
      %v2676 = vunpack.c.l.b16 %v301
      %v2677 = vunpack.c.h.b16 %v301
      %v2678 = vunpack.c.l.b16 %v302
      %v2679 = vunpack.c.h.b16 %v302
      %v2680 = vunpack.c.l.b16 %v303
      %v2681 = vunpack.c.h.b16 %v303
      %v2682 = vunpack.c.l.b16 %v304
      %v2683 = vunpack.c.h.b16 %v304
      %v2684 = vunpack.c.l.b16 %v305
      %v2685 = vunpack.c.h.b16 %v305
      %v2686 = vunpack.c.l.b16 %v306
      %v2687 = vunpack.c.h.b16 %v306
      %v2688 = vunpack.c.l.b16 %v307
      %v2689 = vunpack.c.h.b16 %v307
      %v2690 = vunpack.c.l.b16 %v308
      %v2691 = vunpack.c.h.b16 %v308
      %v2692 = vunpack.c.l.b16 %v309
      %v2693 = vunpack.c.h.b16 %v309
      %v2694 = vunpack.c.l.b16 %v310
      %v2695 = vunpack.c.h.b16 %v310
      %v2696 = vunpack.c.l.b16 %v311
      %v2697 = vunpack.c.h.b16 %v311
      %v2698 = vunpack.c.l.b16 %v312
      %v2699 = vunpack.c.h.b16 %v312
      %v2700 = vunpack.c.l.b16 %v313
      %v2701 = vunpack.c.h.b16 %v313
      %v2702 = vunpack.c.l.b16 %v314
      %v2703 = vunpack.c.h.b16 %v314
      %v2704 = vunpack.c.l.b16 %v315
      %v2705 = vunpack.c.h.b16 %v315
      %v2706 = vunpack.c.l.b16 %v316
      %v2707 = vunpack.c.h.b16 %v316
      %v2708 = vunpack.c.l.b16 %v317
      %v2709 = vunpack.c.h.b16 %v317
      %v2710 = vunpack.c.l.b16 %v318
      %v2711 = vunpack.c.h.b16 %v318
      %v2712 = vunpack.c.l.b16 %v319
      %v2713 = vunpack.c.h.b16 %v319
      %v2714 = vunpack.c.l.b16 %v320
      %v2715 = vunpack.c.h.b16 %v320
      %v2716 = vunpack.c.l.b16 %v321
      %v2717 = vunpack.c.h.b16 %v321
      %v2718 = vunpack.c.l.b16 %v322
      %v2719 = vunpack.c.h.b16 %v322
      %v2720 = vunpack.c.l.b16 %v323
      %v2721 = vunpack.c.h.b16 %v323
      %v2722 = vunpack.c.l.b16 %v324
      %v2723 = vunpack.c.h.b16 %v324
      %v2724 = vunpack.c.l.b16 %v325
      %v2725 = vunpack.c.h.b16 %v325
      %v2726 = vunpack.c.l.b16 %v326
      %v2727 = vunpack.c.h.b16 %v326
      %v2728 = vunpack.c.l.b16 %v327
      %v2729 = vunpack.c.h.b16 %v327
      %v2730 = vunpack.c.l.b16 %v328
      %v2731 = vunpack.c.h.b16 %v328
      %v2732 = vunpack.c.l.b16 %v329
      %v2733 = vunpack.c.h.b16 %v329
      %v2734 = vunpack.c.l.b16 %v330
      %v2735 = vunpack.c.h.b16 %v330
      %v2736 = vunpack.c.l.b16 %v331
      %v2737 = vunpack.c.h.b16 %v331
      %v2738 = vunpack.c.l.b16 %v332
      %v2739 = vunpack.c.h.b16 %v332
      %v2740 = vunpack.c.l.b16 %v333
      %v2741 = vunpack.c.h.b16 %v333
      %v2742 = vunpack.c.l.b16 %v334
      %v2743 = vunpack.c.h.b16 %v334
      %v2744 = vunpack.c.l.b16 %v335
      %v2745 = vunpack.c.h.b16 %v335
      %v2746 = vunpack.c.l.b16 %v336
      %v2747 = vunpack.c.h.b16 %v336
      %v2748 = vunpack.c.l.b16 %v337
      %v2749 = vunpack.c.h.b16 %v337
      %v2750 = vunpack.c.l.b16 %v338
      %v2751 = vunpack.c.h.b16 %v338
      %v2752 = vunpack.c.l.b16 %v339
      %v2753 = vunpack.c.h.b16 %v339
      %v2754 = vunpack.c.l.b16 %v340
      %v2755 = vunpack.c.h.b16 %v340
      %v2756 = vunpack.c.l.b16 %v341
      %v2757 = vunpack.c.h.b16 %v341
      %v2758 = vunpack.c.l.b16 %v342
      %v2759 = vunpack.c.h.b16 %v342
      %v2760 = vunpack.c.l.b16 %v343
      %v2761 = vunpack.c.h.b16 %v343
      %v2762 = vunpack.c.l.b16 %v344
      %v2763 = vunpack.c.h.b16 %v344
      %v2764 = vunpack.c.l.b16 %v345
      %v2765 = vunpack.c.h.b16 %v345
      %v2766 = vunpack.c.l.b16 %v346
      %v2767 = vunpack.c.h.b16 %v346
      %v2768 = vunpack.c.l.b16 %v347
      %v2769 = vunpack.c.h.b16 %v347
      %v2770 = vunpack.c.l.b16 %v348
      %v2771 = vunpack.c.h.b16 %v348
      %v2772 = vunpack.c.l.b16 %v349
      %v2773 = vunpack.c.h.b16 %v349
      %v2774 = vunpack.c.l.b16 %v350
      %v2775 = vunpack.c.h.b16 %v350
      %v2776 = vunpack.c.l.b16 %v351
      %v2777 = vunpack.c.h.b16 %v351
      %v2778 = vunpack.c.l.b16 %v352
      %v2779 = vunpack.c.h.b16 %v352
      %v2780 = vunpack.c.l.b16 %v353
      %v2781 = vunpack.c.h.b16 %v353
      %v2782 = vunpack.c.l.b16 %v354
      %v2783 = vunpack.c.h.b16 %v354
      %v2784 = vunpack.c.l.b16 %v355
      %v2785 = vunpack.c.h.b16 %v355
      %v2786 = vunpack.c.l.b16 %v356
      %v2787 = vunpack.c.h.b16 %v356
      %v2788 = vunpack.c.l.b16 %v357
      %v2789 = vunpack.c.h.b16 %v357
      %v2790 = vunpack.c.l.b16 %v358
      %v2791 = vunpack.c.h.b16 %v358
      %v2792 = vunpack.c.l.b16 %v359
      %v2793 = vunpack.c.h.b16 %v359
      %v2794 = vunpack.c.l.b16 %v360
      %v2795 = vunpack.c.h.b16 %v360
      %v2796 = vunpack.c.l.b16 %v361
      %v2797 = vunpack.c.h.b16 %v361
      %v2798 = vunpack.c.l.b16 %v362
      %v2799 = vunpack.c.h.b16 %v362
      %v2800 = vunpack.c.l.b16 %v363
      %v2801 = vunpack.c.h.b16 %v363
      %v2802 = vunpack.c.l.b16 %v364
      %v2803 = vunpack.c.h.b16 %v364
      %v2804 = vunpack.c.l.b16 %v365
      %v2805 = vunpack.c.h.b16 %v365
      %v2806 = vunpack.c.l.b16 %v366
      %v2807 = vunpack.c.h.b16 %v366
      %v2808 = vunpack.c.l.b16 %v367
      %v2809 = vunpack.c.h.b16 %v367
      %v2810 = vunpack.c.l.b16 %v368
      %v2811 = vunpack.c.h.b16 %v368
      %v2812 = vunpack.c.l.b16 %v369
      %v2813 = vunpack.c.h.b16 %v369
      %v2814 = vunpack.c.l.b16 %v370
      %v2815 = vunpack.c.h.b16 %v370
      %v2816 = vunpack.c.l.b16 %v371
      %v2817 = vunpack.c.h.b16 %v371
      %v2818 = vunpack.c.l.b16 %v372
      %v2819 = vunpack.c.h.b16 %v372
      %v2820 = vunpack.c.l.b16 %v373
      %v2821 = vunpack.c.h.b16 %v373
      %v2822 = vunpack.c.l.b16 %v374
      %v2823 = vunpack.c.h.b16 %v374
      %v2824 = vunpack.c.l.b16 %v375
      %v2825 = vunpack.c.h.b16 %v375
      %v2826 = vunpack.c.l.b16 %v376
      %v2827 = vunpack.c.h.b16 %v376
      %v2828 = vunpack.c.l.b16 %v377
      %v2829 = vunpack.c.h.b16 %v377
      %v2830 = vunpack.c.l.b16 %v378
      %v2831 = vunpack.c.h.b16 %v378
      %v2832 = vunpack.c.l.b16 %v379
      %v2833 = vunpack.c.h.b16 %v379
      %v2834 = vunpack.c.l.b16 %v380
      %v2835 = vunpack.c.h.b16 %v380
      %v2836 = vunpack.c.l.b16 %v381
      %v2837 = vunpack.c.h.b16 %v381
      %v2838 = vunpack.c.l.b16 %v382
      %v2839 = vunpack.c.h.b16 %v382
      %v2840 = vunpack.c.l.b16 %v383
      %v2841 = vunpack.c.h.b16 %v383
      %v2842 = vunpack.c.l.b16 %v384
      %v2843 = vunpack.c.h.b16 %v384
      %v2844 = vunpack.c.l.b16 %v385
      %v2845 = vunpack.c.h.b16 %v385
      %v2846 = vunpack.c.l.b16 %v386
      %v2847 = vunpack.c.h.b16 %v386
      %v2848 = vunpack.c.l.b16 %v387
      %v2849 = vunpack.c.h.b16 %v387
      %v2850 = vunpack.c.l.b16 %v388
      %v2851 = vunpack.c.h.b16 %v388
      %v2852 = vunpack.c.l.b16 %v389
      %v2853 = vunpack.c.h.b16 %v389
      %v2854 = vunpack.c.l.b16 %v390
      %v2855 = vunpack.c.h.b16 %v390
      %v2856 = vunpack.c.l.b16 %v391
      %v2857 = vunpack.c.h.b16 %v391
      %v2858 = vunpack.c.l.b16 %v392
      %v2859 = vunpack.c.h.b16 %v392
      %v2860 = vunpack.c.l.b16 %v393
      %v2861 = vunpack.c.h.b16 %v393
      %v2862 = vunpack.c.l.b16 %v394
      %v2863 = vunpack.c.h.b16 %v394
      %v2864 = vunpack.c.l.b16 %v395
      %v2865 = vunpack.c.h.b16 %v395
      %v2866 = vunpack.c.l.b16 %v396
      %v2867 = vunpack.c.h.b16 %v396
      %v2868 = vunpack.c.l.b16 %v397
      %v2869 = vunpack.c.h.b16 %v397
      %v2870 = vunpack.c.l.b16 %v398
      %v2871 = vunpack.c.h.b16 %v398
      %v2872 = vunpack.c.l.b16 %v399
      %v2873 = vunpack.c.h.b16 %v399
      %v2874 = vunpack.c.l.b16 %v400
      %v2875 = vunpack.c.h.b16 %v400
      %v2876 = vunpack.c.l.b16 %v401
      %v2877 = vunpack.c.h.b16 %v401
      %v2878 = vunpack.c.l.b16 %v402
      %v2879 = vunpack.c.h.b16 %v402
      %v2880 = vunpack.c.l.b16 %v403
      %v2881 = vunpack.c.h.b16 %v403
      %v2882 = vunpack.c.l.b16 %v404
      %v2883 = vunpack.c.h.b16 %v404
      %v2884 = vunpack.c.l.b16 %v405
      %v2885 = vunpack.c.h.b16 %v405
      %v2886 = vunpack.c.l.b16 %v406
      %v2887 = vunpack.c.h.b16 %v406
      %v2888 = vunpack.c.l.b16 %v407
      %v2889 = vunpack.c.h.b16 %v407
      %v2890 = vunpack.c.l.b16 %v408
      %v2891 = vunpack.c.h.b16 %v408
      %v2892 = vunpack.c.l.b16 %v409
      %v2893 = vunpack.c.h.b16 %v409
      %v2894 = vunpack.c.l.b16 %v410
      %v2895 = vunpack.c.h.b16 %v410
      %v2896 = vunpack.c.l.b16 %v411
      %v2897 = vunpack.c.h.b16 %v411
      %v2898 = vunpack.c.l.b16 %v412
      %v2899 = vunpack.c.h.b16 %v412
      %v2900 = vunpack.c.l.b16 %v413
      %v2901 = vunpack.c.h.b16 %v413
      %v2902 = vunpack.c.l.b16 %v414
      %v2903 = vunpack.c.h.b16 %v414
      %v2904 = vunpack.c.l.b16 %v415
      %v2905 = vunpack.c.h.b16 %v415
      %v2906 = vunpack.c.l.b16 %v416
      %v2907 = vunpack.c.h.b16 %v416
      %v2908 = vunpack.c.l.b16 %v417
      %v2909 = vunpack.c.h.b16 %v417
      %v2910 = vunpack.c.l.b16 %v418
      %v2911 = vunpack.c.h.b16 %v418
      %v2912 = vunpack.c.l.b16 %v419
      %v2913 = vunpack.c.h.b16 %v419
      %v2914 = vunpack.c.l.b16 %v420
      %v2915 = vunpack.c.h.b16 %v420
      %v2916 = vunpack.c.l.b16 %v421
      %v2917 = vunpack.c.h.b16 %v421
      %v2918 = vunpack.c.l.b16 %v422
      %v2919 = vunpack.c.h.b16 %v422
      %v2920 = vunpack.c.l.b16 %v423
      %v2921 = vunpack.c.h.b16 %v423
      %v2922 = vunpack.c.l.b16 %v424
      %v2923 = vunpack.c.h.b16 %v424
      %v2924 = vunpack.c.l.b16 %v425
      %v2925 = vunpack.c.h.b16 %v425
      %v2926 = vunpack.c.l.b16 %v426
      %v2927 = vunpack.c.h.b16 %v426
      %v2928 = vunpack.c.l.b16 %v427
      %v2929 = vunpack.c.h.b16 %v427
      %v2930 = vunpack.c.l.b16 %v428
      %v2931 = vunpack.c.h.b16 %v428
      %v2932 = vunpack.c.l.b16 %v429
      %v2933 = vunpack.c.h.b16 %v429
      %v2934 = vunpack.c.l.b16 %v430
      %v2935 = vunpack.c.h.b16 %v430
      %v2936 = vunpack.c.l.b16 %v431
      %v2937 = vunpack.c.h.b16 %v431
      %v2938 = vunpack.c.l.b16 %v432
      %v2939 = vunpack.c.h.b16 %v432
      %v2940 = vunpack.c.l.b16 %v433
      %v2941 = vunpack.c.h.b16 %v433
      %v2942 = vunpack.c.l.b16 %v434
      %v2943 = vunpack.c.h.b16 %v434
      %v2944 = vunpack.c.l.b16 %v435
      %v2945 = vunpack.c.h.b16 %v435
      %v2946 = vunpack.c.l.b16 %v436
      %v2947 = vunpack.c.h.b16 %v436
      %v2948 = vunpack.c.l.b16 %v437
      %v2949 = vunpack.c.h.b16 %v437
      %v2950 = vunpack.c.l.b16 %v438
      %v2951 = vunpack.c.h.b16 %v438
      %v2952 = vunpack.c.l.b16 %v439
      %v2953 = vunpack.c.h.b16 %v439
      %v2954 = vunpack.c.l.b16 %v440
      %v2955 = vunpack.c.h.b16 %v440
      %v2956 = vunpack.c.l.b16 %v441
      %v2957 = vunpack.c.h.b16 %v441
      %v2958 = vunpack.c.l.b16 %v442
      %v2959 = vunpack.c.h.b16 %v442
      %v2960 = vunpack.c.l.b16 %v443
      %v2961 = vunpack.c.h.b16 %v443
      %v2962 = vunpack.c.l.b16 %v444
      %v2963 = vunpack.c.h.b16 %v444
      %v2964 = vunpack.c.l.b16 %v445
      %v2965 = vunpack.c.h.b16 %v445
      %v2966 = vunpack.c.l.b16 %v446
      %v2967 = vunpack.c.h.b16 %v446
      %v2968 = vunpack.c.l.b16 %v447
      %v2969 = vunpack.c.h.b16 %v447
      %v2970 = vunpack.c.l.b16 %v448
      %v2971 = vunpack.c.h.b16 %v448
      %v2972 = vunpack.c.l.b16 %v449
      %v2973 = vunpack.c.h.b16 %v449
      %v2974 = vunpack.c.l.b16 %v450
      %v2975 = vunpack.c.h.b16 %v450
      %v2976 = vunpack.c.l.b16 %v451
      %v2977 = vunpack.c.h.b16 %v451
      %v2978 = vunpack.c.l.b16 %v452
      %v2979 = vunpack.c.h.b16 %v452
      %v2980 = vunpack.c.l.b16 %v453
      %v2981 = vunpack.c.h.b16 %v453
      %v2982 = vunpack.c.l.b16 %v454
      %v2983 = vunpack.c.h.b16 %v454
      %v2984 = vunpack.c.l.b16 %v455
      %v2985 = vunpack.c.h.b16 %v455
      %v2986 = vunpack.c.l.b16 %v456
      %v2987 = vunpack.c.h.b16 %v456
      %v2988 = vunpack.c.l.b16 %v457
      %v2989 = vunpack.c.h.b16 %v457
      %v2990 = vunpack.c.l.b16 %v458
      %v2991 = vunpack.c.h.b16 %v458
      %v2992 = vunpack.c.l.b16 %v459
      %v2993 = vunpack.c.h.b16 %v459
      %v2994 = vunpack.c.l.b16 %v460
      %v2995 = vunpack.c.h.b16 %v460
      %v2996 = vunpack.c.l.b16 %v461
      %v2997 = vunpack.c.h.b16 %v461
      %v2998 = vunpack.c.l.b16 %v462
      %v2999 = vunpack.c.h.b16 %v462
      %v3000 = vunpack.c.l.b16 %v463
      %v3001 = vunpack.c.h.b16 %v463
      %v3002 = vunpack.c.l.b16 %v464
      %v3003 = vunpack.c.h.b16 %v464
      %v3004 = vunpack.c.l.b16 %v465
      %v3005 = vunpack.c.h.b16 %v465
      %v3006 = vunpack.c.l.b16 %v466
      %v3007 = vunpack.c.h.b16 %v466
      %v3008 = vunpack.c.l.b16 %v467
      %v3009 = vunpack.c.h.b16 %v467
      %v3010 = vunpack.c.l.b16 %v468
      %v3011 = vunpack.c.h.b16 %v468
      %v3012 = vunpack.c.l.b16 %v469
      %v3013 = vunpack.c.h.b16 %v469
      %v3014 = vunpack.c.l.b16 %v470
      %v3015 = vunpack.c.h.b16 %v470
      %v3016 = vunpack.c.l.b16 %v471
      %v3017 = vunpack.c.h.b16 %v471
      %v3018 = vunpack.c.l.b16 %v472
      %v3019 = vunpack.c.h.b16 %v472
      %v3020 = vunpack.c.l.b16 %v473
      %v3021 = vunpack.c.h.b16 %v473
      %v3022 = vunpack.c.l.b16 %v474
      %v3023 = vunpack.c.h.b16 %v474
      %v3024 = vunpack.c.l.b16 %v475
      %v3025 = vunpack.c.h.b16 %v475
      %v3026 = vunpack.c.l.b16 %v476
      %v3027 = vunpack.c.h.b16 %v476
      %v3028 = vunpack.c.l.b16 %v477
      %v3029 = vunpack.c.h.b16 %v477
      %v3030 = vunpack.c.l.b16 %v478
      %v3031 = vunpack.c.h.b16 %v478
      %v3032 = vunpack.c.l.b16 %v479
      %v3033 = vunpack.c.h.b16 %v479
      %v3034 = vunpack.c.l.b16 %v480
      %v3035 = vunpack.c.h.b16 %v480
      %v3036 = vunpack.c.l.b16 %v481
      %v3037 = vunpack.c.h.b16 %v481
      %v3038 = vunpack.c.l.b16 %v482
      %v3039 = vunpack.c.h.b16 %v482
      %v3040 = vunpack.c.l.b16 %v483
      %v3041 = vunpack.c.h.b16 %v483
      %v3042 = vunpack.c.l.b16 %v484
      %v3043 = vunpack.c.h.b16 %v484
      %v3044 = vunpack.c.l.b16 %v485
      %v3045 = vunpack.c.h.b16 %v485
      %v3046 = vunpack.c.l.b16 %v486
      %v3047 = vunpack.c.h.b16 %v486
      %v3048 = vunpack.c.l.b16 %v487
      %v3049 = vunpack.c.h.b16 %v487
      %v3050 = vunpack.c.l.b16 %v488
      %v3051 = vunpack.c.h.b16 %v488
      %v3052 = vunpack.c.l.b16 %v489
      %v3053 = vunpack.c.h.b16 %v489
      %v3054 = vunpack.c.l.b16 %v490
      %v3055 = vunpack.c.h.b16 %v490
      %v3056 = vunpack.c.l.b16 %v491
      %v3057 = vunpack.c.h.b16 %v491
      %v3058 = vunpack.c.l.b16 %v492
      %v3059 = vunpack.c.h.b16 %v492
      %v3060 = vunpack.c.l.b16 %v493
      %v3061 = vunpack.c.h.b16 %v493
      %v3062 = vunpack.c.l.b16 %v494
      %v3063 = vunpack.c.h.b16 %v494
      %v3064 = vunpack.c.l.b16 %v495
      %v3065 = vunpack.c.h.b16 %v495
      %v3066 = vunpack.c.l.b16 %v496
      %v3067 = vunpack.c.h.b16 %v496
      %v3068 = vunpack.c.l.b16 %v497
      %v3069 = vunpack.c.h.b16 %v497
      %v3070 = vunpack.c.l.b16 %v498
      %v3071 = vunpack.c.h.b16 %v498
      %v3072 = vunpack.c.l.b16 %v499
      %v3073 = vunpack.c.h.b16 %v499
      %v3074 = vunpack.c.l.b16 %v500
      %v3075 = vunpack.c.h.b16 %v500
      %v3076 = vunpack.c.l.b16 %v501
      %v3077 = vunpack.c.h.b16 %v501
      %v3078 = vunpack.c.l.b16 %v502
      %v3079 = vunpack.c.h.b16 %v502
      %v3080 = vunpack.c.l.b16 %v503
      %v3081 = vunpack.c.h.b16 %v503
      %v3082 = vunpack.c.l.b16 %v504
      %v3083 = vunpack.c.h.b16 %v504
      %v3084 = vunpack.c.l.b16 %v505
      %v3085 = vunpack.c.h.b16 %v505
      %v3086 = vunpack.c.l.b16 %v506
      %v3087 = vunpack.c.h.b16 %v506
      %v3088 = vunpack.c.l.b16 %v507
      %v3089 = vunpack.c.h.b16 %v507
      %v3090 = vunpack.c.l.b16 %v508
      %v3091 = vunpack.c.h.b16 %v508
      %v3092 = vunpack.c.l.b16 %v509
      %v3093 = vunpack.c.h.b16 %v509
      %v3094 = vunpack.c.l.b16 %v510
      %v3095 = vunpack.c.h.b16 %v510
      %v3096 = vunpack.c.l.b16 %v511
      %v3097 = vunpack.c.h.b16 %v511
      %v3098 = vunpack.c.l.b16 %v512
      %v3099 = vunpack.c.h.b16 %v512
      %v3100 = vunpack.c.l.b16 %v513
      %v3101 = vunpack.c.h.b16 %v513
      %v3102 = vunpack.c.l.b16 %v514
      %v3103 = vunpack.c.h.b16 %v514
      %v3104 = vunpack.c.l.b16 %v515
      %v3105 = vunpack.c.h.b16 %v515
      %v3106 = vunpack.c.l.b16 %v516
      %v3107 = vunpack.c.h.b16 %v516
      %v3108 = vunpack.c.l.b16 %v517
      %v3109 = vunpack.c.h.b16 %v517
      %v3110 = vunpack.c.l.b16 %v518
      %v3111 = vunpack.c.h.b16 %v518
      %v3112 = vunpack.c.l.b16 %v519
      %v3113 = vunpack.c.h.b16 %v519
      %v3114 = vunpack.c.l.b16 %v520
      %v3115 = vunpack.c.h.b16 %v520
      %v3116 = vunpack.c.l.b16 %v521
      %v3117 = vunpack.c.h.b16 %v521
      %v3118 = vunpack.c.l.b16 %v522
      %v3119 = vunpack.c.h.b16 %v522
      %v3120 = vunpack.c.l.b16 %v523
      %v3121 = vunpack.c.h.b16 %v523
      %v3122 = vunpack.c.l.b16 %v524
      %v3123 = vunpack.c.h.b16 %v524
      %v3124 = vunpack.c.l.b16 %v525
      %v3125 = vunpack.c.h.b16 %v525
      %v3126 = vunpack.c.l.b16 %v526
      %v3127 = vunpack.c.h.b16 %v526
      %v3128 = vunpack.c.l.b16 %v527
      %v3129 = vunpack.c.h.b16 %v527
      %v3130 = vunpack.c.l.b16 %v528
      %v3131 = vunpack.c.h.b16 %v528
      %v3132 = vunpack.c.l.b16 %v529
      %v3133 = vunpack.c.h.b16 %v529
      %v3134 = vunpack.c.l.b16 %v530
      %v3135 = vunpack.c.h.b16 %v530
      %v3136 = vunpack.c.l.b16 %v531
      %v3137 = vunpack.c.h.b16 %v531
      %v3138 = vunpack.c.l.b16 %v532
      %v3139 = vunpack.c.h.b16 %v532
      %v3140 = vunpack.c.l.b16 %v533
      %v3141 = vunpack.c.h.b16 %v533
      %v3142 = vunpack.c.l.b16 %v534
      %v3143 = vunpack.c.h.b16 %v534
      %v3144 = vunpack.c.l.b16 %v535
      %v3145 = vunpack.c.h.b16 %v535
      %v3146 = vunpack.c.l.b16 %v536
      %v3147 = vunpack.c.h.b16 %v536
      %v3148 = vunpack.c.l.b16 %v537
      %v3149 = vunpack.c.h.b16 %v537
      %v3150 = vunpack.c.l.b16 %v538
      %v3151 = vunpack.c.h.b16 %v538
      %v3152 = vunpack.c.l.b16 %v539
      %v3153 = vunpack.c.h.b16 %v539
      %v3154 = vunpack.c.l.b16 %v540
      %v3155 = vunpack.c.h.b16 %v540
      %v3156 = vunpack.c.l.b16 %v541
      %v3157 = vunpack.c.h.b16 %v541
      %v3158 = vunpack.c.l.b16 %v542
      %v3159 = vunpack.c.h.b16 %v542
      %v3160 = vunpack.c.l.b16 %v543
      %v3161 = vunpack.c.h.b16 %v543
      %v3162 = vunpack.c.l.b16 %v544
      %v3163 = vunpack.c.h.b16 %v544
      %v3164 = vunpack.c.l.b16 %v545
      %v3165 = vunpack.c.h.b16 %v545
      %v3166 = vunpack.c.l.b16 %v546
      %v3167 = vunpack.c.h.b16 %v546
      %v3168 = vunpack.c.l.b16 %v547
      %v3169 = vunpack.c.h.b16 %v547
      %v3170 = vunpack.c.l.b16 %v548
      %v3171 = vunpack.c.h.b16 %v548
      %v3172 = vunpack.c.l.b16 %v549
      %v3173 = vunpack.c.h.b16 %v549
      %v3174 = vunpack.c.l.b16 %v550
      %v3175 = vunpack.c.h.b16 %v550
      %v3176 = vunpack.c.l.b16 %v551
      %v3177 = vunpack.c.h.b16 %v551
      %v3178 = vunpack.c.l.b16 %v552
      %v3179 = vunpack.c.h.b16 %v552
      %v3180 = vunpack.c.l.b16 %v553
      %v3181 = vunpack.c.h.b16 %v553
      %v3182 = vunpack.c.l.b16 %v554
      %v3183 = vunpack.c.h.b16 %v554
      %v3184 = vunpack.c.l.b16 %v555
      %v3185 = vunpack.c.h.b16 %v555
      %v3186 = vunpack.c.l.b16 %v556
      %v3187 = vunpack.c.h.b16 %v556
      %v3188 = vunpack.c.l.b16 %v557
      %v3189 = vunpack.c.h.b16 %v557
      %v3190 = vunpack.c.l.b16 %v558
      %v3191 = vunpack.c.h.b16 %v558
      %v3192 = vunpack.c.l.b16 %v559
      %v3193 = vunpack.c.h.b16 %v559
      %v3194 = vunpack.c.l.b16 %v560
      %v3195 = vunpack.c.h.b16 %v560
      %v3196 = vunpack.c.l.b16 %v561
      %v3197 = vunpack.c.h.b16 %v561
      %v3198 = vunpack.c.l.b16 %v562
      %v3199 = vunpack.c.h.b16 %v562
      %v3200 = vunpack.c.l.b16 %v563
      %v3201 = vunpack.c.h.b16 %v563
      %v3202 = vunpack.c.l.b16 %v564
      %v3203 = vunpack.c.h.b16 %v564
      %v3204 = vunpack.c.l.b16 %v565
      %v3205 = vunpack.c.h.b16 %v565
      %v3206 = vunpack.c.l.b16 %v566
      %v3207 = vunpack.c.h.b16 %v566
      %v3208 = vunpack.c.l.b16 %v567
      %v3209 = vunpack.c.h.b16 %v567
      %v3210 = vunpack.c.l.b16 %v568
      %v3211 = vunpack.c.h.b16 %v568
      %v3212 = vunpack.c.l.b16 %v569
      %v3213 = vunpack.c.h.b16 %v569
      %v3214 = vunpack.c.l.b16 %v570
      %v3215 = vunpack.c.h.b16 %v570
      %v3216 = vunpack.c.l.b16 %v571
      %v3217 = vunpack.c.h.b16 %v571
      %v3218 = vunpack.c.l.b16 %v572
      %v3219 = vunpack.c.h.b16 %v572
      %v3220 = vunpack.c.l.b16 %v573
      %v3221 = vunpack.c.h.b16 %v573
      %v3222 = vunpack.c.l.b16 %v574
      %v3223 = vunpack.c.h.b16 %v574
      %v3224 = vunpack.c.l.b16 %v575
      %v3225 = vunpack.c.h.b16 %v575
      %v3226 = vunpack.c.l.b16 %v576
      %v3227 = vunpack.c.h.b16 %v576
      %v3228 = vunpack.c.l.b16 %v577
      %v3229 = vunpack.c.h.b16 %v577
      %v3230 = vunpack.c.l.b16 %v578
      %v3231 = vunpack.c.h.b16 %v578
      %v3232 = vunpack.c.l.b16 %v579
      %v3233 = vunpack.c.h.b16 %v579
      %v3234 = vunpack.c.l.b16 %v580
      %v3235 = vunpack.c.h.b16 %v580
      %v3236 = vunpack.c.l.b16 %v581
      %v3237 = vunpack.c.h.b16 %v581
      %v3238 = vunpack.c.l.b16 %v582
      %v3239 = vunpack.c.h.b16 %v582
      %v3240 = vunpack.c.l.b16 %v583
      %v3241 = vunpack.c.h.b16 %v583
      %v3242 = vunpack.c.l.b16 %v584
      %v3243 = vunpack.c.h.b16 %v584
      %v3244 = vunpack.c.l.b16 %v585
      %v3245 = vunpack.c.h.b16 %v585
      %v3246 = vunpack.c.l.b16 %v586
      %v3247 = vunpack.c.h.b16 %v586
      %v3248 = vunpack.c.l.b16 %v587
      %v3249 = vunpack.c.h.b16 %v587
      %v3250 = vunpack.c.l.b16 %v588
      %v3251 = vunpack.c.h.b16 %v588
      %v3252 = vunpack.c.l.b16 %v589
      %v3253 = vunpack.c.h.b16 %v589
      %v3254 = vunpack.c.l.b16 %v590
      %v3255 = vunpack.c.h.b16 %v590
      %v3256 = vunpack.c.l.b16 %v591
      %v3257 = vunpack.c.h.b16 %v591
      %v3258 = vunpack.c.l.b16 %v592
      %v3259 = vunpack.c.h.b16 %v592
      %v3260 = vunpack.c.l.b16 %v593
      %v3261 = vunpack.c.h.b16 %v593
      %v3262 = vunpack.c.l.b16 %v594
      %v3263 = vunpack.c.h.b16 %v594
      %v3264 = vunpack.c.l.b16 %v595
      %v3265 = vunpack.c.h.b16 %v595
      %v3266 = vunpack.c.l.b16 %v596
      %v3267 = vunpack.c.h.b16 %v596
      %v3268 = vunpack.c.l.b16 %v597
      %v3269 = vunpack.c.h.b16 %v597
      %v3270 = vunpack.c.l.b16 %v598
      %v3271 = vunpack.c.h.b16 %v598
      %v3272 = vunpack.c.l.b16 %v599
      %v3273 = vunpack.c.h.b16 %v599
      %v3274 = vunpack.c.l.b16 %v600
      %v3275 = vunpack.c.h.b16 %v600
      %v3276 = vunpack.c.l.b16 %v601
      %v3277 = vunpack.c.h.b16 %v601
      %v3278 = vunpack.c.l.b16 %v602
      %v3279 = vunpack.c.h.b16 %v602
      %v3280 = vunpack.c.l.b16 %v603
      %v3281 = vunpack.c.h.b16 %v603
      %v3282 = vunpack.c.l.b16 %v604
      %v3283 = vunpack.c.h.b16 %v604
      %v3284 = vunpack.c.l.b16 %v605
      %v3285 = vunpack.c.h.b16 %v605
      %v3286 = vunpack.c.l.b16 %v606
      %v3287 = vunpack.c.h.b16 %v606
      %v3288 = vunpack.c.l.b16 %v607
      %v3289 = vunpack.c.h.b16 %v607
      %v3290 = vunpack.c.l.b16 %v608
      %v3291 = vunpack.c.h.b16 %v608
      %v3292 = vunpack.c.l.b16 %v609
      %v3293 = vunpack.c.h.b16 %v609
      %v3294 = vunpack.c.l.b16 %v610
      %v3295 = vunpack.c.h.b16 %v610
      %v3296 = vunpack.c.l.b16 %v611
      %v3297 = vunpack.c.h.b16 %v611
      %v3298 = vunpack.c.l.b16 %v612
      %v3299 = vunpack.c.h.b16 %v612
      %v3300 = vunpack.c.l.b16 %v613
      %v3301 = vunpack.c.h.b16 %v613
      %v3302 = vunpack.c.l.b16 %v614
      %v3303 = vunpack.c.h.b16 %v614
      %v3304 = vunpack.c.l.b16 %v615
      %v3305 = vunpack.c.h.b16 %v615
      %v3306 = vunpack.c.l.b16 %v616
      %v3307 = vunpack.c.h.b16 %v616
      %v3308 = vunpack.c.l.b16 %v617
      %v3309 = vunpack.c.h.b16 %v617
      %v3310 = vunpack.c.l.b16 %v618
      %v3311 = vunpack.c.h.b16 %v618
      %v3312 = vunpack.c.l.b16 %v619
      %v3313 = vunpack.c.h.b16 %v619
      %v3314 = vunpack.c.l.b16 %v620
      %v3315 = vunpack.c.h.b16 %v620
      %v3316 = vunpack.c.l.b16 %v621
      %v3317 = vunpack.c.h.b16 %v621
      %v3318 = vunpack.c.l.b16 %v622
      %v3319 = vunpack.c.h.b16 %v622
      %v3320 = vunpack.c.l.b16 %v623
      %v3321 = vunpack.c.h.b16 %v623
      %v3322 = vunpack.c.l.b16 %v624
      %v3323 = vunpack.c.h.b16 %v624
      %v3324 = vunpack.c.l.b16 %v625
      %v3325 = vunpack.c.h.b16 %v625
      %v3326 = vunpack.c.l.b16 %v626
      %v3327 = vunpack.c.h.b16 %v626
      %v3328 = vunpack.c.l.b16 %v627
      %v3329 = vunpack.c.h.b16 %v627
      %v3330 = vunpack.c.l.b16 %v628
      %v3331 = vunpack.c.h.b16 %v628
      %v3332 = vunpack.c.l.b16 %v629
      %v3333 = vunpack.c.h.b16 %v629
      %v3334 = vunpack.c.l.b16 %v630
      %v3335 = vunpack.c.h.b16 %v630
      %v3336 = vunpack.c.l.b16 %v631
      %v3337 = vunpack.c.h.b16 %v631
      %v3338 = vunpack.c.l.b16 %v632
      %v3339 = vunpack.c.h.b16 %v632
      %v3340 = vunpack.c.l.b16 %v633
      %v3341 = vunpack.c.h.b16 %v633
      %v3342 = vunpack.c.l.b16 %v634
      %v3343 = vunpack.c.h.b16 %v634
      %v3344 = vunpack.c.l.b16 %v635
      %v3345 = vunpack.c.h.b16 %v635
      %v3346 = vunpack.c.l.b16 %v636
      %v3347 = vunpack.c.h.b16 %v636
      %v3348 = vunpack.c.l.b16 %v637
      %v3349 = vunpack.c.h.b16 %v637
      %v3350 = vunpack.c.l.b16 %v638
      %v3351 = vunpack.c.h.b16 %v638
      %v3352 = vunpack.c.l.b16 %v639
      %v3353 = vunpack.c.h.b16 %v639
      %v3354 = vunpack.c.l.b16 %v640
      %v3355 = vunpack.c.h.b16 %v640
      %v3356 = vunpack.c.l.b16 %v641
      %v3357 = vunpack.c.h.b16 %v641
      %v3358 = vunpack.c.l.b16 %v642
      %v3359 = vunpack.c.h.b16 %v642
      %v3360 = vunpack.c.l.b16 %v643
      %v3361 = vunpack.c.h.b16 %v643
      %v3362 = vunpack.c.l.b16 %v644
      %v3363 = vunpack.c.h.b16 %v644
      %v3364 = vunpack.c.l.b16 %v645
      %v3365 = vunpack.c.h.b16 %v645
      %v3366 = vunpack.c.l.b16 %v646
      %v3367 = vunpack.c.h.b16 %v646
      %v3368 = vunpack.c.l.b16 %v647
      %v3369 = vunpack.c.h.b16 %v647
      %v3370 = vunpack.c.l.b16 %v648
      %v3371 = vunpack.c.h.b16 %v648
      %v3372 = vunpack.c.l.b16 %v649
      %v3373 = vunpack.c.h.b16 %v649
      %v3374 = vunpack.c.l.b16 %v650
      %v3375 = vunpack.c.h.b16 %v650
      %v3376 = vunpack.c.l.b16 %v651
      %v3377 = vunpack.c.h.b16 %v651
      %v3378 = vunpack.c.l.b16 %v652
      %v3379 = vunpack.c.h.b16 %v652
      %v3380 = vunpack.c.l.b16 %v653
      %v3381 = vunpack.c.h.b16 %v653
      %v3382 = vunpack.c.l.b16 %v654
      %v3383 = vunpack.c.h.b16 %v654
      %v3384 = vunpack.c.l.b16 %v655
      %v3385 = vunpack.c.h.b16 %v655
      %v3386 = vunpack.c.l.b16 %v656
      %v3387 = vunpack.c.h.b16 %v656
      %v3388 = vunpack.c.l.b16 %v657
      %v3389 = vunpack.c.h.b16 %v657
      %v3390 = vunpack.c.l.b16 %v658
      %v3391 = vunpack.c.h.b16 %v658
      %v3392 = vunpack.c.l.b16 %v659
      %v3393 = vunpack.c.h.b16 %v659
      %v3394 = vunpack.c.l.b16 %v660
      %v3395 = vunpack.c.h.b16 %v660
      %v3396 = vunpack.c.l.b16 %v661
      %v3397 = vunpack.c.h.b16 %v661
      %v3398 = vunpack.c.l.b16 %v662
      %v3399 = vunpack.c.h.b16 %v662
      %v3400 = vunpack.c.l.b16 %v663
      %v3401 = vunpack.c.h.b16 %v663
      %v3402 = vunpack.c.l.b16 %v664
      %v3403 = vunpack.c.h.b16 %v664
      %v3404 = vunpack.c.l.b16 %v665
      %v3405 = vunpack.c.h.b16 %v665
      %v3406 = vunpack.c.l.b16 %v666
      %v3407 = vunpack.c.h.b16 %v666
      %v3408 = vunpack.c.l.b16 %v667
      %v3409 = vunpack.c.h.b16 %v667
      %v3410 = vunpack.c.l.b16 %v668
      %v3411 = vunpack.c.h.b16 %v668
      %v3412 = vunpack.c.l.b16 %v669
      %v3413 = vunpack.c.h.b16 %v669
      %v3414 = vunpack.c.l.b16 %v670
      %v3415 = vunpack.c.h.b16 %v670
      %v3416 = vunpack.c.l.b16 %v671
      %v3417 = vunpack.c.h.b16 %v671
      %v3418 = vunpack.c.l.b16 %v672
      %v3419 = vunpack.c.h.b16 %v672
      %v3420 = vunpack.c.l.b16 %v673
      %v3421 = vunpack.c.h.b16 %v673
      %v3422 = vunpack.c.l.b16 %v674
      %v3423 = vunpack.c.h.b16 %v674
      %v3424 = vunpack.c.l.b16 %v675
      %v3425 = vunpack.c.h.b16 %v675
      %v3426 = vunpack.c.l.b16 %v676
      %v3427 = vunpack.c.h.b16 %v676
      %v3428 = vunpack.c.l.b16 %v677
      %v3429 = vunpack.c.h.b16 %v677
      %v3430 = vunpack.c.l.b16 %v678
      %v3431 = vunpack.c.h.b16 %v678
      %v3432 = vunpack.c.l.b16 %v679
      %v3433 = vunpack.c.h.b16 %v679
      %v3434 = vunpack.c.l.b16 %v680
      %v3435 = vunpack.c.h.b16 %v680
      %v3436 = vunpack.c.l.b16 %v681
      %v3437 = vunpack.c.h.b16 %v681
      %v3438 = vunpack.c.l.b16 %v682
      %v3439 = vunpack.c.h.b16 %v682
      %v3440 = vunpack.c.l.b16 %v683
      %v3441 = vunpack.c.h.b16 %v683
      %v3442 = vunpack.c.l.b16 %v684
      %v3443 = vunpack.c.h.b16 %v684
      %v3444 = vunpack.c.l.b16 %v685
      %v3445 = vunpack.c.h.b16 %v685
      %v3446 = vunpack.c.l.b16 %v686
      %v3447 = vunpack.c.h.b16 %v686
      %v3448 = vunpack.c.l.b16 %v687
      %v3449 = vunpack.c.h.b16 %v687
      %v3450 = vunpack.c.l.b16 %v688
      %v3451 = vunpack.c.h.b16 %v688
      %v3452 = vunpack.c.l.b16 %v689
      %v3453 = vunpack.c.h.b16 %v689
      %v3454 = vunpack.c.l.b16 %v690
      %v3455 = vunpack.c.h.b16 %v690
      %v3456 = vunpack.c.l.b16 %v691
      %v3457 = vunpack.c.h.b16 %v691
      %v3458 = vunpack.c.l.b16 %v692
      %v3459 = vunpack.c.h.b16 %v692
      %v3460 = vunpack.c.l.b16 %v693
      %v3461 = vunpack.c.h.b16 %v693
      %v3462 = vunpack.c.l.b16 %v694
      %v3463 = vunpack.c.h.b16 %v694
      %v3464 = vunpack.c.l.b16 %v695
      %v3465 = vunpack.c.h.b16 %v695
      %v3466 = vunpack.c.l.b16 %v696
      %v3467 = vunpack.c.h.b16 %v696
      %v3468 = vunpack.c.l.b16 %v697
      %v3469 = vunpack.c.h.b16 %v697
      %v3470 = vunpack.c.l.b16 %v698
      %v3471 = vunpack.c.h.b16 %v698
      %v3472 = vunpack.c.l.b16 %v699
      %v3473 = vunpack.c.h.b16 %v699
      %v3474 = vunpack.c.l.b16 %v700
      %v3475 = vunpack.c.h.b16 %v700
      %v3476 = vunpack.c.l.b16 %v701
      %v3477 = vunpack.c.h.b16 %v701
      %v3478 = vunpack.c.l.b16 %v702
      %v3479 = vunpack.c.h.b16 %v702
      %v3480 = vunpack.c.l.b16 %v703
      %v3481 = vunpack.c.h.b16 %v703
      %v3482 = vunpack.c.l.b16 %v704
      %v3483 = vunpack.c.h.b16 %v704
      %v3484 = vunpack.c.l.b16 %v705
      %v3485 = vunpack.c.h.b16 %v705
      %v3486 = vunpack.c.l.b16 %v706
      %v3487 = vunpack.c.h.b16 %v706
      %v3488 = vunpack.c.l.b16 %v707
      %v3489 = vunpack.c.h.b16 %v707
      %v3490 = vunpack.c.l.b16 %v708
      %v3491 = vunpack.c.h.b16 %v708
      %v3492 = vunpack.c.l.b16 %v709
      %v3493 = vunpack.c.h.b16 %v709
      %v3494 = vunpack.c.l.b16 %v710
      %v3495 = vunpack.c.h.b16 %v710
      %v3496 = vunpack.c.l.b16 %v711
      %v3497 = vunpack.c.h.b16 %v711
      %v3498 = vunpack.c.l.b16 %v712
      %v3499 = vunpack.c.h.b16 %v712
      %v3500 = vunpack.c.l.b16 %v713
      %v3501 = vunpack.c.h.b16 %v713
      %v3502 = vunpack.c.l.b16 %v714
      %v3503 = vunpack.c.h.b16 %v714
      %v3504 = vunpack.c.l.b16 %v715
      %v3505 = vunpack.c.h.b16 %v715
      %v3506 = vunpack.c.l.b16 %v716
      %v3507 = vunpack.c.h.b16 %v716
      %v3508 = vunpack.c.l.b16 %v717
      %v3509 = vunpack.c.h.b16 %v717
      %v3510 = vunpack.c.l.b16 %v718
      %v3511 = vunpack.c.h.b16 %v718
      %v3512 = vunpack.c.l.b16 %v719
      %v3513 = vunpack.c.h.b16 %v719
      %v3514 = vunpack.c.l.b16 %v720
      %v3515 = vunpack.c.h.b16 %v720
      %v3516 = vunpack.c.l.b16 %v721
      %v3517 = vunpack.c.h.b16 %v721
      %v3518 = vunpack.c.l.b16 %v722
      %v3519 = vunpack.c.h.b16 %v722
      %v3520 = vunpack.c.l.b16 %v723
      %v3521 = vunpack.c.h.b16 %v723
      %v3522 = vunpack.c.l.b16 %v724
      %v3523 = vunpack.c.h.b16 %v724
      %v3524 = vunpack.c.l.b16 %v725
      %v3525 = vunpack.c.h.b16 %v725
      %v3526 = vunpack.c.l.b16 %v726
      %v3527 = vunpack.c.h.b16 %v726
      %v3528 = vunpack.c.l.b16 %v727
      %v3529 = vunpack.c.h.b16 %v727
      %v3530 = vunpack.c.l.b16 %v728
      %v3531 = vunpack.c.h.b16 %v728
      %v3532 = vunpack.c.l.b16 %v729
      %v3533 = vunpack.c.h.b16 %v729
      %v3534 = vunpack.c.l.b16 %v730
      %v3535 = vunpack.c.h.b16 %v730
      %v3536 = vunpack.c.l.b16 %v731
      %v3537 = vunpack.c.h.b16 %v731
      %v3538 = vunpack.c.l.b16 %v732
      %v3539 = vunpack.c.h.b16 %v732
      %v3540 = vunpack.c.l.b16 %v733
      %v3541 = vunpack.c.h.b16 %v733
      %v3542 = vunpack.c.l.b16 %v734
      %v3543 = vunpack.c.h.b16 %v734
      %v3544 = vunpack.c.l.b16 %v735
      %v3545 = vunpack.c.h.b16 %v735
      %v3546 = vunpack.c.l.b16 %v736
      %v3547 = vunpack.c.h.b16 %v736
      %v3548 = vunpack.c.l.b16 %v737
      %v3549 = vunpack.c.h.b16 %v737
      %v3550 = vunpack.c.l.b16 %v738
      %v3551 = vunpack.c.h.b16 %v738
      %v3552 = vunpack.c.l.b16 %v739
      %v3553 = vunpack.c.h.b16 %v739
      %v3554 = vunpack.c.l.b16 %v740
      %v3555 = vunpack.c.h.b16 %v740
      %v3556 = vunpack.c.l.b16 %v741
      %v3557 = vunpack.c.h.b16 %v741
      %v3558 = vunpack.c.l.b16 %v742
      %v3559 = vunpack.c.h.b16 %v742
      %v3560 = vunpack.c.l.b16 %v743
      %v3561 = vunpack.c.h.b16 %v743
      %v3562 = vunpack.c.l.b16 %v744
      %v3563 = vunpack.c.h.b16 %v744
      %v3564 = vunpack.c.l.b16 %v745
      %v3565 = vunpack.c.h.b16 %v745
      %v3566 = vunpack.c.l.b16 %v746
      %v3567 = vunpack.c.h.b16 %v746
      %v3568 = vunpack.c.l.b16 %v747
      %v3569 = vunpack.c.h.b16 %v747
      %v3570 = vunpack.c.l.b16 %v748
      %v3571 = vunpack.c.h.b16 %v748
      %v3572 = vunpack.c.l.b16 %v749
      %v3573 = vunpack.c.h.b16 %v749
      %v3574 = vunpack.c.l.b16 %v750
      %v3575 = vunpack.c.h.b16 %v750
      %v3576 = vunpack.c.l.b16 %v751
      %v3577 = vunpack.c.h.b16 %v751
      %v3578 = vunpack.c.l.b16 %v752
      %v3579 = vunpack.c.h.b16 %v752
      %v3580 = vunpack.c.l.b16 %v753
      %v3581 = vunpack.c.h.b16 %v753
      %v3582 = vunpack.c.l.b16 %v754
      %v3583 = vunpack.c.h.b16 %v754
      %v3584 = vunpack.c.l.b16 %v755
      %v3585 = vunpack.c.h.b16 %v755
      %v3586 = vunpack.c.l.b16 %v756
      %v3587 = vunpack.c.h.b16 %v756
      %v3588 = vunpack.c.l.b16 %v757
      %v3589 = vunpack.c.h.b16 %v757
      %v3590 = vunpack.c.l.b16 %v758
      %v3591 = vunpack.c.h.b16 %v758
      %v3592 = vunpack.c.l.b16 %v759
      %v3593 = vunpack.c.h.b16 %v759
      %v3594 = vunpack.c.l.b16 %v760
      %v3595 = vunpack.c.h.b16 %v760
      %v3596 = vunpack.c.l.b16 %v761
      %v3597 = vunpack.c.h.b16 %v761
      %v3598 = vunpack.c.l.b16 %v762
      %v3599 = vunpack.c.h.b16 %v762
      %v3600 = vunpack.c.l.b16 %v763
      %v3601 = vunpack.c.h.b16 %v763
      %v3602 = vunpack.c.l.b16 %v764
      %v3603 = vunpack.c.h.b16 %v764
      %v3604 = vunpack.c.l.b16 %v765
      %v3605 = vunpack.c.h.b16 %v765
      %v3606 = vunpack.c.l.b16 %v766
      %v3607 = vunpack.c.h.b16 %v766
      %v3608 = vunpack.c.l.b16 %v767
      %v3609 = vunpack.c.h.b16 %v767
      %v3610 = vunpack.c.l.b16 %v768
      %v3611 = vunpack.c.h.b16 %v768
      %v3612 = vunpack.c.l.b16 %v769
      %v3613 = vunpack.c.h.b16 %v769
      %v3614 = vunpack.c.l.b16 %v770
      %v3615 = vunpack.c.h.b16 %v770
      %v3616 = vunpack.c.l.b16 %v771
      %v3617 = vunpack.c.h.b16 %v771
      %v3618 = vunpack.c.l.b16 %v772
      %v3619 = vunpack.c.h.b16 %v772
      %v3620 = vunpack.c.l.b16 %v773
      %v3621 = vunpack.c.h.b16 %v773
      %v3622 = vunpack.c.l.b16 %v774
      %v3623 = vunpack.c.h.b16 %v774
      %v3624 = vunpack.c.l.b16 %v775
      %v3625 = vunpack.c.h.b16 %v775
      %v3626 = vunpack.c.l.b16 %v776
      %v3627 = vunpack.c.h.b16 %v776
      %v3628 = vunpack.c.l.b16 %v777
      %v3629 = vunpack.c.h.b16 %v777
      %v3630 = vunpack.c.l.b16 %v778
      %v3631 = vunpack.c.h.b16 %v778
      %v3632 = vunpack.c.l.b16 %v779
      %v3633 = vunpack.c.h.b16 %v779
      %v3634 = vunpack.c.l.b16 %v780
      %v3635 = vunpack.c.h.b16 %v780
      %v3636 = vunpack.c.l.b16 %v781
      %v3637 = vunpack.c.h.b16 %v781
      %v3638 = vunpack.c.l.b16 %v782
      %v3639 = vunpack.c.h.b16 %v782
      %v3640 = vunpack.c.l.b16 %v783
      %v3641 = vunpack.c.h.b16 %v783
      %v3642 = vunpack.c.l.b16 %v784
      %v3643 = vunpack.c.h.b16 %v784
      %v3644 = vunpack.c.l.b16 %v785
      %v3645 = vunpack.c.h.b16 %v785
      %v3646 = vunpack.c.l.b16 %v786
      %v3647 = vunpack.c.h.b16 %v786
      %v3648 = vunpack.c.l.b16 %v787
      %v3649 = vunpack.c.h.b16 %v787
      %v3650 = vunpack.c.l.b16 %v788
      %v3651 = vunpack.c.h.b16 %v788
      %v3652 = vunpack.c.l.b16 %v789
      %v3653 = vunpack.c.h.b16 %v789
      %v3654 = vunpack.c.l.b16 %v790
      %v3655 = vunpack.c.h.b16 %v790
      %v3656 = vunpack.c.l.b16 %v791
      %v3657 = vunpack.c.h.b16 %v791
      %v3658 = vunpack.c.l.b16 %v792
      %v3659 = vunpack.c.h.b16 %v792
      %v3660 = vunpack.c.l.b16 %v793
      %v3661 = vunpack.c.h.b16 %v793
      %v3662 = vunpack.c.l.b16 %v794
      %v3663 = vunpack.c.h.b16 %v794
      %v3664 = vunpack.c.l.b16 %v795
      %v3665 = vunpack.c.h.b16 %v795
      %v3666 = vunpack.c.l.b16 %v796
      %v3667 = vunpack.c.h.b16 %v796
      %v3668 = vunpack.c.l.b16 %v797
      %v3669 = vunpack.c.h.b16 %v797
      %v3670 = vunpack.c.l.b16 %v798
      %v3671 = vunpack.c.h.b16 %v798
      %v3672 = vunpack.c.l.b16 %v799
      %v3673 = vunpack.c.h.b16 %v799
      %v3674 = vunpack.c.l.b16 %v800
      %v3675 = vunpack.c.h.b16 %v800
      %v3676 = vunpack.c.l.b16 %v801
      %v3677 = vunpack.c.h.b16 %v801
      %v3678 = vunpack.c.l.b16 %v802
      %v3679 = vunpack.c.h.b16 %v802
      %v3680 = vunpack.c.l.b16 %v803
      %v3681 = vunpack.c.h.b16 %v803
      %v3682 = vunpack.c.l.b16 %v804
      %v3683 = vunpack.c.h.b16 %v804
      %v3684 = vunpack.c.l.b16 %v805
      %v3685 = vunpack.c.h.b16 %v805
      %v3686 = vunpack.c.l.b16 %v806
      %v3687 = vunpack.c.h.b16 %v806
      %v3688 = vunpack.c.l.b16 %v807
      %v3689 = vunpack.c.h.b16 %v807
      %v3690 = vunpack.c.l.b16 %v808
      %v3691 = vunpack.c.h.b16 %v808
      %v3692 = vunpack.c.l.b16 %v809
      %v3693 = vunpack.c.h.b16 %v809
      %v3694 = vunpack.c.l.b16 %v810
      %v3695 = vunpack.c.h.b16 %v810
      %v3696 = vunpack.c.l.b16 %v811
      %v3697 = vunpack.c.h.b16 %v811
      %v3698 = vunpack.c.l.b16 %v812
      %v3699 = vunpack.c.h.b16 %v812
      %v3700 = vunpack.c.l.b16 %v813
      %v3701 = vunpack.c.h.b16 %v813
      %v3702 = vunpack.c.l.b16 %v814
      %v3703 = vunpack.c.h.b16 %v814
      %v3704 = vunpack.c.l.b16 %v815
      %v3705 = vunpack.c.h.b16 %v815
      %v3706 = vunpack.c.l.b16 %v816
      %v3707 = vunpack.c.h.b16 %v816
      %v3708 = vunpack.c.l.b16 %v817
      %v3709 = vunpack.c.h.b16 %v817
      %v3710 = vunpack.c.l.b16 %v818
      %v3711 = vunpack.c.h.b16 %v818
      %v3712 = vunpack.c.l.b16 %v819
      %v3713 = vunpack.c.h.b16 %v819
      %v3714 = vunpack.c.l.b16 %v820
      %v3715 = vunpack.c.h.b16 %v820
      %v3716 = vunpack.c.l.b16 %v821
      %v3717 = vunpack.c.h.b16 %v821
      %v3718 = vunpack.c.l.b16 %v822
      %v3719 = vunpack.c.h.b16 %v822
      %v3720 = vunpack.c.l.b16 %v823
      %v3721 = vunpack.c.h.b16 %v823
      %v3722 = vunpack.c.l.b16 %v824
      %v3723 = vunpack.c.h.b16 %v824
      %v3724 = vunpack.c.l.b16 %v825
      %v3725 = vunpack.c.h.b16 %v825
      %v3726 = vunpack.c.l.b16 %v826
      %v3727 = vunpack.c.h.b16 %v826
      %v3728 = vunpack.c.l.b16 %v827
      %v3729 = vunpack.c.h.b16 %v827
      %v3730 = vunpack.c.l.b16 %v828
      %v3731 = vunpack.c.h.b16 %v828
      %v3732 = vunpack.c.l.b16 %v829
      %v3733 = vunpack.c.h.b16 %v829
      %v3734 = vunpack.c.l.b16 %v830
      %v3735 = vunpack.c.h.b16 %v830
      %v3736 = vunpack.c.l.b16 %v831
      %v3737 = vunpack.c.h.b16 %v831
      %v3738 = vunpack.c.l.b16 %v832
      %v3739 = vunpack.c.h.b16 %v832
      %v3740 = vunpack.c.l.b16 %v833
      %v3741 = vunpack.c.h.b16 %v833
      %v3742 = vunpack.c.l.b16 %v834
      %v3743 = vunpack.c.h.b16 %v834
      %v3744 = vunpack.c.l.b16 %v835
      %v3745 = vunpack.c.h.b16 %v835
      %v3746 = vunpack.c.l.b16 %v836
      %v3747 = vunpack.c.h.b16 %v836
      %v3748 = vunpack.c.l.b16 %v837
      %v3749 = vunpack.c.h.b16 %v837
      %v3750 = vunpack.c.l.b16 %v838
      %v3751 = vunpack.c.h.b16 %v838
      %v3752 = vunpack.c.l.b16 %v839
      %v3753 = vunpack.c.h.b16 %v839
      %v3754 = vunpack.c.l.b16 %v840
      %v3755 = vunpack.c.h.b16 %v840
      %v3756 = vunpack.c.l.b16 %v841
      %v3757 = vunpack.c.h.b16 %v841
      %v3758 = vunpack.c.l.b16 %v842
      %v3759 = vunpack.c.h.b16 %v842
      %v3760 = vunpack.c.l.b16 %v843
      %v3761 = vunpack.c.h.b16 %v843
      %v3762 = vunpack.c.l.b16 %v844
      %v3763 = vunpack.c.h.b16 %v844
      %v3764 = vunpack.c.l.b16 %v845
      %v3765 = vunpack.c.h.b16 %v845
      %v3766 = vunpack.c.l.b16 %v846
      %v3767 = vunpack.c.h.b16 %v846
      %v3768 = vunpack.c.l.b16 %v847
      %v3769 = vunpack.c.h.b16 %v847
      %v3770 = vunpack.c.l.b16 %v848
      %v3771 = vunpack.c.h.b16 %v848
      %v3772 = vunpack.c.l.b16 %v849
      %v3773 = vunpack.c.h.b16 %v849
      %v3774 = vunpack.c.l.b16 %v850
      %v3775 = vunpack.c.h.b16 %v850
      %v3776 = vunpack.c.l.b16 %v851
      %v3777 = vunpack.c.h.b16 %v851
      %v3778 = vunpack.c.l.b16 %v852
      %v3779 = vunpack.c.h.b16 %v852
      %v3780 = vunpack.c.l.b16 %v853
      %v3781 = vunpack.c.h.b16 %v853
      %v3782 = vunpack.c.l.b16 %v854
      %v3783 = vunpack.c.h.b16 %v854
      %v3784 = vunpack.c.l.b16 %v855
      %v3785 = vunpack.c.h.b16 %v855
      %v3786 = vunpack.c.l.b16 %v856
      %v3787 = vunpack.c.h.b16 %v856
      %v3788 = vunpack.c.l.b16 %v857
      %v3789 = vunpack.c.h.b16 %v857
      %v3790 = vunpack.c.l.b16 %v858
      %v3791 = vunpack.c.h.b16 %v858
      %v3792 = vunpack.c.l.b16 %v859
      %v3793 = vunpack.c.h.b16 %v859
      %v3794 = vunpack.c.l.b16 %v860
      %v3795 = vunpack.c.h.b16 %v860
      %v3796 = vunpack.c.l.b16 %v861
      %v3797 = vunpack.c.h.b16 %v861
      %v3798 = vunpack.c.l.b16 %v862
      %v3799 = vunpack.c.h.b16 %v862
      %v3800 = vunpack.c.l.b16 %v863
      %v3801 = vunpack.c.h.b16 %v863
      %v3802 = vunpack.c.l.b16 %v864
      %v3803 = vunpack.c.h.b16 %v864
      %v3804 = vunpack.c.l.b16 %v865
      %v3805 = vunpack.c.h.b16 %v865
      %v3806 = vunpack.c.l.b16 %v866
      %v3807 = vunpack.c.h.b16 %v866
      %v3808 = vunpack.c.l.b16 %v867
      %v3809 = vunpack.c.h.b16 %v867
      %v3810 = vunpack.c.l.b16 %v868
      %v3811 = vunpack.c.h.b16 %v868
      %v3812 = vunpack.c.l.b16 %v869
      %v3813 = vunpack.c.h.b16 %v869
      %v3814 = vunpack.c.l.b16 %v870
      %v3815 = vunpack.c.h.b16 %v870
      %v3816 = vunpack.c.l.b16 %v871
      %v3817 = vunpack.c.h.b16 %v871
      %v3818 = vunpack.c.l.b16 %v872
      %v3819 = vunpack.c.h.b16 %v872
      %v3820 = vunpack.c.l.b16 %v873
      %v3821 = vunpack.c.h.b16 %v873
      %v3822 = vunpack.c.l.b16 %v874
      %v3823 = vunpack.c.h.b16 %v874
      %v3824 = vunpack.c.l.b16 %v875
      %v3825 = vunpack.c.h.b16 %v875
      %v3826 = vunpack.c.l.b16 %v876
      %v3827 = vunpack.c.h.b16 %v876
      %v3828 = vunpack.c.l.b16 %v877
      %v3829 = vunpack.c.h.b16 %v877
      %v3830 = vunpack.c.l.b16 %v878
      %v3831 = vunpack.c.h.b16 %v878
      %v3832 = vunpack.c.l.b16 %v879
      %v3833 = vunpack.c.h.b16 %v879
      %v3834 = vunpack.c.l.b16 %v880
      %v3835 = vunpack.c.h.b16 %v880
      %v3836 = vunpack.c.l.b16 %v881
      %v3837 = vunpack.c.h.b16 %v881
      %v3838 = vunpack.c.l.b16 %v882
      %v3839 = vunpack.c.h.b16 %v882
      %v3840 = vunpack.c.l.b16 %v883
      %v3841 = vunpack.c.h.b16 %v883
      %v3842 = vunpack.c.l.b16 %v884
      %v3843 = vunpack.c.h.b16 %v884
      %v3844 = vunpack.c.l.b16 %v885
      %v3845 = vunpack.c.h.b16 %v885
      %v3846 = vunpack.c.l.b16 %v886
      %v3847 = vunpack.c.h.b16 %v886
      %v3848 = vunpack.c.l.b16 %v887
      %v3849 = vunpack.c.h.b16 %v887
      %v3850 = vunpack.c.l.b16 %v888
      %v3851 = vunpack.c.h.b16 %v888
      %v3852 = vunpack.c.l.b16 %v889
      %v3853 = vunpack.c.h.b16 %v889
      %v3854 = vunpack.c.l.b16 %v890
      %v3855 = vunpack.c.h.b16 %v890
      %v3856 = vunpack.c.l.b16 %v891
      %v3857 = vunpack.c.h.b16 %v891
      %v3858 = vunpack.c.l.b16 %v892
      %v3859 = vunpack.c.h.b16 %v892
      %v3860 = vunpack.c.l.b16 %v893
      %v3861 = vunpack.c.h.b16 %v893
      %v3862 = vunpack.c.l.b16 %v894
      %v3863 = vunpack.c.h.b16 %v894
      %v3864 = vunpack.c.l.b16 %v895
      %v3865 = vunpack.c.h.b16 %v895
      %v3866 = vunpack.c.l.b16 %v896
      %v3867 = vunpack.c.h.b16 %v896
      %v3868 = vunpack.c.l.b16 %v897
      %v3869 = vunpack.c.h.b16 %v897
      %v3870 = vunpack.c.l.b16 %v898
      %v3871 = vunpack.c.h.b16 %v898
      %v3872 = vunpack.c.l.b16 %v899
      %v3873 = vunpack.c.h.b16 %v899
      %v3874 = vunpack.c.l.b16 %v900
      %v3875 = vunpack.c.h.b16 %v900
      %v3876 = vunpack.c.l.b16 %v901
      %v3877 = vunpack.c.h.b16 %v901
      %v3878 = vunpack.c.l.b16 %v902
      %v3879 = vunpack.c.h.b16 %v902
      %v3880 = vunpack.c.l.b16 %v903
      %v3881 = vunpack.c.h.b16 %v903
      %v3882 = vunpack.c.l.b16 %v904
      %v3883 = vunpack.c.h.b16 %v904
      %v3884 = vunpack.c.l.b16 %v905
      %v3885 = vunpack.c.h.b16 %v905
      %v3886 = vunpack.c.l.b16 %v906
      %v3887 = vunpack.c.h.b16 %v906
      %v3888 = vunpack.c.l.b16 %v907
      %v3889 = vunpack.c.h.b16 %v907
      %v3890 = vunpack.c.l.b16 %v908
      %v3891 = vunpack.c.h.b16 %v908
      %v3892 = vunpack.c.l.b16 %v909
      %v3893 = vunpack.c.h.b16 %v909
      %v3894 = vunpack.c.l.b16 %v910
      %v3895 = vunpack.c.h.b16 %v910
      %v3896 = vunpack.c.l.b16 %v911
      %v3897 = vunpack.c.h.b16 %v911
      %v3898 = vunpack.c.l.b16 %v912
      %v3899 = vunpack.c.h.b16 %v912
      %v3900 = vunpack.c.l.b16 %v913
      %v3901 = vunpack.c.h.b16 %v913
      %v3902 = vunpack.c.l.b16 %v914
      %v3903 = vunpack.c.h.b16 %v914
      %v3904 = vunpack.c.l.b16 %v915
      %v3905 = vunpack.c.h.b16 %v915
      %v3906 = vunpack.c.l.b16 %v916
      %v3907 = vunpack.c.h.b16 %v916
      %v3908 = vunpack.c.l.b16 %v917
      %v3909 = vunpack.c.h.b16 %v917
      %v3910 = vunpack.c.l.b16 %v918
      %v3911 = vunpack.c.h.b16 %v918
      %v3912 = vunpack.c.l.b16 %v919
      %v3913 = vunpack.c.h.b16 %v919
      %v3914 = vunpack.c.l.b16 %v920
      %v3915 = vunpack.c.h.b16 %v920
      %v3916 = vunpack.c.l.b16 %v921
      %v3917 = vunpack.c.h.b16 %v921
      %v3918 = vunpack.c.l.b16 %v922
      %v3919 = vunpack.c.h.b16 %v922
      %v3920 = vunpack.c.l.b16 %v923
      %v3921 = vunpack.c.h.b16 %v923
      %v3922 = vunpack.c.l.b16 %v924
      %v3923 = vunpack.c.h.b16 %v924
      %v3924 = vunpack.c.l.b16 %v925
      %v3925 = vunpack.c.h.b16 %v925
      %v3926 = vunpack.c.l.b16 %v926
      %v3927 = vunpack.c.h.b16 %v926
      %v3928 = vunpack.c.l.b16 %v927
      %v3929 = vunpack.c.h.b16 %v927
      %v3930 = vunpack.c.l.b16 %v928
      %v3931 = vunpack.c.h.b16 %v928
      %v3932 = vunpack.c.l.b16 %v929
      %v3933 = vunpack.c.h.b16 %v929
      %v3934 = vunpack.c.l.b16 %v930
      %v3935 = vunpack.c.h.b16 %v930
      %v3936 = vunpack.c.l.b16 %v931
      %v3937 = vunpack.c.h.b16 %v931
      %v3938 = vunpack.c.l.b16 %v932
      %v3939 = vunpack.c.h.b16 %v932
      %v3940 = vunpack.c.l.b16 %v933
      %v3941 = vunpack.c.h.b16 %v933
      %v3942 = vunpack.c.l.b16 %v934
      %v3943 = vunpack.c.h.b16 %v934
      %v3944 = vunpack.c.l.b16 %v935
      %v3945 = vunpack.c.h.b16 %v935
      %v3946 = vunpack.c.l.b16 %v936
      %v3947 = vunpack.c.h.b16 %v936
      %v3948 = vunpack.c.l.b16 %v937
      %v3949 = vunpack.c.h.b16 %v937
      %v3950 = vunpack.c.l.b16 %v938
      %v3951 = vunpack.c.h.b16 %v938
      %v3952 = vunpack.c.l.b16 %v939
      %v3953 = vunpack.c.h.b16 %v939
      %v3954 = vunpack.c.l.b16 %v940
      %v3955 = vunpack.c.h.b16 %v940
      %v3956 = vunpack.c.l.b16 %v941
      %v3957 = vunpack.c.h.b16 %v941
      %v3958 = vunpack.c.l.b16 %v942
      %v3959 = vunpack.c.h.b16 %v942
      %v3960 = vunpack.c.l.b16 %v943
      %v3961 = vunpack.c.h.b16 %v943
      %v3962 = vunpack.c.l.b16 %v944
      %v3963 = vunpack.c.h.b16 %v944
      %v3964 = vunpack.c.l.b16 %v945
      %v3965 = vunpack.c.h.b16 %v945
      %v3966 = vunpack.c.l.b16 %v946
      %v3967 = vunpack.c.h.b16 %v946
      %v3968 = vunpack.c.l.b16 %v947
      %v3969 = vunpack.c.h.b16 %v947
      %v3970 = vunpack.c.l.b16 %v948
      %v3971 = vunpack.c.h.b16 %v948
      %v3972 = vunpack.c.l.b16 %v949
      %v3973 = vunpack.c.h.b16 %v949
      %v3974 = vunpack.c.l.b16 %v950
      %v3975 = vunpack.c.h.b16 %v950
      %v3976 = vunpack.c.l.b16 %v951
      %v3977 = vunpack.c.h.b16 %v951
      %v3978 = vunpack.c.l.b16 %v952
      %v3979 = vunpack.c.h.b16 %v952
      %v3980 = vunpack.c.l.b16 %v953
      %v3981 = vunpack.c.h.b16 %v953
      %v3982 = vunpack.c.l.b16 %v954
      %v3983 = vunpack.c.h.b16 %v954
      %v3984 = vunpack.c.l.b16 %v955
      %v3985 = vunpack.c.h.b16 %v955
      %v3986 = vunpack.c.l.b16 %v956
      %v3987 = vunpack.c.h.b16 %v956
      %v3988 = vunpack.c.l.b16 %v957
      %v3989 = vunpack.c.h.b16 %v957
      %v3990 = vunpack.c.l.b16 %v958
      %v3991 = vunpack.c.h.b16 %v958
      %v3992 = vunpack.c.l.b16 %v959
      %v3993 = vunpack.c.h.b16 %v959
      %v3994 = vunpack.c.l.b16 %v960
      %v3995 = vunpack.c.h.b16 %v960
      %v3996 = vunpack.c.l.b16 %v961
      %v3997 = vunpack.c.h.b16 %v961
      %v3998 = vunpack.c.l.b16 %v962
      %v3999 = vunpack.c.h.b16 %v962
      %v4000 = vunpack.c.l.b16 %v963
      %v4001 = vunpack.c.h.b16 %v963
      %v4002 = vunpack.c.l.b16 %v964
      %v4003 = vunpack.c.h.b16 %v964
      %v4004 = vunpack.c.l.b16 %v965
      %v4005 = vunpack.c.h.b16 %v965
      %v4006 = vunpack.c.l.b16 %v966
      %v4007 = vunpack.c.h.b16 %v966
      %v4008 = vunpack.c.l.b16 %v967
      %v4009 = vunpack.c.h.b16 %v967
      %v4010 = vunpack.c.l.b16 %v968
      %v4011 = vunpack.c.h.b16 %v968
      %v4012 = vunpack.c.l.b16 %v969
      %v4013 = vunpack.c.h.b16 %v969
      %v4014 = vunpack.c.l.b16 %v970
      %v4015 = vunpack.c.h.b16 %v970
      %v4016 = vunpack.c.l.b16 %v971
      %v4017 = vunpack.c.h.b16 %v971
      %v4018 = vunpack.c.l.b16 %v972
      %v4019 = vunpack.c.h.b16 %v972
      %v4020 = vunpack.c.l.b16 %v973
      %v4021 = vunpack.c.h.b16 %v973
      %v4022 = vunpack.c.l.b16 %v974
      %v4023 = vunpack.c.h.b16 %v974
      %v4024 = vunpack.c.l.b16 %v975
      %v4025 = vunpack.c.h.b16 %v975
      %v4026 = vunpack.c.l.b16 %v976
      %v4027 = vunpack.c.h.b16 %v976
      %v4028 = vunpack.c.l.b16 %v977
      %v4029 = vunpack.c.h.b16 %v977
      %v4030 = vunpack.c.l.b16 %v978
      %v4031 = vunpack.c.h.b16 %v978
      %v4032 = vunpack.c.l.b16 %v979
      %v4033 = vunpack.c.h.b16 %v979
      %v4034 = vunpack.c.l.b16 %v980
      %v4035 = vunpack.c.h.b16 %v980
      %v4036 = vunpack.c.l.b16 %v981
      %v4037 = vunpack.c.h.b16 %v981
      %v4038 = vunpack.c.l.b16 %v982
      %v4039 = vunpack.c.h.b16 %v982
      %v4040 = vunpack.c.l.b16 %v983
      %v4041 = vunpack.c.h.b16 %v983
      %v4042 = vunpack.c.l.b16 %v984
      %v4043 = vunpack.c.h.b16 %v984
      %v4044 = vunpack.c.l.b16 %v985
      %v4045 = vunpack.c.h.b16 %v985
      %v4046 = vunpack.c.l.b16 %v986
      %v4047 = vunpack.c.h.b16 %v986
      %v4048 = vunpack.c.l.b16 %v987
      %v4049 = vunpack.c.h.b16 %v987
      %v4050 = vunpack.c.l.b16 %v988
      %v4051 = vunpack.c.h.b16 %v988
      %v4052 = vunpack.c.l.b16 %v989
      %v4053 = vunpack.c.h.b16 %v989
      %v4054 = vunpack.c.l.b16 %v990
      %v4055 = vunpack.c.h.b16 %v990
      %v4056 = vunpack.c.l.b16 %v991
      %v4057 = vunpack.c.h.b16 %v991
      %v4058 = vunpack.c.l.b16 %v992
      %v4059 = vunpack.c.h.b16 %v992
      %v4060 = vunpack.c.l.b16 %v993
      %v4061 = vunpack.c.h.b16 %v993
      %v4062 = vunpack.c.l.b16 %v994
      %v4063 = vunpack.c.h.b16 %v994
      %v4064 = vunpack.c.l.b16 %v995
      %v4065 = vunpack.c.h.b16 %v995
      %v4066 = vunpack.c.l.b16 %v996
      %v4067 = vunpack.c.h.b16 %v996
      %v4068 = vunpack.c.l.b16 %v997
      %v4069 = vunpack.c.h.b16 %v997
      %v4070 = vunpack.c.l.b16 %v998
      %v4071 = vunpack.c.h.b16 %v998
      %v4072 = vunpack.c.l.b16 %v999
      %v4073 = vunpack.c.h.b16 %v999
      %v4074 = vunpack.c.l.b16 %v1000
      %v4075 = vunpack.c.h.b16 %v1000
      %v4076 = vunpack.c.l.b16 %v1001
      %v4077 = vunpack.c.h.b16 %v1001
      %v4078 = vunpack.c.l.b16 %v1002
      %v4079 = vunpack.c.h.b16 %v1002
      %v4080 = vunpack.c.l.b16 %v1003
      %v4081 = vunpack.c.h.b16 %v1003
      %v4082 = vunpack.c.l.b16 %v1004
      %v4083 = vunpack.c.h.b16 %v1004
      %v4084 = vunpack.c.l.b16 %v1005
      %v4085 = vunpack.c.h.b16 %v1005
      %v4086 = vunpack.c.l.b16 %v1006
      %v4087 = vunpack.c.h.b16 %v1006
      %v4088 = vunpack.c.l.b16 %v1007
      %v4089 = vunpack.c.h.b16 %v1007
      %v4090 = vunpack.c.l.b16 %v1008
      %v4091 = vunpack.c.h.b16 %v1008
      %v4092 = vunpack.c.l.b16 %v1009
      %v4093 = vunpack.c.h.b16 %v1009
      %v4094 = vunpack.c.l.b16 %v1010
      %v4095 = vunpack.c.h.b16 %v1010
      %v4096 = vunpack.c.l.b16 %v1011
      %v4097 = vunpack.c.h.b16 %v1011
      %v4098 = vunpack.c.l.b16 %v1012
      %v4099 = vunpack.c.h.b16 %v1012
      %v4100 = vunpack.c.l.b16 %v1013
      %v4101 = vunpack.c.h.b16 %v1013
      %v4102 = vunpack.c.l.b16 %v1014
      %v4103 = vunpack.c.h.b16 %v1014
      %v4104 = vunpack.c.l.b16 %v1015
      %v4105 = vunpack.c.h.b16 %v1015
      %v4106 = vunpack.c.l.b16 %v1016
      %v4107 = vunpack.c.h.b16 %v1016
      %v4108 = vunpack.c.l.b16 %v1017
      %v4109 = vunpack.c.h.b16 %v1017
      %v4110 = vunpack.c.l.b16 %v1018
      %v4111 = vunpack.c.h.b16 %v1018
      %v4112 = vunpack.c.l.b16 %v1019
      %v4113 = vunpack.c.h.b16 %v1019
      %v4114 = vunpack.c.l.b16 %v1020
      %v4115 = vunpack.c.h.b16 %v1020
      %v4116 = vunpack.c.l.b16 %v1021
      %v4117 = vunpack.c.h.b16 %v1021
      %v4118 = vunpack.c.l.b16 %v1022
      %v4119 = vunpack.c.h.b16 %v1022
      %v4120 = vunpack.c.l.b16 %v1023
      %v4121 = vunpack.c.h.b16 %v1023
      %v4122 = vunpack.c.l.b16 %v1024
      %v4123 = vunpack.c.h.b16 %v1024
      %v4124 = vunpack.c.l.b16 %v1025
      %v4125 = vunpack.c.h.b16 %v1025
      %v4126 = vunpack.c.l.b16 %v1026
      %v4127 = vunpack.c.h.b16 %v1026
      %v4128 = vunpack.c.l.b16 %v1027
      %v4129 = vunpack.c.h.b16 %v1027
      %v4130 = vunpack.c.l.b16 %v1028
      %v4131 = vunpack.c.h.b16 %v1028
      %v4132 = vunpack.c.l.b16 %v1029
      %v4133 = vunpack.c.h.b16 %v1029
      %v4134 = vunpack.c.l.b16 %v1030
      %v4135 = vunpack.c.h.b16 %v1030
      %v4136 = vunpack.c.l.b16 %v1031
      %v4137 = vunpack.c.h.b16 %v1031
      %v4138 = vunpack.c.l.b16 %v1032
      %v4139 = vunpack.c.h.b16 %v1032
      %v4140 = vunpack.c.l.b16 %v1033
      %v4141 = vunpack.c.h.b16 %v1033
      %v4142 = vunpack.c.l.b16 %v1034
      %v4143 = vunpack.c.h.b16 %v1034
      %v4144 = vunpack.c.l.b16 %v1035
      %v4145 = vunpack.c.h.b16 %v1035
      %v4146 = vunpack.c.l.b16 %v1036
      %v4147 = vunpack.c.h.b16 %v1036
      %v4148 = vunpack.c.l.b16 %v1037
      %v4149 = vunpack.c.h.b16 %v1037
      %v4150 = vunpack.c.l.b16 %v1038
      %v4151 = vunpack.c.h.b16 %v1038
      %v4152 = vunpack.c.l.b16 %v1039
      %v4153 = vunpack.c.h.b16 %v1039
      %v4154 = vunpack.c.l.b16 %v1040
      %v4155 = vunpack.c.h.b16 %v1040
      %v4156 = vunpack.c.l.b16 %v1041
      %v4157 = vunpack.c.h.b16 %v1041
      %v4158 = vunpack.c.l.b16 %v1042
      %v4159 = vunpack.c.h.b16 %v1042
      %v4160 = vunpack.c.l.b16 %v1043
      %v4161 = vunpack.c.h.b16 %v1043
      %v4162 = vunpack.c.l.b16 %v1044
      %v4163 = vunpack.c.h.b16 %v1044
      %v4164 = vunpack.c.l.b16 %v1045
      %v4165 = vunpack.c.h.b16 %v1045
      %v4166 = vunpack.c.l.b16 %v1046
      %v4167 = vunpack.c.h.b16 %v1046
      %v4168 = vunpack.c.l.b16 %v1047
      %v4169 = vunpack.c.h.b16 %v1047
      %v4170 = vunpack.c.l.b16 %v1048
      %v4171 = vunpack.c.h.b16 %v1048
      %v4172 = vunpack.c.l.b16 %v1049
      %v4173 = vunpack.c.h.b16 %v1049
      %v4174 = vunpack.c.l.b16 %v1050
      %v4175 = vunpack.c.h.b16 %v1050
      %v4176 = vunpack.c.l.b16 %v1051
      %v4177 = vunpack.c.h.b16 %v1051
      %v4178 = vunpack.c.l.b16 %v1052
      %v4179 = vunpack.c.h.b16 %v1052
      %v4180 = vunpack.c.l.b16 %v1053
      %v4181 = vunpack.c.h.b16 %v1053
      %v4182 = vunpack.c.l.b16 %v1054
      %v4183 = vunpack.c.h.b16 %v1054
      %v4184 = vunpack.c.l.b16 %v1055
      %v4185 = vunpack.c.h.b16 %v1055
      %v4186 = vunpack.c.l.b16 %v1056
      %v4187 = vunpack.c.h.b16 %v1056
      %v4188 = vunpack.c.l.b16 %v1057
      %v4189 = vunpack.c.h.b16 %v1057
      %v4190 = vunpack.c.l.b16 %v1058
      %v4191 = vunpack.c.h.b16 %v1058
      %v4192 = vunpack.c.l.b16 %v1059
      %v4193 = vunpack.c.h.b16 %v1059
      %v4194 = vunpack.c.l.b16 %v1060
      %v4195 = vunpack.c.h.b16 %v1060
      %v4196 = vunpack.c.l.b16 %v1061
      %v4197 = vunpack.c.h.b16 %v1061
      %v4198 = vunpack.c.l.b16 %v1062
      %v4199 = vunpack.c.h.b16 %v1062
      %v4200 = vunpack.c.l.b16 %v1063
      %v4201 = vunpack.c.h.b16 %v1063
      %v4202 = vunpack.c.l.b16 %v1064
      %v4203 = vunpack.c.h.b16 %v1064
      %v4204 = vunpack.c.l.b16 %v1065
      %v4205 = vunpack.c.h.b16 %v1065
      %v4206 = vunpack.c.l.b16 %v1066
      %v4207 = vunpack.c.h.b16 %v1066
      %v4208 = vunpack.c.l.b16 %v1067
      %v4209 = vunpack.c.h.b16 %v1067
      %v4210 = vunpack.c.l.b16 %v1068
      %v4211 = vunpack.c.h.b16 %v1068
      %v4212 = vunpack.c.l.b16 %v1069
      %v4213 = vunpack.c.h.b16 %v1069
      %v4214 = vunpack.c.l.b16 %v1070
      %v4215 = vunpack.c.h.b16 %v1070
      %v4216 = vunpack.c.l.b16 %v1071
      %v4217 = vunpack.c.h.b16 %v1071
      %v4218 = vunpack.c.l.b16 %v1072
      %v4219 = vunpack.c.h.b16 %v1072
      %v4220 = vunpack.c.l.b16 %v1073
      %v4221 = vunpack.c.h.b16 %v1073
      %v4222 = vunpack.c.l.b16 %v1074
      %v4223 = vunpack.c.h.b16 %v1074
      %v4224 = vunpack.c.l.b16 %v1075
      %v4225 = vunpack.c.h.b16 %v1075
      %v4226 = vunpack.c.l.b16 %v1076
      %v4227 = vunpack.c.h.b16 %v1076
      %v4228 = vunpack.c.l.b16 %v1077
      %v4229 = vunpack.c.h.b16 %v1077
      %v4230 = vunpack.c.l.b16 %v1078
      %v4231 = vunpack.c.h.b16 %v1078
      %v4232 = vunpack.c.l.b16 %v1079
      %v4233 = vunpack.c.h.b16 %v1079
      %v4234 = vunpack.c.l.b16 %v1080
      %v4235 = vunpack.c.h.b16 %v1080
      %v4236 = vunpack.c.l.b16 %v1081
      %v4237 = vunpack.c.h.b16 %v1081
      %v4238 = vunpack.c.l.b16 %v1082
      %v4239 = vunpack.c.h.b16 %v1082
      %v4240 = vunpack.c.l.b16 %v1083
      %v4241 = vunpack.c.h.b16 %v1083
      %v4242 = vunpack.c.l.b16 %v1084
      %v4243 = vunpack.c.h.b16 %v1084
      %v4244 = vunpack.c.l.b16 %v1085
      %v4245 = vunpack.c.h.b16 %v1085
      %v4246 = vunpack.c.l.b16 %v1086
      %v4247 = vunpack.c.h.b16 %v1086
      %v4248 = vunpack.c.l.b16 %v1087
      %v4249 = vunpack.c.h.b16 %v1087
      %v4250 = vunpack.c.l.b16 %v1088
      %v4251 = vunpack.c.h.b16 %v1088
      %v4252 = vunpack.c.l.b16 %v1089
      %v4253 = vunpack.c.h.b16 %v1089
      %v4254 = vunpack.c.l.b16 %v1090
      %v4255 = vunpack.c.h.b16 %v1090
      %v4256 = vunpack.c.l.b16 %v1091
      %v4257 = vunpack.c.h.b16 %v1091
      %v4258 = vunpack.c.l.b16 %v1092
      %v4259 = vunpack.c.h.b16 %v1092
      %v4260 = vunpack.c.l.b16 %v1093
      %v4261 = vunpack.c.h.b16 %v1093
      %v4262 = vunpack.c.l.b16 %v1094
      %v4263 = vunpack.c.h.b16 %v1094
      %v4264 = vunpack.c.l.b16 %v1095
      %v4265 = vunpack.c.h.b16 %v1095
      %v4266 = vunpack.c.l.b16 %v1096
      %v4267 = vunpack.c.h.b16 %v1096
      %v4268 = vunpack.c.l.b16 %v1097
      %v4269 = vunpack.c.h.b16 %v1097
      %v4270 = vunpack.c.l.b16 %v1098
      %v4271 = vunpack.c.h.b16 %v1098
      %v4272 = vunpack.c.l.b16 %v1099
      %v4273 = vunpack.c.h.b16 %v1099
      %v4274 = vunpack.c.l.b16 %v1100
      %v4275 = vunpack.c.h.b16 %v1100
      %v4276 = vunpack.c.l.b16 %v1101
      %v4277 = vunpack.c.h.b16 %v1101
      %v4278 = vunpack.c.l.b16 %v1102
      %v4279 = vunpack.c.h.b16 %v1102
      %v4280 = vunpack.c.l.b16 %v1103
      %v4281 = vunpack.c.h.b16 %v1103
      %v4282 = vunpack.c.l.b16 %v1104
      %v4283 = vunpack.c.h.b16 %v1104
      %v4284 = vunpack.c.l.b16 %v1105
      %v4285 = vunpack.c.h.b16 %v1105
      %v4286 = vunpack.c.l.b16 %v1106
      %v4287 = vunpack.c.h.b16 %v1106
      %v4288 = vunpack.c.l.b16 %v1107
      %v4289 = vunpack.c.h.b16 %v1107
      %v4290 = vunpack.c.l.b16 %v1108
      %v4291 = vunpack.c.h.b16 %v1108
      %v4292 = vunpack.c.l.b16 %v1109
      %v4293 = vunpack.c.h.b16 %v1109
      %v4294 = vunpack.c.l.b16 %v1110
      %v4295 = vunpack.c.h.b16 %v1110
      %v4296 = vunpack.c.l.b16 %v1111
      %v4297 = vunpack.c.h.b16 %v1111
      %v4298 = vunpack.c.l.b16 %v1112
      %v4299 = vunpack.c.h.b16 %v1112
      %v4300 = vunpack.c.l.b16 %v1113
      %v4301 = vunpack.c.h.b16 %v1113
      %v4302 = vunpack.c.l.b16 %v1114
      %v4303 = vunpack.c.h.b16 %v1114
      %v4304 = vunpack.c.l.b16 %v1115
      %v4305 = vunpack.c.h.b16 %v1115
      %v4306 = vunpack.c.l.b16 %v1116
      %v4307 = vunpack.c.h.b16 %v1116
      %v4308 = vunpack.c.l.b16 %v1117
      %v4309 = vunpack.c.h.b16 %v1117
      %v4310 = vunpack.c.l.b16 %v1118
      %v4311 = vunpack.c.h.b16 %v1118
      %v4312 = vunpack.c.l.b16 %v1119
      %v4313 = vunpack.c.h.b16 %v1119
      %v4314 = vunpack.c.l.b16 %v1120
      %v4315 = vunpack.c.h.b16 %v1120
      %v4316 = vunpack.c.l.b16 %v1121
      %v4317 = vunpack.c.h.b16 %v1121
      %v4318 = vunpack.c.l.b16 %v1122
      %v4319 = vunpack.c.h.b16 %v1122
      %v4320 = vunpack.c.l.b16 %v1123
      %v4321 = vunpack.c.h.b16 %v1123
      %v4322 = vunpack.c.l.b16 %v1124
      %v4323 = vunpack.c.h.b16 %v1124
      %v4324 = vunpack.c.l.b16 %v1125
      %v4325 = vunpack.c.h.b16 %v1125
      %v4326 = vunpack.c.l.b16 %v1126
      %v4327 = vunpack.c.h.b16 %v1126
      %v4328 = vunpack.c.l.b16 %v1127
      %v4329 = vunpack.c.h.b16 %v1127
      %v4330 = vunpack.c.l.b16 %v1128
      %v4331 = vunpack.c.h.b16 %v1128
      %v4332 = vunpack.c.l.b16 %v1129
      %v4333 = vunpack.c.h.b16 %v1129
      %v4334 = vunpack.c.l.b16 %v1130
      %v4335 = vunpack.c.h.b16 %v1130
      %v4336 = vunpack.c.l.b16 %v1131
      %v4337 = vunpack.c.h.b16 %v1131
      %v4338 = vunpack.c.l.b16 %v1132
      %v4339 = vunpack.c.h.b16 %v1132
      %v4340 = vunpack.c.l.b16 %v1133
      %v4341 = vunpack.c.h.b16 %v1133
      %v4342 = vunpack.c.l.b16 %v1134
      %v4343 = vunpack.c.h.b16 %v1134
      %v4344 = vunpack.c.l.b16 %v1135
      %v4345 = vunpack.c.h.b16 %v1135
      %v4346 = vunpack.c.l.b16 %v1136
      %v4347 = vunpack.c.h.b16 %v1136
      %v4348 = vunpack.c.l.b16 %v1137
      %v4349 = vunpack.c.h.b16 %v1137
      %v4350 = vunpack.c.l.b16 %v1138
      %v4351 = vunpack.c.h.b16 %v1138
      %v4352 = vunpack.c.l.b16 %v1139
      %v4353 = vunpack.c.h.b16 %v1139
      %v4354 = vunpack.c.l.b16 %v1140
      %v4355 = vunpack.c.h.b16 %v1140
      %v4356 = vunpack.c.l.b16 %v1141
      %v4357 = vunpack.c.h.b16 %v1141
      %v4358 = vunpack.c.l.b16 %v1142
      %v4359 = vunpack.c.h.b16 %v1142
      %v4360 = vunpack.c.l.b16 %v1143
      %v4361 = vunpack.c.h.b16 %v1143
      %v4362 = vunpack.c.l.b16 %v1144
      %v4363 = vunpack.c.h.b16 %v1144
      %v4364 = vunpack.c.l.b16 %v1145
      %v4365 = vunpack.c.h.b16 %v1145
      %v4366 = vunpack.c.l.b16 %v1146
      %v4367 = vunpack.c.h.b16 %v1146
      %v4368 = vunpack.c.l.b16 %v1147
      %v4369 = vunpack.c.h.b16 %v1147
      %v4370 = vunpack.c.l.b16 %v1148
      %v4371 = vunpack.c.h.b16 %v1148
      %v4372 = vunpack.c.l.b16 %v1149
      %v4373 = vunpack.c.h.b16 %v1149
      %v4374 = vunpack.c.l.b16 %v1150
      %v4375 = vunpack.c.h.b16 %v1150
      %v4376 = vunpack.c.l.b16 %v1151
      %v4377 = vunpack.c.h.b16 %v1151
      %v4378 = vunpack.c.l.b16 %v1152
      %v4379 = vunpack.c.h.b16 %v1152
      %v4380 = vunpack.c.l.b16 %v1153
      %v4381 = vunpack.c.h.b16 %v1153
      %v4382 = vunpack.c.l.b16 %v1154
      %v4383 = vunpack.c.h.b16 %v1154
      %v4384 = vunpack.c.l.b16 %v1155
      %v4385 = vunpack.c.h.b16 %v1155
      %v4386 = vunpack.c.l.b16 %v1156
      %v4387 = vunpack.c.h.b16 %v1156
      %v4388 = vunpack.c.l.b16 %v1157
      %v4389 = vunpack.c.h.b16 %v1157
      %v4390 = vunpack.c.l.b16 %v1158
      %v4391 = vunpack.c.h.b16 %v1158
      %v4392 = vunpack.c.l.b16 %v1159
      %v4393 = vunpack.c.h.b16 %v1159
      %v4394 = vunpack.c.l.b16 %v1160
      %v4395 = vunpack.c.h.b16 %v1160
      %v4396 = vunpack.c.l.b16 %v1161
      %v4397 = vunpack.c.h.b16 %v1161
      %v4398 = vunpack.c.l.b16 %v1162
      %v4399 = vunpack.c.h.b16 %v1162
      %v4400 = vunpack.c.l.b16 %v1163
      %v4401 = vunpack.c.h.b16 %v1163
      %v4402 = vunpack.c.l.b16 %v1164
      %v4403 = vunpack.c.h.b16 %v1164
      %v4404 = vunpack.c.l.b16 %v1165
      %v4405 = vunpack.c.h.b16 %v1165
      %v4406 = vunpack.c.l.b16 %v1166
      %v4407 = vunpack.c.h.b16 %v1166
      %v4408 = vunpack.c.l.b16 %v1167
      %v4409 = vunpack.c.h.b16 %v1167
      %v4410 = vunpack.c.l.b16 %v1168
      %v4411 = vunpack.c.h.b16 %v1168
      %v4412 = vunpack.c.l.b16 %v1169
      %v4413 = vunpack.c.h.b16 %v1169
      %v4414 = vunpack.c.l.b16 %v1170
      %v4415 = vunpack.c.h.b16 %v1170
      %v4416 = vunpack.c.l.b16 %v1171
      %v4417 = vunpack.c.h.b16 %v1171
      %v4418 = vunpack.c.l.b16 %v1172
      %v4419 = vunpack.c.h.b16 %v1172
      %v4420 = vunpack.c.l.b16 %v1173
      %v4421 = vunpack.c.h.b16 %v1173
      %v4422 = vpack.c.b16 %v2378, %v2374
      %v4423 = vpack.c.b16 %v2379, %v2375
      %v4424 = vpack.c.b16 %v2380, %v2376
      %v4425 = vpack.c.b16 %v2381, %v2377
      %v4426 = vpack.c.b16 %v2386, %v2382
      %v4427 = vpack.c.b16 %v2387, %v2383
      %v4428 = vpack.c.b16 %v2388, %v2384
      %v4429 = vpack.c.b16 %v2389, %v2385
      %v4430 = vpack.c.b16 %v2394, %v2390
      %v4431 = vpack.c.b16 %v2395, %v2391
      %v4432 = vpack.c.b16 %v2396, %v2392
      %v4433 = vpack.c.b16 %v2397, %v2393
      %v4434 = vpack.c.b16 %v2402, %v2398
      %v4435 = vpack.c.b16 %v2403, %v2399
      %v4436 = vpack.c.b16 %v2404, %v2400
      %v4437 = vpack.c.b16 %v2405, %v2401
      %v4438 = vpack.c.b16 %v2410, %v2406
      %v4439 = vpack.c.b16 %v2411, %v2407
      %v4440 = vpack.c.b16 %v2412, %v2408
      %v4441 = vpack.c.b16 %v2413, %v2409
      %v4442 = vpack.c.b16 %v2418, %v2414
      %v4443 = vpack.c.b16 %v2419, %v2415
      %v4444 = vpack.c.b16 %v2420, %v2416
      %v4445 = vpack.c.b16 %v2421, %v2417
      %v4446 = vpack.c.b16 %v2426, %v2422
      %v4447 = vpack.c.b16 %v2427, %v2423
      %v4448 = vpack.c.b16 %v2428, %v2424
      %v4449 = vpack.c.b16 %v2429, %v2425
      %v4450 = vpack.c.b16 %v2434, %v2430
      %v4451 = vpack.c.b16 %v2435, %v2431
      %v4452 = vpack.c.b16 %v2436, %v2432
      %v4453 = vpack.c.b16 %v2437, %v2433
      %v4454 = vpack.c.b16 %v2442, %v2438
      %v4455 = vpack.c.b16 %v2443, %v2439
      %v4456 = vpack.c.b16 %v2444, %v2440
      %v4457 = vpack.c.b16 %v2445, %v2441
      %v4458 = vpack.c.b16 %v2450, %v2446
      %v4459 = vpack.c.b16 %v2451, %v2447
      %v4460 = vpack.c.b16 %v2452, %v2448
      %v4461 = vpack.c.b16 %v2453, %v2449
      %v4462 = vpack.c.b16 %v2458, %v2454
      %v4463 = vpack.c.b16 %v2459, %v2455
      %v4464 = vpack.c.b16 %v2460, %v2456
      %v4465 = vpack.c.b16 %v2461, %v2457
      %v4466 = vpack.c.b16 %v2466, %v2462
      %v4467 = vpack.c.b16 %v2467, %v2463
      %v4468 = vpack.c.b16 %v2468, %v2464
      %v4469 = vpack.c.b16 %v2469, %v2465
      %v4470 = vpack.c.b16 %v2474, %v2470
      %v4471 = vpack.c.b16 %v2475, %v2471
      %v4472 = vpack.c.b16 %v2476, %v2472
      %v4473 = vpack.c.b16 %v2477, %v2473
      %v4474 = vpack.c.b16 %v2482, %v2478
      %v4475 = vpack.c.b16 %v2483, %v2479
      %v4476 = vpack.c.b16 %v2484, %v2480
      %v4477 = vpack.c.b16 %v2485, %v2481
      %v4478 = vpack.c.b16 %v2490, %v2486
      %v4479 = vpack.c.b16 %v2491, %v2487
      %v4480 = vpack.c.b16 %v2492, %v2488
      %v4481 = vpack.c.b16 %v2493, %v2489
      %v4482 = vpack.c.b16 %v2498, %v2494
      %v4483 = vpack.c.b16 %v2499, %v2495
      %v4484 = vpack.c.b16 %v2500, %v2496
      %v4485 = vpack.c.b16 %v2501, %v2497
      %v4486 = vpack.c.b16 %v2506, %v2502
      %v4487 = vpack.c.b16 %v2507, %v2503
      %v4488 = vpack.c.b16 %v2508, %v2504
      %v4489 = vpack.c.b16 %v2509, %v2505
      %v4490 = vpack.c.b16 %v2514, %v2510
      %v4491 = vpack.c.b16 %v2515, %v2511
      %v4492 = vpack.c.b16 %v2516, %v2512
      %v4493 = vpack.c.b16 %v2517, %v2513
      %v4494 = vpack.c.b16 %v2522, %v2518
      %v4495 = vpack.c.b16 %v2523, %v2519
      %v4496 = vpack.c.b16 %v2524, %v2520
      %v4497 = vpack.c.b16 %v2525, %v2521
      %v4498 = vpack.c.b16 %v2530, %v2526
      %v4499 = vpack.c.b16 %v2531, %v2527
      %v4500 = vpack.c.b16 %v2532, %v2528
      %v4501 = vpack.c.b16 %v2533, %v2529
      %v4502 = vpack.c.b16 %v2538, %v2534
      %v4503 = vpack.c.b16 %v2539, %v2535
      %v4504 = vpack.c.b16 %v2540, %v2536
      %v4505 = vpack.c.b16 %v2541, %v2537
      %v4506 = vpack.c.b16 %v2546, %v2542
      %v4507 = vpack.c.b16 %v2547, %v2543
      %v4508 = vpack.c.b16 %v2548, %v2544
      %v4509 = vpack.c.b16 %v2549, %v2545
      %v4510 = vpack.c.b16 %v2554, %v2550
      %v4511 = vpack.c.b16 %v2555, %v2551
      %v4512 = vpack.c.b16 %v2556, %v2552
      %v4513 = vpack.c.b16 %v2557, %v2553
      %v4514 = vpack.c.b16 %v2562, %v2558
      %v4515 = vpack.c.b16 %v2563, %v2559
      %v4516 = vpack.c.b16 %v2564, %v2560
      %v4517 = vpack.c.b16 %v2565, %v2561
      %v4518 = vpack.c.b16 %v2570, %v2566
      %v4519 = vpack.c.b16 %v2571, %v2567
      %v4520 = vpack.c.b16 %v2572, %v2568
      %v4521 = vpack.c.b16 %v2573, %v2569
      %v4522 = vpack.c.b16 %v2578, %v2574
      %v4523 = vpack.c.b16 %v2579, %v2575
      %v4524 = vpack.c.b16 %v2580, %v2576
      %v4525 = vpack.c.b16 %v2581, %v2577
      %v4526 = vpack.c.b16 %v2586, %v2582
      %v4527 = vpack.c.b16 %v2587, %v2583
      %v4528 = vpack.c.b16 %v2588, %v2584
      %v4529 = vpack.c.b16 %v2589, %v2585
      %v4530 = vpack.c.b16 %v2594, %v2590
      %v4531 = vpack.c.b16 %v2595, %v2591
      %v4532 = vpack.c.b16 %v2596, %v2592
      %v4533 = vpack.c.b16 %v2597, %v2593
      %v4534 = vpack.c.b16 %v2602, %v2598
      %v4535 = vpack.c.b16 %v2603, %v2599
      %v4536 = vpack.c.b16 %v2604, %v2600
      %v4537 = vpack.c.b16 %v2605, %v2601
      %v4538 = vpack.c.b16 %v2610, %v2606
      %v4539 = vpack.c.b16 %v2611, %v2607
      %v4540 = vpack.c.b16 %v2612, %v2608
      %v4541 = vpack.c.b16 %v2613, %v2609
      %v4542 = vpack.c.b16 %v2618, %v2614
      %v4543 = vpack.c.b16 %v2619, %v2615
      %v4544 = vpack.c.b16 %v2620, %v2616
      %v4545 = vpack.c.b16 %v2621, %v2617
      %v4546 = vpack.c.b16 %v2626, %v2622
      %v4547 = vpack.c.b16 %v2627, %v2623
      %v4548 = vpack.c.b16 %v2628, %v2624
      %v4549 = vpack.c.b16 %v2629, %v2625
      %v4550 = vpack.c.b16 %v2634, %v2630
      %v4551 = vpack.c.b16 %v2635, %v2631
      %v4552 = vpack.c.b16 %v2636, %v2632
      %v4553 = vpack.c.b16 %v2637, %v2633
      %v4554 = vpack.c.b16 %v2642, %v2638
      %v4555 = vpack.c.b16 %v2643, %v2639
      %v4556 = vpack.c.b16 %v2644, %v2640
      %v4557 = vpack.c.b16 %v2645, %v2641
      %v4558 = vpack.c.b16 %v2650, %v2646
      %v4559 = vpack.c.b16 %v2651, %v2647
      %v4560 = vpack.c.b16 %v2652, %v2648
      %v4561 = vpack.c.b16 %v2653, %v2649
      %v4562 = vpack.c.b16 %v2658, %v2654
      %v4563 = vpack.c.b16 %v2659, %v2655
      %v4564 = vpack.c.b16 %v2660, %v2656
      %v4565 = vpack.c.b16 %v2661, %v2657
      %v4566 = vpack.c.b16 %v2666, %v2662
      %v4567 = vpack.c.b16 %v2667, %v2663
      %v4568 = vpack.c.b16 %v2668, %v2664
      %v4569 = vpack.c.b16 %v2669, %v2665
      %v4570 = vpack.c.b16 %v2674, %v2670
      %v4571 = vpack.c.b16 %v2675, %v2671
      %v4572 = vpack.c.b16 %v2676, %v2672
      %v4573 = vpack.c.b16 %v2677, %v2673
      %v4574 = vpack.c.b16 %v2682, %v2678
      %v4575 = vpack.c.b16 %v2683, %v2679
      %v4576 = vpack.c.b16 %v2684, %v2680
      %v4577 = vpack.c.b16 %v2685, %v2681
      %v4578 = vpack.c.b16 %v2690, %v2686
      %v4579 = vpack.c.b16 %v2691, %v2687
      %v4580 = vpack.c.b16 %v2692, %v2688
      %v4581 = vpack.c.b16 %v2693, %v2689
      %v4582 = vpack.c.b16 %v2698, %v2694
      %v4583 = vpack.c.b16 %v2699, %v2695
      %v4584 = vpack.c.b16 %v2700, %v2696
      %v4585 = vpack.c.b16 %v2701, %v2697
      %v4586 = vpack.c.b16 %v2706, %v2702
      %v4587 = vpack.c.b16 %v2707, %v2703
      %v4588 = vpack.c.b16 %v2708, %v2704
      %v4589 = vpack.c.b16 %v2709, %v2705
      %v4590 = vpack.c.b16 %v2714, %v2710
      %v4591 = vpack.c.b16 %v2715, %v2711
      %v4592 = vpack.c.b16 %v2716, %v2712
      %v4593 = vpack.c.b16 %v2717, %v2713
      %v4594 = vpack.c.b16 %v2722, %v2718
      %v4595 = vpack.c.b16 %v2723, %v2719
      %v4596 = vpack.c.b16 %v2724, %v2720
      %v4597 = vpack.c.b16 %v2725, %v2721
      %v4598 = vpack.c.b16 %v2730, %v2726
      %v4599 = vpack.c.b16 %v2731, %v2727
      %v4600 = vpack.c.b16 %v2732, %v2728
      %v4601 = vpack.c.b16 %v2733, %v2729
      %v4602 = vpack.c.b16 %v2738, %v2734
      %v4603 = vpack.c.b16 %v2739, %v2735
      %v4604 = vpack.c.b16 %v2740, %v2736
      %v4605 = vpack.c.b16 %v2741, %v2737
      %v4606 = vpack.c.b16 %v2746, %v2742
      %v4607 = vpack.c.b16 %v2747, %v2743
      %v4608 = vpack.c.b16 %v2748, %v2744
      %v4609 = vpack.c.b16 %v2749, %v2745
      %v4610 = vpack.c.b16 %v2754, %v2750
      %v4611 = vpack.c.b16 %v2755, %v2751
      %v4612 = vpack.c.b16 %v2756, %v2752
      %v4613 = vpack.c.b16 %v2757, %v2753
      %v4614 = vpack.c.b16 %v2762, %v2758
      %v4615 = vpack.c.b16 %v2763, %v2759
      %v4616 = vpack.c.b16 %v2764, %v2760
      %v4617 = vpack.c.b16 %v2765, %v2761
      %v4618 = vpack.c.b16 %v2770, %v2766
      %v4619 = vpack.c.b16 %v2771, %v2767
      %v4620 = vpack.c.b16 %v2772, %v2768
      %v4621 = vpack.c.b16 %v2773, %v2769
      %v4622 = vpack.c.b16 %v2778, %v2774
      %v4623 = vpack.c.b16 %v2779, %v2775
      %v4624 = vpack.c.b16 %v2780, %v2776
      %v4625 = vpack.c.b16 %v2781, %v2777
      %v4626 = vpack.c.b16 %v2786, %v2782
      %v4627 = vpack.c.b16 %v2787, %v2783
      %v4628 = vpack.c.b16 %v2788, %v2784
      %v4629 = vpack.c.b16 %v2789, %v2785
      %v4630 = vpack.c.b16 %v2794, %v2790
      %v4631 = vpack.c.b16 %v2795, %v2791
      %v4632 = vpack.c.b16 %v2796, %v2792
      %v4633 = vpack.c.b16 %v2797, %v2793
      %v4634 = vpack.c.b16 %v2802, %v2798
      %v4635 = vpack.c.b16 %v2803, %v2799
      %v4636 = vpack.c.b16 %v2804, %v2800
      %v4637 = vpack.c.b16 %v2805, %v2801
      %v4638 = vpack.c.b16 %v2810, %v2806
      %v4639 = vpack.c.b16 %v2811, %v2807
      %v4640 = vpack.c.b16 %v2812, %v2808
      %v4641 = vpack.c.b16 %v2813, %v2809
      %v4642 = vpack.c.b16 %v2818, %v2814
      %v4643 = vpack.c.b16 %v2819, %v2815
      %v4644 = vpack.c.b16 %v2820, %v2816
      %v4645 = vpack.c.b16 %v2821, %v2817
      %v4646 = vpack.c.b16 %v2826, %v2822
      %v4647 = vpack.c.b16 %v2827, %v2823
      %v4648 = vpack.c.b16 %v2828, %v2824
      %v4649 = vpack.c.b16 %v2829, %v2825
      %v4650 = vpack.c.b16 %v2834, %v2830
      %v4651 = vpack.c.b16 %v2835, %v2831
      %v4652 = vpack.c.b16 %v2836, %v2832
      %v4653 = vpack.c.b16 %v2837, %v2833
      %v4654 = vpack.c.b16 %v2842, %v2838
      %v4655 = vpack.c.b16 %v2843, %v2839
      %v4656 = vpack.c.b16 %v2844, %v2840
      %v4657 = vpack.c.b16 %v2845, %v2841
      %v4658 = vpack.c.b16 %v2850, %v2846
      %v4659 = vpack.c.b16 %v2851, %v2847
      %v4660 = vpack.c.b16 %v2852, %v2848
      %v4661 = vpack.c.b16 %v2853, %v2849
      %v4662 = vpack.c.b16 %v2858, %v2854
      %v4663 = vpack.c.b16 %v2859, %v2855
      %v4664 = vpack.c.b16 %v2860, %v2856
      %v4665 = vpack.c.b16 %v2861, %v2857
      %v4666 = vpack.c.b16 %v2866, %v2862
      %v4667 = vpack.c.b16 %v2867, %v2863
      %v4668 = vpack.c.b16 %v2868, %v2864
      %v4669 = vpack.c.b16 %v2869, %v2865
      %v4670 = vpack.c.b16 %v2874, %v2870
      %v4671 = vpack.c.b16 %v2875, %v2871
      %v4672 = vpack.c.b16 %v2876, %v2872
      %v4673 = vpack.c.b16 %v2877, %v2873
      %v4674 = vpack.c.b16 %v2882, %v2878
      %v4675 = vpack.c.b16 %v2883, %v2879
      %v4676 = vpack.c.b16 %v2884, %v2880
      %v4677 = vpack.c.b16 %v2885, %v2881
      %v4678 = vpack.c.b16 %v2890, %v2886
      %v4679 = vpack.c.b16 %v2891, %v2887
      %v4680 = vpack.c.b16 %v2892, %v2888
      %v4681 = vpack.c.b16 %v2893, %v2889
      %v4682 = vpack.c.b16 %v2898, %v2894
      %v4683 = vpack.c.b16 %v2899, %v2895
      %v4684 = vpack.c.b16 %v2900, %v2896
      %v4685 = vpack.c.b16 %v2901, %v2897
      %v4686 = vpack.c.b16 %v2906, %v2902
      %v4687 = vpack.c.b16 %v2907, %v2903
      %v4688 = vpack.c.b16 %v2908, %v2904
      %v4689 = vpack.c.b16 %v2909, %v2905
      %v4690 = vpack.c.b16 %v2914, %v2910
      %v4691 = vpack.c.b16 %v2915, %v2911
      %v4692 = vpack.c.b16 %v2916, %v2912
      %v4693 = vpack.c.b16 %v2917, %v2913
      %v4694 = vpack.c.b16 %v2922, %v2918
      %v4695 = vpack.c.b16 %v2923, %v2919
      %v4696 = vpack.c.b16 %v2924, %v2920
      %v4697 = vpack.c.b16 %v2925, %v2921
      %v4698 = vpack.c.b16 %v2930, %v2926
      %v4699 = vpack.c.b16 %v2931, %v2927
      %v4700 = vpack.c.b16 %v2932, %v2928
      %v4701 = vpack.c.b16 %v2933, %v2929
      %v4702 = vpack.c.b16 %v2938, %v2934
      %v4703 = vpack.c.b16 %v2939, %v2935
      %v4704 = vpack.c.b16 %v2940, %v2936
      %v4705 = vpack.c.b16 %v2941, %v2937
      %v4706 = vpack.c.b16 %v2946, %v2942
      %v4707 = vpack.c.b16 %v2947, %v2943
      %v4708 = vpack.c.b16 %v2948, %v2944
      %v4709 = vpack.c.b16 %v2949, %v2945
      %v4710 = vpack.c.b16 %v2954, %v2950
      %v4711 = vpack.c.b16 %v2955, %v2951
      %v4712 = vpack.c.b16 %v2956, %v2952
      %v4713 = vpack.c.b16 %v2957, %v2953
      %v4714 = vpack.c.b16 %v2962, %v2958
      %v4715 = vpack.c.b16 %v2963, %v2959
      %v4716 = vpack.c.b16 %v2964, %v2960
      %v4717 = vpack.c.b16 %v2965, %v2961
      %v4718 = vpack.c.b16 %v2970, %v2966
      %v4719 = vpack.c.b16 %v2971, %v2967
      %v4720 = vpack.c.b16 %v2972, %v2968
      %v4721 = vpack.c.b16 %v2973, %v2969
      %v4722 = vpack.c.b16 %v2978, %v2974
      %v4723 = vpack.c.b16 %v2979, %v2975
      %v4724 = vpack.c.b16 %v2980, %v2976
      %v4725 = vpack.c.b16 %v2981, %v2977
      %v4726 = vpack.c.b16 %v2986, %v2982
      %v4727 = vpack.c.b16 %v2987, %v2983
      %v4728 = vpack.c.b16 %v2988, %v2984
      %v4729 = vpack.c.b16 %v2989, %v2985
      %v4730 = vpack.c.b16 %v2994, %v2990
      %v4731 = vpack.c.b16 %v2995, %v2991
      %v4732 = vpack.c.b16 %v2996, %v2992
      %v4733 = vpack.c.b16 %v2997, %v2993
      %v4734 = vpack.c.b16 %v3002, %v2998
      %v4735 = vpack.c.b16 %v3003, %v2999
      %v4736 = vpack.c.b16 %v3004, %v3000
      %v4737 = vpack.c.b16 %v3005, %v3001
      %v4738 = vpack.c.b16 %v3010, %v3006
      %v4739 = vpack.c.b16 %v3011, %v3007
      %v4740 = vpack.c.b16 %v3012, %v3008
      %v4741 = vpack.c.b16 %v3013, %v3009
      %v4742 = vpack.c.b16 %v3018, %v3014
      %v4743 = vpack.c.b16 %v3019, %v3015
      %v4744 = vpack.c.b16 %v3020, %v3016
      %v4745 = vpack.c.b16 %v3021, %v3017
      %v4746 = vpack.c.b16 %v3026, %v3022
      %v4747 = vpack.c.b16 %v3027, %v3023
      %v4748 = vpack.c.b16 %v3028, %v3024
      %v4749 = vpack.c.b16 %v3029, %v3025
      %v4750 = vpack.c.b16 %v3034, %v3030
      %v4751 = vpack.c.b16 %v3035, %v3031
      %v4752 = vpack.c.b16 %v3036, %v3032
      %v4753 = vpack.c.b16 %v3037, %v3033
      %v4754 = vpack.c.b16 %v3042, %v3038
      %v4755 = vpack.c.b16 %v3043, %v3039
      %v4756 = vpack.c.b16 %v3044, %v3040
      %v4757 = vpack.c.b16 %v3045, %v3041
      %v4758 = vpack.c.b16 %v3050, %v3046
      %v4759 = vpack.c.b16 %v3051, %v3047
      %v4760 = vpack.c.b16 %v3052, %v3048
      %v4761 = vpack.c.b16 %v3053, %v3049
      %v4762 = vpack.c.b16 %v3058, %v3054
      %v4763 = vpack.c.b16 %v3059, %v3055
      %v4764 = vpack.c.b16 %v3060, %v3056
      %v4765 = vpack.c.b16 %v3061, %v3057
      %v4766 = vpack.c.b16 %v3066, %v3062
      %v4767 = vpack.c.b16 %v3067, %v3063
      %v4768 = vpack.c.b16 %v3068, %v3064
      %v4769 = vpack.c.b16 %v3069, %v3065
      %v4770 = vpack.c.b16 %v3074, %v3070
      %v4771 = vpack.c.b16 %v3075, %v3071
      %v4772 = vpack.c.b16 %v3076, %v3072
      %v4773 = vpack.c.b16 %v3077, %v3073
      %v4774 = vpack.c.b16 %v3082, %v3078
      %v4775 = vpack.c.b16 %v3083, %v3079
      %v4776 = vpack.c.b16 %v3084, %v3080
      %v4777 = vpack.c.b16 %v3085, %v3081
      %v4778 = vpack.c.b16 %v3090, %v3086
      %v4779 = vpack.c.b16 %v3091, %v3087
      %v4780 = vpack.c.b16 %v3092, %v3088
      %v4781 = vpack.c.b16 %v3093, %v3089
      %v4782 = vpack.c.b16 %v3098, %v3094
      %v4783 = vpack.c.b16 %v3099, %v3095
      %v4784 = vpack.c.b16 %v3100, %v3096
      %v4785 = vpack.c.b16 %v3101, %v3097
      %v4786 = vpack.c.b16 %v3106, %v3102
      %v4787 = vpack.c.b16 %v3107, %v3103
      %v4788 = vpack.c.b16 %v3108, %v3104
      %v4789 = vpack.c.b16 %v3109, %v3105
      %v4790 = vpack.c.b16 %v3114, %v3110
      %v4791 = vpack.c.b16 %v3115, %v3111
      %v4792 = vpack.c.b16 %v3116, %v3112
      %v4793 = vpack.c.b16 %v3117, %v3113
      %v4794 = vpack.c.b16 %v3122, %v3118
      %v4795 = vpack.c.b16 %v3123, %v3119
      %v4796 = vpack.c.b16 %v3124, %v3120
      %v4797 = vpack.c.b16 %v3125, %v3121
      %v4798 = vpack.c.b16 %v3130, %v3126
      %v4799 = vpack.c.b16 %v3131, %v3127
      %v4800 = vpack.c.b16 %v3132, %v3128
      %v4801 = vpack.c.b16 %v3133, %v3129
      %v4802 = vpack.c.b16 %v3138, %v3134
      %v4803 = vpack.c.b16 %v3139, %v3135
      %v4804 = vpack.c.b16 %v3140, %v3136
      %v4805 = vpack.c.b16 %v3141, %v3137
      %v4806 = vpack.c.b16 %v3146, %v3142
      %v4807 = vpack.c.b16 %v3147, %v3143
      %v4808 = vpack.c.b16 %v3148, %v3144
      %v4809 = vpack.c.b16 %v3149, %v3145
      %v4810 = vpack.c.b16 %v3154, %v3150
      %v4811 = vpack.c.b16 %v3155, %v3151
      %v4812 = vpack.c.b16 %v3156, %v3152
      %v4813 = vpack.c.b16 %v3157, %v3153
      %v4814 = vpack.c.b16 %v3162, %v3158
      %v4815 = vpack.c.b16 %v3163, %v3159
      %v4816 = vpack.c.b16 %v3164, %v3160
      %v4817 = vpack.c.b16 %v3165, %v3161
      %v4818 = vpack.c.b16 %v3170, %v3166
      %v4819 = vpack.c.b16 %v3171, %v3167
      %v4820 = vpack.c.b16 %v3172, %v3168
      %v4821 = vpack.c.b16 %v3173, %v3169
      %v4822 = vpack.c.b16 %v3178, %v3174
      %v4823 = vpack.c.b16 %v3179, %v3175
      %v4824 = vpack.c.b16 %v3180, %v3176
      %v4825 = vpack.c.b16 %v3181, %v3177
      %v4826 = vpack.c.b16 %v3186, %v3182
      %v4827 = vpack.c.b16 %v3187, %v3183
      %v4828 = vpack.c.b16 %v3188, %v3184
      %v4829 = vpack.c.b16 %v3189, %v3185
      %v4830 = vpack.c.b16 %v3194, %v3190
      %v4831 = vpack.c.b16 %v3195, %v3191
      %v4832 = vpack.c.b16 %v3196, %v3192
      %v4833 = vpack.c.b16 %v3197, %v3193
      %v4834 = vpack.c.b16 %v3202, %v3198
      %v4835 = vpack.c.b16 %v3203, %v3199
      %v4836 = vpack.c.b16 %v3204, %v3200
      %v4837 = vpack.c.b16 %v3205, %v3201
      %v4838 = vpack.c.b16 %v3210, %v3206
      %v4839 = vpack.c.b16 %v3211, %v3207
      %v4840 = vpack.c.b16 %v3212, %v3208
      %v4841 = vpack.c.b16 %v3213, %v3209
      %v4842 = vpack.c.b16 %v3218, %v3214
      %v4843 = vpack.c.b16 %v3219, %v3215
      %v4844 = vpack.c.b16 %v3220, %v3216
      %v4845 = vpack.c.b16 %v3221, %v3217
      %v4846 = vpack.c.b16 %v3226, %v3222
      %v4847 = vpack.c.b16 %v3227, %v3223
      %v4848 = vpack.c.b16 %v3228, %v3224
      %v4849 = vpack.c.b16 %v3229, %v3225
      %v4850 = vpack.c.b16 %v3234, %v3230
      %v4851 = vpack.c.b16 %v3235, %v3231
      %v4852 = vpack.c.b16 %v3236, %v3232
      %v4853 = vpack.c.b16 %v3237, %v3233
      %v4854 = vpack.c.b16 %v3242, %v3238
      %v4855 = vpack.c.b16 %v3243, %v3239
      %v4856 = vpack.c.b16 %v3244, %v3240
      %v4857 = vpack.c.b16 %v3245, %v3241
      %v4858 = vpack.c.b16 %v3250, %v3246
      %v4859 = vpack.c.b16 %v3251, %v3247
      %v4860 = vpack.c.b16 %v3252, %v3248
      %v4861 = vpack.c.b16 %v3253, %v3249
      %v4862 = vpack.c.b16 %v3258, %v3254
      %v4863 = vpack.c.b16 %v3259, %v3255
      %v4864 = vpack.c.b16 %v3260, %v3256
      %v4865 = vpack.c.b16 %v3261, %v3257
      %v4866 = vpack.c.b16 %v3266, %v3262
      %v4867 = vpack.c.b16 %v3267, %v3263
      %v4868 = vpack.c.b16 %v3268, %v3264
      %v4869 = vpack.c.b16 %v3269, %v3265
      %v4870 = vpack.c.b16 %v3274, %v3270
      %v4871 = vpack.c.b16 %v3275, %v3271
      %v4872 = vpack.c.b16 %v3276, %v3272
      %v4873 = vpack.c.b16 %v3277, %v3273
      %v4874 = vpack.c.b16 %v3282, %v3278
      %v4875 = vpack.c.b16 %v3283, %v3279
      %v4876 = vpack.c.b16 %v3284, %v3280
      %v4877 = vpack.c.b16 %v3285, %v3281
      %v4878 = vpack.c.b16 %v3290, %v3286
      %v4879 = vpack.c.b16 %v3291, %v3287
      %v4880 = vpack.c.b16 %v3292, %v3288
      %v4881 = vpack.c.b16 %v3293, %v3289
      %v4882 = vpack.c.b16 %v3298, %v3294
      %v4883 = vpack.c.b16 %v3299, %v3295
      %v4884 = vpack.c.b16 %v3300, %v3296
      %v4885 = vpack.c.b16 %v3301, %v3297
      %v4886 = vpack.c.b16 %v3306, %v3302
      %v4887 = vpack.c.b16 %v3307, %v3303
      %v4888 = vpack.c.b16 %v3308, %v3304
      %v4889 = vpack.c.b16 %v3309, %v3305
      %v4890 = vpack.c.b16 %v3314, %v3310
      %v4891 = vpack.c.b16 %v3315, %v3311
      %v4892 = vpack.c.b16 %v3316, %v3312
      %v4893 = vpack.c.b16 %v3317, %v3313
      %v4894 = vpack.c.b16 %v3322, %v3318
      %v4895 = vpack.c.b16 %v3323, %v3319
      %v4896 = vpack.c.b16 %v3324, %v3320
      %v4897 = vpack.c.b16 %v3325, %v3321
      %v4898 = vpack.c.b16 %v3330, %v3326
      %v4899 = vpack.c.b16 %v3331, %v3327
      %v4900 = vpack.c.b16 %v3332, %v3328
      %v4901 = vpack.c.b16 %v3333, %v3329
      %v4902 = vpack.c.b16 %v3338, %v3334
      %v4903 = vpack.c.b16 %v3339, %v3335
      %v4904 = vpack.c.b16 %v3340, %v3336
      %v4905 = vpack.c.b16 %v3341, %v3337
      %v4906 = vpack.c.b16 %v3346, %v3342
      %v4907 = vpack.c.b16 %v3347, %v3343
      %v4908 = vpack.c.b16 %v3348, %v3344
      %v4909 = vpack.c.b16 %v3349, %v3345
      %v4910 = vpack.c.b16 %v3354, %v3350
      %v4911 = vpack.c.b16 %v3355, %v3351
      %v4912 = vpack.c.b16 %v3356, %v3352
      %v4913 = vpack.c.b16 %v3357, %v3353
      %v4914 = vpack.c.b16 %v3362, %v3358
      %v4915 = vpack.c.b16 %v3363, %v3359
      %v4916 = vpack.c.b16 %v3364, %v3360
      %v4917 = vpack.c.b16 %v3365, %v3361
      %v4918 = vpack.c.b16 %v3370, %v3366
      %v4919 = vpack.c.b16 %v3371, %v3367
      %v4920 = vpack.c.b16 %v3372, %v3368
      %v4921 = vpack.c.b16 %v3373, %v3369
      %v4922 = vpack.c.b16 %v3378, %v3374
      %v4923 = vpack.c.b16 %v3379, %v3375
      %v4924 = vpack.c.b16 %v3380, %v3376
      %v4925 = vpack.c.b16 %v3381, %v3377
      %v4926 = vpack.c.b16 %v3386, %v3382
      %v4927 = vpack.c.b16 %v3387, %v3383
      %v4928 = vpack.c.b16 %v3388, %v3384
      %v4929 = vpack.c.b16 %v3389, %v3385
      %v4930 = vpack.c.b16 %v3394, %v3390
      %v4931 = vpack.c.b16 %v3395, %v3391
      %v4932 = vpack.c.b16 %v3396, %v3392
      %v4933 = vpack.c.b16 %v3397, %v3393
      %v4934 = vpack.c.b16 %v3402, %v3398
      %v4935 = vpack.c.b16 %v3403, %v3399
      %v4936 = vpack.c.b16 %v3404, %v3400
      %v4937 = vpack.c.b16 %v3405, %v3401
      %v4938 = vpack.c.b16 %v3410, %v3406
      %v4939 = vpack.c.b16 %v3411, %v3407
      %v4940 = vpack.c.b16 %v3412, %v3408
      %v4941 = vpack.c.b16 %v3413, %v3409
      %v4942 = vpack.c.b16 %v3418, %v3414
      %v4943 = vpack.c.b16 %v3419, %v3415
      %v4944 = vpack.c.b16 %v3420, %v3416
      %v4945 = vpack.c.b16 %v3421, %v3417
      %v4946 = vpack.c.b16 %v3426, %v3422
      %v4947 = vpack.c.b16 %v3427, %v3423
      %v4948 = vpack.c.b16 %v3428, %v3424
      %v4949 = vpack.c.b16 %v3429, %v3425
      %v4950 = vpack.c.b16 %v3434, %v3430
      %v4951 = vpack.c.b16 %v3435, %v3431
      %v4952 = vpack.c.b16 %v3436, %v3432
      %v4953 = vpack.c.b16 %v3437, %v3433
      %v4954 = vpack.c.b16 %v3442, %v3438
      %v4955 = vpack.c.b16 %v3443, %v3439
      %v4956 = vpack.c.b16 %v3444, %v3440
      %v4957 = vpack.c.b16 %v3445, %v3441
      %v4958 = vpack.c.b16 %v3450, %v3446
      %v4959 = vpack.c.b16 %v3451, %v3447
      %v4960 = vpack.c.b16 %v3452, %v3448
      %v4961 = vpack.c.b16 %v3453, %v3449
      %v4962 = vpack.c.b16 %v3458, %v3454
      %v4963 = vpack.c.b16 %v3459, %v3455
      %v4964 = vpack.c.b16 %v3460, %v3456
      %v4965 = vpack.c.b16 %v3461, %v3457
      %v4966 = vpack.c.b16 %v3466, %v3462
      %v4967 = vpack.c.b16 %v3467, %v3463
      %v4968 = vpack.c.b16 %v3468, %v3464
      %v4969 = vpack.c.b16 %v3469, %v3465
      %v4970 = vpack.c.b16 %v3474, %v3470
      %v4971 = vpack.c.b16 %v3475, %v3471
      %v4972 = vpack.c.b16 %v3476, %v3472
      %v4973 = vpack.c.b16 %v3477, %v3473
      %v4974 = vpack.c.b16 %v3482, %v3478
      %v4975 = vpack.c.b16 %v3483, %v3479
      %v4976 = vpack.c.b16 %v3484, %v3480
      %v4977 = vpack.c.b16 %v3485, %v3481
      %v4978 = vpack.c.b16 %v3490, %v3486
      %v4979 = vpack.c.b16 %v3491, %v3487
      %v4980 = vpack.c.b16 %v3492, %v3488
      %v4981 = vpack.c.b16 %v3493, %v3489
      %v4982 = vpack.c.b16 %v3498, %v3494
      %v4983 = vpack.c.b16 %v3499, %v3495
      %v4984 = vpack.c.b16 %v3500, %v3496
      %v4985 = vpack.c.b16 %v3501, %v3497
      %v4986 = vpack.c.b16 %v3506, %v3502
      %v4987 = vpack.c.b16 %v3507, %v3503
      %v4988 = vpack.c.b16 %v3508, %v3504
      %v4989 = vpack.c.b16 %v3509, %v3505
      %v4990 = vpack.c.b16 %v3514, %v3510
      %v4991 = vpack.c.b16 %v3515, %v3511
      %v4992 = vpack.c.b16 %v3516, %v3512
      %v4993 = vpack.c.b16 %v3517, %v3513
      %v4994 = vpack.c.b16 %v3522, %v3518
      %v4995 = vpack.c.b16 %v3523, %v3519
      %v4996 = vpack.c.b16 %v3524, %v3520
      %v4997 = vpack.c.b16 %v3525, %v3521
      %v4998 = vpack.c.b16 %v3530, %v3526
      %v4999 = vpack.c.b16 %v3531, %v3527
      %v5000 = vpack.c.b16 %v3532, %v3528
      %v5001 = vpack.c.b16 %v3533, %v3529
      %v5002 = vpack.c.b16 %v3538, %v3534
      %v5003 = vpack.c.b16 %v3539, %v3535
      %v5004 = vpack.c.b16 %v3540, %v3536
      %v5005 = vpack.c.b16 %v3541, %v3537
      %v5006 = vpack.c.b16 %v3546, %v3542
      %v5007 = vpack.c.b16 %v3547, %v3543
      %v5008 = vpack.c.b16 %v3548, %v3544
      %v5009 = vpack.c.b16 %v3549, %v3545
      %v5010 = vpack.c.b16 %v3554, %v3550
      %v5011 = vpack.c.b16 %v3555, %v3551
      %v5012 = vpack.c.b16 %v3556, %v3552
      %v5013 = vpack.c.b16 %v3557, %v3553
      %v5014 = vpack.c.b16 %v3562, %v3558
      %v5015 = vpack.c.b16 %v3563, %v3559
      %v5016 = vpack.c.b16 %v3564, %v3560
      %v5017 = vpack.c.b16 %v3565, %v3561
      %v5018 = vpack.c.b16 %v3570, %v3566
      %v5019 = vpack.c.b16 %v3571, %v3567
      %v5020 = vpack.c.b16 %v3572, %v3568
      %v5021 = vpack.c.b16 %v3573, %v3569
      %v5022 = vpack.c.b16 %v3578, %v3574
      %v5023 = vpack.c.b16 %v3579, %v3575
      %v5024 = vpack.c.b16 %v3580, %v3576
      %v5025 = vpack.c.b16 %v3581, %v3577
      %v5026 = vpack.c.b16 %v3586, %v3582
      %v5027 = vpack.c.b16 %v3587, %v3583
      %v5028 = vpack.c.b16 %v3588, %v3584
      %v5029 = vpack.c.b16 %v3589, %v3585
      %v5030 = vpack.c.b16 %v3594, %v3590
      %v5031 = vpack.c.b16 %v3595, %v3591
      %v5032 = vpack.c.b16 %v3596, %v3592
      %v5033 = vpack.c.b16 %v3597, %v3593
      %v5034 = vpack.c.b16 %v3602, %v3598
      %v5035 = vpack.c.b16 %v3603, %v3599
      %v5036 = vpack.c.b16 %v3604, %v3600
      %v5037 = vpack.c.b16 %v3605, %v3601
      %v5038 = vpack.c.b16 %v3610, %v3606
      %v5039 = vpack.c.b16 %v3611, %v3607
      %v5040 = vpack.c.b16 %v3612, %v3608
      %v5041 = vpack.c.b16 %v3613, %v3609
      %v5042 = vpack.c.b16 %v3618, %v3614
      %v5043 = vpack.c.b16 %v3619, %v3615
      %v5044 = vpack.c.b16 %v3620, %v3616
      %v5045 = vpack.c.b16 %v3621, %v3617
      %v5046 = vpack.c.b16 %v3626, %v3622
      %v5047 = vpack.c.b16 %v3627, %v3623
      %v5048 = vpack.c.b16 %v3628, %v3624
      %v5049 = vpack.c.b16 %v3629, %v3625
      %v5050 = vpack.c.b16 %v3634, %v3630
      %v5051 = vpack.c.b16 %v3635, %v3631
      %v5052 = vpack.c.b16 %v3636, %v3632
      %v5053 = vpack.c.b16 %v3637, %v3633
      %v5054 = vpack.c.b16 %v3642, %v3638
      %v5055 = vpack.c.b16 %v3643, %v3639
      %v5056 = vpack.c.b16 %v3644, %v3640
      %v5057 = vpack.c.b16 %v3645, %v3641
      %v5058 = vpack.c.b16 %v3650, %v3646
      %v5059 = vpack.c.b16 %v3651, %v3647
      %v5060 = vpack.c.b16 %v3652, %v3648
      %v5061 = vpack.c.b16 %v3653, %v3649
      %v5062 = vpack.c.b16 %v3658, %v3654
      %v5063 = vpack.c.b16 %v3659, %v3655
      %v5064 = vpack.c.b16 %v3660, %v3656
      %v5065 = vpack.c.b16 %v3661, %v3657
      %v5066 = vpack.c.b16 %v3666, %v3662
      %v5067 = vpack.c.b16 %v3667, %v3663
      %v5068 = vpack.c.b16 %v3668, %v3664
      %v5069 = vpack.c.b16 %v3669, %v3665
      %v5070 = vpack.c.b16 %v3674, %v3670
      %v5071 = vpack.c.b16 %v3675, %v3671
      %v5072 = vpack.c.b16 %v3676, %v3672
      %v5073 = vpack.c.b16 %v3677, %v3673
      %v5074 = vpack.c.b16 %v3682, %v3678
      %v5075 = vpack.c.b16 %v3683, %v3679
      %v5076 = vpack.c.b16 %v3684, %v3680
      %v5077 = vpack.c.b16 %v3685, %v3681
      %v5078 = vpack.c.b16 %v3690, %v3686
      %v5079 = vpack.c.b16 %v3691, %v3687
      %v5080 = vpack.c.b16 %v3692, %v3688
      %v5081 = vpack.c.b16 %v3693, %v3689
      %v5082 = vpack.c.b16 %v3698, %v3694
      %v5083 = vpack.c.b16 %v3699, %v3695
      %v5084 = vpack.c.b16 %v3700, %v3696
      %v5085 = vpack.c.b16 %v3701, %v3697
      %v5086 = vpack.c.b16 %v3706, %v3702
      %v5087 = vpack.c.b16 %v3707, %v3703
      %v5088 = vpack.c.b16 %v3708, %v3704
      %v5089 = vpack.c.b16 %v3709, %v3705
      %v5090 = vpack.c.b16 %v3714, %v3710
      %v5091 = vpack.c.b16 %v3715, %v3711
      %v5092 = vpack.c.b16 %v3716, %v3712
      %v5093 = vpack.c.b16 %v3717, %v3713
      %v5094 = vpack.c.b16 %v3722, %v3718
      %v5095 = vpack.c.b16 %v3723, %v3719
      %v5096 = vpack.c.b16 %v3724, %v3720
      %v5097 = vpack.c.b16 %v3725, %v3721
      %v5098 = vpack.c.b16 %v3730, %v3726
      %v5099 = vpack.c.b16 %v3731, %v3727
      %v5100 = vpack.c.b16 %v3732, %v3728
      %v5101 = vpack.c.b16 %v3733, %v3729
      %v5102 = vpack.c.b16 %v3738, %v3734
      %v5103 = vpack.c.b16 %v3739, %v3735
      %v5104 = vpack.c.b16 %v3740, %v3736
      %v5105 = vpack.c.b16 %v3741, %v3737
      %v5106 = vpack.c.b16 %v3746, %v3742
      %v5107 = vpack.c.b16 %v3747, %v3743
      %v5108 = vpack.c.b16 %v3748, %v3744
      %v5109 = vpack.c.b16 %v3749, %v3745
      %v5110 = vpack.c.b16 %v3754, %v3750
      %v5111 = vpack.c.b16 %v3755, %v3751
      %v5112 = vpack.c.b16 %v3756, %v3752
      %v5113 = vpack.c.b16 %v3757, %v3753
      %v5114 = vpack.c.b16 %v3762, %v3758
      %v5115 = vpack.c.b16 %v3763, %v3759
      %v5116 = vpack.c.b16 %v3764, %v3760
      %v5117 = vpack.c.b16 %v3765, %v3761
      %v5118 = vpack.c.b16 %v3770, %v3766
      %v5119 = vpack.c.b16 %v3771, %v3767
      %v5120 = vpack.c.b16 %v3772, %v3768
      %v5121 = vpack.c.b16 %v3773, %v3769
      %v5122 = vpack.c.b16 %v3778, %v3774
      %v5123 = vpack.c.b16 %v3779, %v3775
      %v5124 = vpack.c.b16 %v3780, %v3776
      %v5125 = vpack.c.b16 %v3781, %v3777
      %v5126 = vpack.c.b16 %v3786, %v3782
      %v5127 = vpack.c.b16 %v3787, %v3783
      %v5128 = vpack.c.b16 %v3788, %v3784
      %v5129 = vpack.c.b16 %v3789, %v3785
      %v5130 = vpack.c.b16 %v3794, %v3790
      %v5131 = vpack.c.b16 %v3795, %v3791
      %v5132 = vpack.c.b16 %v3796, %v3792
      %v5133 = vpack.c.b16 %v3797, %v3793
      %v5134 = vpack.c.b16 %v3802, %v3798
      %v5135 = vpack.c.b16 %v3803, %v3799
      %v5136 = vpack.c.b16 %v3804, %v3800
      %v5137 = vpack.c.b16 %v3805, %v3801
      %v5138 = vpack.c.b16 %v3810, %v3806
      %v5139 = vpack.c.b16 %v3811, %v3807
      %v5140 = vpack.c.b16 %v3812, %v3808
      %v5141 = vpack.c.b16 %v3813, %v3809
      %v5142 = vpack.c.b16 %v3818, %v3814
      %v5143 = vpack.c.b16 %v3819, %v3815
      %v5144 = vpack.c.b16 %v3820, %v3816
      %v5145 = vpack.c.b16 %v3821, %v3817
      %v5146 = vpack.c.b16 %v3826, %v3822
      %v5147 = vpack.c.b16 %v3827, %v3823
      %v5148 = vpack.c.b16 %v3828, %v3824
      %v5149 = vpack.c.b16 %v3829, %v3825
      %v5150 = vpack.c.b16 %v3834, %v3830
      %v5151 = vpack.c.b16 %v3835, %v3831
      %v5152 = vpack.c.b16 %v3836, %v3832
      %v5153 = vpack.c.b16 %v3837, %v3833
      %v5154 = vpack.c.b16 %v3842, %v3838
      %v5155 = vpack.c.b16 %v3843, %v3839
      %v5156 = vpack.c.b16 %v3844, %v3840
      %v5157 = vpack.c.b16 %v3845, %v3841
      %v5158 = vpack.c.b16 %v3850, %v3846
      %v5159 = vpack.c.b16 %v3851, %v3847
      %v5160 = vpack.c.b16 %v3852, %v3848
      %v5161 = vpack.c.b16 %v3853, %v3849
      %v5162 = vpack.c.b16 %v3858, %v3854
      %v5163 = vpack.c.b16 %v3859, %v3855
      %v5164 = vpack.c.b16 %v3860, %v3856
      %v5165 = vpack.c.b16 %v3861, %v3857
      %v5166 = vpack.c.b16 %v3866, %v3862
      %v5167 = vpack.c.b16 %v3867, %v3863
      %v5168 = vpack.c.b16 %v3868, %v3864
      %v5169 = vpack.c.b16 %v3869, %v3865
      %v5170 = vpack.c.b16 %v3874, %v3870
      %v5171 = vpack.c.b16 %v3875, %v3871
      %v5172 = vpack.c.b16 %v3876, %v3872
      %v5173 = vpack.c.b16 %v3877, %v3873
      %v5174 = vpack.c.b16 %v3882, %v3878
      %v5175 = vpack.c.b16 %v3883, %v3879
      %v5176 = vpack.c.b16 %v3884, %v3880
      %v5177 = vpack.c.b16 %v3885, %v3881
      %v5178 = vpack.c.b16 %v3890, %v3886
      %v5179 = vpack.c.b16 %v3891, %v3887
      %v5180 = vpack.c.b16 %v3892, %v3888
      %v5181 = vpack.c.b16 %v3893, %v3889
      %v5182 = vpack.c.b16 %v3898, %v3894
      %v5183 = vpack.c.b16 %v3899, %v3895
      %v5184 = vpack.c.b16 %v3900, %v3896
      %v5185 = vpack.c.b16 %v3901, %v3897
      %v5186 = vpack.c.b16 %v3906, %v3902
      %v5187 = vpack.c.b16 %v3907, %v3903
      %v5188 = vpack.c.b16 %v3908, %v3904
      %v5189 = vpack.c.b16 %v3909, %v3905
      %v5190 = vpack.c.b16 %v3914, %v3910
      %v5191 = vpack.c.b16 %v3915, %v3911
      %v5192 = vpack.c.b16 %v3916, %v3912
      %v5193 = vpack.c.b16 %v3917, %v3913
      %v5194 = vpack.c.b16 %v3922, %v3918
      %v5195 = vpack.c.b16 %v3923, %v3919
      %v5196 = vpack.c.b16 %v3924, %v3920
      %v5197 = vpack.c.b16 %v3925, %v3921
      %v5198 = vpack.c.b16 %v3930, %v3926
      %v5199 = vpack.c.b16 %v3931, %v3927
      %v5200 = vpack.c.b16 %v3932, %v3928
      %v5201 = vpack.c.b16 %v3933, %v3929
      %v5202 = vpack.c.b16 %v3938, %v3934
      %v5203 = vpack.c.b16 %v3939, %v3935
      %v5204 = vpack.c.b16 %v3940, %v3936
      %v5205 = vpack.c.b16 %v3941, %v3937
      %v5206 = vpack.c.b16 %v3946, %v3942
      %v5207 = vpack.c.b16 %v3947, %v3943
      %v5208 = vpack.c.b16 %v3948, %v3944
      %v5209 = vpack.c.b16 %v3949, %v3945
      %v5210 = vpack.c.b16 %v3954, %v3950
      %v5211 = vpack.c.b16 %v3955, %v3951
      %v5212 = vpack.c.b16 %v3956, %v3952
      %v5213 = vpack.c.b16 %v3957, %v3953
      %v5214 = vpack.c.b16 %v3962, %v3958
      %v5215 = vpack.c.b16 %v3963, %v3959
      %v5216 = vpack.c.b16 %v3964, %v3960
      %v5217 = vpack.c.b16 %v3965, %v3961
      %v5218 = vpack.c.b16 %v3970, %v3966
      %v5219 = vpack.c.b16 %v3971, %v3967
      %v5220 = vpack.c.b16 %v3972, %v3968
      %v5221 = vpack.c.b16 %v3973, %v3969
      %v5222 = vpack.c.b16 %v3978, %v3974
      %v5223 = vpack.c.b16 %v3979, %v3975
      %v5224 = vpack.c.b16 %v3980, %v3976
      %v5225 = vpack.c.b16 %v3981, %v3977
      %v5226 = vpack.c.b16 %v3986, %v3982
      %v5227 = vpack.c.b16 %v3987, %v3983
      %v5228 = vpack.c.b16 %v3988, %v3984
      %v5229 = vpack.c.b16 %v3989, %v3985
      %v5230 = vpack.c.b16 %v3994, %v3990
      %v5231 = vpack.c.b16 %v3995, %v3991
      %v5232 = vpack.c.b16 %v3996, %v3992
      %v5233 = vpack.c.b16 %v3997, %v3993
      %v5234 = vpack.c.b16 %v4002, %v3998
      %v5235 = vpack.c.b16 %v4003, %v3999
      %v5236 = vpack.c.b16 %v4004, %v4000
      %v5237 = vpack.c.b16 %v4005, %v4001
      %v5238 = vpack.c.b16 %v4010, %v4006
      %v5239 = vpack.c.b16 %v4011, %v4007
      %v5240 = vpack.c.b16 %v4012, %v4008
      %v5241 = vpack.c.b16 %v4013, %v4009
      %v5242 = vpack.c.b16 %v4018, %v4014
      %v5243 = vpack.c.b16 %v4019, %v4015
      %v5244 = vpack.c.b16 %v4020, %v4016
      %v5245 = vpack.c.b16 %v4021, %v4017
      %v5246 = vpack.c.b16 %v4026, %v4022
      %v5247 = vpack.c.b16 %v4027, %v4023
      %v5248 = vpack.c.b16 %v4028, %v4024
      %v5249 = vpack.c.b16 %v4029, %v4025
      %v5250 = vpack.c.b16 %v4034, %v4030
      %v5251 = vpack.c.b16 %v4035, %v4031
      %v5252 = vpack.c.b16 %v4036, %v4032
      %v5253 = vpack.c.b16 %v4037, %v4033
      %v5254 = vpack.c.b16 %v4042, %v4038
      %v5255 = vpack.c.b16 %v4043, %v4039
      %v5256 = vpack.c.b16 %v4044, %v4040
      %v5257 = vpack.c.b16 %v4045, %v4041
      %v5258 = vpack.c.b16 %v4050, %v4046
      %v5259 = vpack.c.b16 %v4051, %v4047
      %v5260 = vpack.c.b16 %v4052, %v4048
      %v5261 = vpack.c.b16 %v4053, %v4049
      %v5262 = vpack.c.b16 %v4058, %v4054
      %v5263 = vpack.c.b16 %v4059, %v4055
      %v5264 = vpack.c.b16 %v4060, %v4056
      %v5265 = vpack.c.b16 %v4061, %v4057
      %v5266 = vpack.c.b16 %v4066, %v4062
      %v5267 = vpack.c.b16 %v4067, %v4063
      %v5268 = vpack.c.b16 %v4068, %v4064
      %v5269 = vpack.c.b16 %v4069, %v4065
      %v5270 = vpack.c.b16 %v4074, %v4070
      %v5271 = vpack.c.b16 %v4075, %v4071
      %v5272 = vpack.c.b16 %v4076, %v4072
      %v5273 = vpack.c.b16 %v4077, %v4073
      %v5274 = vpack.c.b16 %v4082, %v4078
      %v5275 = vpack.c.b16 %v4083, %v4079
      %v5276 = vpack.c.b16 %v4084, %v4080
      %v5277 = vpack.c.b16 %v4085, %v4081
      %v5278 = vpack.c.b16 %v4090, %v4086
      %v5279 = vpack.c.b16 %v4091, %v4087
      %v5280 = vpack.c.b16 %v4092, %v4088
      %v5281 = vpack.c.b16 %v4093, %v4089
      %v5282 = vpack.c.b16 %v4098, %v4094
      %v5283 = vpack.c.b16 %v4099, %v4095
      %v5284 = vpack.c.b16 %v4100, %v4096
      %v5285 = vpack.c.b16 %v4101, %v4097
      %v5286 = vpack.c.b16 %v4106, %v4102
      %v5287 = vpack.c.b16 %v4107, %v4103
      %v5288 = vpack.c.b16 %v4108, %v4104
      %v5289 = vpack.c.b16 %v4109, %v4105
      %v5290 = vpack.c.b16 %v4114, %v4110
      %v5291 = vpack.c.b16 %v4115, %v4111
      %v5292 = vpack.c.b16 %v4116, %v4112
      %v5293 = vpack.c.b16 %v4117, %v4113
      %v5294 = vpack.c.b16 %v4122, %v4118
      %v5295 = vpack.c.b16 %v4123, %v4119
      %v5296 = vpack.c.b16 %v4124, %v4120
      %v5297 = vpack.c.b16 %v4125, %v4121
      %v5298 = vpack.c.b16 %v4130, %v4126
      %v5299 = vpack.c.b16 %v4131, %v4127
      %v5300 = vpack.c.b16 %v4132, %v4128
      %v5301 = vpack.c.b16 %v4133, %v4129
      %v5302 = vpack.c.b16 %v4138, %v4134
      %v5303 = vpack.c.b16 %v4139, %v4135
      %v5304 = vpack.c.b16 %v4140, %v4136
      %v5305 = vpack.c.b16 %v4141, %v4137
      %v5306 = vpack.c.b16 %v4146, %v4142
      %v5307 = vpack.c.b16 %v4147, %v4143
      %v5308 = vpack.c.b16 %v4148, %v4144
      %v5309 = vpack.c.b16 %v4149, %v4145
      %v5310 = vpack.c.b16 %v4154, %v4150
      %v5311 = vpack.c.b16 %v4155, %v4151
      %v5312 = vpack.c.b16 %v4156, %v4152
      %v5313 = vpack.c.b16 %v4157, %v4153
      %v5314 = vpack.c.b16 %v4162, %v4158
      %v5315 = vpack.c.b16 %v4163, %v4159
      %v5316 = vpack.c.b16 %v4164, %v4160
      %v5317 = vpack.c.b16 %v4165, %v4161
      %v5318 = vpack.c.b16 %v4170, %v4166
      %v5319 = vpack.c.b16 %v4171, %v4167
      %v5320 = vpack.c.b16 %v4172, %v4168
      %v5321 = vpack.c.b16 %v4173, %v4169
      %v5322 = vpack.c.b16 %v4178, %v4174
      %v5323 = vpack.c.b16 %v4179, %v4175
      %v5324 = vpack.c.b16 %v4180, %v4176
      %v5325 = vpack.c.b16 %v4181, %v4177
      %v5326 = vpack.c.b16 %v4186, %v4182
      %v5327 = vpack.c.b16 %v4187, %v4183
      %v5328 = vpack.c.b16 %v4188, %v4184
      %v5329 = vpack.c.b16 %v4189, %v4185
      %v5330 = vpack.c.b16 %v4194, %v4190
      %v5331 = vpack.c.b16 %v4195, %v4191
      %v5332 = vpack.c.b16 %v4196, %v4192
      %v5333 = vpack.c.b16 %v4197, %v4193
      %v5334 = vpack.c.b16 %v4202, %v4198
      %v5335 = vpack.c.b16 %v4203, %v4199
      %v5336 = vpack.c.b16 %v4204, %v4200
      %v5337 = vpack.c.b16 %v4205, %v4201
      %v5338 = vpack.c.b16 %v4210, %v4206
      %v5339 = vpack.c.b16 %v4211, %v4207
      %v5340 = vpack.c.b16 %v4212, %v4208
      %v5341 = vpack.c.b16 %v4213, %v4209
      %v5342 = vpack.c.b16 %v4218, %v4214
      %v5343 = vpack.c.b16 %v4219, %v4215
      %v5344 = vpack.c.b16 %v4220, %v4216
      %v5345 = vpack.c.b16 %v4221, %v4217
      %v5346 = vpack.c.b16 %v4226, %v4222
      %v5347 = vpack.c.b16 %v4227, %v4223
      %v5348 = vpack.c.b16 %v4228, %v4224
      %v5349 = vpack.c.b16 %v4229, %v4225
      %v5350 = vpack.c.b16 %v4234, %v4230
      %v5351 = vpack.c.b16 %v4235, %v4231
      %v5352 = vpack.c.b16 %v4236, %v4232
      %v5353 = vpack.c.b16 %v4237, %v4233
      %v5354 = vpack.c.b16 %v4242, %v4238
      %v5355 = vpack.c.b16 %v4243, %v4239
      %v5356 = vpack.c.b16 %v4244, %v4240
      %v5357 = vpack.c.b16 %v4245, %v4241
      %v5358 = vpack.c.b16 %v4250, %v4246
      %v5359 = vpack.c.b16 %v4251, %v4247
      %v5360 = vpack.c.b16 %v4252, %v4248
      %v5361 = vpack.c.b16 %v4253, %v4249
      %v5362 = vpack.c.b16 %v4258, %v4254
      %v5363 = vpack.c.b16 %v4259, %v4255
      %v5364 = vpack.c.b16 %v4260, %v4256
      %v5365 = vpack.c.b16 %v4261, %v4257
      %v5366 = vpack.c.b16 %v4266, %v4262
      %v5367 = vpack.c.b16 %v4267, %v4263
      %v5368 = vpack.c.b16 %v4268, %v4264
      %v5369 = vpack.c.b16 %v4269, %v4265
      %v5370 = vpack.c.b16 %v4274, %v4270
      %v5371 = vpack.c.b16 %v4275, %v4271
      %v5372 = vpack.c.b16 %v4276, %v4272
      %v5373 = vpack.c.b16 %v4277, %v4273
      %v5374 = vpack.c.b16 %v4282, %v4278
      %v5375 = vpack.c.b16 %v4283, %v4279
      %v5376 = vpack.c.b16 %v4284, %v4280
      %v5377 = vpack.c.b16 %v4285, %v4281
      %v5378 = vpack.c.b16 %v4290, %v4286
      %v5379 = vpack.c.b16 %v4291, %v4287
      %v5380 = vpack.c.b16 %v4292, %v4288
      %v5381 = vpack.c.b16 %v4293, %v4289
      %v5382 = vpack.c.b16 %v4298, %v4294
      %v5383 = vpack.c.b16 %v4299, %v4295
      %v5384 = vpack.c.b16 %v4300, %v4296
      %v5385 = vpack.c.b16 %v4301, %v4297
      %v5386 = vpack.c.b16 %v4306, %v4302
      %v5387 = vpack.c.b16 %v4307, %v4303
      %v5388 = vpack.c.b16 %v4308, %v4304
      %v5389 = vpack.c.b16 %v4309, %v4305
      %v5390 = vpack.c.b16 %v4314, %v4310
      %v5391 = vpack.c.b16 %v4315, %v4311
      %v5392 = vpack.c.b16 %v4316, %v4312
      %v5393 = vpack.c.b16 %v4317, %v4313
      %v5394 = vpack.c.b16 %v4322, %v4318
      %v5395 = vpack.c.b16 %v4323, %v4319
      %v5396 = vpack.c.b16 %v4324, %v4320
      %v5397 = vpack.c.b16 %v4325, %v4321
      %v5398 = vpack.c.b16 %v4330, %v4326
      %v5399 = vpack.c.b16 %v4331, %v4327
      %v5400 = vpack.c.b16 %v4332, %v4328
      %v5401 = vpack.c.b16 %v4333, %v4329
      %v5402 = vpack.c.b16 %v4338, %v4334
      %v5403 = vpack.c.b16 %v4339, %v4335
      %v5404 = vpack.c.b16 %v4340, %v4336
      %v5405 = vpack.c.b16 %v4341, %v4337
      %v5406 = vpack.c.b16 %v4346, %v4342
      %v5407 = vpack.c.b16 %v4347, %v4343
      %v5408 = vpack.c.b16 %v4348, %v4344
      %v5409 = vpack.c.b16 %v4349, %v4345
      %v5410 = vpack.c.b16 %v4354, %v4350
      %v5411 = vpack.c.b16 %v4355, %v4351
      %v5412 = vpack.c.b16 %v4356, %v4352
      %v5413 = vpack.c.b16 %v4357, %v4353
      %v5414 = vpack.c.b16 %v4362, %v4358
      %v5415 = vpack.c.b16 %v4363, %v4359
      %v5416 = vpack.c.b16 %v4364, %v4360
      %v5417 = vpack.c.b16 %v4365, %v4361
      %v5418 = vpack.c.b16 %v4370, %v4366
      %v5419 = vpack.c.b16 %v4371, %v4367
      %v5420 = vpack.c.b16 %v4372, %v4368
      %v5421 = vpack.c.b16 %v4373, %v4369
      %v5422 = vpack.c.b16 %v4378, %v4374
      %v5423 = vpack.c.b16 %v4379, %v4375
      %v5424 = vpack.c.b16 %v4380, %v4376
      %v5425 = vpack.c.b16 %v4381, %v4377
      %v5426 = vpack.c.b16 %v4386, %v4382
      %v5427 = vpack.c.b16 %v4387, %v4383
      %v5428 = vpack.c.b16 %v4388, %v4384
      %v5429 = vpack.c.b16 %v4389, %v4385
      %v5430 = vpack.c.b16 %v4394, %v4390
      %v5431 = vpack.c.b16 %v4395, %v4391
      %v5432 = vpack.c.b16 %v4396, %v4392
      %v5433 = vpack.c.b16 %v4397, %v4393
      %v5434 = vpack.c.b16 %v4402, %v4398
      %v5435 = vpack.c.b16 %v4403, %v4399
      %v5436 = vpack.c.b16 %v4404, %v4400
      %v5437 = vpack.c.b16 %v4405, %v4401
      %v5438 = vpack.c.b16 %v4410, %v4406
      %v5439 = vpack.c.b16 %v4411, %v4407
      %v5440 = vpack.c.b16 %v4412, %v4408
      %v5441 = vpack.c.b16 %v4413, %v4409
      %v5442 = vpack.c.b16 %v4418, %v4414
      %v5443 = vpack.c.b16 %v4419, %v4415
      %v5444 = vpack.c.b16 %v4420, %v4416
      %v5445 = vpack.c.b16 %v4421, %v4417
      %6470 = vmatprep.subr.bf16.mxu0 %v4423
      %6471 = vmatpush1.bf16.msra.mxu0 %v4422
      %6472 = vmatprep.subr.bf16.mxu0 %v4427
      %6473 = vmatpush1.bf16.msra.mxu0 %v4426
      %6474 = vmatprep.subr.bf16.mxu0 %v4431
      %6475 = vmatpush1.bf16.msra.mxu0 %v4430
      %6476 = vmatprep.subr.bf16.mxu0 %v4435
      %6477 = vmatpush1.bf16.msra.mxu0 %v4434
      %6478 = vmatprep.subr.bf16.mxu0 %v4439
      %6479 = vmatpush1.bf16.msra.mxu0 %v4438
      %6480 = vmatprep.subr.bf16.mxu0 %v4443
      %6481 = vmatpush1.bf16.msra.mxu0 %v4442
      %6482 = vmatprep.subr.bf16.mxu0 %v4447
      %6483 = vmatpush1.bf16.msra.mxu0 %v4446
      %6484 = vmatprep.subr.bf16.mxu0 %v4451
      %6485 = vmatpush1.bf16.msra.mxu0 %v4450
      %6486 = vmatprep.subr.bf16.mxu0 %v4455
      %6487 = vmatpush1.bf16.msra.mxu0 %v4454
      %6488 = vmatprep.subr.bf16.mxu0 %v4459
      %6489 = vmatpush1.bf16.msra.mxu0 %v4458
      %6490 = vmatprep.subr.bf16.mxu0 %v4463
      %6491 = vmatpush1.bf16.msra.mxu0 %v4462
      %6492 = vmatprep.subr.bf16.mxu0 %v4467
      %6493 = vmatpush1.bf16.msra.mxu0 %v4466
      %6494 = vmatprep.subr.bf16.mxu0 %v4471
      %6495 = vmatpush1.bf16.msra.mxu0 %v4470
      %6496 = vmatprep.subr.bf16.mxu0 %v4475
      %6497 = vmatpush1.bf16.msra.mxu0 %v4474
      %6498 = vmatprep.subr.bf16.mxu0 %v4479
      %6499 = vmatpush1.bf16.msra.mxu0 %v4478
      %6500 = vmatprep.subr.bf16.mxu0 %v4483
      %6501 = vmatpush1.bf16.msra.mxu0 %v4482
      %6502 = vmatprep.mubr.bf16.mxu0 %v1197
      %6503 = vmatmul.mubr.bf16.gmra.mrb[0].mxu0 %v1189
      %v6504 = vpop.f32.mrb[0].mxu0
      %v6505 = vadd.f32 0.0, %v6504
      %v6506 = vpop.f32.mrb[0].mxu0
      %v6507 = vadd.f32 0.0, %v6506
      %v6508 = vpop.f32.mrb[0].mxu0
      %v6509 = vpop.f32.mrb[0].mxu0
      %6510 = vdwg.mxu0
      %6511 = vmatprep.subr.bf16.mxu0 %v4487
      %6512 = vmatpush1.bf16.msra.mxu0 %v4486
      %6513 = vmatprep.subr.bf16.mxu0 %v4491
      %6514 = vmatpush1.bf16.msra.mxu0 %v4490
      %6515 = vmatprep.subr.bf16.mxu0 %v4495
      %6516 = vmatpush1.bf16.msra.mxu0 %v4494
      %6517 = vmatprep.subr.bf16.mxu0 %v4499
      %6518 = vmatpush1.bf16.msra.mxu0 %v4498
      %6519 = vmatprep.subr.bf16.mxu0 %v4503
      %6520 = vmatpush1.bf16.msra.mxu0 %v4502
      %6521 = vmatprep.subr.bf16.mxu0 %v4507
      %6522 = vmatpush1.bf16.msra.mxu0 %v4506
      %6523 = vmatprep.subr.bf16.mxu0 %v4511
      %6524 = vmatpush1.bf16.msra.mxu0 %v4510
      %6525 = vmatprep.subr.bf16.mxu0 %v4515
      %6526 = vmatpush1.bf16.msra.mxu0 %v4514
      %6527 = vmatprep.subr.bf16.mxu0 %v4519
      %6528 = vmatpush1.bf16.msra.mxu0 %v4518
      %6529 = vmatprep.subr.bf16.mxu0 %v4523
      %6530 = vmatpush1.bf16.msra.mxu0 %v4522
      %6531 = vmatprep.subr.bf16.mxu0 %v4527
      %6532 = vmatpush1.bf16.msra.mxu0 %v4526
      %6533 = vmatprep.subr.bf16.mxu0 %v4531
      %6534 = vmatpush1.bf16.msra.mxu0 %v4530
      %6535 = vmatprep.subr.bf16.mxu0 %v4535
      %6536 = vmatpush1.bf16.msra.mxu0 %v4534
      %6537 = vmatprep.subr.bf16.mxu0 %v4539
      %6538 = vmatpush1.bf16.msra.mxu0 %v4538
      %6539 = vmatprep.subr.bf16.mxu0 %v4543
      %6540 = vmatpush1.bf16.msra.mxu0 %v4542
      %6541 = vmatprep.subr.bf16.mxu0 %v4547
      %6542 = vmatpush1.bf16.msra.mxu0 %v4546
      %6543 = vmatprep.mubr.bf16.mxu0 %v1198
      %6544 = vmatmul.mubr.bf16.gmra.mrb[0].mxu0 %v1196
      %v6545 = vpop.f32.mrb[0].mxu0
      %v6546 = vadd.f32 %v6505, %v6545
      %v6547 = vpop.f32.mrb[0].mxu0
      %v6548 = vadd.f32 %v6507, %v6547
      %v6549 = vpop.f32.mrb[0].mxu0
      %v6550 = vpop.f32.mrb[0].mxu0
      %6551 = vdwg.mxu0
      %6552 = vmatprep.subr.bf16.mxu0 %v4551
      %6553 = vmatpush1.bf16.msra.mxu0 %v4550
      %6554 = vmatprep.subr.bf16.mxu0 %v4555
      %6555 = vmatpush1.bf16.msra.mxu0 %v4554
      %6556 = vmatprep.subr.bf16.mxu0 %v4559
      %6557 = vmatpush1.bf16.msra.mxu0 %v4558
      %6558 = vmatprep.subr.bf16.mxu0 %v4563
      %6559 = vmatpush1.bf16.msra.mxu0 %v4562
      %6560 = vmatprep.subr.bf16.mxu0 %v4567
      %6561 = vmatpush1.bf16.msra.mxu0 %v4566
      %6562 = vmatprep.subr.bf16.mxu0 %v4571
      %6563 = vmatpush1.bf16.msra.mxu0 %v4570
      %6564 = vmatprep.subr.bf16.mxu0 %v4575
      %6565 = vmatpush1.bf16.msra.mxu0 %v4574
      %6566 = vmatprep.subr.bf16.mxu0 %v4579
      %6567 = vmatpush1.bf16.msra.mxu0 %v4578
      %6568 = vmatprep.subr.bf16.mxu0 %v4583
      %6569 = vmatpush1.bf16.msra.mxu0 %v4582
      %6570 = vmatprep.subr.bf16.mxu0 %v4587
      %6571 = vmatpush1.bf16.msra.mxu0 %v4586
      %6572 = vmatprep.subr.bf16.mxu0 %v4591
      %6573 = vmatpush1.bf16.msra.mxu0 %v4590
      %6574 = vmatprep.subr.bf16.mxu0 %v4595
      %6575 = vmatpush1.bf16.msra.mxu0 %v4594
      %6576 = vmatprep.subr.bf16.mxu0 %v4599
      %6577 = vmatpush1.bf16.msra.mxu0 %v4598
      %6578 = vmatprep.subr.bf16.mxu0 %v4603
      %6579 = vmatpush1.bf16.msra.mxu0 %v4602
      %6580 = vmatprep.subr.bf16.mxu0 %v4607
      %6581 = vmatpush1.bf16.msra.mxu0 %v4606
      %6582 = vmatprep.subr.bf16.mxu0 %v4611
      %6583 = vmatpush1.bf16.msra.mxu0 %v4610
      %6584 = vmatprep.mubr.bf16.mxu0 %v1214
      %6585 = vmatmul.mubr.bf16.gmra.mrb[0].mxu0 %v1206
      %v6586 = vpop.f32.mrb[0].mxu0
      %v6587 = vadd.f32 %v6546, %v6586
      %v6588 = vpop.f32.mrb[0].mxu0
      %v6589 = vadd.f32 %v6548, %v6588
      %v6590 = vpop.f32.mrb[0].mxu0
      %v6591 = vpop.f32.mrb[0].mxu0
      %6592 = vdwg.mxu0
      %6593 = vmatprep.subr.bf16.mxu0 %v4615
      %6594 = vmatpush1.bf16.msra.mxu0 %v4614
      %6595 = vmatprep.subr.bf16.mxu0 %v4619
      %6596 = vmatpush1.bf16.msra.mxu0 %v4618
      %6597 = vmatprep.subr.bf16.mxu0 %v4623
      %6598 = vmatpush1.bf16.msra.mxu0 %v4622
      %6599 = vmatprep.subr.bf16.mxu0 %v4627
      %6600 = vmatpush1.bf16.msra.mxu0 %v4626
      %6601 = vmatprep.subr.bf16.mxu0 %v4631
      %6602 = vmatpush1.bf16.msra.mxu0 %v4630
      %6603 = vmatprep.subr.bf16.mxu0 %v4635
      %6604 = vmatpush1.bf16.msra.mxu0 %v4634
      %6605 = vmatprep.subr.bf16.mxu0 %v4639
      %6606 = vmatpush1.bf16.msra.mxu0 %v4638
      %6607 = vmatprep.subr.bf16.mxu0 %v4643
      %6608 = vmatpush1.bf16.msra.mxu0 %v4642
      %6609 = vmatprep.subr.bf16.mxu0 %v4647
      %6610 = vmatpush1.bf16.msra.mxu0 %v4646
      %6611 = vmatprep.subr.bf16.mxu0 %v4651
      %6612 = vmatpush1.bf16.msra.mxu0 %v4650
      %6613 = vmatprep.subr.bf16.mxu0 %v4655
      %6614 = vmatpush1.bf16.msra.mxu0 %v4654
      %6615 = vmatprep.subr.bf16.mxu0 %v4659
      %6616 = vmatpush1.bf16.msra.mxu0 %v4658
      %6617 = vmatprep.subr.bf16.mxu0 %v4663
      %6618 = vmatpush1.bf16.msra.mxu0 %v4662
      %6619 = vmatprep.subr.bf16.mxu0 %v4667
      %6620 = vmatpush1.bf16.msra.mxu0 %v4666
      %6621 = vmatprep.subr.bf16.mxu0 %v4671
      %6622 = vmatpush1.bf16.msra.mxu0 %v4670
      %6623 = vmatprep.subr.bf16.mxu0 %v4675
      %6624 = vmatpush1.bf16.msra.mxu0 %v4674
      %6625 = vmatprep.mubr.bf16.mxu0 %v1215
      %6626 = vmatmul.mubr.bf16.gmra.mrb[0].mxu0 %v1213
      %v6627 = vpop.f32.mrb[0].mxu0
      %v6628 = vadd.f32 %v6587, %v6627
      %v6629 = vpop.f32.mrb[0].mxu0
      %v6630 = vadd.f32 %v6589, %v6629
      %v6631 = vpop.f32.mrb[0].mxu0
      %v6632 = vpop.f32.mrb[0].mxu0
      %6633 = vdwg.mxu0
      %6634 = vmatprep.subr.bf16.mxu0 %v4679
      %6635 = vmatpush1.bf16.msra.mxu0 %v4678
      %6636 = vmatprep.subr.bf16.mxu0 %v4683
      %6637 = vmatpush1.bf16.msra.mxu0 %v4682
      %6638 = vmatprep.subr.bf16.mxu0 %v4687
      %6639 = vmatpush1.bf16.msra.mxu0 %v4686
      %6640 = vmatprep.subr.bf16.mxu0 %v4691
      %6641 = vmatpush1.bf16.msra.mxu0 %v4690
      %6642 = vmatprep.subr.bf16.mxu0 %v4695
      %6643 = vmatpush1.bf16.msra.mxu0 %v4694
      %6644 = vmatprep.subr.bf16.mxu0 %v4699
      %6645 = vmatpush1.bf16.msra.mxu0 %v4698
      %6646 = vmatprep.subr.bf16.mxu0 %v4703
      %6647 = vmatpush1.bf16.msra.mxu0 %v4702
      %6648 = vmatprep.subr.bf16.mxu0 %v4707
      %6649 = vmatpush1.bf16.msra.mxu0 %v4706
      %6650 = vmatprep.subr.bf16.mxu0 %v4711
      %6651 = vmatpush1.bf16.msra.mxu0 %v4710
      %6652 = vmatprep.subr.bf16.mxu0 %v4715
      %6653 = vmatpush1.bf16.msra.mxu0 %v4714
      %6654 = vmatprep.subr.bf16.mxu0 %v4719
      %6655 = vmatpush1.bf16.msra.mxu0 %v4718
      %6656 = vmatprep.subr.bf16.mxu0 %v4723
      %6657 = vmatpush1.bf16.msra.mxu0 %v4722
      %6658 = vmatprep.subr.bf16.mxu0 %v4727
      %6659 = vmatpush1.bf16.msra.mxu0 %v4726
      %6660 = vmatprep.subr.bf16.mxu0 %v4731
      %6661 = vmatpush1.bf16.msra.mxu0 %v4730
      %6662 = vmatprep.subr.bf16.mxu0 %v4735
      %6663 = vmatpush1.bf16.msra.mxu0 %v4734
      %6664 = vmatprep.subr.bf16.mxu0 %v4739
      %6665 = vmatpush1.bf16.msra.mxu0 %v4738
      %6666 = vmatprep.mubr.bf16.mxu0 %v1231
      %6667 = vmatmul.mubr.bf16.gmra.mrb[0].mxu0 %v1223
      %v6668 = vpop.f32.mrb[0].mxu0
      %v6669 = vadd.f32 %v6628, %v6668
      %v6670 = vpop.f32.mrb[0].mxu0
      %v6671 = vadd.f32 %v6630, %v6670
      %v6672 = vpop.f32.mrb[0].mxu0
      %v6673 = vpop.f32.mrb[0].mxu0
      %6674 = vdwg.mxu0
      %6675 = vmatprep.subr.bf16.mxu0 %v4743
      %6676 = vmatpush1.bf16.msra.mxu0 %v4742
      %6677 = vmatprep.subr.bf16.mxu0 %v4747
      %6678 = vmatpush1.bf16.msra.mxu0 %v4746
      %6679 = vmatprep.subr.bf16.mxu0 %v4751
      %6680 = vmatpush1.bf16.msra.mxu0 %v4750
      %6681 = vmatprep.subr.bf16.mxu0 %v4755
      %6682 = vmatpush1.bf16.msra.mxu0 %v4754
      %6683 = vmatprep.subr.bf16.mxu0 %v4759
      %6684 = vmatpush1.bf16.msra.mxu0 %v4758
      %6685 = vmatprep.subr.bf16.mxu0 %v4763
      %6686 = vmatpush1.bf16.msra.mxu0 %v4762
      %6687 = vmatprep.subr.bf16.mxu0 %v4767
      %6688 = vmatpush1.bf16.msra.mxu0 %v4766
      %6689 = vmatprep.subr.bf16.mxu0 %v4771
      %6690 = vmatpush1.bf16.msra.mxu0 %v4770
      %6691 = vmatprep.subr.bf16.mxu0 %v4775
      %6692 = vmatpush1.bf16.msra.mxu0 %v4774
      %6693 = vmatprep.subr.bf16.mxu0 %v4779
      %6694 = vmatpush1.bf16.msra.mxu0 %v4778
      %6695 = vmatprep.subr.bf16.mxu0 %v4783
      %6696 = vmatpush1.bf16.msra.mxu0 %v4782
      %6697 = vmatprep.subr.bf16.mxu0 %v4787
      %6698 = vmatpush1.bf16.msra.mxu0 %v4786
      %6699 = vmatprep.subr.bf16.mxu0 %v4791
      %6700 = vmatpush1.bf16.msra.mxu0 %v4790
      %6701 = vmatprep.subr.bf16.mxu0 %v4795
      %6702 = vmatpush1.bf16.msra.mxu0 %v4794
      %6703 = vmatprep.subr.bf16.mxu0 %v4799
      %6704 = vmatpush1.bf16.msra.mxu0 %v4798
      %6705 = vmatprep.subr.bf16.mxu0 %v4803
      %6706 = vmatpush1.bf16.msra.mxu0 %v4802
      %6707 = vmatprep.mubr.bf16.mxu0 %v1232
      %6708 = vmatmul.mubr.bf16.gmra.mrb[0].mxu0 %v1230
      %v6709 = vpop.f32.mrb[0].mxu0
      %v6710 = vadd.f32 %v6669, %v6709
      %v6711 = vpop.f32.mrb[0].mxu0
      %v6712 = vadd.f32 %v6671, %v6711
      %v6713 = vpop.f32.mrb[0].mxu0
      %v6714 = vpop.f32.mrb[0].mxu0
      %6715 = vdwg.mxu0
      %6716 = vmatprep.subr.bf16.mxu0 %v4807
      %6717 = vmatpush1.bf16.msra.mxu0 %v4806
      %6718 = vmatprep.subr.bf16.mxu0 %v4811
      %6719 = vmatpush1.bf16.msra.mxu0 %v4810
      %6720 = vmatprep.subr.bf16.mxu0 %v4815
      %6721 = vmatpush1.bf16.msra.mxu0 %v4814
      %6722 = vmatprep.subr.bf16.mxu0 %v4819
      %6723 = vmatpush1.bf16.msra.mxu0 %v4818
      %6724 = vmatprep.subr.bf16.mxu0 %v4823
      %6725 = vmatpush1.bf16.msra.mxu0 %v4822
      %6726 = vmatprep.subr.bf16.mxu0 %v4827
      %6727 = vmatpush1.bf16.msra.mxu0 %v4826
      %6728 = vmatprep.subr.bf16.mxu0 %v4831
      %6729 = vmatpush1.bf16.msra.mxu0 %v4830
      %6730 = vmatprep.subr.bf16.mxu0 %v4835
      %6731 = vmatpush1.bf16.msra.mxu0 %v4834
      %6732 = vmatprep.subr.bf16.mxu0 %v4839
      %6733 = vmatpush1.bf16.msra.mxu0 %v4838
      %6734 = vmatprep.subr.bf16.mxu0 %v4843
      %6735 = vmatpush1.bf16.msra.mxu0 %v4842
      %6736 = vmatprep.subr.bf16.mxu0 %v4847
      %6737 = vmatpush1.bf16.msra.mxu0 %v4846
      %6738 = vmatprep.subr.bf16.mxu0 %v4851
      %6739 = vmatpush1.bf16.msra.mxu0 %v4850
      %6740 = vmatprep.subr.bf16.mxu0 %v4855
      %6741 = vmatpush1.bf16.msra.mxu0 %v4854
      %6742 = vmatprep.subr.bf16.mxu0 %v4859
      %6743 = vmatpush1.bf16.msra.mxu0 %v4858
      %6744 = vmatprep.subr.bf16.mxu0 %v4863
      %6745 = vmatpush1.bf16.msra.mxu0 %v4862
      %6746 = vmatprep.subr.bf16.mxu0 %v4867
      %6747 = vmatpush1.bf16.msra.mxu0 %v4866
      %6748 = vmatprep.mubr.bf16.mxu0 %v1248
      %6749 = vmatmul.mubr.bf16.gmra.mrb[0].mxu0 %v1240
      %v6750 = vpop.f32.mrb[0].mxu0
      %v6751 = vadd.f32 %v6710, %v6750
      %v6752 = vpop.f32.mrb[0].mxu0
      %v6753 = vadd.f32 %v6712, %v6752
      %v6754 = vpop.f32.mrb[0].mxu0
      %v6755 = vpop.f32.mrb[0].mxu0
      %6756 = vdwg.mxu0
      %6757 = vmatprep.subr.bf16.mxu0 %v4871
      %6758 = vmatpush1.bf16.msra.mxu0 %v4870
      %6759 = vmatprep.subr.bf16.mxu0 %v4875
      %6760 = vmatpush1.bf16.msra.mxu0 %v4874
      %6761 = vmatprep.subr.bf16.mxu0 %v4879
      %6762 = vmatpush1.bf16.msra.mxu0 %v4878
      %6763 = vmatprep.subr.bf16.mxu0 %v4883
      %6764 = vmatpush1.bf16.msra.mxu0 %v4882
      %6765 = vmatprep.subr.bf16.mxu0 %v4887
      %6766 = vmatpush1.bf16.msra.mxu0 %v4886
      %6767 = vmatprep.subr.bf16.mxu0 %v4891
      %6768 = vmatpush1.bf16.msra.mxu0 %v4890
      %6769 = vmatprep.subr.bf16.mxu0 %v4895
      %6770 = vmatpush1.bf16.msra.mxu0 %v4894
      %6771 = vmatprep.subr.bf16.mxu0 %v4899
      %6772 = vmatpush1.bf16.msra.mxu0 %v4898
      %6773 = vmatprep.subr.bf16.mxu0 %v4903
      %6774 = vmatpush1.bf16.msra.mxu0 %v4902
      %6775 = vmatprep.subr.bf16.mxu0 %v4907
      %6776 = vmatpush1.bf16.msra.mxu0 %v4906
      %6777 = vmatprep.subr.bf16.mxu0 %v4911
      %6778 = vmatpush1.bf16.msra.mxu0 %v4910
      %6779 = vmatprep.subr.bf16.mxu0 %v4915
      %6780 = vmatpush1.bf16.msra.mxu0 %v4914
      %6781 = vmatprep.subr.bf16.mxu0 %v4919
      %6782 = vmatpush1.bf16.msra.mxu0 %v4918
      %6783 = vmatprep.subr.bf16.mxu0 %v4923
      %6784 = vmatpush1.bf16.msra.mxu0 %v4922
      %6785 = vmatprep.subr.bf16.mxu0 %v4927
      %6786 = vmatpush1.bf16.msra.mxu0 %v4926
      %6787 = vmatprep.subr.bf16.mxu0 %v4931
      %6788 = vmatpush1.bf16.msra.mxu0 %v4930
      %6789 = vmatprep.mubr.bf16.mxu0 %v1249
      %6790 = vmatmul.mubr.bf16.gmra.mrb[0].mxu0 %v1247
      %v6791 = vpop.f32.mrb[0].mxu0
      %v6792 = vadd.f32 %v6751, %v6791
      %v6793 = vpop.f32.mrb[0].mxu0
      %v6794 = vadd.f32 %v6753, %v6793
      %v6795 = vpop.f32.mrb[0].mxu0
      %v6796 = vpop.f32.mrb[0].mxu0
      %6797 = vdwg.mxu0
      %6798 = vmatprep.subr.bf16.mxu0 %v4935
      %6799 = vmatpush1.bf16.msra.mxu0 %v4934
      %6800 = vmatprep.subr.bf16.mxu0 %v4939
      %6801 = vmatpush1.bf16.msra.mxu0 %v4938
      %6802 = vmatprep.subr.bf16.mxu0 %v4943
      %6803 = vmatpush1.bf16.msra.mxu0 %v4942
      %6804 = vmatprep.subr.bf16.mxu0 %v4947
      %6805 = vmatpush1.bf16.msra.mxu0 %v4946
      %6806 = vmatprep.subr.bf16.mxu0 %v4951
      %6807 = vmatpush1.bf16.msra.mxu0 %v4950
      %6808 = vmatprep.subr.bf16.mxu0 %v4955
      %6809 = vmatpush1.bf16.msra.mxu0 %v4954
      %6810 = vmatprep.subr.bf16.mxu0 %v4959
      %6811 = vmatpush1.bf16.msra.mxu0 %v4958
      %6812 = vmatprep.subr.bf16.mxu0 %v4963
      %6813 = vmatpush1.bf16.msra.mxu0 %v4962
      %6814 = vmatprep.subr.bf16.mxu0 %v4967
      %6815 = vmatpush1.bf16.msra.mxu0 %v4966
      %6816 = vmatprep.subr.bf16.mxu0 %v4971
      %6817 = vmatpush1.bf16.msra.mxu0 %v4970
      %6818 = vmatprep.subr.bf16.mxu0 %v4975
      %6819 = vmatpush1.bf16.msra.mxu0 %v4974
      %6820 = vmatprep.subr.bf16.mxu0 %v4979
      %6821 = vmatpush1.bf16.msra.mxu0 %v4978
      %6822 = vmatprep.subr.bf16.mxu0 %v4983
      %6823 = vmatpush1.bf16.msra.mxu0 %v4982
      %6824 = vmatprep.subr.bf16.mxu0 %v4987
      %6825 = vmatpush1.bf16.msra.mxu0 %v4986
      %6826 = vmatprep.subr.bf16.mxu0 %v4991
      %6827 = vmatpush1.bf16.msra.mxu0 %v4990
      %6828 = vmatprep.subr.bf16.mxu0 %v4995
      %6829 = vmatpush1.bf16.msra.mxu0 %v4994
      %6830 = vmatprep.mubr.bf16.mxu0 %v1265
      %6831 = vmatmul.mubr.bf16.gmra.mrb[0].mxu0 %v1257
      %v6832 = vpop.f32.mrb[0].mxu0
      %v6833 = vadd.f32 %v6792, %v6832
      %v6834 = vpop.f32.mrb[0].mxu0
      %v6835 = vadd.f32 %v6794, %v6834
      %v6836 = vpop.f32.mrb[0].mxu0
      %v6837 = vpop.f32.mrb[0].mxu0
      %6838 = vdwg.mxu0
      %6839 = vmatprep.subr.bf16.mxu0 %v4999
      %6840 = vmatpush1.bf16.msra.mxu0 %v4998
      %6841 = vmatprep.subr.bf16.mxu0 %v5003
      %6842 = vmatpush1.bf16.msra.mxu0 %v5002
      %6843 = vmatprep.subr.bf16.mxu0 %v5007
      %6844 = vmatpush1.bf16.msra.mxu0 %v5006
      %6845 = vmatprep.subr.bf16.mxu0 %v5011
      %6846 = vmatpush1.bf16.msra.mxu0 %v5010
      %6847 = vmatprep.subr.bf16.mxu0 %v5015
      %6848 = vmatpush1.bf16.msra.mxu0 %v5014
      %6849 = vmatprep.subr.bf16.mxu0 %v5019
      %6850 = vmatpush1.bf16.msra.mxu0 %v5018
      %6851 = vmatprep.subr.bf16.mxu0 %v5023
      %6852 = vmatpush1.bf16.msra.mxu0 %v5022
      %6853 = vmatprep.subr.bf16.mxu0 %v5027
      %6854 = vmatpush1.bf16.msra.mxu0 %v5026
      %6855 = vmatprep.subr.bf16.mxu0 %v5031
      %6856 = vmatpush1.bf16.msra.mxu0 %v5030
      %6857 = vmatprep.subr.bf16.mxu0 %v5035
      %6858 = vmatpush1.bf16.msra.mxu0 %v5034
      %6859 = vmatprep.subr.bf16.mxu0 %v5039
      %6860 = vmatpush1.bf16.msra.mxu0 %v5038
      %6861 = vmatprep.subr.bf16.mxu0 %v5043
      %6862 = vmatpush1.bf16.msra.mxu0 %v5042
      %6863 = vmatprep.subr.bf16.mxu0 %v5047
      %6864 = vmatpush1.bf16.msra.mxu0 %v5046
      %6865 = vmatprep.subr.bf16.mxu0 %v5051
      %6866 = vmatpush1.bf16.msra.mxu0 %v5050
      %6867 = vmatprep.subr.bf16.mxu0 %v5055
      %6868 = vmatpush1.bf16.msra.mxu0 %v5054
      %6869 = vmatprep.subr.bf16.mxu0 %v5059
      %6870 = vmatpush1.bf16.msra.mxu0 %v5058
      %6871 = vmatprep.mubr.bf16.mxu0 %v1266
      %6872 = vmatmul.mubr.bf16.gmra.mrb[0].mxu0 %v1264
      %v6873 = vpop.f32.mrb[0].mxu0
      %v6874 = vadd.f32 %v6833, %v6873
      %v6875 = vpop.f32.mrb[0].mxu0
      %v6876 = vadd.f32 %v6835, %v6875
      %v6877 = vpop.f32.mrb[0].mxu0
      %v6878 = vpop.f32.mrb[0].mxu0
      %6879 = vdwg.mxu0
      %6880 = vmatprep.subr.bf16.mxu0 %v5063
      %6881 = vmatpush1.bf16.msra.mxu0 %v5062
      %6882 = vmatprep.subr.bf16.mxu0 %v5067
      %6883 = vmatpush1.bf16.msra.mxu0 %v5066
      %6884 = vmatprep.subr.bf16.mxu0 %v5071
      %6885 = vmatpush1.bf16.msra.mxu0 %v5070
      %6886 = vmatprep.subr.bf16.mxu0 %v5075
      %6887 = vmatpush1.bf16.msra.mxu0 %v5074
      %6888 = vmatprep.subr.bf16.mxu0 %v5079
      %6889 = vmatpush1.bf16.msra.mxu0 %v5078
      %6890 = vmatprep.subr.bf16.mxu0 %v5083
      %6891 = vmatpush1.bf16.msra.mxu0 %v5082
      %6892 = vmatprep.subr.bf16.mxu0 %v5087
      %6893 = vmatpush1.bf16.msra.mxu0 %v5086
      %6894 = vmatprep.subr.bf16.mxu0 %v5091
      %6895 = vmatpush1.bf16.msra.mxu0 %v5090
      %6896 = vmatprep.subr.bf16.mxu0 %v5095
      %6897 = vmatpush1.bf16.msra.mxu0 %v5094
      %6898 = vmatprep.subr.bf16.mxu0 %v5099
      %6899 = vmatpush1.bf16.msra.mxu0 %v5098
      %6900 = vmatprep.subr.bf16.mxu0 %v5103
      %6901 = vmatpush1.bf16.msra.mxu0 %v5102
      %6902 = vmatprep.subr.bf16.mxu0 %v5107
      %6903 = vmatpush1.bf16.msra.mxu0 %v5106
      %6904 = vmatprep.subr.bf16.mxu0 %v5111
      %6905 = vmatpush1.bf16.msra.mxu0 %v5110
      %6906 = vmatprep.subr.bf16.mxu0 %v5115
      %6907 = vmatpush1.bf16.msra.mxu0 %v5114
      %6908 = vmatprep.subr.bf16.mxu0 %v5119
      %6909 = vmatpush1.bf16.msra.mxu0 %v5118
      %6910 = vmatprep.subr.bf16.mxu0 %v5123
      %6911 = vmatpush1.bf16.msra.mxu0 %v5122
      %6912 = vmatprep.mubr.bf16.mxu0 %v1282
      %6913 = vmatmul.mubr.bf16.gmra.mrb[0].mxu0 %v1274
      %v6914 = vpop.f32.mrb[0].mxu0
      %v6915 = vadd.f32 %v6874, %v6914
      %v6916 = vpop.f32.mrb[0].mxu0
      %v6917 = vadd.f32 %v6876, %v6916
      %v6918 = vpop.f32.mrb[0].mxu0
      %v6919 = vpop.f32.mrb[0].mxu0
      %6920 = vdwg.mxu0
      %6921 = vmatprep.subr.bf16.mxu0 %v5127
      %6922 = vmatpush1.bf16.msra.mxu0 %v5126
      %6923 = vmatprep.subr.bf16.mxu0 %v5131
      %6924 = vmatpush1.bf16.msra.mxu0 %v5130
      %6925 = vmatprep.subr.bf16.mxu0 %v5135
      %6926 = vmatpush1.bf16.msra.mxu0 %v5134
      %6927 = vmatprep.subr.bf16.mxu0 %v5139
      %6928 = vmatpush1.bf16.msra.mxu0 %v5138
      %6929 = vmatprep.subr.bf16.mxu0 %v5143
      %6930 = vmatpush1.bf16.msra.mxu0 %v5142
      %6931 = vmatprep.subr.bf16.mxu0 %v5147
      %6932 = vmatpush1.bf16.msra.mxu0 %v5146
      %6933 = vmatprep.subr.bf16.mxu0 %v5151
      %6934 = vmatpush1.bf16.msra.mxu0 %v5150
      %6935 = vmatprep.subr.bf16.mxu0 %v5155
      %6936 = vmatpush1.bf16.msra.mxu0 %v5154
      %6937 = vmatprep.subr.bf16.mxu0 %v5159
      %6938 = vmatpush1.bf16.msra.mxu0 %v5158
      %6939 = vmatprep.subr.bf16.mxu0 %v5163
      %6940 = vmatpush1.bf16.msra.mxu0 %v5162
      %6941 = vmatprep.subr.bf16.mxu0 %v5167
      %6942 = vmatpush1.bf16.msra.mxu0 %v5166
      %6943 = vmatprep.subr.bf16.mxu0 %v5171
      %6944 = vmatpush1.bf16.msra.mxu0 %v5170
      %6945 = vmatprep.subr.bf16.mxu0 %v5175
      %6946 = vmatpush1.bf16.msra.mxu0 %v5174
      %6947 = vmatprep.subr.bf16.mxu0 %v5179
      %6948 = vmatpush1.bf16.msra.mxu0 %v5178
      %6949 = vmatprep.subr.bf16.mxu0 %v5183
      %6950 = vmatpush1.bf16.msra.mxu0 %v5182
      %6951 = vmatprep.subr.bf16.mxu0 %v5187
      %6952 = vmatpush1.bf16.msra.mxu0 %v5186
      %6953 = vmatprep.mubr.bf16.mxu0 %v1283
      %6954 = vmatmul.mubr.bf16.gmra.mrb[0].mxu0 %v1281
      %v6955 = vpop.f32.mrb[0].mxu0
      %v6956 = vadd.f32 %v6915, %v6955
      %v6957 = vpop.f32.mrb[0].mxu0
      %v6958 = vadd.f32 %v6917, %v6957
      %v6959 = vpop.f32.mrb[0].mxu0
      %v6960 = vpop.f32.mrb[0].mxu0
      %6961 = vdwg.mxu0
      %6962 = vmatprep.subr.bf16.mxu0 %v5191
      %6963 = vmatpush1.bf16.msra.mxu0 %v5190
      %6964 = vmatprep.subr.bf16.mxu0 %v5195
      %6965 = vmatpush1.bf16.msra.mxu0 %v5194
      %6966 = vmatprep.subr.bf16.mxu0 %v5199
      %6967 = vmatpush1.bf16.msra.mxu0 %v5198
      %6968 = vmatprep.subr.bf16.mxu0 %v5203
      %6969 = vmatpush1.bf16.msra.mxu0 %v5202
      %6970 = vmatprep.subr.bf16.mxu0 %v5207
      %6971 = vmatpush1.bf16.msra.mxu0 %v5206
      %6972 = vmatprep.subr.bf16.mxu0 %v5211
      %6973 = vmatpush1.bf16.msra.mxu0 %v5210
      %6974 = vmatprep.subr.bf16.mxu0 %v5215
      %6975 = vmatpush1.bf16.msra.mxu0 %v5214
      %6976 = vmatprep.subr.bf16.mxu0 %v5219
      %6977 = vmatpush1.bf16.msra.mxu0 %v5218
      %6978 = vmatprep.subr.bf16.mxu0 %v5223
      %6979 = vmatpush1.bf16.msra.mxu0 %v5222
      %6980 = vmatprep.subr.bf16.mxu0 %v5227
      %6981 = vmatpush1.bf16.msra.mxu0 %v5226
      %6982 = vmatprep.subr.bf16.mxu0 %v5231
      %6983 = vmatpush1.bf16.msra.mxu0 %v5230
      %6984 = vmatprep.subr.bf16.mxu0 %v5235
      %6985 = vmatpush1.bf16.msra.mxu0 %v5234
      %6986 = vmatprep.subr.bf16.mxu0 %v5239
      %6987 = vmatpush1.bf16.msra.mxu0 %v5238
      %6988 = vmatprep.subr.bf16.mxu0 %v5243
      %6989 = vmatpush1.bf16.msra.mxu0 %v5242
      %6990 = vmatprep.subr.bf16.mxu0 %v5247
      %6991 = vmatpush1.bf16.msra.mxu0 %v5246
      %6992 = vmatprep.subr.bf16.mxu0 %v5251
      %6993 = vmatpush1.bf16.msra.mxu0 %v5250
      %6994 = vmatprep.mubr.bf16.mxu0 %v1299
      %6995 = vmatmul.mubr.bf16.gmra.mrb[0].mxu0 %v1291
      %v6996 = vpop.f32.mrb[0].mxu0
      %v6997 = vadd.f32 %v6956, %v6996
      %v6998 = vpop.f32.mrb[0].mxu0
      %v6999 = vadd.f32 %v6958, %v6998
      %v7000 = vpop.f32.mrb[0].mxu0
      %v7001 = vpop.f32.mrb[0].mxu0
      %7002 = vdwg.mxu0
      %7003 = vmatprep.subr.bf16.mxu0 %v5255
      %7004 = vmatpush1.bf16.msra.mxu0 %v5254
      %7005 = vmatprep.subr.bf16.mxu0 %v5259
      %7006 = vmatpush1.bf16.msra.mxu0 %v5258
      %7007 = vmatprep.subr.bf16.mxu0 %v5263
      %7008 = vmatpush1.bf16.msra.mxu0 %v5262
      %7009 = vmatprep.subr.bf16.mxu0 %v5267
      %7010 = vmatpush1.bf16.msra.mxu0 %v5266
      %7011 = vmatprep.subr.bf16.mxu0 %v5271
      %7012 = vmatpush1.bf16.msra.mxu0 %v5270
      %7013 = vmatprep.subr.bf16.mxu0 %v5275
      %7014 = vmatpush1.bf16.msra.mxu0 %v5274
      %7015 = vmatprep.subr.bf16.mxu0 %v5279
      %7016 = vmatpush1.bf16.msra.mxu0 %v5278
      %7017 = vmatprep.subr.bf16.mxu0 %v5283
      %7018 = vmatpush1.bf16.msra.mxu0 %v5282
      %7019 = vmatprep.subr.bf16.mxu0 %v5287
      %7020 = vmatpush1.bf16.msra.mxu0 %v5286
      %7021 = vmatprep.subr.bf16.mxu0 %v5291
      %7022 = vmatpush1.bf16.msra.mxu0 %v5290
      %7023 = vmatprep.subr.bf16.mxu0 %v5295
      %7024 = vmatpush1.bf16.msra.mxu0 %v5294
      %7025 = vmatprep.subr.bf16.mxu0 %v5299
      %7026 = vmatpush1.bf16.msra.mxu0 %v5298
      %7027 = vmatprep.subr.bf16.mxu0 %v5303
      %7028 = vmatpush1.bf16.msra.mxu0 %v5302
      %7029 = vmatprep.subr.bf16.mxu0 %v5307
      %7030 = vmatpush1.bf16.msra.mxu0 %v5306
      %7031 = vmatprep.subr.bf16.mxu0 %v5311
      %7032 = vmatpush1.bf16.msra.mxu0 %v5310
      %7033 = vmatprep.subr.bf16.mxu0 %v5315
      %7034 = vmatpush1.bf16.msra.mxu0 %v5314
      %7035 = vmatprep.mubr.bf16.mxu0 %v1300
      %7036 = vmatmul.mubr.bf16.gmra.mrb[0].mxu0 %v1298
      %v7037 = vpop.f32.mrb[0].mxu0
      %v7038 = vadd.f32 %v6997, %v7037
      %v7039 = vpop.f32.mrb[0].mxu0
      %v7040 = vadd.f32 %v6999, %v7039
      %v7041 = vpop.f32.mrb[0].mxu0
      %v7042 = vpop.f32.mrb[0].mxu0
      %7043 = vdwg.mxu0
      %7044 = vmatprep.subr.bf16.mxu0 %v5319
      %7045 = vmatpush1.bf16.msra.mxu0 %v5318
      %7046 = vmatprep.subr.bf16.mxu0 %v5323
      %7047 = vmatpush1.bf16.msra.mxu0 %v5322
      %7048 = vmatprep.subr.bf16.mxu0 %v5327
      %7049 = vmatpush1.bf16.msra.mxu0 %v5326
      %7050 = vmatprep.subr.bf16.mxu0 %v5331
      %7051 = vmatpush1.bf16.msra.mxu0 %v5330
      %7052 = vmatprep.subr.bf16.mxu0 %v5335
      %7053 = vmatpush1.bf16.msra.mxu0 %v5334
      %7054 = vmatprep.subr.bf16.mxu0 %v5339
      %7055 = vmatpush1.bf16.msra.mxu0 %v5338
      %7056 = vmatprep.subr.bf16.mxu0 %v5343
      %7057 = vmatpush1.bf16.msra.mxu0 %v5342
      %7058 = vmatprep.subr.bf16.mxu0 %v5347
      %7059 = vmatpush1.bf16.msra.mxu0 %v5346
      %7060 = vmatprep.subr.bf16.mxu0 %v5351
      %7061 = vmatpush1.bf16.msra.mxu0 %v5350
      %7062 = vmatprep.subr.bf16.mxu0 %v5355
      %7063 = vmatpush1.bf16.msra.mxu0 %v5354
      %7064 = vmatprep.subr.bf16.mxu0 %v5359
      %7065 = vmatpush1.bf16.msra.mxu0 %v5358
      %7066 = vmatprep.subr.bf16.mxu0 %v5363
      %7067 = vmatpush1.bf16.msra.mxu0 %v5362
      %7068 = vmatprep.subr.bf16.mxu0 %v5367
      %7069 = vmatpush1.bf16.msra.mxu0 %v5366
      %7070 = vmatprep.subr.bf16.mxu0 %v5371
      %7071 = vmatpush1.bf16.msra.mxu0 %v5370
      %7072 = vmatprep.subr.bf16.mxu0 %v5375
      %7073 = vmatpush1.bf16.msra.mxu0 %v5374
      %7074 = vmatprep.subr.bf16.mxu0 %v5379
      %7075 = vmatpush1.bf16.msra.mxu0 %v5378
      %7076 = vmatprep.mubr.bf16.mxu0 %v1316
      %7077 = vmatmul.mubr.bf16.gmra.mrb[0].mxu0 %v1308
      %v7078 = vpop.f32.mrb[0].mxu0
      %v7079 = vadd.f32 %v7038, %v7078
      %v7080 = vpop.f32.mrb[0].mxu0
      %v7081 = vadd.f32 %v7040, %v7080
      %v7082 = vpop.f32.mrb[0].mxu0
      %v7083 = vpop.f32.mrb[0].mxu0
      %7084 = vdwg.mxu0
      %7085 = vmatprep.subr.bf16.mxu0 %v5383
      %7086 = vmatpush1.bf16.msra.mxu0 %v5382
      %7087 = vmatprep.subr.bf16.mxu0 %v5387
      %7088 = vmatpush1.bf16.msra.mxu0 %v5386
      %7089 = vmatprep.subr.bf16.mxu0 %v5391
      %7090 = vmatpush1.bf16.msra.mxu0 %v5390
      %7091 = vmatprep.subr.bf16.mxu0 %v5395
      %7092 = vmatpush1.bf16.msra.mxu0 %v5394
      %7093 = vmatprep.subr.bf16.mxu0 %v5399
      %7094 = vmatpush1.bf16.msra.mxu0 %v5398
      %7095 = vmatprep.subr.bf16.mxu0 %v5403
      %7096 = vmatpush1.bf16.msra.mxu0 %v5402
      %7097 = vmatprep.subr.bf16.mxu0 %v5407
      %7098 = vmatpush1.bf16.msra.mxu0 %v5406
      %7099 = vmatprep.subr.bf16.mxu0 %v5411
      %7100 = vmatpush1.bf16.msra.mxu0 %v5410
      %7101 = vmatprep.subr.bf16.mxu0 %v5415
      %7102 = vmatpush1.bf16.msra.mxu0 %v5414
      %7103 = vmatprep.subr.bf16.mxu0 %v5419
      %7104 = vmatpush1.bf16.msra.mxu0 %v5418
      %7105 = vmatprep.subr.bf16.mxu0 %v5423
      %7106 = vmatpush1.bf16.msra.mxu0 %v5422
      %7107 = vmatprep.subr.bf16.mxu0 %v5427
      %7108 = vmatpush1.bf16.msra.mxu0 %v5426
      %7109 = vmatprep.subr.bf16.mxu0 %v5431
      %7110 = vmatpush1.bf16.msra.mxu0 %v5430
      %7111 = vmatprep.subr.bf16.mxu0 %v5435
      %7112 = vmatpush1.bf16.msra.mxu0 %v5434
      %7113 = vmatprep.subr.bf16.mxu0 %v5439
      %7114 = vmatpush1.bf16.msra.mxu0 %v5438
      %7115 = vmatprep.subr.bf16.mxu0 %v5443
      %7116 = vmatpush1.bf16.msra.mxu0 %v5442
      %7117 = vmatprep.mubr.bf16.mxu0 %v1317
      %7118 = vmatmul.mubr.bf16.gmra.mrb[0].mxu0 %v1315
      %v7119 = vpop.f32.mrb[0].mxu0
      %v7120 = vadd.f32 %v7079, %v7119
      %v7121 = vpop.f32.mrb[0].mxu0
      %v7122 = vadd.f32 %v7081, %v7121
      %v7123 = vpop.f32.mrb[0].mxu0
      %v7124 = vpop.f32.mrb[0].mxu0
      %7125 = vdwg.mxu0
      %7126 = vmatprep.subr.bf16.mxu0 %v4425
      %7127 = vmatpush1.bf16.msra.mxu0 %v4424
      %7128 = vmatprep.subr.bf16.mxu0 %v4429
      %7129 = vmatpush1.bf16.msra.mxu0 %v4428
      %7130 = vmatprep.subr.bf16.mxu0 %v4433
      %7131 = vmatpush1.bf16.msra.mxu0 %v4432
      %7132 = vmatprep.subr.bf16.mxu0 %v4437
      %7133 = vmatpush1.bf16.msra.mxu0 %v4436
      %7134 = vmatprep.subr.bf16.mxu0 %v4441
      %7135 = vmatpush1.bf16.msra.mxu0 %v4440
      %7136 = vmatprep.subr.bf16.mxu0 %v4445
      %7137 = vmatpush1.bf16.msra.mxu0 %v4444
      %7138 = vmatprep.subr.bf16.mxu0 %v4449
      %7139 = vmatpush1.bf16.msra.mxu0 %v4448
      %7140 = vmatprep.subr.bf16.mxu0 %v4453
      %7141 = vmatpush1.bf16.msra.mxu0 %v4452
      %7142 = vmatprep.subr.bf16.mxu0 %v4457
      %7143 = vmatpush1.bf16.msra.mxu0 %v4456
      %7144 = vmatprep.subr.bf16.mxu0 %v4461
      %7145 = vmatpush1.bf16.msra.mxu0 %v4460
      %7146 = vmatprep.subr.bf16.mxu0 %v4465
      %7147 = vmatpush1.bf16.msra.mxu0 %v4464
      %7148 = vmatprep.subr.bf16.mxu0 %v4469
      %7149 = vmatpush1.bf16.msra.mxu0 %v4468
      %7150 = vmatprep.subr.bf16.mxu0 %v4473
      %7151 = vmatpush1.bf16.msra.mxu0 %v4472
      %7152 = vmatprep.subr.bf16.mxu0 %v4477
      %7153 = vmatpush1.bf16.msra.mxu0 %v4476
      %7154 = vmatprep.subr.bf16.mxu0 %v4481
      %7155 = vmatpush1.bf16.msra.mxu0 %v4480
      %7156 = vmatprep.subr.bf16.mxu0 %v4485
      %7157 = vmatpush1.bf16.msra.mxu0 %v4484
      %7158 = vmatprep.mubr.bf16.mxu0 %v1197
      %7159 = vmatmul.mubr.bf16.gmra.mrb[0].mxu0 %v1189
      %v7160 = vpop.f32.mrb[0].mxu0
      %v7161 = vadd.f32 0.0, %v7160
      %v7162 = vpop.f32.mrb[0].mxu0
      %v7163 = vadd.f32 0.0, %v7162
      %v7164 = vpop.f32.mrb[0].mxu0
      %v7165 = vpop.f32.mrb[0].mxu0
      %7166 = vdwg.mxu0
      %7167 = vmatprep.subr.bf16.mxu0 %v4489
      %7168 = vmatpush1.bf16.msra.mxu0 %v4488
      %7169 = vmatprep.subr.bf16.mxu0 %v4493
      %7170 = vmatpush1.bf16.msra.mxu0 %v4492
      %7171 = vmatprep.subr.bf16.mxu0 %v4497
      %7172 = vmatpush1.bf16.msra.mxu0 %v4496
      %7173 = vmatprep.subr.bf16.mxu0 %v4501
      %7174 = vmatpush1.bf16.msra.mxu0 %v4500
      %7175 = vmatprep.subr.bf16.mxu0 %v4505
      %7176 = vmatpush1.bf16.msra.mxu0 %v4504
      %7177 = vmatprep.subr.bf16.mxu0 %v4509
      %7178 = vmatpush1.bf16.msra.mxu0 %v4508
      %7179 = vmatprep.subr.bf16.mxu0 %v4513
      %7180 = vmatpush1.bf16.msra.mxu0 %v4512
      %7181 = vmatprep.subr.bf16.mxu0 %v4517
      %7182 = vmatpush1.bf16.msra.mxu0 %v4516
      %7183 = vmatprep.subr.bf16.mxu0 %v4521
      %7184 = vmatpush1.bf16.msra.mxu0 %v4520
      %7185 = vmatprep.subr.bf16.mxu0 %v4525
      %7186 = vmatpush1.bf16.msra.mxu0 %v4524
      %7187 = vmatprep.subr.bf16.mxu0 %v4529
      %7188 = vmatpush1.bf16.msra.mxu0 %v4528
      %7189 = vmatprep.subr.bf16.mxu0 %v4533
      %7190 = vmatpush1.bf16.msra.mxu0 %v4532
      %7191 = vmatprep.subr.bf16.mxu0 %v4537
      %7192 = vmatpush1.bf16.msra.mxu0 %v4536
      %7193 = vmatprep.subr.bf16.mxu0 %v4541
      %7194 = vmatpush1.bf16.msra.mxu0 %v4540
      %7195 = vmatprep.subr.bf16.mxu0 %v4545
      %7196 = vmatpush1.bf16.msra.mxu0 %v4544
      %7197 = vmatprep.subr.bf16.mxu0 %v4549
      %7198 = vmatpush1.bf16.msra.mxu0 %v4548
      %7199 = vmatprep.mubr.bf16.mxu0 %v1198
      %7200 = vmatmul.mubr.bf16.gmra.mrb[0].mxu0 %v1196
      %v7201 = vpop.f32.mrb[0].mxu0
      %v7202 = vadd.f32 %v7161, %v7201
      %v7203 = vpop.f32.mrb[0].mxu0
      %v7204 = vadd.f32 %v7163, %v7203
      %v7205 = vpop.f32.mrb[0].mxu0
      %v7206 = vpop.f32.mrb[0].mxu0
      %7207 = vdwg.mxu0
      %7208 = vmatprep.subr.bf16.mxu0 %v4553
      %7209 = vmatpush1.bf16.msra.mxu0 %v4552
      %7210 = vmatprep.subr.bf16.mxu0 %v4557
      %7211 = vmatpush1.bf16.msra.mxu0 %v4556
      %7212 = vmatprep.subr.bf16.mxu0 %v4561
      %7213 = vmatpush1.bf16.msra.mxu0 %v4560
      %7214 = vmatprep.subr.bf16.mxu0 %v4565
      %7215 = vmatpush1.bf16.msra.mxu0 %v4564
      %7216 = vmatprep.subr.bf16.mxu0 %v4569
      %7217 = vmatpush1.bf16.msra.mxu0 %v4568
      %7218 = vmatprep.subr.bf16.mxu0 %v4573
      %7219 = vmatpush1.bf16.msra.mxu0 %v4572
      %7220 = vmatprep.subr.bf16.mxu0 %v4577
      %7221 = vmatpush1.bf16.msra.mxu0 %v4576
      %7222 = vmatprep.subr.bf16.mxu0 %v4581
      %7223 = vmatpush1.bf16.msra.mxu0 %v4580
      %7224 = vmatprep.subr.bf16.mxu0 %v4585
      %7225 = vmatpush1.bf16.msra.mxu0 %v4584
      %7226 = vmatprep.subr.bf16.mxu0 %v4589
      %7227 = vmatpush1.bf16.msra.mxu0 %v4588
      %7228 = vmatprep.subr.bf16.mxu0 %v4593
      %7229 = vmatpush1.bf16.msra.mxu0 %v4592
      %7230 = vmatprep.subr.bf16.mxu0 %v4597
      %7231 = vmatpush1.bf16.msra.mxu0 %v4596
      %7232 = vmatprep.subr.bf16.mxu0 %v4601
      %7233 = vmatpush1.bf16.msra.mxu0 %v4600
      %7234 = vmatprep.subr.bf16.mxu0 %v4605
      %7235 = vmatpush1.bf16.msra.mxu0 %v4604
      %7236 = vmatprep.subr.bf16.mxu0 %v4609
      %7237 = vmatpush1.bf16.msra.mxu0 %v4608
      %7238 = vmatprep.subr.bf16.mxu0 %v4613
      %7239 = vmatpush1.bf16.msra.mxu0 %v4612
      %7240 = vmatprep.mubr.bf16.mxu0 %v1214
      %7241 = vmatmul.mubr.bf16.gmra.mrb[0].mxu0 %v1206
      %v7242 = vpop.f32.mrb[0].mxu0
      %v7243 = vadd.f32 %v7202, %v7242
      %v7244 = vpop.f32.mrb[0].mxu0
      %v7245 = vadd.f32 %v7204, %v7244
      %v7246 = vpop.f32.mrb[0].mxu0
      %v7247 = vpop.f32.mrb[0].mxu0
      %7248 = vdwg.mxu0
      %7249 = vmatprep.subr.bf16.mxu0 %v4617
      %7250 = vmatpush1.bf16.msra.mxu0 %v4616
      %7251 = vmatprep.subr.bf16.mxu0 %v4621
      %7252 = vmatpush1.bf16.msra.mxu0 %v4620
      %7253 = vmatprep.subr.bf16.mxu0 %v4625
      %7254 = vmatpush1.bf16.msra.mxu0 %v4624
      %7255 = vmatprep.subr.bf16.mxu0 %v4629
      %7256 = vmatpush1.bf16.msra.mxu0 %v4628
      %7257 = vmatprep.subr.bf16.mxu0 %v4633
      %7258 = vmatpush1.bf16.msra.mxu0 %v4632
      %7259 = vmatprep.subr.bf16.mxu0 %v4637
      %7260 = vmatpush1.bf16.msra.mxu0 %v4636
      %7261 = vmatprep.subr.bf16.mxu0 %v4641
      %7262 = vmatpush1.bf16.msra.mxu0 %v4640
      %7263 = vmatprep.subr.bf16.mxu0 %v4645
      %7264 = vmatpush1.bf16.msra.mxu0 %v4644
      %7265 = vmatprep.subr.bf16.mxu0 %v4649
      %7266 = vmatpush1.bf16.msra.mxu0 %v4648
      %7267 = vmatprep.subr.bf16.mxu0 %v4653
      %7268 = vmatpush1.bf16.msra.mxu0 %v4652
      %7269 = vmatprep.subr.bf16.mxu0 %v4657
      %7270 = vmatpush1.bf16.msra.mxu0 %v4656
      %7271 = vmatprep.subr.bf16.mxu0 %v4661
      %7272 = vmatpush1.bf16.msra.mxu0 %v4660
      %7273 = vmatprep.subr.bf16.mxu0 %v4665
      %7274 = vmatpush1.bf16.msra.mxu0 %v4664
      %7275 = vmatprep.subr.bf16.mxu0 %v4669
      %7276 = vmatpush1.bf16.msra.mxu0 %v4668
      %7277 = vmatprep.subr.bf16.mxu0 %v4673
      %7278 = vmatpush1.bf16.msra.mxu0 %v4672
      %7279 = vmatprep.subr.bf16.mxu0 %v4677
      %7280 = vmatpush1.bf16.msra.mxu0 %v4676
      %7281 = vmatprep.mubr.bf16.mxu0 %v1215
      %7282 = vmatmul.mubr.bf16.gmra.mrb[0].mxu0 %v1213
      %v7283 = vpop.f32.mrb[0].mxu0
      %v7284 = vadd.f32 %v7243, %v7283
      %v7285 = vpop.f32.mrb[0].mxu0
      %v7286 = vadd.f32 %v7245, %v7285
      %v7287 = vpop.f32.mrb[0].mxu0
      %v7288 = vpop.f32.mrb[0].mxu0
      %7289 = vdwg.mxu0
      %7290 = vmatprep.subr.bf16.mxu0 %v4681
      %7291 = vmatpush1.bf16.msra.mxu0 %v4680
      %7292 = vmatprep.subr.bf16.mxu0 %v4685
      %7293 = vmatpush1.bf16.msra.mxu0 %v4684
      %7294 = vmatprep.subr.bf16.mxu0 %v4689
      %7295 = vmatpush1.bf16.msra.mxu0 %v4688
      %7296 = vmatprep.subr.bf16.mxu0 %v4693
      %7297 = vmatpush1.bf16.msra.mxu0 %v4692
      %7298 = vmatprep.subr.bf16.mxu0 %v4697
      %7299 = vmatpush1.bf16.msra.mxu0 %v4696
      %7300 = vmatprep.subr.bf16.mxu0 %v4701
      %7301 = vmatpush1.bf16.msra.mxu0 %v4700
      %7302 = vmatprep.subr.bf16.mxu0 %v4705
      %7303 = vmatpush1.bf16.msra.mxu0 %v4704
      %7304 = vmatprep.subr.bf16.mxu0 %v4709
      %7305 = vmatpush1.bf16.msra.mxu0 %v4708
      %7306 = vmatprep.subr.bf16.mxu0 %v4713
      %7307 = vmatpush1.bf16.msra.mxu0 %v4712
      %7308 = vmatprep.subr.bf16.mxu0 %v4717
      %7309 = vmatpush1.bf16.msra.mxu0 %v4716
      %7310 = vmatprep.subr.bf16.mxu0 %v4721
      %7311 = vmatpush1.bf16.msra.mxu0 %v4720
      %7312 = vmatprep.subr.bf16.mxu0 %v4725
      %7313 = vmatpush1.bf16.msra.mxu0 %v4724
      %7314 = vmatprep.subr.bf16.mxu0 %v4729
      %7315 = vmatpush1.bf16.msra.mxu0 %v4728
      %7316 = vmatprep.subr.bf16.mxu0 %v4733
      %7317 = vmatpush1.bf16.msra.mxu0 %v4732
      %7318 = vmatprep.subr.bf16.mxu0 %v4737
      %7319 = vmatpush1.bf16.msra.mxu0 %v4736
      %7320 = vmatprep.subr.bf16.mxu0 %v4741
      %7321 = vmatpush1.bf16.msra.mxu0 %v4740
      %7322 = vmatprep.mubr.bf16.mxu0 %v1231
      %7323 = vmatmul.mubr.bf16.gmra.mrb[0].mxu0 %v1223
      %v7324 = vpop.f32.mrb[0].mxu0
      %v7325 = vadd.f32 %v7284, %v7324
      %v7326 = vpop.f32.mrb[0].mxu0
      %v7327 = vadd.f32 %v7286, %v7326
      %v7328 = vpop.f32.mrb[0].mxu0
      %v7329 = vpop.f32.mrb[0].mxu0
      %7330 = vdwg.mxu0
      %7331 = vmatprep.subr.bf16.mxu0 %v4745
      %7332 = vmatpush1.bf16.msra.mxu0 %v4744
      %7333 = vmatprep.subr.bf16.mxu0 %v4749
      %7334 = vmatpush1.bf16.msra.mxu0 %v4748
      %7335 = vmatprep.subr.bf16.mxu0 %v4753
      %7336 = vmatpush1.bf16.msra.mxu0 %v4752
      %7337 = vmatprep.subr.bf16.mxu0 %v4757
      %7338 = vmatpush1.bf16.msra.mxu0 %v4756
      %7339 = vmatprep.subr.bf16.mxu0 %v4761
      %7340 = vmatpush1.bf16.msra.mxu0 %v4760
      %7341 = vmatprep.subr.bf16.mxu0 %v4765
      %7342 = vmatpush1.bf16.msra.mxu0 %v4764
      %7343 = vmatprep.subr.bf16.mxu0 %v4769
      %7344 = vmatpush1.bf16.msra.mxu0 %v4768
      %7345 = vmatprep.subr.bf16.mxu0 %v4773
      %7346 = vmatpush1.bf16.msra.mxu0 %v4772
      %7347 = vmatprep.subr.bf16.mxu0 %v4777
      %7348 = vmatpush1.bf16.msra.mxu0 %v4776
      %7349 = vmatprep.subr.bf16.mxu0 %v4781
      %7350 = vmatpush1.bf16.msra.mxu0 %v4780
      %7351 = vmatprep.subr.bf16.mxu0 %v4785
      %7352 = vmatpush1.bf16.msra.mxu0 %v4784
      %7353 = vmatprep.subr.bf16.mxu0 %v4789
      %7354 = vmatpush1.bf16.msra.mxu0 %v4788
      %7355 = vmatprep.subr.bf16.mxu0 %v4793
      %7356 = vmatpush1.bf16.msra.mxu0 %v4792
      %7357 = vmatprep.subr.bf16.mxu0 %v4797
      %7358 = vmatpush1.bf16.msra.mxu0 %v4796
      %7359 = vmatprep.subr.bf16.mxu0 %v4801
      %7360 = vmatpush1.bf16.msra.mxu0 %v4800
      %7361 = vmatprep.subr.bf16.mxu0 %v4805
      %7362 = vmatpush1.bf16.msra.mxu0 %v4804
      %7363 = vmatprep.mubr.bf16.mxu0 %v1232
      %7364 = vmatmul.mubr.bf16.gmra.mrb[0].mxu0 %v1230
      %v7365 = vpop.f32.mrb[0].mxu0
      %v7366 = vadd.f32 %v7325, %v7365
      %v7367 = vpop.f32.mrb[0].mxu0
      %v7368 = vadd.f32 %v7327, %v7367
      %v7369 = vpop.f32.mrb[0].mxu0
      %v7370 = vpop.f32.mrb[0].mxu0
      %7371 = vdwg.mxu0
      %7372 = vmatprep.subr.bf16.mxu0 %v4809
      %7373 = vmatpush1.bf16.msra.mxu0 %v4808
      %7374 = vmatprep.subr.bf16.mxu0 %v4813
      %7375 = vmatpush1.bf16.msra.mxu0 %v4812
      %7376 = vmatprep.subr.bf16.mxu0 %v4817
      %7377 = vmatpush1.bf16.msra.mxu0 %v4816
      %7378 = vmatprep.subr.bf16.mxu0 %v4821
      %7379 = vmatpush1.bf16.msra.mxu0 %v4820
      %7380 = vmatprep.subr.bf16.mxu0 %v4825
      %7381 = vmatpush1.bf16.msra.mxu0 %v4824
      %7382 = vmatprep.subr.bf16.mxu0 %v4829
      %7383 = vmatpush1.bf16.msra.mxu0 %v4828
      %7384 = vmatprep.subr.bf16.mxu0 %v4833
      %7385 = vmatpush1.bf16.msra.mxu0 %v4832
      %7386 = vmatprep.subr.bf16.mxu0 %v4837
      %7387 = vmatpush1.bf16.msra.mxu0 %v4836
      %7388 = vmatprep.subr.bf16.mxu0 %v4841
      %7389 = vmatpush1.bf16.msra.mxu0 %v4840
      %7390 = vmatprep.subr.bf16.mxu0 %v4845
      %7391 = vmatpush1.bf16.msra.mxu0 %v4844
      %7392 = vmatprep.subr.bf16.mxu0 %v4849
      %7393 = vmatpush1.bf16.msra.mxu0 %v4848
      %7394 = vmatprep.subr.bf16.mxu0 %v4853
      %7395 = vmatpush1.bf16.msra.mxu0 %v4852
      %7396 = vmatprep.subr.bf16.mxu0 %v4857
      %7397 = vmatpush1.bf16.msra.mxu0 %v4856
      %7398 = vmatprep.subr.bf16.mxu0 %v4861
      %7399 = vmatpush1.bf16.msra.mxu0 %v4860
      %7400 = vmatprep.subr.bf16.mxu0 %v4865
      %7401 = vmatpush1.bf16.msra.mxu0 %v4864
      %7402 = vmatprep.subr.bf16.mxu0 %v4869
      %7403 = vmatpush1.bf16.msra.mxu0 %v4868
      %7404 = vmatprep.mubr.bf16.mxu0 %v1248
      %7405 = vmatmul.mubr.bf16.gmra.mrb[0].mxu0 %v1240
      %v7406 = vpop.f32.mrb[0].mxu0
      %v7407 = vadd.f32 %v7366, %v7406
      %v7408 = vpop.f32.mrb[0].mxu0
      %v7409 = vadd.f32 %v7368, %v7408
      %v7410 = vpop.f32.mrb[0].mxu0
      %v7411 = vpop.f32.mrb[0].mxu0
      %7412 = vdwg.mxu0
      %7413 = vmatprep.subr.bf16.mxu0 %v4873
      %7414 = vmatpush1.bf16.msra.mxu0 %v4872
      %7415 = vmatprep.subr.bf16.mxu0 %v4877
      %7416 = vmatpush1.bf16.msra.mxu0 %v4876
      %7417 = vmatprep.subr.bf16.mxu0 %v4881
      %7418 = vmatpush1.bf16.msra.mxu0 %v4880
      %7419 = vmatprep.subr.bf16.mxu0 %v4885
      %7420 = vmatpush1.bf16.msra.mxu0 %v4884
      %7421 = vmatprep.subr.bf16.mxu0 %v4889
      %7422 = vmatpush1.bf16.msra.mxu0 %v4888
      %7423 = vmatprep.subr.bf16.mxu0 %v4893
      %7424 = vmatpush1.bf16.msra.mxu0 %v4892
      %7425 = vmatprep.subr.bf16.mxu0 %v4897
      %7426 = vmatpush1.bf16.msra.mxu0 %v4896
      %7427 = vmatprep.subr.bf16.mxu0 %v4901
      %7428 = vmatpush1.bf16.msra.mxu0 %v4900
      %7429 = vmatprep.subr.bf16.mxu0 %v4905
      %7430 = vmatpush1.bf16.msra.mxu0 %v4904
      %7431 = vmatprep.subr.bf16.mxu0 %v4909
      %7432 = vmatpush1.bf16.msra.mxu0 %v4908
      %7433 = vmatprep.subr.bf16.mxu0 %v4913
      %7434 = vmatpush1.bf16.msra.mxu0 %v4912
      %7435 = vmatprep.subr.bf16.mxu0 %v4917
      %7436 = vmatpush1.bf16.msra.mxu0 %v4916
      %7437 = vmatprep.subr.bf16.mxu0 %v4921
      %7438 = vmatpush1.bf16.msra.mxu0 %v4920
      %7439 = vmatprep.subr.bf16.mxu0 %v4925
      %7440 = vmatpush1.bf16.msra.mxu0 %v4924
      %7441 = vmatprep.subr.bf16.mxu0 %v4929
      %7442 = vmatpush1.bf16.msra.mxu0 %v4928
      %7443 = vmatprep.subr.bf16.mxu0 %v4933
      %7444 = vmatpush1.bf16.msra.mxu0 %v4932
      %7445 = vmatprep.mubr.bf16.mxu0 %v1249
      %7446 = vmatmul.mubr.bf16.gmra.mrb[0].mxu0 %v1247
      %v7447 = vpop.f32.mrb[0].mxu0
      %v7448 = vadd.f32 %v7407, %v7447
      %v7449 = vpop.f32.mrb[0].mxu0
      %v7450 = vadd.f32 %v7409, %v7449
      %v7451 = vpop.f32.mrb[0].mxu0
      %v7452 = vpop.f32.mrb[0].mxu0
      %7453 = vdwg.mxu0
      %7454 = vmatprep.subr.bf16.mxu0 %v4937
      %7455 = vmatpush1.bf16.msra.mxu0 %v4936
      %7456 = vmatprep.subr.bf16.mxu0 %v4941
      %7457 = vmatpush1.bf16.msra.mxu0 %v4940
      %7458 = vmatprep.subr.bf16.mxu0 %v4945
      %7459 = vmatpush1.bf16.msra.mxu0 %v4944
      %7460 = vmatprep.subr.bf16.mxu0 %v4949
      %7461 = vmatpush1.bf16.msra.mxu0 %v4948
      %7462 = vmatprep.subr.bf16.mxu0 %v4953
      %7463 = vmatpush1.bf16.msra.mxu0 %v4952
      %7464 = vmatprep.subr.bf16.mxu0 %v4957
      %7465 = vmatpush1.bf16.msra.mxu0 %v4956
      %7466 = vmatprep.subr.bf16.mxu0 %v4961
      %7467 = vmatpush1.bf16.msra.mxu0 %v4960
      %7468 = vmatprep.subr.bf16.mxu0 %v4965
      %7469 = vmatpush1.bf16.msra.mxu0 %v4964
      %7470 = vmatprep.subr.bf16.mxu0 %v4969
      %7471 = vmatpush1.bf16.msra.mxu0 %v4968
      %7472 = vmatprep.subr.bf16.mxu0 %v4973
      %7473 = vmatpush1.bf16.msra.mxu0 %v4972
      %7474 = vmatprep.subr.bf16.mxu0 %v4977
      %7475 = vmatpush1.bf16.msra.mxu0 %v4976
      %7476 = vmatprep.subr.bf16.mxu0 %v4981
      %7477 = vmatpush1.bf16.msra.mxu0 %v4980
      %7478 = vmatprep.subr.bf16.mxu0 %v4985
      %7479 = vmatpush1.bf16.msra.mxu0 %v4984
      %7480 = vmatprep.subr.bf16.mxu0 %v4989
      %7481 = vmatpush1.bf16.msra.mxu0 %v4988
      %7482 = vmatprep.subr.bf16.mxu0 %v4993
      %7483 = vmatpush1.bf16.msra.mxu0 %v4992
      %7484 = vmatprep.subr.bf16.mxu0 %v4997
      %7485 = vmatpush1.bf16.msra.mxu0 %v4996
      %7486 = vmatprep.mubr.bf16.mxu0 %v1265
      %7487 = vmatmul.mubr.bf16.gmra.mrb[0].mxu0 %v1257
      %v7488 = vpop.f32.mrb[0].mxu0
      %v7489 = vadd.f32 %v7448, %v7488
      %v7490 = vpop.f32.mrb[0].mxu0
      %v7491 = vadd.f32 %v7450, %v7490
      %v7492 = vpop.f32.mrb[0].mxu0
      %v7493 = vpop.f32.mrb[0].mxu0
      %7494 = vdwg.mxu0
      %7495 = vmatprep.subr.bf16.mxu0 %v5001
      %7496 = vmatpush1.bf16.msra.mxu0 %v5000
      %7497 = vmatprep.subr.bf16.mxu0 %v5005
      %7498 = vmatpush1.bf16.msra.mxu0 %v5004
      %7499 = vmatprep.subr.bf16.mxu0 %v5009
      %7500 = vmatpush1.bf16.msra.mxu0 %v5008
      %7501 = vmatprep.subr.bf16.mxu0 %v5013
      %7502 = vmatpush1.bf16.msra.mxu0 %v5012
      %7503 = vmatprep.subr.bf16.mxu0 %v5017
      %7504 = vmatpush1.bf16.msra.mxu0 %v5016
      %7505 = vmatprep.subr.bf16.mxu0 %v5021
      %7506 = vmatpush1.bf16.msra.mxu0 %v5020
      %7507 = vmatprep.subr.bf16.mxu0 %v5025
      %7508 = vmatpush1.bf16.msra.mxu0 %v5024
      %7509 = vmatprep.subr.bf16.mxu0 %v5029
      %7510 = vmatpush1.bf16.msra.mxu0 %v5028
      %7511 = vmatprep.subr.bf16.mxu0 %v5033
      %7512 = vmatpush1.bf16.msra.mxu0 %v5032
      %7513 = vmatprep.subr.bf16.mxu0 %v5037
      %7514 = vmatpush1.bf16.msra.mxu0 %v5036
      %7515 = vmatprep.subr.bf16.mxu0 %v5041
      %7516 = vmatpush1.bf16.msra.mxu0 %v5040
      %7517 = vmatprep.subr.bf16.mxu0 %v5045
      %7518 = vmatpush1.bf16.msra.mxu0 %v5044
      %7519 = vmatprep.subr.bf16.mxu0 %v5049
      %7520 = vmatpush1.bf16.msra.mxu0 %v5048
      %7521 = vmatprep.subr.bf16.mxu0 %v5053
      %7522 = vmatpush1.bf16.msra.mxu0 %v5052
      %7523 = vmatprep.subr.bf16.mxu0 %v5057
      %7524 = vmatpush1.bf16.msra.mxu0 %v5056
      %7525 = vmatprep.subr.bf16.mxu0 %v5061
      %7526 = vmatpush1.bf16.msra.mxu0 %v5060
      %7527 = vmatprep.mubr.bf16.mxu0 %v1266
      %7528 = vmatmul.mubr.bf16.gmra.mrb[0].mxu0 %v1264
      %v7529 = vpop.f32.mrb[0].mxu0
      %v7530 = vadd.f32 %v7489, %v7529
      %v7531 = vpop.f32.mrb[0].mxu0
      %v7532 = vadd.f32 %v7491, %v7531
      %v7533 = vpop.f32.mrb[0].mxu0
      %v7534 = vpop.f32.mrb[0].mxu0
      %7535 = vdwg.mxu0
      %7536 = vmatprep.subr.bf16.mxu0 %v5065
      %7537 = vmatpush1.bf16.msra.mxu0 %v5064
      %7538 = vmatprep.subr.bf16.mxu0 %v5069
      %7539 = vmatpush1.bf16.msra.mxu0 %v5068
      %7540 = vmatprep.subr.bf16.mxu0 %v5073
      %7541 = vmatpush1.bf16.msra.mxu0 %v5072
      %7542 = vmatprep.subr.bf16.mxu0 %v5077
      %7543 = vmatpush1.bf16.msra.mxu0 %v5076
      %7544 = vmatprep.subr.bf16.mxu0 %v5081
      %7545 = vmatpush1.bf16.msra.mxu0 %v5080
      %7546 = vmatprep.subr.bf16.mxu0 %v5085
      %7547 = vmatpush1.bf16.msra.mxu0 %v5084
      %7548 = vmatprep.subr.bf16.mxu0 %v5089
      %7549 = vmatpush1.bf16.msra.mxu0 %v5088
      %7550 = vmatprep.subr.bf16.mxu0 %v5093
      %7551 = vmatpush1.bf16.msra.mxu0 %v5092
      %7552 = vmatprep.subr.bf16.mxu0 %v5097
      %7553 = vmatpush1.bf16.msra.mxu0 %v5096
      %7554 = vmatprep.subr.bf16.mxu0 %v5101
      %7555 = vmatpush1.bf16.msra.mxu0 %v5100
      %7556 = vmatprep.subr.bf16.mxu0 %v5105
      %7557 = vmatpush1.bf16.msra.mxu0 %v5104
      %7558 = vmatprep.subr.bf16.mxu0 %v5109
      %7559 = vmatpush1.bf16.msra.mxu0 %v5108
      %7560 = vmatprep.subr.bf16.mxu0 %v5113
      %7561 = vmatpush1.bf16.msra.mxu0 %v5112
      %7562 = vmatprep.subr.bf16.mxu0 %v5117
      %7563 = vmatpush1.bf16.msra.mxu0 %v5116
      %7564 = vmatprep.subr.bf16.mxu0 %v5121
      %7565 = vmatpush1.bf16.msra.mxu0 %v5120
      %7566 = vmatprep.subr.bf16.mxu0 %v5125
      %7567 = vmatpush1.bf16.msra.mxu0 %v5124
      %7568 = vmatprep.mubr.bf16.mxu0 %v1282
      %7569 = vmatmul.mubr.bf16.gmra.mrb[0].mxu0 %v1274
      %v7570 = vpop.f32.mrb[0].mxu0
      %v7571 = vadd.f32 %v7530, %v7570
      %v7572 = vpop.f32.mrb[0].mxu0
      %v7573 = vadd.f32 %v7532, %v7572
      %v7574 = vpop.f32.mrb[0].mxu0
      %v7575 = vpop.f32.mrb[0].mxu0
      %7576 = vdwg.mxu0
      %7577 = vmatprep.subr.bf16.mxu0 %v5129
      %7578 = vmatpush1.bf16.msra.mxu0 %v5128
      %7579 = vmatprep.subr.bf16.mxu0 %v5133
      %7580 = vmatpush1.bf16.msra.mxu0 %v5132
      %7581 = vmatprep.subr.bf16.mxu0 %v5137
      %7582 = vmatpush1.bf16.msra.mxu0 %v5136
      %7583 = vmatprep.subr.bf16.mxu0 %v5141
      %7584 = vmatpush1.bf16.msra.mxu0 %v5140
      %7585 = vmatprep.subr.bf16.mxu0 %v5145
      %7586 = vmatpush1.bf16.msra.mxu0 %v5144
      %7587 = vmatprep.subr.bf16.mxu0 %v5149
      %7588 = vmatpush1.bf16.msra.mxu0 %v5148
      %7589 = vmatprep.subr.bf16.mxu0 %v5153
      %7590 = vmatpush1.bf16.msra.mxu0 %v5152
      %7591 = vmatprep.subr.bf16.mxu0 %v5157
      %7592 = vmatpush1.bf16.msra.mxu0 %v5156
      %7593 = vmatprep.subr.bf16.mxu0 %v5161
      %7594 = vmatpush1.bf16.msra.mxu0 %v5160
      %7595 = vmatprep.subr.bf16.mxu0 %v5165
      %7596 = vmatpush1.bf16.msra.mxu0 %v5164
      %7597 = vmatprep.subr.bf16.mxu0 %v5169
      %7598 = vmatpush1.bf16.msra.mxu0 %v5168
      %7599 = vmatprep.subr.bf16.mxu0 %v5173
      %7600 = vmatpush1.bf16.msra.mxu0 %v5172
      %7601 = vmatprep.subr.bf16.mxu0 %v5177
      %7602 = vmatpush1.bf16.msra.mxu0 %v5176
      %7603 = vmatprep.subr.bf16.mxu0 %v5181
      %7604 = vmatpush1.bf16.msra.mxu0 %v5180
      %7605 = vmatprep.subr.bf16.mxu0 %v5185
      %7606 = vmatpush1.bf16.msra.mxu0 %v5184
      %7607 = vmatprep.subr.bf16.mxu0 %v5189
      %7608 = vmatpush1.bf16.msra.mxu0 %v5188
      %7609 = vmatprep.mubr.bf16.mxu0 %v1283
      %7610 = vmatmul.mubr.bf16.gmra.mrb[0].mxu0 %v1281
      %v7611 = vpop.f32.mrb[0].mxu0
      %v7612 = vadd.f32 %v7571, %v7611
      %v7613 = vpop.f32.mrb[0].mxu0
      %v7614 = vadd.f32 %v7573, %v7613
      %v7615 = vpop.f32.mrb[0].mxu0
      %v7616 = vpop.f32.mrb[0].mxu0
      %7617 = vdwg.mxu0
      %7618 = vmatprep.subr.bf16.mxu0 %v5193
      %7619 = vmatpush1.bf16.msra.mxu0 %v5192
      %7620 = vmatprep.subr.bf16.mxu0 %v5197
      %7621 = vmatpush1.bf16.msra.mxu0 %v5196
      %7622 = vmatprep.subr.bf16.mxu0 %v5201
      %7623 = vmatpush1.bf16.msra.mxu0 %v5200
      %7624 = vmatprep.subr.bf16.mxu0 %v5205
      %7625 = vmatpush1.bf16.msra.mxu0 %v5204
      %7626 = vmatprep.subr.bf16.mxu0 %v5209
      %7627 = vmatpush1.bf16.msra.mxu0 %v5208
      %7628 = vmatprep.subr.bf16.mxu0 %v5213
      %7629 = vmatpush1.bf16.msra.mxu0 %v5212
      %7630 = vmatprep.subr.bf16.mxu0 %v5217
      %7631 = vmatpush1.bf16.msra.mxu0 %v5216
      %7632 = vmatprep.subr.bf16.mxu0 %v5221
      %7633 = vmatpush1.bf16.msra.mxu0 %v5220
      %7634 = vmatprep.subr.bf16.mxu0 %v5225
      %7635 = vmatpush1.bf16.msra.mxu0 %v5224
      %7636 = vmatprep.subr.bf16.mxu0 %v5229
      %7637 = vmatpush1.bf16.msra.mxu0 %v5228
      %7638 = vmatprep.subr.bf16.mxu0 %v5233
      %7639 = vmatpush1.bf16.msra.mxu0 %v5232
      %7640 = vmatprep.subr.bf16.mxu0 %v5237
      %7641 = vmatpush1.bf16.msra.mxu0 %v5236
      %7642 = vmatprep.subr.bf16.mxu0 %v5241
      %7643 = vmatpush1.bf16.msra.mxu0 %v5240
      %7644 = vmatprep.subr.bf16.mxu0 %v5245
      %7645 = vmatpush1.bf16.msra.mxu0 %v5244
      %7646 = vmatprep.subr.bf16.mxu0 %v5249
      %7647 = vmatpush1.bf16.msra.mxu0 %v5248
      %7648 = vmatprep.subr.bf16.mxu0 %v5253
      %7649 = vmatpush1.bf16.msra.mxu0 %v5252
      %7650 = vmatprep.mubr.bf16.mxu0 %v1299
      %7651 = vmatmul.mubr.bf16.gmra.mrb[0].mxu0 %v1291
      %v7652 = vpop.f32.mrb[0].mxu0
      %v7653 = vadd.f32 %v7612, %v7652
      %v7654 = vpop.f32.mrb[0].mxu0
      %v7655 = vadd.f32 %v7614, %v7654
      %v7656 = vpop.f32.mrb[0].mxu0
      %v7657 = vpop.f32.mrb[0].mxu0
      %7658 = vdwg.mxu0
      %7659 = vmatprep.subr.bf16.mxu0 %v5257
      %7660 = vmatpush1.bf16.msra.mxu0 %v5256
      %7661 = vmatprep.subr.bf16.mxu0 %v5261
      %7662 = vmatpush1.bf16.msra.mxu0 %v5260
      %7663 = vmatprep.subr.bf16.mxu0 %v5265
      %7664 = vmatpush1.bf16.msra.mxu0 %v5264
      %7665 = vmatprep.subr.bf16.mxu0 %v5269
      %7666 = vmatpush1.bf16.msra.mxu0 %v5268
      %7667 = vmatprep.subr.bf16.mxu0 %v5273
      %7668 = vmatpush1.bf16.msra.mxu0 %v5272
      %7669 = vmatprep.subr.bf16.mxu0 %v5277
      %7670 = vmatpush1.bf16.msra.mxu0 %v5276
      %7671 = vmatprep.subr.bf16.mxu0 %v5281
      %7672 = vmatpush1.bf16.msra.mxu0 %v5280
      %7673 = vmatprep.subr.bf16.mxu0 %v5285
      %7674 = vmatpush1.bf16.msra.mxu0 %v5284
      %7675 = vmatprep.subr.bf16.mxu0 %v5289
      %7676 = vmatpush1.bf16.msra.mxu0 %v5288
      %7677 = vmatprep.subr.bf16.mxu0 %v5293
      %7678 = vmatpush1.bf16.msra.mxu0 %v5292
      %7679 = vmatprep.subr.bf16.mxu0 %v5297
      %7680 = vmatpush1.bf16.msra.mxu0 %v5296
      %7681 = vmatprep.subr.bf16.mxu0 %v5301
      %7682 = vmatpush1.bf16.msra.mxu0 %v5300
      %7683 = vmatprep.subr.bf16.mxu0 %v5305
      %7684 = vmatpush1.bf16.msra.mxu0 %v5304
      %7685 = vmatprep.subr.bf16.mxu0 %v5309
      %7686 = vmatpush1.bf16.msra.mxu0 %v5308
      %7687 = vmatprep.subr.bf16.mxu0 %v5313
      %7688 = vmatpush1.bf16.msra.mxu0 %v5312
      %7689 = vmatprep.subr.bf16.mxu0 %v5317
      %7690 = vmatpush1.bf16.msra.mxu0 %v5316
      %7691 = vmatprep.mubr.bf16.mxu0 %v1300
      %7692 = vmatmul.mubr.bf16.gmra.mrb[0].mxu0 %v1298
      %v7693 = vpop.f32.mrb[0].mxu0
      %v7694 = vadd.f32 %v7653, %v7693
      %v7695 = vpop.f32.mrb[0].mxu0
      %v7696 = vadd.f32 %v7655, %v7695
      %v7697 = vpop.f32.mrb[0].mxu0
      %v7698 = vpop.f32.mrb[0].mxu0
      %7699 = vdwg.mxu0
      %7700 = vmatprep.subr.bf16.mxu0 %v5321
      %7701 = vmatpush1.bf16.msra.mxu0 %v5320
      %7702 = vmatprep.subr.bf16.mxu0 %v5325
      %7703 = vmatpush1.bf16.msra.mxu0 %v5324
      %7704 = vmatprep.subr.bf16.mxu0 %v5329
      %7705 = vmatpush1.bf16.msra.mxu0 %v5328
      %7706 = vmatprep.subr.bf16.mxu0 %v5333
      %7707 = vmatpush1.bf16.msra.mxu0 %v5332
      %7708 = vmatprep.subr.bf16.mxu0 %v5337
      %7709 = vmatpush1.bf16.msra.mxu0 %v5336
      %7710 = vmatprep.subr.bf16.mxu0 %v5341
      %7711 = vmatpush1.bf16.msra.mxu0 %v5340
      %7712 = vmatprep.subr.bf16.mxu0 %v5345
      %7713 = vmatpush1.bf16.msra.mxu0 %v5344
      %7714 = vmatprep.subr.bf16.mxu0 %v5349
      %7715 = vmatpush1.bf16.msra.mxu0 %v5348
      %7716 = vmatprep.subr.bf16.mxu0 %v5353
      %7717 = vmatpush1.bf16.msra.mxu0 %v5352
      %7718 = vmatprep.subr.bf16.mxu0 %v5357
      %7719 = vmatpush1.bf16.msra.mxu0 %v5356
      %7720 = vmatprep.subr.bf16.mxu0 %v5361
      %7721 = vmatpush1.bf16.msra.mxu0 %v5360
      %7722 = vmatprep.subr.bf16.mxu0 %v5365
      %7723 = vmatpush1.bf16.msra.mxu0 %v5364
      %7724 = vmatprep.subr.bf16.mxu0 %v5369
      %7725 = vmatpush1.bf16.msra.mxu0 %v5368
      %7726 = vmatprep.subr.bf16.mxu0 %v5373
      %7727 = vmatpush1.bf16.msra.mxu0 %v5372
      %7728 = vmatprep.subr.bf16.mxu0 %v5377
      %7729 = vmatpush1.bf16.msra.mxu0 %v5376
      %7730 = vmatprep.subr.bf16.mxu0 %v5381
      %7731 = vmatpush1.bf16.msra.mxu0 %v5380
      %7732 = vmatprep.mubr.bf16.mxu0 %v1316
      %7733 = vmatmul.mubr.bf16.gmra.mrb[0].mxu0 %v1308
      %v7734 = vpop.f32.mrb[0].mxu0
      %v7735 = vadd.f32 %v7694, %v7734
      %v7736 = vpop.f32.mrb[0].mxu0
      %v7737 = vadd.f32 %v7696, %v7736
      %v7738 = vpop.f32.mrb[0].mxu0
      %v7739 = vpop.f32.mrb[0].mxu0
      %7740 = vdwg.mxu0
      %7741 = vmatprep.subr.bf16.mxu0 %v5385
      %7742 = vmatpush1.bf16.msra.mxu0 %v5384
      %7743 = vmatprep.subr.bf16.mxu0 %v5389
      %7744 = vmatpush1.bf16.msra.mxu0 %v5388
      %7745 = vmatprep.subr.bf16.mxu0 %v5393
      %7746 = vmatpush1.bf16.msra.mxu0 %v5392
      %7747 = vmatprep.subr.bf16.mxu0 %v5397
      %7748 = vmatpush1.bf16.msra.mxu0 %v5396
      %7749 = vmatprep.subr.bf16.mxu0 %v5401
      %7750 = vmatpush1.bf16.msra.mxu0 %v5400
      %7751 = vmatprep.subr.bf16.mxu0 %v5405
      %7752 = vmatpush1.bf16.msra.mxu0 %v5404
      %7753 = vmatprep.subr.bf16.mxu0 %v5409
      %7754 = vmatpush1.bf16.msra.mxu0 %v5408
      %7755 = vmatprep.subr.bf16.mxu0 %v5413
      %7756 = vmatpush1.bf16.msra.mxu0 %v5412
      %7757 = vmatprep.subr.bf16.mxu0 %v5417
      %7758 = vmatpush1.bf16.msra.mxu0 %v5416
      %7759 = vmatprep.subr.bf16.mxu0 %v5421
      %7760 = vmatpush1.bf16.msra.mxu0 %v5420
      %7761 = vmatprep.subr.bf16.mxu0 %v5425
      %7762 = vmatpush1.bf16.msra.mxu0 %v5424
      %7763 = vmatprep.subr.bf16.mxu0 %v5429
      %7764 = vmatpush1.bf16.msra.mxu0 %v5428
      %7765 = vmatprep.subr.bf16.mxu0 %v5433
      %7766 = vmatpush1.bf16.msra.mxu0 %v5432
      %7767 = vmatprep.subr.bf16.mxu0 %v5437
      %7768 = vmatpush1.bf16.msra.mxu0 %v5436
      %7769 = vmatprep.subr.bf16.mxu0 %v5441
      %7770 = vmatpush1.bf16.msra.mxu0 %v5440
      %7771 = vmatprep.subr.bf16.mxu0 %v5445
      %7772 = vmatpush1.bf16.msra.mxu0 %v5444
      %7773 = vmatprep.mubr.bf16.mxu0 %v1317
      %7774 = vmatmul.mubr.bf16.gmra.mrb[0].mxu0 %v1315
      %v7775 = vpop.f32.mrb[0].mxu0
      %v7776 = vadd.f32 %v7735, %v7775
      %v7777 = vpop.f32.mrb[0].mxu0
      %v7778 = vadd.f32 %v7737, %v7777
      %v7779 = vpop.f32.mrb[0].mxu0
      %v7780 = vpop.f32.mrb[0].mxu0
      %7781 = vdwg.mxu0
      %vm7782 = vcmask 1043456
      %v7783 = vsel %vm7782, %v7120, 0.0
      %v7784 = vrot.slane %v7783, 4
      %v7785 = vadd.f32 %v7783, %v7784
      %v7786 = vrot.slane %v7785, 2
      %v7787 = vadd.f32 %v7785, %v7786
      %v7788 = vrot.slane %v7787, 1
      %v7789 = vadd.f32 %v7787, %v7788
      %v7790 = vsel %vm7782, %v7122, 0.0
      %v7791 = vrot.slane %v7790, 4
      %v7792 = vadd.f32 %v7790, %v7791
      %v7793 = vrot.slane %v7792, 2
      %v7794 = vadd.f32 %v7792, %v7793
      %v7795 = vrot.slane %v7794, 1
      %v7796 = vadd.f32 %v7794, %v7795
      %v7797 = vsel %vm7782, %v7776, 0.0
      %v7798 = vrot.slane %v7797, 4
      %v7799 = vadd.f32 %v7797, %v7798
      %v7800 = vrot.slane %v7799, 2
      %v7801 = vadd.f32 %v7799, %v7800
      %v7802 = vrot.slane %v7801, 1
      %v7803 = vadd.f32 %v7801, %v7802
      %v7804 = vsel %vm7782, %v7778, 0.0
      %v7805 = vrot.slane %v7804, 4
      %v7806 = vadd.f32 %v7804, %v7805
      %v7807 = vrot.slane %v7806, 2
      %v7808 = vadd.f32 %v7806, %v7807
      %v7809 = vrot.slane %v7808, 1
      %v7810 = vadd.f32 %v7808, %v7809
      %v7811 = vrcp.pop 4.0
      %v7812 = vmul.f32 %v7789, %v7811
      %v7813 = vmul.f32 %v7796, %v7811
      %v7814 = vmul.f32 %v7803, %v7811
      %v7815 = vmul.f32 %v7810, %v7811
      %v7816 = vsub.f32 %v7120, %v7812
      %v7817 = vsub.f32 %v7122, %v7813
      %v7818 = vsub.f32 %v7776, %v7814
      %v7819 = vsub.f32 %v7778, %v7815
      %v7820 = vmul.f32 %v7816, %v7816
      %v7821 = vmul.f32 %v7817, %v7817
      %v7822 = vmul.f32 %v7818, %v7818
      %v7823 = vmul.f32 %v7819, %v7819
      %v7824 = vsel %vm7782, %v7820, 0.0
      %v7825 = vrot.slane %v7824, 4
      %v7826 = vadd.f32 %v7824, %v7825
      %v7827 = vrot.slane %v7826, 2
      %v7828 = vadd.f32 %v7826, %v7827
      %v7829 = vrot.slane %v7828, 1
      %v7830 = vadd.f32 %v7828, %v7829
      %v7831 = vsel %vm7782, %v7821, 0.0
      %v7832 = vrot.slane %v7831, 4
      %v7833 = vadd.f32 %v7831, %v7832
      %v7834 = vrot.slane %v7833, 2
      %v7835 = vadd.f32 %v7833, %v7834
      %v7836 = vrot.slane %v7835, 1
      %v7837 = vadd.f32 %v7835, %v7836
      %v7838 = vsel %vm7782, %v7822, 0.0
      %v7839 = vrot.slane %v7838, 4
      %v7840 = vadd.f32 %v7838, %v7839
      %v7841 = vrot.slane %v7840, 2
      %v7842 = vadd.f32 %v7840, %v7841
      %v7843 = vrot.slane %v7842, 1
      %v7844 = vadd.f32 %v7842, %v7843
      %v7845 = vsel %vm7782, %v7823, 0.0
      %v7846 = vrot.slane %v7845, 4
      %v7847 = vadd.f32 %v7845, %v7846
      %v7848 = vrot.slane %v7847, 2
      %v7849 = vadd.f32 %v7847, %v7848
      %v7850 = vrot.slane %v7849, 1
      %v7851 = vadd.f32 %v7849, %v7850
      %v7852 = vmul.f32 %v7830, %v7811
      %v7853 = vmul.f32 %v7837, %v7811
      %v7854 = vmul.f32 %v7844, %v7811
      %v7855 = vmul.f32 %v7851, %v7811
      %v7856 = vadd.f32 %v7852, 1e-05
      %v7857 = vadd.f32 %v7853, 1e-05
      %v7858 = vadd.f32 %v7854, 1e-05
      %v7859 = vadd.f32 %v7855, 1e-05
      %v7860 = vrsqrt.pop %v7856
      %v7861 = vrsqrt.pop %v7857
      %v7862 = vrsqrt.pop %v7858
      %v7863 = vrsqrt.pop %v7859
      %v7864 = vmul.f32 %v7816, %v7860
      %v7865 = vmul.f32 %v7817, %v7861
      %v7866 = vmul.f32 %v7818, %v7862
      %v7867 = vmul.f32 %v7819, %v7863
      %vm7868 = vcmp.ge.f32.partialorder %v7864, 0.0
      %vm7869 = vcmp.ge.f32.partialorder %v7865, 0.0
      %vm7870 = vcmp.ge.f32.partialorder %v7866, 0.0
      %vm7871 = vcmp.ge.f32.partialorder %v7867, 0.0
      %v7872 = vmul.f32 %v7864, 0.2
      %v7873 = vmul.f32 %v7865, 0.2
      %v7874 = vmul.f32 %v7866, 0.2
      %v7875 = vmul.f32 %v7867, 0.2
      %v7876 = vsel %vm7868, %v7864, %v7872
      %v7877 = vsel %vm7869, %v7865, %v7873
      %v7878 = vsel %vm7870, %v7866, %v7874
      %v7879 = vsel %vm7871, %v7867, %v7875
      %v7880 = vsel %vm7782, %v7876, 0.0
      %v7881 = vrot.slane %v7880, 4
      %v7882 = vadd.f32 %v7880, %v7881
      %v7883 = vrot.slane %v7882, 2
      %v7884 = vadd.f32 %v7882, %v7883
      %v7885 = vrot.slane %v7884, 1
      %v7886 = vadd.f32 %v7884, %v7885
      %v7887 = vsel %vm7782, %v7877, 0.0
      %v7888 = vrot.slane %v7887, 4
      %v7889 = vadd.f32 %v7887, %v7888
      %v7890 = vrot.slane %v7889, 2
      %v7891 = vadd.f32 %v7889, %v7890
      %v7892 = vrot.slane %v7891, 1
      %v7893 = vadd.f32 %v7891, %v7892
      %v7894 = vsel %vm7782, %v7878, 0.0
      %v7895 = vrot.slane %v7894, 4
      %v7896 = vadd.f32 %v7894, %v7895
      %v7897 = vrot.slane %v7896, 2
      %v7898 = vadd.f32 %v7896, %v7897
      %v7899 = vrot.slane %v7898, 1
      %v7900 = vadd.f32 %v7898, %v7899
      %v7901 = vsel %vm7782, %v7879, 0.0
      %v7902 = vrot.slane %v7901, 4
      %v7903 = vadd.f32 %v7901, %v7902
      %v7904 = vrot.slane %v7903, 2
      %v7905 = vadd.f32 %v7903, %v7904
      %v7906 = vrot.slane %v7905, 1
      %v7907 = vadd.f32 %v7905, %v7906
      %v7908 = vmul.f32 %v7886, %v7811
      %v7909 = vmul.f32 %v7893, %v7811
      %v7910 = vmul.f32 %v7900, %v7811
      %v7911 = vmul.f32 %v7907, %v7811
      %v7916 = vcombine.low %v7908, %v7909
      %v7917 = vcombine.low %v7910, %v7911
      %v7919 = vunpack.c.l.s4 1966171168
      %v7920 = vunpack.c.0.s8 %v7919
      %v7921 = vlaneseq
      %v7922 = vshrl.u32 %v7921, 7
      %v7923 = vsub.s32 %v7920, %v7922
      %v7924 = vrot.slane %v7916, %v7923
      %v7926 = vunpack.c.l.s4 1966171168
      %v7927 = vunpack.c.0.s8 %v7926
      %v7928 = vlaneseq
      %v7929 = vshrl.u32 %v7928, 7
      %v7930 = vsub.s32 %v7927, %v7929
      %v7931 = vrot.slane %v7917, %v7930
      %v7932 = vcombine.low %v7924, %v7931
      %v7934 = vunpack.c.l.s4 1966171168
      %v7935 = vunpack.c.0.s8 %v7934
      %v7936 = vlaneseq
      %v7937 = vshrl.u32 %v7936, 7
      %v7938 = vsub.s32 %v7935, %v7937
      %v7939 = vrot.slane %v7932, %v7938
      %v7941 = vlaneseq
      %vm7942 = vcmp.ge.s32.totalorder %v7941, 0
      %vm7943 = vcmp.lt.s32.totalorder %v7941, 512
      %vm7944 = vmand %vm7942, %vm7943
      %7945 = vst.msk [vmem:[%s141] sm:$0xf] %vm7944, %v7939
      %p7946 = scmp.lt.s32.totalorder %s13, 1
      %s7947 = scalar_select %p7946, %s13, 1
      %s7948 = smul.addr %s7947, 4
      %s7949 = scalar_lea.vmem %s2, %s7948
      // Predicated region
      $region29: #{siamese_forward.8} parent=27 // pred_check
        %p7950 = pneg %p78
      $region30: #{siamese_forward.8} parent=27 // pred_check_branch
        %7952 = sbr.rel (%p7950) target = $region32
      $region31: #{siamese_forward.8} parent=27 // pred_region
        _
      $region32: #{siamese_forward.8} parent=27 // pred_fallthru
        _
    $region28: #{siamese_forward.8} parent=5 // pred_fallthru
      _
    %p7953 = scmp.le.s32.totalorder 2, %s8
    // Predicated region
    $region33: #{siamese_forward.8} parent=5 // pred_check
      %p7954 = pneg %p7953
    $region34: #{siamese_forward.8} parent=5 // pred_check_branch
      %7956 = sbr.rel (%p7954) target = $region36
    $region35: #{siamese_forward.8} parent=5 // pred_region
      %s7957 = ssub.s32 %s8, 2
      // Predicated region
      $region37: #{siamese_forward.8} parent=35 // pred_check
        %p7958 = pneg %p84
      $region38: #{siamese_forward.8} parent=35 // pred_check_branch
        %7960 = sbr.rel (%p7958) target = $region40
      $region39: #{siamese_forward.8} parent=35 // pred_region
        %p7961 = scmp.lt.s32.totalorder %s14, 1
        %s7962 = scalar_select %p7961, %s14, 1
        %s7963 = smul.addr %s7962, 4
        %s7964 = scalar_lea.vmem %s2, %s7963
      $region40: #{siamese_forward.8} parent=35 // pred_fallthru
        _
    $region36: #{siamese_forward.8} parent=5 // pred_fallthru
      _
  $region6: #{siamese_forward.8} parent=0 // loop_footer
    %s12 = sadd.s32 1, %s8
  $region7: #{siamese_forward.8} parent=0 // loop_footer_branch
    %7 = sbr.rel target = $region3
  $region8: #{siamese_forward.8} parent=0 // loop_exit
    _

</llo_original>
